<compile_context>
chip_gen: v5e
topology: v5e:2x2
jax: 0.10.0
libtpu: 0.0.40
codegen_flags: <defaults>
</compile_context>

<pallas_src>
import functools

import jax
import jax.numpy as jnp
from jax.experimental import pallas as pl
from jax.experimental.pallas import tpu as pltpu


# ---------------------------------------------------------------------------
# Pallas kernel: full MLP hot path for one batch tile.
# ---------------------------------------------------------------------------
def actor_kernel(
    zm_ref, za_ref,                       # f32 [TB, dm], [TB, da]
    wm_ref, wa_ref,                       # bf16 [dm, d_in], [da, d_in]
    w0_ref,                               # bf16 [2*d_in, d_mid]
    w1_ref, w2_ref, w3_ref,               # bf16 [d_mid, d_mid]
    wo_ref,                               # bf16 [d_mid, 2*(dm+da)]
    bias_ref,                             # f32 [8, packed_width]
    out_ref,                              # f32 [TB, dm+da]  (melody | accompany)
):
    d_in = wm_ref.shape[1]
    d_mid = w1_ref.shape[1]
    dm = zm_ref.shape[-1]
    da = za_ref.shape[-1]

    zm = zm_ref[...]                      # f32, reused by the gating residual
    za = za_ref[...]

    # Packed biases (row order fixed by prepare_actor_params).
    b_mel = bias_ref[0:1, :d_in]
    b_acc = bias_ref[1:2, :d_in]
    b0 = bias_ref[2:3, :d_mid]
    b1 = bias_ref[3:4, :d_mid]
    b2 = bias_ref[4:5, :d_mid]
    b3 = bias_ref[5:6, :d_mid]
    b_out = bias_ref[6:7, :2 * (dm + da)]

    def mm(x_f32, w_ref):
        # bf16 operands into the MXU, f32 accumulation.
        return jnp.dot(x_f32.astype(jnp.bfloat16), w_ref[...],
                       preferred_element_type=jnp.float32)

    # Input projections.  fw_layer starts with ReLU on cat([h_m, h_a]);
    # ReLU is elementwise so apply it per-half, then lane-concat (d_in is a
    # multiple of 128 -> cheap layout op) and do ONE K=2*d_in matmul.
    h_m = jnp.maximum(mm(zm, wm_ref) + b_mel, 0.0)
    h_a = jnp.maximum(mm(za, wa_ref) + b_acc, 0.0)
    h = jnp.concatenate([h_m, h_a], axis=-1)

    # 4 hidden Linear+ReLU blocks (Dropout(p=0) == identity, no BatchNorm).
    x = jnp.maximum(mm(h, w0_ref) + b0, 0.0)
    x = jnp.maximum(mm(x, w1_ref) + b1, 0.0)
    x = jnp.maximum(mm(x, w2_ref) + b2, 0.0)
    x = jnp.maximum(mm(x, w3_ref) + b3, 0.0)

    # Output projection: [TB, 2*(dm+da)].
    out = mm(x, wo_ref) + b_out

    # torch: out_melody = out[:, :2*dm].chunk(2) -> (gate, dz); same for acc.
    gate_m = jax.nn.sigmoid(out[:, :dm])
    dz_m = out[:, dm:2 * dm]
    gate_a = jax.nn.sigmoid(out[:, 2 * dm:2 * dm + da])
    dz_a = out[:, 2 * dm + da:2 * (dm + da)]

    new_m = (1.0 - gate_m) * zm + gate_m * dz_m
    new_a = (1.0 - gate_a) * za + gate_a * dz_a
    # Single lane-dense output slab (one contiguous store / writeback stream).
    out_ref[...] = jnp.concatenate([new_m, new_a], axis=-1).astype(out_ref.dtype)


# ---------------------------------------------------------------------------
# Parameter preparation: bf16 weights, packed f32 biases.
# ---------------------------------------------------------------------------
def prepare_actor_params(params):
    # TODO(synk): for dm/da not multiples of 128, pad w_out/b_out columns so the
    # gate/dz segments each start on a 128-lane boundary (free slices in-kernel).
    prepared = {
        "wm": params["w_mel"].astype(jnp.bfloat16),
        "wa": params["w_acc"].astype(jnp.bfloat16),
        "w0": params["w0"].astype(jnp.bfloat16),
        "w1": params["w1"].astype(jnp.bfloat16),
        "w2": params["w2"].astype(jnp.bfloat16),
        "w3": params["w3"].astype(jnp.bfloat16),
        "wo": params["w_out"].astype(jnp.bfloat16),
    }
    biases = [params["b_mel"], params["b_acc"], params["b0"], params["b1"],
              params["b2"], params["b3"], params["b_out"]]
    max_w = max(int(b.shape[-1]) for b in biases)
    max_w = ((max_w + 127) // 128) * 128            # lane-aligned packed width
    packed = jnp.zeros((8, max_w), jnp.float32)     # 8 rows (sublane-aligned)
    for i, b in enumerate(biases):
        packed = packed.at[i, : b.shape[-1]].set(b.reshape(-1).astype(jnp.float32))
    prepared["bias"] = packed
    return prepared


# ---------------------------------------------------------------------------
# Tile / grid selection.
# ---------------------------------------------------------------------------
def _default_num_cores():
    """Best-effort TensorCores-per-device: 2 on v7x / megacore parts, else 1."""
    try:
        kind = jax.devices()[0].device_kind.lower()
    except Exception:
        return 1
    return 2 if any(tag in kind for tag in ("v7", "v4", "v5p")) else 1


def _choose_tile(batch, num_cores, max_tile):
    """Return (tb, padded_batch).  tb is a multiple of 8; grid = padded/tb is a
    multiple of num_cores so all TensorCores get work on multi-core parts,
    while single-core parts collapse to grid=(1,) when the batch fits."""
    cdiv = lambda a, b: -(-a // b)
    up8 = lambda n: cdiv(n, 8) * 8
    steps = max(num_cores, cdiv(batch, max_tile))
    steps = cdiv(steps, num_cores) * num_cores
    tb = up8(cdiv(batch, steps))
    return tb, steps * tb


# ---------------------------------------------------------------------------
# Wrapper: (small) grid over the batch dimension, weights VMEM-resident.
# ---------------------------------------------------------------------------
def actor_forward(prepared, z_melody, z_accompany, c0=None, c1=None, c2=None,
                  c3=None, *, num_cores=None, max_tile=512):
    # c0..c3 accepted for signature parity; unused because c_input_dims == [].
    # TODO(synk): c_input_dims != [] branch (4 extra Linear(1, k) layers) not implemented.
    B, dm = z_melody.shape
    _, da = z_accompany.shape
    if num_cores is None:
        num_cores = _default_num_cores()

    tb, bp = _choose_tile(B, num_cores, max_tile)
    if bp != B:
        pad = bp - B
        zm_p = jnp.pad(z_melody, ((0, pad), (0, 0)))
        za_p = jnp.pad(z_accompany, ((0, pad), (0, 0)))
    else:
        zm_p, za_p = z_melody, z_accompany

    weight_names = ["wm", "wa", "w0", "w1", "w2", "w3", "wo", "bias"]
    weights = [prepared[k] for k in weight_names]

    def const_spec(arr):
        # Constant block index -> weight stays resident in VMEM across the grid.
        # (At scale, add pipeline_mode=pl.Buffered(1) / vmem_limit_bytes; the
        #  resident set here is ~1 MiB so the default budget is ample.)
        return pl.BlockSpec(arr.shape, lambda i: (0, 0))

    in_specs = (
        [pl.BlockSpec((tb, dm), lambda i: (i, 0)),
         pl.BlockSpec((tb, da), lambda i: (i, 0))]
        + [const_spec(w) for w in weights]
    )
    out_specs = pl.BlockSpec((tb, dm + da), lambda i: (i, 0))

    d_in = prepared["wm"].shape[1]
    d_mid = prepared["w1"].shape[1]
    d_out = prepared["wo"].shape[1]
    macs_per_row = (dm * d_in + da * d_in + 2 * d_in * d_mid
                    + 3 * d_mid * d_mid + d_mid * d_out)
    cost = pl.CostEstimate(
        flops=2 * bp * macs_per_row,
        transcendentals=bp * (dm + da),
        bytes_accessed=int(sum(w.size * w.dtype.itemsize for w in weights)
                           + bp * (dm + da) * 4 * 2),
    )

    out = pl.pallas_call(
        actor_kernel,
        out_shape=jax.ShapeDtypeStruct((bp, dm + da), jnp.float32),
        grid=(bp // tb,),
        in_specs=in_specs,
        out_specs=out_specs,
        compiler_params=pltpu.CompilerParams(
            dimension_semantics=("parallel",)),
        cost_estimate=cost,
    )(zm_p, za_p, *weights)

    return out[:B, :dm], out[:B, dm:dm + da]


# ---------------------------------------------------------------------------
# Deterministic parameter init (PyTorch-Linear-style uniform bounds).
# Master weights stored f32 as [in, out]; biases as [1, out].
# ---------------------------------------------------------------------------
def init_params(key, d_z_melody, d_z_accompany, d_input, d_mid, layer_num=4):
    def linear(key, fan_in, fan_out):
        kw, kb = jax.random.split(key)
        bound = 1.0 / jnp.sqrt(jnp.float32(fan_in))
        w = jax.random.uniform(kw, (fan_in, fan_out), jnp.float32, -bound, bound)
        b = jax.random.uniform(kb, (1, fan_out), jnp.float32, -bound, bound)
        return w, b

    keys = jax.random.split(key, 3 + layer_num)
    params = {}
    params["w_mel"], params["b_mel"] = linear(keys[0], d_z_melody, d_input)
    params["w_acc"], params["b_acc"] = linear(keys[1], d_z_accompany, d_input)
    for i in range(layer_num):
        w, b = linear(keys[2 + i], 2 * d_input if i == 0 else d_mid, d_mid)
        params[f"w{i}"] = w
        params[f"b{i}"] = b
    params["w_out"], params["b_out"] = linear(
        keys[2 + layer_num], d_mid, (d_z_melody + d_z_accompany) * 2
    )
    return params


# ---------------------------------------------------------------------------
# Pure-JAX reference mirroring the kernel's bf16-weight / f32-accumulate math.
# (Accepted accuracy trade vs. the f32 torch module.)
# ---------------------------------------------------------------------------
def actor_reference(params, z_melody, z_accompany):
    def mm(x, w):
        return jnp.dot(x.astype(jnp.bfloat16), w.astype(jnp.bfloat16),
                       preferred_element_type=jnp.float32)

    h_m = jnp.maximum(mm(z_melody, params["w_mel"]) + params["b_mel"], 0.0)
    h_a = jnp.maximum(mm(z_accompany, params["w_acc"]) + params["b_acc"], 0.0)
    x = jnp.maximum(mm(jnp.concatenate([h_m, h_a], axis=-1), params["w0"])
                    + params["b0"], 0.0)
    for i in range(1, 4):
        x = jnp.maximum(mm(x, params[f"w{i}"]) + params[f"b{i}"], 0.0)
    out = mm(x, params["w_out"]) + params["b_out"]

    dm = z_melody.shape[-1]
    da = z_accompany.shape[-1]
    gate_m = jax.nn.sigmoid(out[:, :dm])
    dz_m = out[:, dm:2 * dm]
    gate_a = jax.nn.sigmoid(out[:, 2 * dm:2 * dm + da])
    dz_a = out[:, 2 * dm + da:]
    new_m = (1.0 - gate_m) * z_melody + gate_m * dz_m
    new_a = (1.0 - gate_a) * z_accompany + gate_a * dz_a
    return new_m, new_a


if __name__ == "__main__":
    # Small shapes consistent with the module (scaled-down hidden dims).
    B = 256
    d_z_melody = 128
    d_z_accompany = 128
    d_input = 256
    d_mid = 256

    key = jax.random.PRNGKey(0)
    kp, kzm, kza = jax.random.split(key, 3)

    params = init_params(kp, d_z_melody, d_z_accompany, d_input, d_mid)
    prepared = prepare_actor_params(params)

    z_melody = jax.random.normal(kzm, (B, d_z_melody), jnp.float32)
    z_accompany = jax.random.normal(kza, (B, d_z_accompany), jnp.float32)
    # Unused condition inputs (c_input_dims == []).
    c0 = c1 = c2 = c3 = jnp.zeros((B, 1), jnp.float32)

    fwd = jax.jit(functools.partial(actor_forward, prepared))
    out_m, out_a = fwd(z_melody, z_accompany, c0, c1, c2, c3)
    jax.block_until_ready((out_m, out_a))

    ref_m, ref_a = actor_reference(params, z_melody, z_accompany)
    assert out_m.shape == (B, d_z_melody) and out_a.shape == (B, d_z_accompany)
    assert jnp.allclose(out_m, ref_m, atol=1e-2, rtol=1e-2)
    assert jnp.allclose(out_a, ref_a, atol=1e-2, rtol=1e-2)

    print("KERNEL_OK")
</pallas_src>

<mosaic_0001>
module attributes {stable_mosaic.version = 11 : i64} {
  func.func @actor_kernel(%arg0: i32, %arg1: memref<256x128xf32, #tpu.memory_space<vmem>>, %arg2: memref<256x128xf32, #tpu.memory_space<vmem>>, %arg3: memref<128x256xbf16, #tpu.memory_space<vmem>>, %arg4: memref<128x256xbf16, #tpu.memory_space<vmem>>, %arg5: memref<512x256xbf16, #tpu.memory_space<vmem>>, %arg6: memref<256x256xbf16, #tpu.memory_space<vmem>>, %arg7: memref<256x256xbf16, #tpu.memory_space<vmem>>, %arg8: memref<256x256xbf16, #tpu.memory_space<vmem>>, %arg9: memref<256x512xbf16, #tpu.memory_space<vmem>>, %arg10: memref<8x512xf32, #tpu.memory_space<vmem>>, %arg11: memref<256x256xf32, #tpu.memory_space<vmem>>) attributes {dimension_semantics = [#tpu.dimension_semantics<parallel>], iteration_bounds = array<i64: 1>, scalar_prefetch = 0 : i64, scratch_operands = 0 : i64, tpu.core_type = #tpu.core_type<tc>, window_params = [{transform_indices = @transform_0, window_bounds = array<i64: 256, 128>}, {transform_indices = @transform_1, window_bounds = array<i64: 256, 128>}, {pipeline_mode = #tpu.pipeline_mode<synchronous>, transform_indices = @transform_2, window_bounds = array<i64: 128, 256>}, {pipeline_mode = #tpu.pipeline_mode<synchronous>, transform_indices = @transform_3, window_bounds = array<i64: 128, 256>}, {pipeline_mode = #tpu.pipeline_mode<synchronous>, transform_indices = @transform_4, window_bounds = array<i64: 512, 256>}, {pipeline_mode = #tpu.pipeline_mode<synchronous>, transform_indices = @transform_5, window_bounds = array<i64: 256, 256>}, {pipeline_mode = #tpu.pipeline_mode<synchronous>, transform_indices = @transform_6, window_bounds = array<i64: 256, 256>}, {pipeline_mode = #tpu.pipeline_mode<synchronous>, transform_indices = @transform_7, window_bounds = array<i64: 256, 256>}, {pipeline_mode = #tpu.pipeline_mode<synchronous>, transform_indices = @transform_8, window_bounds = array<i64: 256, 512>}, {pipeline_mode = #tpu.pipeline_mode<synchronous>, transform_indices = @transform_9, window_bounds = array<i64: 8, 512>}, {transform_indices = @transform_10, window_bounds = array<i64: 256, 256>}]} {
    %c0 = arith.constant 0 : index
    %c0_0 = arith.constant 0 : index
    %0 = vector.load %arg1[%c0, %c0_0] : memref<256x128xf32, #tpu.memory_space<vmem>>, vector<256x128xf32>
    %c0_1 = arith.constant 0 : index
    %c0_2 = arith.constant 0 : index
    %1 = vector.load %arg2[%c0_1, %c0_2] : memref<256x128xf32, #tpu.memory_space<vmem>>, vector<256x128xf32>
    %c0_3 = arith.constant 0 : index
    %c0_4 = arith.constant 0 : index
    %2 = vector.load %arg10[%c0_3, %c0_4] : memref<8x512xf32, #tpu.memory_space<vmem>>, vector<1x256xf32>
    %c1 = arith.constant 1 : index
    %c0_5 = arith.constant 0 : index
    %3 = vector.load %arg10[%c1, %c0_5] : memref<8x512xf32, #tpu.memory_space<vmem>>, vector<1x256xf32>
    %c2 = arith.constant 2 : index
    %c0_6 = arith.constant 0 : index
    %4 = vector.load %arg10[%c2, %c0_6] : memref<8x512xf32, #tpu.memory_space<vmem>>, vector<1x256xf32>
    %c3 = arith.constant 3 : index
    %c0_7 = arith.constant 0 : index
    %5 = vector.load %arg10[%c3, %c0_7] : memref<8x512xf32, #tpu.memory_space<vmem>>, vector<1x256xf32>
    %c4 = arith.constant 4 : index
    %c0_8 = arith.constant 0 : index
    %6 = vector.load %arg10[%c4, %c0_8] : memref<8x512xf32, #tpu.memory_space<vmem>>, vector<1x256xf32>
    %c5 = arith.constant 5 : index
    %c0_9 = arith.constant 0 : index
    %7 = vector.load %arg10[%c5, %c0_9] : memref<8x512xf32, #tpu.memory_space<vmem>>, vector<1x256xf32>
    %c6 = arith.constant 6 : index
    %c0_10 = arith.constant 0 : index
    %8 = vector.load %arg10[%c6, %c0_10] : memref<8x512xf32, #tpu.memory_space<vmem>>, vector<1x512xf32>
    %9 = arith.truncf %0 : vector<256x128xf32> to vector<256x128xbf16>
    %c0_11 = arith.constant 0 : index
    %c0_12 = arith.constant 0 : index
    %10 = vector.load %arg3[%c0_11, %c0_12] : memref<128x256xbf16, #tpu.memory_space<vmem>>, vector<128x256xbf16>
    %cst = arith.constant dense<0.000000e+00> : vector<256x256xf32>
    %11 = tpu.matmul %9, %10, %cst {dimension_numbers = #tpu.dot_dimension_numbers<[1], [0], [0], [1], [0, 0, 1, 1], [], []>} : vector<256x128xbf16>, vector<128x256xbf16>, vector<256x256xf32> -> vector<256x256xf32>
    %12 = vector.broadcast %2 : vector<1x256xf32> to vector<256x256xf32>
    %13 = arith.addf %11, %12 : vector<256x256xf32>
    %cst_13 = arith.constant 0.000000e+00 : f32
    %14 = vector.broadcast %cst_13 : f32 to vector<256x256xf32>
    %15 = arith.maximumf %13, %14 : vector<256x256xf32>
    %16 = arith.truncf %1 : vector<256x128xf32> to vector<256x128xbf16>
    %c0_14 = arith.constant 0 : index
    %c0_15 = arith.constant 0 : index
    %17 = vector.load %arg4[%c0_14, %c0_15] : memref<128x256xbf16, #tpu.memory_space<vmem>>, vector<128x256xbf16>
    %cst_16 = arith.constant dense<0.000000e+00> : vector<256x256xf32>
    %18 = tpu.matmul %16, %17, %cst_16 {dimension_numbers = #tpu.dot_dimension_numbers<[1], [0], [0], [1], [0, 0, 1, 1], [], []>} : vector<256x128xbf16>, vector<128x256xbf16>, vector<256x256xf32> -> vector<256x256xf32>
    %19 = vector.broadcast %3 : vector<1x256xf32> to vector<256x256xf32>
    %20 = arith.addf %18, %19 : vector<256x256xf32>
    %cst_17 = arith.constant 0.000000e+00 : f32
    %21 = vector.broadcast %cst_17 : f32 to vector<256x256xf32>
    %22 = arith.maximumf %20, %21 : vector<256x256xf32>
    %23 = tpu.concatenate %15, %22 in 1 : vector<256x256xf32>, vector<256x256xf32> -> vector<256x512xf32>
    %24 = arith.truncf %23 : vector<256x512xf32> to vector<256x512xbf16>
    %c0_18 = arith.constant 0 : index
    %c0_19 = arith.constant 0 : index
    %25 = vector.load %arg5[%c0_18, %c0_19] : memref<512x256xbf16, #tpu.memory_space<vmem>>, vector<512x256xbf16>
    %cst_20 = arith.constant dense<0.000000e+00> : vector<256x256xf32>
    %26 = tpu.matmul %24, %25, %cst_20 {dimension_numbers = #tpu.dot_dimension_numbers<[1], [0], [0], [1], [0, 0, 1, 1], [], []>} : vector<256x512xbf16>, vector<512x256xbf16>, vector<256x256xf32> -> vector<256x256xf32>
    %27 = vector.broadcast %4 : vector<1x256xf32> to vector<256x256xf32>
    %28 = arith.addf %26, %27 : vector<256x256xf32>
    %cst_21 = arith.constant 0.000000e+00 : f32
    %29 = vector.broadcast %cst_21 : f32 to vector<256x256xf32>
    %30 = arith.maximumf %28, %29 : vector<256x256xf32>
    %31 = arith.truncf %30 : vector<256x256xf32> to vector<256x256xbf16>
    %c0_22 = arith.constant 0 : index
    %c0_23 = arith.constant 0 : index
    %32 = vector.load %arg6[%c0_22, %c0_23] : memref<256x256xbf16, #tpu.memory_space<vmem>>, vector<256x256xbf16>
    %cst_24 = arith.constant dense<0.000000e+00> : vector<256x256xf32>
    %33 = tpu.matmul %31, %32, %cst_24 {dimension_numbers = #tpu.dot_dimension_numbers<[1], [0], [0], [1], [0, 0, 1, 1], [], []>} : vector<256x256xbf16>, vector<256x256xbf16>, vector<256x256xf32> -> vector<256x256xf32>
    %34 = vector.broadcast %5 : vector<1x256xf32> to vector<256x256xf32>
    %35 = arith.addf %33, %34 : vector<256x256xf32>
    %cst_25 = arith.constant 0.000000e+00 : f32
    %36 = vector.broadcast %cst_25 : f32 to vector<256x256xf32>
    %37 = arith.maximumf %35, %36 : vector<256x256xf32>
    %38 = arith.truncf %37 : vector<256x256xf32> to vector<256x256xbf16>
    %c0_26 = arith.constant 0 : index
    %c0_27 = arith.constant 0 : index
    %39 = vector.load %arg7[%c0_26, %c0_27] : memref<256x256xbf16, #tpu.memory_space<vmem>>, vector<256x256xbf16>
    %cst_28 = arith.constant dense<0.000000e+00> : vector<256x256xf32>
    %40 = tpu.matmul %38, %39, %cst_28 {dimension_numbers = #tpu.dot_dimension_numbers<[1], [0], [0], [1], [0, 0, 1, 1], [], []>} : vector<256x256xbf16>, vector<256x256xbf16>, vector<256x256xf32> -> vector<256x256xf32>
    %41 = vector.broadcast %6 : vector<1x256xf32> to vector<256x256xf32>
    %42 = arith.addf %40, %41 : vector<256x256xf32>
    %cst_29 = arith.constant 0.000000e+00 : f32
    %43 = vector.broadcast %cst_29 : f32 to vector<256x256xf32>
    %44 = arith.maximumf %42, %43 : vector<256x256xf32>
    %45 = arith.truncf %44 : vector<256x256xf32> to vector<256x256xbf16>
    %c0_30 = arith.constant 0 : index
    %c0_31 = arith.constant 0 : index
    %46 = vector.load %arg8[%c0_30, %c0_31] : memref<256x256xbf16, #tpu.memory_space<vmem>>, vector<256x256xbf16>
    %cst_32 = arith.constant dense<0.000000e+00> : vector<256x256xf32>
    %47 = tpu.matmul %45, %46, %cst_32 {dimension_numbers = #tpu.dot_dimension_numbers<[1], [0], [0], [1], [0, 0, 1, 1], [], []>} : vector<256x256xbf16>, vector<256x256xbf16>, vector<256x256xf32> -> vector<256x256xf32>
    %48 = vector.broadcast %7 : vector<1x256xf32> to vector<256x256xf32>
    %49 = arith.addf %47, %48 : vector<256x256xf32>
    %cst_33 = arith.constant 0.000000e+00 : f32
    %50 = vector.broadcast %cst_33 : f32 to vector<256x256xf32>
    %51 = arith.maximumf %49, %50 : vector<256x256xf32>
    %52 = arith.truncf %51 : vector<256x256xf32> to vector<256x256xbf16>
    %c0_34 = arith.constant 0 : index
    %c0_35 = arith.constant 0 : index
    %53 = vector.load %arg9[%c0_34, %c0_35] : memref<256x512xbf16, #tpu.memory_space<vmem>>, vector<256x512xbf16>
    %cst_36 = arith.constant dense<0.000000e+00> : vector<256x512xf32>
    %54 = tpu.matmul %52, %53, %cst_36 {dimension_numbers = #tpu.dot_dimension_numbers<[1], [0], [0], [1], [0, 0, 1, 1], [], []>} : vector<256x256xbf16>, vector<256x512xbf16>, vector<256x512xf32> -> vector<256x512xf32>
    %55 = vector.broadcast %8 : vector<1x512xf32> to vector<256x512xf32>
    %56 = arith.addf %54, %55 : vector<256x512xf32>
    %57 = vector.extract_strided_slice %56 {offsets = [0, 0], sizes = [256, 128], strides = [1, 1]} : vector<256x512xf32> to vector<256x128xf32>
    %58 = arith.negf %57 : vector<256x128xf32>
    %59 = math.exp %58 : vector<256x128xf32>
    %cst_37 = arith.constant 1.000000e+00 : f32
    %60 = vector.broadcast %cst_37 : f32 to vector<256x128xf32>
    %61 = arith.addf %60, %59 : vector<256x128xf32>
    %62 = arith.divf %60, %61 : vector<256x128xf32>
    %63 = vector.extract_strided_slice %56 {offsets = [0, 128], sizes = [256, 128], strides = [1, 1]} : vector<256x512xf32> to vector<256x128xf32>
    %64 = vector.extract_strided_slice %56 {offsets = [0, 256], sizes = [256, 128], strides = [1, 1]} : vector<256x512xf32> to vector<256x128xf32>
    %65 = arith.negf %64 : vector<256x128xf32>
    %66 = math.exp %65 : vector<256x128xf32>
    %cst_38 = arith.constant 1.000000e+00 : f32
    %67 = vector.broadcast %cst_38 : f32 to vector<256x128xf32>
    %68 = arith.addf %67, %66 : vector<256x128xf32>
    %69 = arith.divf %67, %68 : vector<256x128xf32>
    %70 = vector.extract_strided_slice %56 {offsets = [0, 384], sizes = [256, 128], strides = [1, 1]} : vector<256x512xf32> to vector<256x128xf32>
    %cst_39 = arith.constant 1.000000e+00 : f32
    %71 = vector.broadcast %cst_39 : f32 to vector<256x128xf32>
    %72 = arith.subf %71, %62 : vector<256x128xf32>
    %73 = arith.mulf %72, %0 : vector<256x128xf32>
    %74 = arith.mulf %62, %63 : vector<256x128xf32>
    %75 = arith.addf %73, %74 : vector<256x128xf32>
    %cst_40 = arith.constant 1.000000e+00 : f32
    %76 = vector.broadcast %cst_40 : f32 to vector<256x128xf32>
    %77 = arith.subf %76, %69 : vector<256x128xf32>
    %78 = arith.mulf %77, %1 : vector<256x128xf32>
    %79 = arith.mulf %69, %70 : vector<256x128xf32>
    %80 = arith.addf %78, %79 : vector<256x128xf32>
    %81 = tpu.concatenate %75, %80 in 1 : vector<256x128xf32>, vector<256x128xf32> -> vector<256x256xf32>
    %c0_41 = arith.constant 0 : index
    %c0_42 = arith.constant 0 : index
    %82 = vector.load %arg11[%c0_41, %c0_42] : memref<256x256xf32, #tpu.memory_space<vmem>>, vector<256x256xf32>
    tpu.vector_store %arg11[%c0_41, %c0_42], %81 {strides = array<i32>} : memref<256x256xf32, #tpu.memory_space<vmem>>, vector<256x256xf32>,
    return
  }
  func.func @transform_0(%arg0: i32) -> (i32, i32) {
    %c0_i32 = arith.constant 0 : i32
    %c0_i32_0 = arith.constant 0 : i32
    return %arg0, %c0_i32 : i32, i32
  }
  func.func @transform_1(%arg0: i32) -> (i32, i32) {
    %c0_i32 = arith.constant 0 : i32
    %c0_i32_0 = arith.constant 0 : i32
    return %arg0, %c0_i32 : i32, i32
  }
  func.func @transform_2(%arg0: i32) -> (i32, i32) {
    %c0_i32 = arith.constant 0 : i32
    %c0_i32_0 = arith.constant 0 : i32
    %c0_i32_1 = arith.constant 0 : i32
    return %c0_i32, %c0_i32_0 : i32, i32
  }
  func.func @transform_3(%arg0: i32) -> (i32, i32) {
    %c0_i32 = arith.constant 0 : i32
    %c0_i32_0 = arith.constant 0 : i32
    %c0_i32_1 = arith.constant 0 : i32
    return %c0_i32, %c0_i32_0 : i32, i32
  }
  func.func @transform_4(%arg0: i32) -> (i32, i32) {
    %c0_i32 = arith.constant 0 : i32
    %c0_i32_0 = arith.constant 0 : i32
    %c0_i32_1 = arith.constant 0 : i32
    return %c0_i32, %c0_i32_0 : i32, i32
  }
  func.func @transform_5(%arg0: i32) -> (i32, i32) {
    %c0_i32 = arith.constant 0 : i32
    %c0_i32_0 = arith.constant 0 : i32
    %c0_i32_1 = arith.constant 0 : i32
    return %c0_i32, %c0_i32_0 : i32, i32
  }
  func.func @transform_6(%arg0: i32) -> (i32, i32) {
    %c0_i32 = arith.constant 0 : i32
    %c0_i32_0 = arith.constant 0 : i32
    %c0_i32_1 = arith.constant 0 : i32
    return %c0_i32, %c0_i32_0 : i32, i32
  }
  func.func @transform_7(%arg0: i32) -> (i32, i32) {
    %c0_i32 = arith.constant 0 : i32
    %c0_i32_0 = arith.constant 0 : i32
    %c0_i32_1 = arith.constant 0 : i32
    return %c0_i32, %c0_i32_0 : i32, i32
  }
  func.func @transform_8(%arg0: i32) -> (i32, i32) {
    %c0_i32 = arith.constant 0 : i32
    %c0_i32_0 = arith.constant 0 : i32
    %c0_i32_1 = arith.constant 0 : i32
    return %c0_i32, %c0_i32_0 : i32, i32
  }
  func.func @transform_9(%arg0: i32) -> (i32, i32) {
    %c0_i32 = arith.constant 0 : i32
    %c0_i32_0 = arith.constant 0 : i32
    %c0_i32_1 = arith.constant 0 : i32
    return %c0_i32, %c0_i32_0 : i32, i32
  }
  func.func @transform_10(%arg0: i32) -> (i32, i32) {
    %c0_i32 = arith.constant 0 : i32
    %c0_i32_0 = arith.constant 0 : i32
    return %arg0, %c0_i32 : i32, i32
  }
}

</mosaic_0001>

<llo_original>
// kernel: actor_forward.1
$region0: #{actor_forward.1}
  #allocation0 [shape = 'u32[]', space=smem, size = 0x4, offset = 0x4, fixed_abs, tag = 'smem constant byte address 0x4 - core index']
  #allocation1 [shape = 'u32[72,128]{1,0:T(1,128)}', space=vmem, size = 0x9000, scoped, tag = 'internal scratch']
  %s0 = inlined_call_operand.hbm [shape: f32[256,128], index: 0, kind: input, shape index: {}]
  %s1 = inlined_call_operand.hbm [shape: f32[256,128], index: 1, kind: input, shape index: {}]
  %s2 = inlined_call_operand.hbm [shape: bf16[128,256], index: 2, kind: input, shape index: {}]
  %s3 = inlined_call_operand.hbm [shape: bf16[128,256], index: 3, kind: input, shape index: {}]
  %s4 = inlined_call_operand.hbm [shape: bf16[512,256], index: 4, kind: input, shape index: {}]
  %s5 = inlined_call_operand.hbm [shape: bf16[256,256], index: 5, kind: input, shape index: {}]
  %s6 = inlined_call_operand.hbm [shape: bf16[256,256], index: 6, kind: input, shape index: {}]
  %s7 = inlined_call_operand.hbm [shape: bf16[256,256], index: 7, kind: input, shape index: {}]
  %s8 = inlined_call_operand.hbm [shape: bf16[256,512], index: 8, kind: input, shape index: {}]
  %s9 = inlined_call_operand.hbm [shape: f32[8,512], index: 9, kind: input, shape index: {}]
  %s10 = inlined_call_operand.vmem [shape: f32[256,256], index: 10, kind: output, shape index: {}]
  %s11 = sld [smem:[#allocation0]]
  $region90: #{actor_forward.1} parent=0
    _
  %s13 = ssub.s32 1, %s11
  %s14 = scalar_select 0, %s13, %s11
  $region1: #{actor_forward.1} parent=0
    #allocation2 [shape = 'u8[131072]{0}', space=vmem, size = 0x20000, scoped, tag = 'input window, operand 0, single buffered']
    #allocation3 [shape = 's32[1]{0}', space=sflag, size = 0x4, scoped, tag = 'scoped memory for actor_forward.1']
    #allocation4 [shape = 'u8[131072]{0}', space=vmem, size = 0x20000, scoped, tag = 'input window, operand 1, single buffered']
    #allocation5 [shape = 's32[1]{0}', space=sflag, size = 0x4, scoped, tag = 'scoped memory for actor_forward.1']
    #allocation6 [shape = 'u8[65536]{0}', space=vmem, size = 0x10000, scoped, tag = 'input window, operand 2, single buffered']
    #allocation7 [shape = 'u8[65536]{0}', space=vmem, size = 0x10000, scoped, tag = 'input window, operand 3, single buffered']
    #allocation8 [shape = 's32[1]{0}', space=sflag, size = 0x4, scoped, tag = 'scoped memory for actor_forward.1']
    #allocation9 [shape = 'u8[262144]{0}', space=vmem, size = 0x40000, scoped, tag = 'input window, operand 4, single buffered']
    #allocation10 [shape = 'u8[131072]{0}', space=vmem, size = 0x20000, scoped, tag = 'input window, operand 5, single buffered']
    #allocation11 [shape = 's32[1]{0}', space=sflag, size = 0x4, scoped, tag = 'scoped memory for actor_forward.1']
    #allocation12 [shape = 'u8[131072]{0}', space=vmem, size = 0x20000, scoped, tag = 'input window, operand 6, single buffered']
    #allocation13 [shape = 'u8[131072]{0}', space=vmem, size = 0x20000, scoped, tag = 'input window, operand 7, single buffered']
    #allocation14 [shape = 's32[1]{0}', space=sflag, size = 0x4, scoped, tag = 'scoped memory for actor_forward.1']
    #allocation15 [shape = 'u8[262144]{0}', space=vmem, size = 0x40000, scoped, tag = 'input window, operand 8, single buffered']
    #allocation16 [shape = 'u8[16384]{0}', space=vmem, size = 0x4000, scoped, tag = 'input window, operand 9, single buffered']
    #allocation17 [shape = 's32[1]{0}', space=sflag, size = 0x4, scoped, tag = 'scoped memory for actor_forward.1']
    %15 = vsyncpa [#allocation3], 0
    %16 = vsyncpa [#allocation5], 0
    %17 = vsyncpa [#allocation8], 0
    %18 = vsyncpa [#allocation11], 0
    %19 = vsyncpa [#allocation14], 0
    %20 = vsyncpa [#allocation17], 0
    // Predicated region
    $region2: #{actor_forward.1} parent=1 // pred_check
      _
    $region3: #{actor_forward.1} parent=1 // pred_check_branch
      %22 = sbr.rel (0) target = $region5
    $region4: #{actor_forward.1} parent=1 // pred_region
      %24 = vsyncadd [#allocation3], 0
      %s25 = sshll.u32 %s0, 4
      %s26 = int_to_ptr.hbm [resolvable:$true] %s25
      %s27 = sshll.u32 [#allocation2], 4
      %s28 = int_to_ptr.vmem [resolvable:$true] %s27
      %33 = dma.hbm_to_vmem [thread:$0]  %s26, 4096, %s28, [#allocation3], 128, 128, 8
    $region5: #{actor_forward.1} parent=1 // pred_fallthru
      _
    // Predicated region
    $region6: #{actor_forward.1} parent=1 // pred_check
      _
    $region7: #{actor_forward.1} parent=1 // pred_check_branch
      %35 = sbr.rel (0) target = $region9
    $region8: #{actor_forward.1} parent=1 // pred_region
      %37 = vsyncadd [#allocation5], 0
      %s38 = sshll.u32 %s1, 4
      %s39 = int_to_ptr.hbm [resolvable:$true] %s38
      %s40 = sshll.u32 [#allocation4], 4
      %s41 = int_to_ptr.vmem [resolvable:$true] %s40
      %46 = dma.hbm_to_vmem [thread:$0]  %s39, 4096, %s41, [#allocation5], 128, 128, 8
    $region9: #{actor_forward.1} parent=1 // pred_fallthru
      _
    // Predicated region
    $region10: #{actor_forward.1} parent=1 // pred_check
      _
    $region11: #{actor_forward.1} parent=1 // pred_check_branch
      %48 = sbr.rel (0) target = $region13
    $region12: #{actor_forward.1} parent=1 // pred_region
      %50 = vsyncadd [#allocation5], 0
      %s51 = sshll.u32 %s2, 4
      %s52 = int_to_ptr.hbm [resolvable:$true] %s51
      %s53 = sshll.u32 [#allocation6], 4
      %s54 = int_to_ptr.vmem [resolvable:$true] %s53
      %59 = dma.hbm_to_vmem [thread:$0]  %s52, 2048, %s54, [#allocation5], 128, 128, 8
    $region13: #{actor_forward.1} parent=1 // pred_fallthru
      _
    // Predicated region
    $region14: #{actor_forward.1} parent=1 // pred_check
      _
    $region15: #{actor_forward.1} parent=1 // pred_check_branch
      %61 = sbr.rel (0) target = $region17
    $region16: #{actor_forward.1} parent=1 // pred_region
      %63 = vsyncadd [#allocation8], 0
      %s64 = sshll.u32 %s3, 4
      %s65 = int_to_ptr.hbm [resolvable:$true] %s64
      %s66 = sshll.u32 [#allocation7], 4
      %s67 = int_to_ptr.vmem [resolvable:$true] %s66
      %72 = dma.hbm_to_vmem [thread:$0]  %s65, 2048, %s67, [#allocation8], 128, 128, 8
    $region17: #{actor_forward.1} parent=1 // pred_fallthru
      _
    // Predicated region
    $region18: #{actor_forward.1} parent=1 // pred_check
      _
    $region19: #{actor_forward.1} parent=1 // pred_check_branch
      %74 = sbr.rel (0) target = $region21
    $region20: #{actor_forward.1} parent=1 // pred_region
      %76 = vsyncadd [#allocation8], 0
      %s77 = sshll.u32 %s4, 4
      %s78 = int_to_ptr.hbm [resolvable:$true] %s77
      %s79 = sshll.u32 [#allocation9], 4
      %s80 = int_to_ptr.vmem [resolvable:$true] %s79
      %85 = dma.hbm_to_vmem [thread:$0]  %s78, 8192, %s80, [#allocation8], 128, 128, 8
    $region21: #{actor_forward.1} parent=1 // pred_fallthru
      _
    // Predicated region
    $region22: #{actor_forward.1} parent=1 // pred_check
      _
    $region23: #{actor_forward.1} parent=1 // pred_check_branch
      %87 = sbr.rel (0) target = $region25
    $region24: #{actor_forward.1} parent=1 // pred_region
      %89 = vsyncadd [#allocation11], 0
      %s90 = sshll.u32 %s5, 4
      %s91 = int_to_ptr.hbm [resolvable:$true] %s90
      %s92 = sshll.u32 [#allocation10], 4
      %s93 = int_to_ptr.vmem [resolvable:$true] %s92
      %98 = dma.hbm_to_vmem [thread:$0]  %s91, 4096, %s93, [#allocation11], 128, 128, 8
    $region25: #{actor_forward.1} parent=1 // pred_fallthru
      _
    // Predicated region
    $region26: #{actor_forward.1} parent=1 // pred_check
      _
    $region27: #{actor_forward.1} parent=1 // pred_check_branch
      %100 = sbr.rel (0) target = $region29
    $region28: #{actor_forward.1} parent=1 // pred_region
      %102 = vsyncadd [#allocation11], 0
      %s103 = sshll.u32 %s6, 4
      %s104 = int_to_ptr.hbm [resolvable:$true] %s103
      %s105 = sshll.u32 [#allocation12], 4
      %s106 = int_to_ptr.vmem [resolvable:$true] %s105
      %111 = dma.hbm_to_vmem [thread:$0]  %s104, 4096, %s106, [#allocation11], 128, 128, 8
    $region29: #{actor_forward.1} parent=1 // pred_fallthru
      _
    // Predicated region
    $region30: #{actor_forward.1} parent=1 // pred_check
      _
    $region31: #{actor_forward.1} parent=1 // pred_check_branch
      %113 = sbr.rel (0) target = $region33
    $region32: #{actor_forward.1} parent=1 // pred_region
      %115 = vsyncadd [#allocation14], 0
      %s116 = sshll.u32 %s7, 4
      %s117 = int_to_ptr.hbm [resolvable:$true] %s116
      %s118 = sshll.u32 [#allocation13], 4
      %s119 = int_to_ptr.vmem [resolvable:$true] %s118
      %124 = dma.hbm_to_vmem [thread:$0]  %s117, 4096, %s119, [#allocation14], 128, 128, 8
    $region33: #{actor_forward.1} parent=1 // pred_fallthru
      _
    // Predicated region
    $region34: #{actor_forward.1} parent=1 // pred_check
      _
    $region35: #{actor_forward.1} parent=1 // pred_check_branch
      %126 = sbr.rel (0) target = $region37
    $region36: #{actor_forward.1} parent=1 // pred_region
      %128 = vsyncadd [#allocation14], 0
      %s129 = sshll.u32 %s8, 4
      %s130 = int_to_ptr.hbm [resolvable:$true] %s129
      %s131 = sshll.u32 [#allocation15], 4
      %s132 = int_to_ptr.vmem [resolvable:$true] %s131
      %137 = dma.hbm_to_vmem [thread:$0]  %s130, 8192, %s132, [#allocation14], 256, 256, 16
    $region37: #{actor_forward.1} parent=1 // pred_fallthru
      _
    // Predicated region
    $region38: #{actor_forward.1} parent=1 // pred_check
      _
    $region39: #{actor_forward.1} parent=1 // pred_check_branch
      %139 = sbr.rel (0) target = $region41
    $region40: #{actor_forward.1} parent=1 // pred_region
      %141 = vsyncadd [#allocation17], 0
      %s143 = sshll.u32 %s9, 4
      %s144 = int_to_ptr.hbm [resolvable:$true] %s143
      %s145 = sshll.u32 [#allocation16], 4
      %s146 = int_to_ptr.vmem [resolvable:$true] %s145
      %148 = dma.hbm_to_vmem [thread:$0]  %s144, 512, %s146, [#allocation17]
    $region41: #{actor_forward.1} parent=1 // pred_fallthru
      _
    // Predicated region
    $region42: #{actor_forward.1} parent=1 // pred_check
      _
    $region43: #{actor_forward.1} parent=1 // pred_check_branch
      %150 = sbr.rel (0) target = $region45
    $region44: #{actor_forward.1} parent=1 // pred_region
      %152 = dma.done [#allocation3], 4096
    $region45: #{actor_forward.1} parent=1 // pred_fallthru
      _
    // Predicated region
    $region46: #{actor_forward.1} parent=1 // pred_check
      _
    $region47: #{actor_forward.1} parent=1 // pred_check_branch
      %154 = sbr.rel (0) target = $region49
    $region48: #{actor_forward.1} parent=1 // pred_region
      %156 = dma.done [#allocation5], 4096
    $region49: #{actor_forward.1} parent=1 // pred_fallthru
      _
    // Predicated region
    $region50: #{actor_forward.1} parent=1 // pred_check
      _
    $region51: #{actor_forward.1} parent=1 // pred_check_branch
      %158 = sbr.rel (0) target = $region53
    $region52: #{actor_forward.1} parent=1 // pred_region
      %160 = dma.done [#allocation5], 2048
    $region53: #{actor_forward.1} parent=1 // pred_fallthru
      _
    // Predicated region
    $region54: #{actor_forward.1} parent=1 // pred_check
      _
    $region55: #{actor_forward.1} parent=1 // pred_check_branch
      %162 = sbr.rel (0) target = $region57
    $region56: #{actor_forward.1} parent=1 // pred_region
      %164 = dma.done [#allocation8], 2048
    $region57: #{actor_forward.1} parent=1 // pred_fallthru
      _
    // Predicated region
    $region58: #{actor_forward.1} parent=1 // pred_check
      _
    $region59: #{actor_forward.1} parent=1 // pred_check_branch
      %166 = sbr.rel (0) target = $region61
    $region60: #{actor_forward.1} parent=1 // pred_region
      %168 = dma.done [#allocation8], 8192
    $region61: #{actor_forward.1} parent=1 // pred_fallthru
      _
    // Predicated region
    $region62: #{actor_forward.1} parent=1 // pred_check
      _
    $region63: #{actor_forward.1} parent=1 // pred_check_branch
      %170 = sbr.rel (0) target = $region65
    $region64: #{actor_forward.1} parent=1 // pred_region
      %172 = dma.done [#allocation11], 4096
    $region65: #{actor_forward.1} parent=1 // pred_fallthru
      _
    // Predicated region
    $region66: #{actor_forward.1} parent=1 // pred_check
      _
    $region67: #{actor_forward.1} parent=1 // pred_check_branch
      %174 = sbr.rel (0) target = $region69
    $region68: #{actor_forward.1} parent=1 // pred_region
      %176 = dma.done [#allocation11], 4096
    $region69: #{actor_forward.1} parent=1 // pred_fallthru
      _
    // Predicated region
    $region70: #{actor_forward.1} parent=1 // pred_check
      _
    $region71: #{actor_forward.1} parent=1 // pred_check_branch
      %178 = sbr.rel (0) target = $region73
    $region72: #{actor_forward.1} parent=1 // pred_region
      %180 = dma.done [#allocation14], 4096
    $region73: #{actor_forward.1} parent=1 // pred_fallthru
      _
    // Predicated region
    $region74: #{actor_forward.1} parent=1 // pred_check
      _
    $region75: #{actor_forward.1} parent=1 // pred_check_branch
      %182 = sbr.rel (0) target = $region77
    $region76: #{actor_forward.1} parent=1 // pred_region
      %184 = dma.done [#allocation14], 8192
    $region77: #{actor_forward.1} parent=1 // pred_fallthru
      _
    // Predicated region
    $region78: #{actor_forward.1} parent=1 // pred_check
      _
    $region79: #{actor_forward.1} parent=1 // pred_check_branch
      %186 = sbr.rel (0) target = $region81
    $region80: #{actor_forward.1} parent=1 // pred_region
      %188 = dma.done [#allocation17], 512
    $region81: #{actor_forward.1} parent=1 // pred_fallthru
      _
    %v189 = vld [vmem:[#allocation2] sm:$0xff]
    %v190 = vld [vmem:[#allocation2 + $0x8] sm:$0xff]
    %v191 = vld [vmem:[#allocation2 + $0x10] sm:$0xff]
    %v192 = vld [vmem:[#allocation2 + $0x18] sm:$0xff]
    %v193 = vld [vmem:[#allocation2 + $0x20] sm:$0xff]
    %v194 = vld [vmem:[#allocation2 + $0x28] sm:$0xff]
    %v195 = vld [vmem:[#allocation2 + $0x30] sm:$0xff]
    %v196 = vld [vmem:[#allocation2 + $0x38] sm:$0xff]
    %v197 = vld [vmem:[#allocation2 + $0x40] sm:$0xff]
    %v198 = vld [vmem:[#allocation2 + $0x48] sm:$0xff]
    %v199 = vld [vmem:[#allocation2 + $0x50] sm:$0xff]
    %v200 = vld [vmem:[#allocation2 + $0x58] sm:$0xff]
    %v201 = vld [vmem:[#allocation2 + $0x60] sm:$0xff]
    %v202 = vld [vmem:[#allocation2 + $0x68] sm:$0xff]
    %v203 = vld [vmem:[#allocation2 + $0x70] sm:$0xff]
    %v204 = vld [vmem:[#allocation2 + $0x78] sm:$0xff]
    %v205 = vld [vmem:[#allocation2 + $0x80] sm:$0xff]
    %v206 = vld [vmem:[#allocation2 + $0x88] sm:$0xff]
    %v207 = vld [vmem:[#allocation2 + $0x90] sm:$0xff]
    %v208 = vld [vmem:[#allocation2 + $0x98] sm:$0xff]
    %v209 = vld [vmem:[#allocation2 + $0xa0] sm:$0xff]
    %v210 = vld [vmem:[#allocation2 + $0xa8] sm:$0xff]
    %v211 = vld [vmem:[#allocation2 + $0xb0] sm:$0xff]
    %v212 = vld [vmem:[#allocation2 + $0xb8] sm:$0xff]
    %v213 = vld [vmem:[#allocation2 + $0xc0] sm:$0xff]
    %v214 = vld [vmem:[#allocation2 + $0xc8] sm:$0xff]
    %v215 = vld [vmem:[#allocation2 + $0xd0] sm:$0xff]
    %v216 = vld [vmem:[#allocation2 + $0xd8] sm:$0xff]
    %v217 = vld [vmem:[#allocation2 + $0xe0] sm:$0xff]
    %v218 = vld [vmem:[#allocation2 + $0xe8] sm:$0xff]
    %v219 = vld [vmem:[#allocation2 + $0xf0] sm:$0xff]
    %v220 = vld [vmem:[#allocation2 + $0xf8] sm:$0xff]
    %v221 = vld [vmem:[#allocation4] sm:$0xff]
    %v222 = vld [vmem:[#allocation4 + $0x8] sm:$0xff]
    %v223 = vld [vmem:[#allocation4 + $0x10] sm:$0xff]
    %v224 = vld [vmem:[#allocation4 + $0x18] sm:$0xff]
    %v225 = vld [vmem:[#allocation4 + $0x20] sm:$0xff]
    %v226 = vld [vmem:[#allocation4 + $0x28] sm:$0xff]
    %v227 = vld [vmem:[#allocation4 + $0x30] sm:$0xff]
    %v228 = vld [vmem:[#allocation4 + $0x38] sm:$0xff]
    %v229 = vld [vmem:[#allocation4 + $0x40] sm:$0xff]
    %v230 = vld [vmem:[#allocation4 + $0x48] sm:$0xff]
    %v231 = vld [vmem:[#allocation4 + $0x50] sm:$0xff]
    %v232 = vld [vmem:[#allocation4 + $0x58] sm:$0xff]
    %v233 = vld [vmem:[#allocation4 + $0x60] sm:$0xff]
    %v234 = vld [vmem:[#allocation4 + $0x68] sm:$0xff]
    %v235 = vld [vmem:[#allocation4 + $0x70] sm:$0xff]
    %v236 = vld [vmem:[#allocation4 + $0x78] sm:$0xff]
    %v237 = vld [vmem:[#allocation4 + $0x80] sm:$0xff]
    %v238 = vld [vmem:[#allocation4 + $0x88] sm:$0xff]
    %v239 = vld [vmem:[#allocation4 + $0x90] sm:$0xff]
    %v240 = vld [vmem:[#allocation4 + $0x98] sm:$0xff]
    %v241 = vld [vmem:[#allocation4 + $0xa0] sm:$0xff]
    %v242 = vld [vmem:[#allocation4 + $0xa8] sm:$0xff]
    %v243 = vld [vmem:[#allocation4 + $0xb0] sm:$0xff]
    %v244 = vld [vmem:[#allocation4 + $0xb8] sm:$0xff]
    %v245 = vld [vmem:[#allocation4 + $0xc0] sm:$0xff]
    %v246 = vld [vmem:[#allocation4 + $0xc8] sm:$0xff]
    %v247 = vld [vmem:[#allocation4 + $0xd0] sm:$0xff]
    %v248 = vld [vmem:[#allocation4 + $0xd8] sm:$0xff]
    %v249 = vld [vmem:[#allocation4 + $0xe0] sm:$0xff]
    %v250 = vld [vmem:[#allocation4 + $0xe8] sm:$0xff]
    %v251 = vld [vmem:[#allocation4 + $0xf0] sm:$0xff]
    %v252 = vld [vmem:[#allocation4 + $0xf8] sm:$0xff]
    %v253 = vld [vmem:[#allocation16] ss:$8 sm:$0x3]
    %s254 = scalar_lea.vmem [#allocation16], 1
    %v255 = vld [vmem:[%s254] ss:$8 sm:$0x3]
    %s256 = scalar_lea.vmem [#allocation16], 2
    %v257 = vld [vmem:[%s256] ss:$8 sm:$0x3]
    %s258 = scalar_lea.vmem [#allocation16], 3
    %v259 = vld [vmem:[%s258] ss:$8 sm:$0x3]
    %s260 = scalar_lea.vmem [#allocation16], 4
    %v261 = vld [vmem:[%s260] ss:$8 sm:$0x3]
    %s262 = scalar_lea.vmem [#allocation16], 5
    %v263 = vld [vmem:[%s262] ss:$8 sm:$0x3]
    %s264 = scalar_lea.vmem [#allocation16], 6
    %v265 = vld [vmem:[%s264] ss:$8 sm:$0xf]
    %v266 = vpack.c.bf16 %v190, %v189
    %v267 = vpack.c.bf16 %v192, %v191
    %v268 = vpack.c.bf16 %v194, %v193
    %v269 = vpack.c.bf16 %v196, %v195
    %v270 = vpack.c.bf16 %v198, %v197
    %v271 = vpack.c.bf16 %v200, %v199
    %v272 = vpack.c.bf16 %v202, %v201
    %v273 = vpack.c.bf16 %v204, %v203
    %v274 = vpack.c.bf16 %v206, %v205
    %v275 = vpack.c.bf16 %v208, %v207
    %v276 = vpack.c.bf16 %v210, %v209
    %v277 = vpack.c.bf16 %v212, %v211
    %v278 = vpack.c.bf16 %v214, %v213
    %v279 = vpack.c.bf16 %v216, %v215
    %v280 = vpack.c.bf16 %v218, %v217
    %v281 = vpack.c.bf16 %v220, %v219
    %v282 = vld [vmem:[#allocation6] sm:$0xff]
    %v283 = vld [vmem:[#allocation6 + $0x8] sm:$0xff]
    %v284 = vld [vmem:[#allocation6 + $0x10] sm:$0xff]
    %v285 = vld [vmem:[#allocation6 + $0x18] sm:$0xff]
    %v286 = vld [vmem:[#allocation6 + $0x20] sm:$0xff]
    %v287 = vld [vmem:[#allocation6 + $0x28] sm:$0xff]
    %v288 = vld [vmem:[#allocation6 + $0x30] sm:$0xff]
    %v289 = vld [vmem:[#allocation6 + $0x38] sm:$0xff]
    %v290 = vld [vmem:[#allocation6 + $0x40] sm:$0xff]
    %v291 = vld [vmem:[#allocation6 + $0x48] sm:$0xff]
    %v292 = vld [vmem:[#allocation6 + $0x50] sm:$0xff]
    %v293 = vld [vmem:[#allocation6 + $0x58] sm:$0xff]
    %v294 = vld [vmem:[#allocation6 + $0x60] sm:$0xff]
    %v295 = vld [vmem:[#allocation6 + $0x68] sm:$0xff]
    %v296 = vld [vmem:[#allocation6 + $0x70] sm:$0xff]
    %v297 = vld [vmem:[#allocation6 + $0x78] sm:$0xff]
    %v299 = vperm.slane %v253, 0
    %v300 = vperm.slane %v253, 1
    %v319 = vunpack.c.l.b16 %v282
    %v320 = vunpack.c.h.b16 %v282
    %v321 = vunpack.c.l.b16 %v283
    %v322 = vunpack.c.h.b16 %v283
    %v323 = vunpack.c.l.b16 %v284
    %v324 = vunpack.c.h.b16 %v284
    %v325 = vunpack.c.l.b16 %v285
    %v326 = vunpack.c.h.b16 %v285
    %v327 = vunpack.c.l.b16 %v286
    %v328 = vunpack.c.h.b16 %v286
    %v329 = vunpack.c.l.b16 %v287
    %v330 = vunpack.c.h.b16 %v287
    %v331 = vunpack.c.l.b16 %v288
    %v332 = vunpack.c.h.b16 %v288
    %v333 = vunpack.c.l.b16 %v289
    %v334 = vunpack.c.h.b16 %v289
    %v335 = vunpack.c.l.b16 %v290
    %v336 = vunpack.c.h.b16 %v290
    %v337 = vunpack.c.l.b16 %v291
    %v338 = vunpack.c.h.b16 %v291
    %v339 = vunpack.c.l.b16 %v292
    %v340 = vunpack.c.h.b16 %v292
    %v341 = vunpack.c.l.b16 %v293
    %v342 = vunpack.c.h.b16 %v293
    %v343 = vunpack.c.l.b16 %v294
    %v344 = vunpack.c.h.b16 %v294
    %v345 = vunpack.c.l.b16 %v295
    %v346 = vunpack.c.h.b16 %v295
    %v347 = vunpack.c.l.b16 %v296
    %v348 = vunpack.c.h.b16 %v296
    %v349 = vunpack.c.l.b16 %v297
    %v350 = vunpack.c.h.b16 %v297
    %v351 = vpack.c.b16 %v321, %v319
    %v352 = vpack.c.b16 %v322, %v320
    %v353 = vpack.c.b16 %v325, %v323
    %v354 = vpack.c.b16 %v326, %v324
    %v355 = vpack.c.b16 %v329, %v327
    %v356 = vpack.c.b16 %v330, %v328
    %v357 = vpack.c.b16 %v333, %v331
    %v358 = vpack.c.b16 %v334, %v332
    %v359 = vpack.c.b16 %v337, %v335
    %v360 = vpack.c.b16 %v338, %v336
    %v361 = vpack.c.b16 %v341, %v339
    %v362 = vpack.c.b16 %v342, %v340
    %v363 = vpack.c.b16 %v345, %v343
    %v364 = vpack.c.b16 %v346, %v344
    %v365 = vpack.c.b16 %v349, %v347
    %v366 = vpack.c.b16 %v350, %v348
    %383 = vmatpush.bf16.msra.mxu0 %v365
    %384 = vmatpush.bf16.msra.mxu0 %v363
    %385 = vmatpush.bf16.msra.mxu0 %v361
    %386 = vmatpush.bf16.msra.mxu0 %v359
    %387 = vmatpush.bf16.msra.mxu0 %v357
    %388 = vmatpush.bf16.msra.mxu0 %v355
    %389 = vmatpush.bf16.msra.mxu0 %v353
    %390 = vmatpush.bf16.msra.mxu0 %v351
    %391 = vmatmul.bf16.gmra.mxu0 %v266
    %v392 = vpop.f32.mrf.mxu0
    %v393 = vadd.f32 %v299, %v392
    %v394 = vpop.f32.mrf.mxu0
    %v395 = vadd.f32 %v299, %v394
    %396 = vmatmul.bf16.gmra.mxu0 %v267
    %v397 = vpop.f32.mrf.mxu0
    %v398 = vadd.f32 %v299, %v397
    %v399 = vpop.f32.mrf.mxu0
    %v400 = vadd.f32 %v299, %v399
    %401 = vmatmul.bf16.gmra.mxu0 %v268
    %v402 = vpop.f32.mrf.mxu0
    %v403 = vadd.f32 %v299, %v402
    %v404 = vpop.f32.mrf.mxu0
    %v405 = vadd.f32 %v299, %v404
    %406 = vmatmul.bf16.gmra.mxu0 %v269
    %v407 = vpop.f32.mrf.mxu0
    %v408 = vadd.f32 %v299, %v407
    %v409 = vpop.f32.mrf.mxu0
    %v410 = vadd.f32 %v299, %v409
    %411 = vmatmul.bf16.gmra.mxu0 %v270
    %v412 = vpop.f32.mrf.mxu0
    %v413 = vadd.f32 %v299, %v412
    %v414 = vpop.f32.mrf.mxu0
    %v415 = vadd.f32 %v299, %v414
    %416 = vmatmul.bf16.gmra.mxu0 %v271
    %v417 = vpop.f32.mrf.mxu0
    %v418 = vadd.f32 %v299, %v417
    %v419 = vpop.f32.mrf.mxu0
    %v420 = vadd.f32 %v299, %v419
    %421 = vmatmul.bf16.gmra.mxu0 %v272
    %v422 = vpop.f32.mrf.mxu0
    %v423 = vadd.f32 %v299, %v422
    %v424 = vpop.f32.mrf.mxu0
    %v425 = vadd.f32 %v299, %v424
    %426 = vmatmul.bf16.gmra.mxu0 %v273
    %v427 = vpop.f32.mrf.mxu0
    %v428 = vadd.f32 %v299, %v427
    %v429 = vpop.f32.mrf.mxu0
    %v430 = vadd.f32 %v299, %v429
    %431 = vmatmul.bf16.gmra.mxu0 %v274
    %v432 = vpop.f32.mrf.mxu0
    %v433 = vadd.f32 %v299, %v432
    %v434 = vpop.f32.mrf.mxu0
    %v435 = vadd.f32 %v299, %v434
    %436 = vmatmul.bf16.gmra.mxu0 %v275
    %v437 = vpop.f32.mrf.mxu0
    %v438 = vadd.f32 %v299, %v437
    %v439 = vpop.f32.mrf.mxu0
    %v440 = vadd.f32 %v299, %v439
    %441 = vmatmul.bf16.gmra.mxu0 %v276
    %v442 = vpop.f32.mrf.mxu0
    %v443 = vadd.f32 %v299, %v442
    %v444 = vpop.f32.mrf.mxu0
    %v445 = vadd.f32 %v299, %v444
    %446 = vmatmul.bf16.gmra.mxu0 %v277
    %v447 = vpop.f32.mrf.mxu0
    %v448 = vadd.f32 %v299, %v447
    %v449 = vpop.f32.mrf.mxu0
    %v450 = vadd.f32 %v299, %v449
    %451 = vmatmul.bf16.gmra.mxu0 %v278
    %v452 = vpop.f32.mrf.mxu0
    %v453 = vadd.f32 %v299, %v452
    %v454 = vpop.f32.mrf.mxu0
    %v455 = vadd.f32 %v299, %v454
    %456 = vmatmul.bf16.gmra.mxu0 %v279
    %v457 = vpop.f32.mrf.mxu0
    %v458 = vadd.f32 %v299, %v457
    %v459 = vpop.f32.mrf.mxu0
    %v460 = vadd.f32 %v299, %v459
    %461 = vmatmul.bf16.gmra.mxu0 %v280
    %v462 = vpop.f32.mrf.mxu0
    %v463 = vadd.f32 %v299, %v462
    %v464 = vpop.f32.mrf.mxu0
    %v465 = vadd.f32 %v299, %v464
    %466 = vmatmul.bf16.gmra.mxu0 %v281
    %v467 = vpop.f32.mrf.mxu0
    %v468 = vadd.f32 %v299, %v467
    %v469 = vpop.f32.mrf.mxu0
    %v470 = vadd.f32 %v299, %v469
    %471 = vdwg.mxu0
    %472 = vmatpush.bf16.msra.mxu0 %v366
    %473 = vmatpush.bf16.msra.mxu0 %v364
    %474 = vmatpush.bf16.msra.mxu0 %v362
    %475 = vmatpush.bf16.msra.mxu0 %v360
    %476 = vmatpush.bf16.msra.mxu0 %v358
    %477 = vmatpush.bf16.msra.mxu0 %v356
    %478 = vmatpush.bf16.msra.mxu0 %v354
    %479 = vmatpush.bf16.msra.mxu0 %v352
    %480 = vmatmul.bf16.gmra.mxu0 %v266
    %v481 = vpop.f32.mrf.mxu0
    %v482 = vadd.f32 %v300, %v481
    %v483 = vpop.f32.mrf.mxu0
    %v484 = vadd.f32 %v300, %v483
    %485 = vmatmul.bf16.gmra.mxu0 %v267
    %v486 = vpop.f32.mrf.mxu0
    %v487 = vadd.f32 %v300, %v486
    %v488 = vpop.f32.mrf.mxu0
    %v489 = vadd.f32 %v300, %v488
    %490 = vmatmul.bf16.gmra.mxu0 %v268
    %v491 = vpop.f32.mrf.mxu0
    %v492 = vadd.f32 %v300, %v491
    %v493 = vpop.f32.mrf.mxu0
    %v494 = vadd.f32 %v300, %v493
    %495 = vmatmul.bf16.gmra.mxu0 %v269
    %v496 = vpop.f32.mrf.mxu0
    %v497 = vadd.f32 %v300, %v496
    %v498 = vpop.f32.mrf.mxu0
    %v499 = vadd.f32 %v300, %v498
    %500 = vmatmul.bf16.gmra.mxu0 %v270
    %v501 = vpop.f32.mrf.mxu0
    %v502 = vadd.f32 %v300, %v501
    %v503 = vpop.f32.mrf.mxu0
    %v504 = vadd.f32 %v300, %v503
    %505 = vmatmul.bf16.gmra.mxu0 %v271
    %v506 = vpop.f32.mrf.mxu0
    %v507 = vadd.f32 %v300, %v506
    %v508 = vpop.f32.mrf.mxu0
    %v509 = vadd.f32 %v300, %v508
    %510 = vmatmul.bf16.gmra.mxu0 %v272
    %v511 = vpop.f32.mrf.mxu0
    %v512 = vadd.f32 %v300, %v511
    %v513 = vpop.f32.mrf.mxu0
    %v514 = vadd.f32 %v300, %v513
    %515 = vmatmul.bf16.gmra.mxu0 %v273
    %v516 = vpop.f32.mrf.mxu0
    %v517 = vadd.f32 %v300, %v516
    %v518 = vpop.f32.mrf.mxu0
    %v519 = vadd.f32 %v300, %v518
    %520 = vmatmul.bf16.gmra.mxu0 %v274
    %v521 = vpop.f32.mrf.mxu0
    %v522 = vadd.f32 %v300, %v521
    %v523 = vpop.f32.mrf.mxu0
    %v524 = vadd.f32 %v300, %v523
    %525 = vmatmul.bf16.gmra.mxu0 %v275
    %v526 = vpop.f32.mrf.mxu0
    %v527 = vadd.f32 %v300, %v526
    %v528 = vpop.f32.mrf.mxu0
    %v529 = vadd.f32 %v300, %v528
    %530 = vmatmul.bf16.gmra.mxu0 %v276
    %v531 = vpop.f32.mrf.mxu0
    %v532 = vadd.f32 %v300, %v531
    %v533 = vpop.f32.mrf.mxu0
    %v534 = vadd.f32 %v300, %v533
    %535 = vmatmul.bf16.gmra.mxu0 %v277
    %v536 = vpop.f32.mrf.mxu0
    %v537 = vadd.f32 %v300, %v536
    %v538 = vpop.f32.mrf.mxu0
    %v539 = vadd.f32 %v300, %v538
    %540 = vmatmul.bf16.gmra.mxu0 %v278
    %v541 = vpop.f32.mrf.mxu0
    %v542 = vadd.f32 %v300, %v541
    %v543 = vpop.f32.mrf.mxu0
    %v544 = vadd.f32 %v300, %v543
    %545 = vmatmul.bf16.gmra.mxu0 %v279
    %v546 = vpop.f32.mrf.mxu0
    %v547 = vadd.f32 %v300, %v546
    %v548 = vpop.f32.mrf.mxu0
    %v549 = vadd.f32 %v300, %v548
    %550 = vmatmul.bf16.gmra.mxu0 %v280
    %v551 = vpop.f32.mrf.mxu0
    %v552 = vadd.f32 %v300, %v551
    %v553 = vpop.f32.mrf.mxu0
    %v554 = vadd.f32 %v300, %v553
    %555 = vmatmul.bf16.gmra.mxu0 %v281
    %v556 = vpop.f32.mrf.mxu0
    %v557 = vadd.f32 %v300, %v556
    %v558 = vpop.f32.mrf.mxu0
    %v559 = vadd.f32 %v300, %v558
    %560 = vdwg.mxu0
    %v561 = vmax.f32 %v393, 0.0
    %v562 = vmax.f32 %v482, 0.0
    %v563 = vmax.f32 %v395, 0.0
    %v564 = vmax.f32 %v484, 0.0
    %v565 = vmax.f32 %v398, 0.0
    %v566 = vmax.f32 %v487, 0.0
    %v567 = vmax.f32 %v400, 0.0
    %v568 = vmax.f32 %v489, 0.0
    %v569 = vmax.f32 %v403, 0.0
    %v570 = vmax.f32 %v492, 0.0
    %v571 = vmax.f32 %v405, 0.0
    %v572 = vmax.f32 %v494, 0.0
    %v573 = vmax.f32 %v408, 0.0
    %v574 = vmax.f32 %v497, 0.0
    %v575 = vmax.f32 %v410, 0.0
    %v576 = vmax.f32 %v499, 0.0
    %v577 = vmax.f32 %v413, 0.0
    %v578 = vmax.f32 %v502, 0.0
    %v579 = vmax.f32 %v415, 0.0
    %v580 = vmax.f32 %v504, 0.0
    %v581 = vmax.f32 %v418, 0.0
    %v582 = vmax.f32 %v507, 0.0
    %v583 = vmax.f32 %v420, 0.0
    %v584 = vmax.f32 %v509, 0.0
    %v585 = vmax.f32 %v423, 0.0
    %v586 = vmax.f32 %v512, 0.0
    %v587 = vmax.f32 %v425, 0.0
    %v588 = vmax.f32 %v514, 0.0
    %v589 = vmax.f32 %v428, 0.0
    %v590 = vmax.f32 %v517, 0.0
    %v591 = vmax.f32 %v430, 0.0
    %v592 = vmax.f32 %v519, 0.0
    %v593 = vmax.f32 %v433, 0.0
    %v594 = vmax.f32 %v522, 0.0
    %v595 = vmax.f32 %v435, 0.0
    %v596 = vmax.f32 %v524, 0.0
    %v597 = vmax.f32 %v438, 0.0
    %v598 = vmax.f32 %v527, 0.0
    %v599 = vmax.f32 %v440, 0.0
    %v600 = vmax.f32 %v529, 0.0
    %v601 = vmax.f32 %v443, 0.0
    %v602 = vmax.f32 %v532, 0.0
    %v603 = vmax.f32 %v445, 0.0
    %v604 = vmax.f32 %v534, 0.0
    %v605 = vmax.f32 %v448, 0.0
    %v606 = vmax.f32 %v537, 0.0
    %v607 = vmax.f32 %v450, 0.0
    %v608 = vmax.f32 %v539, 0.0
    %v609 = vmax.f32 %v453, 0.0
    %v610 = vmax.f32 %v542, 0.0
    %v611 = vmax.f32 %v455, 0.0
    %v612 = vmax.f32 %v544, 0.0
    %v613 = vmax.f32 %v458, 0.0
    %v614 = vmax.f32 %v547, 0.0
    %v615 = vmax.f32 %v460, 0.0
    %v616 = vmax.f32 %v549, 0.0
    %v617 = vmax.f32 %v463, 0.0
    %v618 = vmax.f32 %v552, 0.0
    %v619 = vmax.f32 %v465, 0.0
    %v620 = vmax.f32 %v554, 0.0
    %v621 = vmax.f32 %v468, 0.0
    %v622 = vmax.f32 %v557, 0.0
    %v623 = vmax.f32 %v470, 0.0
    %v624 = vmax.f32 %v559, 0.0
    %v625 = vpack.c.bf16 %v222, %v221
    %v626 = vpack.c.bf16 %v224, %v223
    %v627 = vpack.c.bf16 %v226, %v225
    %v628 = vpack.c.bf16 %v228, %v227
    %v629 = vpack.c.bf16 %v230, %v229
    %v630 = vpack.c.bf16 %v232, %v231
    %v631 = vpack.c.bf16 %v234, %v233
    %v632 = vpack.c.bf16 %v236, %v235
    %v633 = vpack.c.bf16 %v238, %v237
    %v634 = vpack.c.bf16 %v240, %v239
    %v635 = vpack.c.bf16 %v242, %v241
    %v636 = vpack.c.bf16 %v244, %v243
    %v637 = vpack.c.bf16 %v246, %v245
    %v638 = vpack.c.bf16 %v248, %v247
    %v639 = vpack.c.bf16 %v250, %v249
    %v640 = vpack.c.bf16 %v252, %v251
    %v641 = vld [vmem:[#allocation7] sm:$0xff]
    %v642 = vld [vmem:[#allocation7 + $0x8] sm:$0xff]
    %v643 = vld [vmem:[#allocation7 + $0x10] sm:$0xff]
    %v644 = vld [vmem:[#allocation7 + $0x18] sm:$0xff]
    %v645 = vld [vmem:[#allocation7 + $0x20] sm:$0xff]
    %v646 = vld [vmem:[#allocation7 + $0x28] sm:$0xff]
    %v647 = vld [vmem:[#allocation7 + $0x30] sm:$0xff]
    %v648 = vld [vmem:[#allocation7 + $0x38] sm:$0xff]
    %v649 = vld [vmem:[#allocation7 + $0x40] sm:$0xff]
    %v650 = vld [vmem:[#allocation7 + $0x48] sm:$0xff]
    %v651 = vld [vmem:[#allocation7 + $0x50] sm:$0xff]
    %v652 = vld [vmem:[#allocation7 + $0x58] sm:$0xff]
    %v653 = vld [vmem:[#allocation7 + $0x60] sm:$0xff]
    %v654 = vld [vmem:[#allocation7 + $0x68] sm:$0xff]
    %v655 = vld [vmem:[#allocation7 + $0x70] sm:$0xff]
    %v656 = vld [vmem:[#allocation7 + $0x78] sm:$0xff]
    %v658 = vperm.slane %v255, 0
    %v659 = vperm.slane %v255, 1
    %v678 = vunpack.c.l.b16 %v641
    %v679 = vunpack.c.h.b16 %v641
    %v680 = vunpack.c.l.b16 %v642
    %v681 = vunpack.c.h.b16 %v642
    %v682 = vunpack.c.l.b16 %v643
    %v683 = vunpack.c.h.b16 %v643
    %v684 = vunpack.c.l.b16 %v644
    %v685 = vunpack.c.h.b16 %v644
    %v686 = vunpack.c.l.b16 %v645
    %v687 = vunpack.c.h.b16 %v645
    %v688 = vunpack.c.l.b16 %v646
    %v689 = vunpack.c.h.b16 %v646
    %v690 = vunpack.c.l.b16 %v647
    %v691 = vunpack.c.h.b16 %v647
    %v692 = vunpack.c.l.b16 %v648
    %v693 = vunpack.c.h.b16 %v648
    %v694 = vunpack.c.l.b16 %v649
    %v695 = vunpack.c.h.b16 %v649
    %v696 = vunpack.c.l.b16 %v650
    %v697 = vunpack.c.h.b16 %v650
    %v698 = vunpack.c.l.b16 %v651
    %v699 = vunpack.c.h.b16 %v651
    %v700 = vunpack.c.l.b16 %v652
    %v701 = vunpack.c.h.b16 %v652
    %v702 = vunpack.c.l.b16 %v653
    %v703 = vunpack.c.h.b16 %v653
    %v704 = vunpack.c.l.b16 %v654
    %v705 = vunpack.c.h.b16 %v654
    %v706 = vunpack.c.l.b16 %v655
    %v707 = vunpack.c.h.b16 %v655
    %v708 = vunpack.c.l.b16 %v656
    %v709 = vunpack.c.h.b16 %v656
    %v710 = vpack.c.b16 %v680, %v678
    %v711 = vpack.c.b16 %v681, %v679
    %v712 = vpack.c.b16 %v684, %v682
    %v713 = vpack.c.b16 %v685, %v683
    %v714 = vpack.c.b16 %v688, %v686
    %v715 = vpack.c.b16 %v689, %v687
    %v716 = vpack.c.b16 %v692, %v690
    %v717 = vpack.c.b16 %v693, %v691
    %v718 = vpack.c.b16 %v696, %v694
    %v719 = vpack.c.b16 %v697, %v695
    %v720 = vpack.c.b16 %v700, %v698
    %v721 = vpack.c.b16 %v701, %v699
    %v722 = vpack.c.b16 %v704, %v702
    %v723 = vpack.c.b16 %v705, %v703
    %v724 = vpack.c.b16 %v708, %v706
    %v725 = vpack.c.b16 %v709, %v707
    %742 = vmatpush.bf16.msra.mxu0 %v724
    %743 = vmatpush.bf16.msra.mxu0 %v722
    %744 = vmatpush.bf16.msra.mxu0 %v720
    %745 = vmatpush.bf16.msra.mxu0 %v718
    %746 = vmatpush.bf16.msra.mxu0 %v716
    %747 = vmatpush.bf16.msra.mxu0 %v714
    %748 = vmatpush.bf16.msra.mxu0 %v712
    %749 = vmatpush.bf16.msra.mxu0 %v710
    %750 = vmatmul.bf16.gmra.mxu0 %v625
    %v751 = vpop.f32.mrf.mxu0
    %v752 = vadd.f32 %v658, %v751
    %v753 = vpop.f32.mrf.mxu0
    %v754 = vadd.f32 %v658, %v753
    %755 = vmatmul.bf16.gmra.mxu0 %v626
    %v756 = vpop.f32.mrf.mxu0
    %v757 = vadd.f32 %v658, %v756
    %v758 = vpop.f32.mrf.mxu0
    %v759 = vadd.f32 %v658, %v758
    %760 = vmatmul.bf16.gmra.mxu0 %v627
    %v761 = vpop.f32.mrf.mxu0
    %v762 = vadd.f32 %v658, %v761
    %v763 = vpop.f32.mrf.mxu0
    %v764 = vadd.f32 %v658, %v763
    %765 = vmatmul.bf16.gmra.mxu0 %v628
    %v766 = vpop.f32.mrf.mxu0
    %v767 = vadd.f32 %v658, %v766
    %v768 = vpop.f32.mrf.mxu0
    %v769 = vadd.f32 %v658, %v768
    %770 = vmatmul.bf16.gmra.mxu0 %v629
    %v771 = vpop.f32.mrf.mxu0
    %v772 = vadd.f32 %v658, %v771
    %v773 = vpop.f32.mrf.mxu0
    %v774 = vadd.f32 %v658, %v773
    %775 = vmatmul.bf16.gmra.mxu0 %v630
    %v776 = vpop.f32.mrf.mxu0
    %v777 = vadd.f32 %v658, %v776
    %v778 = vpop.f32.mrf.mxu0
    %v779 = vadd.f32 %v658, %v778
    %780 = vmatmul.bf16.gmra.mxu0 %v631
    %v781 = vpop.f32.mrf.mxu0
    %v782 = vadd.f32 %v658, %v781
    %v783 = vpop.f32.mrf.mxu0
    %v784 = vadd.f32 %v658, %v783
    %785 = vmatmul.bf16.gmra.mxu0 %v632
    %v786 = vpop.f32.mrf.mxu0
    %v787 = vadd.f32 %v658, %v786
    %v788 = vpop.f32.mrf.mxu0
    %v789 = vadd.f32 %v658, %v788
    %790 = vmatmul.bf16.gmra.mxu0 %v633
    %v791 = vpop.f32.mrf.mxu0
    %v792 = vadd.f32 %v658, %v791
    %v793 = vpop.f32.mrf.mxu0
    %v794 = vadd.f32 %v658, %v793
    %795 = vmatmul.bf16.gmra.mxu0 %v634
    %v796 = vpop.f32.mrf.mxu0
    %v797 = vadd.f32 %v658, %v796
    %v798 = vpop.f32.mrf.mxu0
    %v799 = vadd.f32 %v658, %v798
    %800 = vmatmul.bf16.gmra.mxu0 %v635
    %v801 = vpop.f32.mrf.mxu0
    %v802 = vadd.f32 %v658, %v801
    %v803 = vpop.f32.mrf.mxu0
    %v804 = vadd.f32 %v658, %v803
    %805 = vmatmul.bf16.gmra.mxu0 %v636
    %v806 = vpop.f32.mrf.mxu0
    %v807 = vadd.f32 %v658, %v806
    %v808 = vpop.f32.mrf.mxu0
    %v809 = vadd.f32 %v658, %v808
    %810 = vmatmul.bf16.gmra.mxu0 %v637
    %v811 = vpop.f32.mrf.mxu0
    %v812 = vadd.f32 %v658, %v811
    %v813 = vpop.f32.mrf.mxu0
    %v814 = vadd.f32 %v658, %v813
    %815 = vmatmul.bf16.gmra.mxu0 %v638
    %v816 = vpop.f32.mrf.mxu0
    %v817 = vadd.f32 %v658, %v816
    %v818 = vpop.f32.mrf.mxu0
    %v819 = vadd.f32 %v658, %v818
    %820 = vmatmul.bf16.gmra.mxu0 %v639
    %v821 = vpop.f32.mrf.mxu0
    %v822 = vadd.f32 %v658, %v821
    %v823 = vpop.f32.mrf.mxu0
    %v824 = vadd.f32 %v658, %v823
    %825 = vmatmul.bf16.gmra.mxu0 %v640
    %v826 = vpop.f32.mrf.mxu0
    %v827 = vadd.f32 %v658, %v826
    %v828 = vpop.f32.mrf.mxu0
    %v829 = vadd.f32 %v658, %v828
    %830 = vdwg.mxu0
    %831 = vmatpush.bf16.msra.mxu0 %v725
    %832 = vmatpush.bf16.msra.mxu0 %v723
    %833 = vmatpush.bf16.msra.mxu0 %v721
    %834 = vmatpush.bf16.msra.mxu0 %v719
    %835 = vmatpush.bf16.msra.mxu0 %v717
    %836 = vmatpush.bf16.msra.mxu0 %v715
    %837 = vmatpush.bf16.msra.mxu0 %v713
    %838 = vmatpush.bf16.msra.mxu0 %v711
    %839 = vmatmul.bf16.gmra.mxu0 %v625
    %v840 = vpop.f32.mrf.mxu0
    %v841 = vadd.f32 %v659, %v840
    %v842 = vpop.f32.mrf.mxu0
    %v843 = vadd.f32 %v659, %v842
    %844 = vmatmul.bf16.gmra.mxu0 %v626
    %v845 = vpop.f32.mrf.mxu0
    %v846 = vadd.f32 %v659, %v845
    %v847 = vpop.f32.mrf.mxu0
    %v848 = vadd.f32 %v659, %v847
    %849 = vmatmul.bf16.gmra.mxu0 %v627
    %v850 = vpop.f32.mrf.mxu0
    %v851 = vadd.f32 %v659, %v850
    %v852 = vpop.f32.mrf.mxu0
    %v853 = vadd.f32 %v659, %v852
    %854 = vmatmul.bf16.gmra.mxu0 %v628
    %v855 = vpop.f32.mrf.mxu0
    %v856 = vadd.f32 %v659, %v855
    %v857 = vpop.f32.mrf.mxu0
    %v858 = vadd.f32 %v659, %v857
    %859 = vmatmul.bf16.gmra.mxu0 %v629
    %v860 = vpop.f32.mrf.mxu0
    %v861 = vadd.f32 %v659, %v860
    %v862 = vpop.f32.mrf.mxu0
    %v863 = vadd.f32 %v659, %v862
    %864 = vmatmul.bf16.gmra.mxu0 %v630
    %v865 = vpop.f32.mrf.mxu0
    %v866 = vadd.f32 %v659, %v865
    %v867 = vpop.f32.mrf.mxu0
    %v868 = vadd.f32 %v659, %v867
    %869 = vmatmul.bf16.gmra.mxu0 %v631
    %v870 = vpop.f32.mrf.mxu0
    %v871 = vadd.f32 %v659, %v870
    %v872 = vpop.f32.mrf.mxu0
    %v873 = vadd.f32 %v659, %v872
    %874 = vmatmul.bf16.gmra.mxu0 %v632
    %v875 = vpop.f32.mrf.mxu0
    %v876 = vadd.f32 %v659, %v875
    %v877 = vpop.f32.mrf.mxu0
    %v878 = vadd.f32 %v659, %v877
    %879 = vmatmul.bf16.gmra.mxu0 %v633
    %v880 = vpop.f32.mrf.mxu0
    %v881 = vadd.f32 %v659, %v880
    %v882 = vpop.f32.mrf.mxu0
    %v883 = vadd.f32 %v659, %v882
    %884 = vmatmul.bf16.gmra.mxu0 %v634
    %v885 = vpop.f32.mrf.mxu0
    %v886 = vadd.f32 %v659, %v885
    %v887 = vpop.f32.mrf.mxu0
    %v888 = vadd.f32 %v659, %v887
    %889 = vmatmul.bf16.gmra.mxu0 %v635
    %v890 = vpop.f32.mrf.mxu0
    %v891 = vadd.f32 %v659, %v890
    %v892 = vpop.f32.mrf.mxu0
    %v893 = vadd.f32 %v659, %v892
    %894 = vmatmul.bf16.gmra.mxu0 %v636
    %v895 = vpop.f32.mrf.mxu0
    %v896 = vadd.f32 %v659, %v895
    %v897 = vpop.f32.mrf.mxu0
    %v898 = vadd.f32 %v659, %v897
    %899 = vmatmul.bf16.gmra.mxu0 %v637
    %v900 = vpop.f32.mrf.mxu0
    %v901 = vadd.f32 %v659, %v900
    %v902 = vpop.f32.mrf.mxu0
    %v903 = vadd.f32 %v659, %v902
    %904 = vmatmul.bf16.gmra.mxu0 %v638
    %v905 = vpop.f32.mrf.mxu0
    %v906 = vadd.f32 %v659, %v905
    %v907 = vpop.f32.mrf.mxu0
    %v908 = vadd.f32 %v659, %v907
    %909 = vmatmul.bf16.gmra.mxu0 %v639
    %v910 = vpop.f32.mrf.mxu0
    %v911 = vadd.f32 %v659, %v910
    %v912 = vpop.f32.mrf.mxu0
    %v913 = vadd.f32 %v659, %v912
    %914 = vmatmul.bf16.gmra.mxu0 %v640
    %v915 = vpop.f32.mrf.mxu0
    %v916 = vadd.f32 %v659, %v915
    %v917 = vpop.f32.mrf.mxu0
    %v918 = vadd.f32 %v659, %v917
    %919 = vdwg.mxu0
    %v920 = vmax.f32 %v752, 0.0
    %v921 = vmax.f32 %v841, 0.0
    %v922 = vmax.f32 %v754, 0.0
    %v923 = vmax.f32 %v843, 0.0
    %v924 = vmax.f32 %v757, 0.0
    %v925 = vmax.f32 %v846, 0.0
    %v926 = vmax.f32 %v759, 0.0
    %v927 = vmax.f32 %v848, 0.0
    %v928 = vmax.f32 %v762, 0.0
    %v929 = vmax.f32 %v851, 0.0
    %v930 = vmax.f32 %v764, 0.0
    %v931 = vmax.f32 %v853, 0.0
    %v932 = vmax.f32 %v767, 0.0
    %v933 = vmax.f32 %v856, 0.0
    %v934 = vmax.f32 %v769, 0.0
    %v935 = vmax.f32 %v858, 0.0
    %v936 = vmax.f32 %v772, 0.0
    %v937 = vmax.f32 %v861, 0.0
    %v938 = vmax.f32 %v774, 0.0
    %v939 = vmax.f32 %v863, 0.0
    %v940 = vmax.f32 %v777, 0.0
    %v941 = vmax.f32 %v866, 0.0
    %v942 = vmax.f32 %v779, 0.0
    %v943 = vmax.f32 %v868, 0.0
    %v944 = vmax.f32 %v782, 0.0
    %v945 = vmax.f32 %v871, 0.0
    %v946 = vmax.f32 %v784, 0.0
    %v947 = vmax.f32 %v873, 0.0
    %v948 = vmax.f32 %v787, 0.0
    %v949 = vmax.f32 %v876, 0.0
    %v950 = vmax.f32 %v789, 0.0
    %v951 = vmax.f32 %v878, 0.0
    %v952 = vmax.f32 %v792, 0.0
    %v953 = vmax.f32 %v881, 0.0
    %v954 = vmax.f32 %v794, 0.0
    %v955 = vmax.f32 %v883, 0.0
    %v956 = vmax.f32 %v797, 0.0
    %v957 = vmax.f32 %v886, 0.0
    %v958 = vmax.f32 %v799, 0.0
    %v959 = vmax.f32 %v888, 0.0
    %v960 = vmax.f32 %v802, 0.0
    %v961 = vmax.f32 %v891, 0.0
    %v962 = vmax.f32 %v804, 0.0
    %v963 = vmax.f32 %v893, 0.0
    %v964 = vmax.f32 %v807, 0.0
    %v965 = vmax.f32 %v896, 0.0
    %v966 = vmax.f32 %v809, 0.0
    %v967 = vmax.f32 %v898, 0.0
    %v968 = vmax.f32 %v812, 0.0
    %v969 = vmax.f32 %v901, 0.0
    %v970 = vmax.f32 %v814, 0.0
    %v971 = vmax.f32 %v903, 0.0
    %v972 = vmax.f32 %v817, 0.0
    %v973 = vmax.f32 %v906, 0.0
    %v974 = vmax.f32 %v819, 0.0
    %v975 = vmax.f32 %v908, 0.0
    %v976 = vmax.f32 %v822, 0.0
    %v977 = vmax.f32 %v911, 0.0
    %v978 = vmax.f32 %v824, 0.0
    %v979 = vmax.f32 %v913, 0.0
    %v980 = vmax.f32 %v827, 0.0
    %v981 = vmax.f32 %v916, 0.0
    %v982 = vmax.f32 %v829, 0.0
    %v983 = vmax.f32 %v918, 0.0
    %v984 = vpack.c.bf16 %v563, %v561
    %v985 = vpack.c.bf16 %v564, %v562
    %v986 = vpack.c.bf16 %v922, %v920
    %v987 = vpack.c.bf16 %v923, %v921
    %v988 = vpack.c.bf16 %v567, %v565
    %v989 = vpack.c.bf16 %v568, %v566
    %v990 = vpack.c.bf16 %v926, %v924
    %v991 = vpack.c.bf16 %v927, %v925
    %v992 = vpack.c.bf16 %v571, %v569
    %v993 = vpack.c.bf16 %v572, %v570
    %v994 = vpack.c.bf16 %v930, %v928
    %v995 = vpack.c.bf16 %v931, %v929
    %v996 = vpack.c.bf16 %v575, %v573
    %v997 = vpack.c.bf16 %v576, %v574
    %v998 = vpack.c.bf16 %v934, %v932
    %v999 = vpack.c.bf16 %v935, %v933
    %v1000 = vpack.c.bf16 %v579, %v577
    %v1001 = vpack.c.bf16 %v580, %v578
    %v1002 = vpack.c.bf16 %v938, %v936
    %v1003 = vpack.c.bf16 %v939, %v937
    %v1004 = vpack.c.bf16 %v583, %v581
    %v1005 = vpack.c.bf16 %v584, %v582
    %v1006 = vpack.c.bf16 %v942, %v940
    %v1007 = vpack.c.bf16 %v943, %v941
    %v1008 = vpack.c.bf16 %v587, %v585
    %v1009 = vpack.c.bf16 %v588, %v586
    %v1010 = vpack.c.bf16 %v946, %v944
    %v1011 = vpack.c.bf16 %v947, %v945
    %v1012 = vpack.c.bf16 %v591, %v589
    %v1013 = vpack.c.bf16 %v592, %v590
    %v1014 = vpack.c.bf16 %v950, %v948
    %v1015 = vpack.c.bf16 %v951, %v949
    %v1016 = vpack.c.bf16 %v595, %v593
    %v1017 = vpack.c.bf16 %v596, %v594
    %v1018 = vpack.c.bf16 %v954, %v952
    %v1019 = vpack.c.bf16 %v955, %v953
    %v1020 = vpack.c.bf16 %v599, %v597
    %v1021 = vpack.c.bf16 %v600, %v598
    %v1022 = vpack.c.bf16 %v958, %v956
    %v1023 = vpack.c.bf16 %v959, %v957
    %v1024 = vpack.c.bf16 %v603, %v601
    %v1025 = vpack.c.bf16 %v604, %v602
    %v1026 = vpack.c.bf16 %v962, %v960
    %v1027 = vpack.c.bf16 %v963, %v961
    %v1028 = vpack.c.bf16 %v607, %v605
    %v1029 = vpack.c.bf16 %v608, %v606
    %v1030 = vpack.c.bf16 %v966, %v964
    %v1031 = vpack.c.bf16 %v967, %v965
    %v1032 = vpack.c.bf16 %v611, %v609
    %v1033 = vpack.c.bf16 %v612, %v610
    %v1034 = vpack.c.bf16 %v970, %v968
    %v1035 = vpack.c.bf16 %v971, %v969
    %v1036 = vpack.c.bf16 %v615, %v613
    %v1037 = vpack.c.bf16 %v616, %v614
    %v1038 = vpack.c.bf16 %v974, %v972
    %v1039 = vpack.c.bf16 %v975, %v973
    %v1040 = vpack.c.bf16 %v619, %v617
    %v1041 = vpack.c.bf16 %v620, %v618
    %v1042 = vpack.c.bf16 %v978, %v976
    %v1043 = vpack.c.bf16 %v979, %v977
    %v1044 = vpack.c.bf16 %v623, %v621
    %v1045 = vpack.c.bf16 %v624, %v622
    %v1046 = vpack.c.bf16 %v982, %v980
    %v1047 = vpack.c.bf16 %v983, %v981
    %v1048 = vld [vmem:[#allocation9] sm:$0xff]
    %v1049 = vld [vmem:[#allocation9 + $0x8] sm:$0xff]
    %v1050 = vld [vmem:[#allocation9 + $0x10] sm:$0xff]
    %v1051 = vld [vmem:[#allocation9 + $0x18] sm:$0xff]
    %v1052 = vld [vmem:[#allocation9 + $0x20] sm:$0xff]
    %v1053 = vld [vmem:[#allocation9 + $0x28] sm:$0xff]
    %v1054 = vld [vmem:[#allocation9 + $0x30] sm:$0xff]
    %v1055 = vld [vmem:[#allocation9 + $0x38] sm:$0xff]
    %v1056 = vld [vmem:[#allocation9 + $0x40] sm:$0xff]
    %v1057 = vld [vmem:[#allocation9 + $0x48] sm:$0xff]
    %v1058 = vld [vmem:[#allocation9 + $0x50] sm:$0xff]
    %v1059 = vld [vmem:[#allocation9 + $0x58] sm:$0xff]
    %v1060 = vld [vmem:[#allocation9 + $0x60] sm:$0xff]
    %v1061 = vld [vmem:[#allocation9 + $0x68] sm:$0xff]
    %v1062 = vld [vmem:[#allocation9 + $0x70] sm:$0xff]
    %v1063 = vld [vmem:[#allocation9 + $0x78] sm:$0xff]
    %v1064 = vld [vmem:[#allocation9 + $0x80] sm:$0xff]
    %v1065 = vld [vmem:[#allocation9 + $0x88] sm:$0xff]
    %v1066 = vld [vmem:[#allocation9 + $0x90] sm:$0xff]
    %v1067 = vld [vmem:[#allocation9 + $0x98] sm:$0xff]
    %v1068 = vld [vmem:[#allocation9 + $0xa0] sm:$0xff]
    %v1069 = vld [vmem:[#allocation9 + $0xa8] sm:$0xff]
    %v1070 = vld [vmem:[#allocation9 + $0xb0] sm:$0xff]
    %v1071 = vld [vmem:[#allocation9 + $0xb8] sm:$0xff]
    %v1072 = vld [vmem:[#allocation9 + $0xc0] sm:$0xff]
    %v1073 = vld [vmem:[#allocation9 + $0xc8] sm:$0xff]
    %v1074 = vld [vmem:[#allocation9 + $0xd0] sm:$0xff]
    %v1075 = vld [vmem:[#allocation9 + $0xd8] sm:$0xff]
    %v1076 = vld [vmem:[#allocation9 + $0xe0] sm:$0xff]
    %v1077 = vld [vmem:[#allocation9 + $0xe8] sm:$0xff]
    %v1078 = vld [vmem:[#allocation9 + $0xf0] sm:$0xff]
    %v1079 = vld [vmem:[#allocation9 + $0xf8] sm:$0xff]
    %v1080 = vld [vmem:[#allocation9 + $0x100] sm:$0xff]
    %v1081 = vld [vmem:[#allocation9 + $0x108] sm:$0xff]
    %v1082 = vld [vmem:[#allocation9 + $0x110] sm:$0xff]
    %v1083 = vld [vmem:[#allocation9 + $0x118] sm:$0xff]
    %v1084 = vld [vmem:[#allocation9 + $0x120] sm:$0xff]
    %v1085 = vld [vmem:[#allocation9 + $0x128] sm:$0xff]
    %v1086 = vld [vmem:[#allocation9 + $0x130] sm:$0xff]
    %v1087 = vld [vmem:[#allocation9 + $0x138] sm:$0xff]
    %v1088 = vld [vmem:[#allocation9 + $0x140] sm:$0xff]
    %v1089 = vld [vmem:[#allocation9 + $0x148] sm:$0xff]
    %v1090 = vld [vmem:[#allocation9 + $0x150] sm:$0xff]
    %v1091 = vld [vmem:[#allocation9 + $0x158] sm:$0xff]
    %v1092 = vld [vmem:[#allocation9 + $0x160] sm:$0xff]
    %v1093 = vld [vmem:[#allocation9 + $0x168] sm:$0xff]
    %v1094 = vld [vmem:[#allocation9 + $0x170] sm:$0xff]
    %v1095 = vld [vmem:[#allocation9 + $0x178] sm:$0xff]
    %v1096 = vld [vmem:[#allocation9 + $0x180] sm:$0xff]
    %v1097 = vld [vmem:[#allocation9 + $0x188] sm:$0xff]
    %v1098 = vld [vmem:[#allocation9 + $0x190] sm:$0xff]
    %v1099 = vld [vmem:[#allocation9 + $0x198] sm:$0xff]
    %v1100 = vld [vmem:[#allocation9 + $0x1a0] sm:$0xff]
    %v1101 = vld [vmem:[#allocation9 + $0x1a8] sm:$0xff]
    %v1102 = vld [vmem:[#allocation9 + $0x1b0] sm:$0xff]
    %v1103 = vld [vmem:[#allocation9 + $0x1b8] sm:$0xff]
    %v1104 = vld [vmem:[#allocation9 + $0x1c0] sm:$0xff]
    %v1105 = vld [vmem:[#allocation9 + $0x1c8] sm:$0xff]
    %v1106 = vld [vmem:[#allocation9 + $0x1d0] sm:$0xff]
    %v1107 = vld [vmem:[#allocation9 + $0x1d8] sm:$0xff]
    %v1108 = vld [vmem:[#allocation9 + $0x1e0] sm:$0xff]
    %v1109 = vld [vmem:[#allocation9 + $0x1e8] sm:$0xff]
    %v1110 = vld [vmem:[#allocation9 + $0x1f0] sm:$0xff]
    %v1111 = vld [vmem:[#allocation9 + $0x1f8] sm:$0xff]
    %v1113 = vperm.slane %v257, 0
    %v1114 = vperm.slane %v257, 1
    %v1181 = vunpack.c.l.b16 %v1048
    %v1182 = vunpack.c.h.b16 %v1048
    %v1183 = vunpack.c.l.b16 %v1049
    %v1184 = vunpack.c.h.b16 %v1049
    %v1185 = vunpack.c.l.b16 %v1050
    %v1186 = vunpack.c.h.b16 %v1050
    %v1187 = vunpack.c.l.b16 %v1051
    %v1188 = vunpack.c.h.b16 %v1051
    %v1189 = vunpack.c.l.b16 %v1052
    %v1190 = vunpack.c.h.b16 %v1052
    %v1191 = vunpack.c.l.b16 %v1053
    %v1192 = vunpack.c.h.b16 %v1053
    %v1193 = vunpack.c.l.b16 %v1054
    %v1194 = vunpack.c.h.b16 %v1054
    %v1195 = vunpack.c.l.b16 %v1055
    %v1196 = vunpack.c.h.b16 %v1055
    %v1197 = vunpack.c.l.b16 %v1056
    %v1198 = vunpack.c.h.b16 %v1056
    %v1199 = vunpack.c.l.b16 %v1057
    %v1200 = vunpack.c.h.b16 %v1057
    %v1201 = vunpack.c.l.b16 %v1058
    %v1202 = vunpack.c.h.b16 %v1058
    %v1203 = vunpack.c.l.b16 %v1059
    %v1204 = vunpack.c.h.b16 %v1059
    %v1205 = vunpack.c.l.b16 %v1060
    %v1206 = vunpack.c.h.b16 %v1060
    %v1207 = vunpack.c.l.b16 %v1061
    %v1208 = vunpack.c.h.b16 %v1061
    %v1209 = vunpack.c.l.b16 %v1062
    %v1210 = vunpack.c.h.b16 %v1062
    %v1211 = vunpack.c.l.b16 %v1063
    %v1212 = vunpack.c.h.b16 %v1063
    %v1213 = vunpack.c.l.b16 %v1064
    %v1214 = vunpack.c.h.b16 %v1064
    %v1215 = vunpack.c.l.b16 %v1065
    %v1216 = vunpack.c.h.b16 %v1065
    %v1217 = vunpack.c.l.b16 %v1066
    %v1218 = vunpack.c.h.b16 %v1066
    %v1219 = vunpack.c.l.b16 %v1067
    %v1220 = vunpack.c.h.b16 %v1067
    %v1221 = vunpack.c.l.b16 %v1068
    %v1222 = vunpack.c.h.b16 %v1068
    %v1223 = vunpack.c.l.b16 %v1069
    %v1224 = vunpack.c.h.b16 %v1069
    %v1225 = vunpack.c.l.b16 %v1070
    %v1226 = vunpack.c.h.b16 %v1070
    %v1227 = vunpack.c.l.b16 %v1071
    %v1228 = vunpack.c.h.b16 %v1071
    %v1229 = vunpack.c.l.b16 %v1072
    %v1230 = vunpack.c.h.b16 %v1072
    %v1231 = vunpack.c.l.b16 %v1073
    %v1232 = vunpack.c.h.b16 %v1073
    %v1233 = vunpack.c.l.b16 %v1074
    %v1234 = vunpack.c.h.b16 %v1074
    %v1235 = vunpack.c.l.b16 %v1075
    %v1236 = vunpack.c.h.b16 %v1075
    %v1237 = vunpack.c.l.b16 %v1076
    %v1238 = vunpack.c.h.b16 %v1076
    %v1239 = vunpack.c.l.b16 %v1077
    %v1240 = vunpack.c.h.b16 %v1077
    %v1241 = vunpack.c.l.b16 %v1078
    %v1242 = vunpack.c.h.b16 %v1078
    %v1243 = vunpack.c.l.b16 %v1079
    %v1244 = vunpack.c.h.b16 %v1079
    %v1245 = vunpack.c.l.b16 %v1080
    %v1246 = vunpack.c.h.b16 %v1080
    %v1247 = vunpack.c.l.b16 %v1081
    %v1248 = vunpack.c.h.b16 %v1081
    %v1249 = vunpack.c.l.b16 %v1082
    %v1250 = vunpack.c.h.b16 %v1082
    %v1251 = vunpack.c.l.b16 %v1083
    %v1252 = vunpack.c.h.b16 %v1083
    %v1253 = vunpack.c.l.b16 %v1084
    %v1254 = vunpack.c.h.b16 %v1084
    %v1255 = vunpack.c.l.b16 %v1085
    %v1256 = vunpack.c.h.b16 %v1085
    %v1257 = vunpack.c.l.b16 %v1086
    %v1258 = vunpack.c.h.b16 %v1086
    %v1259 = vunpack.c.l.b16 %v1087
    %v1260 = vunpack.c.h.b16 %v1087
    %v1261 = vunpack.c.l.b16 %v1088
    %v1262 = vunpack.c.h.b16 %v1088
    %v1263 = vunpack.c.l.b16 %v1089
    %v1264 = vunpack.c.h.b16 %v1089
    %v1265 = vunpack.c.l.b16 %v1090
    %v1266 = vunpack.c.h.b16 %v1090
    %v1267 = vunpack.c.l.b16 %v1091
    %v1268 = vunpack.c.h.b16 %v1091
    %v1269 = vunpack.c.l.b16 %v1092
    %v1270 = vunpack.c.h.b16 %v1092
    %v1271 = vunpack.c.l.b16 %v1093
    %v1272 = vunpack.c.h.b16 %v1093
    %v1273 = vunpack.c.l.b16 %v1094
    %v1274 = vunpack.c.h.b16 %v1094
    %v1275 = vunpack.c.l.b16 %v1095
    %v1276 = vunpack.c.h.b16 %v1095
    %v1277 = vunpack.c.l.b16 %v1096
    %v1278 = vunpack.c.h.b16 %v1096
    %v1279 = vunpack.c.l.b16 %v1097
    %v1280 = vunpack.c.h.b16 %v1097
    %v1281 = vunpack.c.l.b16 %v1098
    %v1282 = vunpack.c.h.b16 %v1098
    %v1283 = vunpack.c.l.b16 %v1099
    %v1284 = vunpack.c.h.b16 %v1099
    %v1285 = vunpack.c.l.b16 %v1100
    %v1286 = vunpack.c.h.b16 %v1100
    %v1287 = vunpack.c.l.b16 %v1101
    %v1288 = vunpack.c.h.b16 %v1101
    %v1289 = vunpack.c.l.b16 %v1102
    %v1290 = vunpack.c.h.b16 %v1102
    %v1291 = vunpack.c.l.b16 %v1103
    %v1292 = vunpack.c.h.b16 %v1103
    %v1293 = vunpack.c.l.b16 %v1104
    %v1294 = vunpack.c.h.b16 %v1104
    %v1295 = vunpack.c.l.b16 %v1105
    %v1296 = vunpack.c.h.b16 %v1105
    %v1297 = vunpack.c.l.b16 %v1106
    %v1298 = vunpack.c.h.b16 %v1106
    %v1299 = vunpack.c.l.b16 %v1107
    %v1300 = vunpack.c.h.b16 %v1107
    %v1301 = vunpack.c.l.b16 %v1108
    %v1302 = vunpack.c.h.b16 %v1108
    %v1303 = vunpack.c.l.b16 %v1109
    %v1304 = vunpack.c.h.b16 %v1109
    %v1305 = vunpack.c.l.b16 %v1110
    %v1306 = vunpack.c.h.b16 %v1110
    %v1307 = vunpack.c.l.b16 %v1111
    %v1308 = vunpack.c.h.b16 %v1111
    %v1309 = vpack.c.b16 %v1183, %v1181
    %v1310 = vpack.c.b16 %v1184, %v1182
    %v1311 = vpack.c.b16 %v1187, %v1185
    %v1312 = vpack.c.b16 %v1188, %v1186
    %v1313 = vpack.c.b16 %v1191, %v1189
    %v1314 = vpack.c.b16 %v1192, %v1190
    %v1315 = vpack.c.b16 %v1195, %v1193
    %v1316 = vpack.c.b16 %v1196, %v1194
    %v1317 = vpack.c.b16 %v1199, %v1197
    %v1318 = vpack.c.b16 %v1200, %v1198
    %v1319 = vpack.c.b16 %v1203, %v1201
    %v1320 = vpack.c.b16 %v1204, %v1202
    %v1321 = vpack.c.b16 %v1207, %v1205
    %v1322 = vpack.c.b16 %v1208, %v1206
    %v1323 = vpack.c.b16 %v1211, %v1209
    %v1324 = vpack.c.b16 %v1212, %v1210
    %v1325 = vpack.c.b16 %v1215, %v1213
    %v1326 = vpack.c.b16 %v1216, %v1214
    %v1327 = vpack.c.b16 %v1219, %v1217
    %v1328 = vpack.c.b16 %v1220, %v1218
    %v1329 = vpack.c.b16 %v1223, %v1221
    %v1330 = vpack.c.b16 %v1224, %v1222
    %v1331 = vpack.c.b16 %v1227, %v1225
    %v1332 = vpack.c.b16 %v1228, %v1226
    %v1333 = vpack.c.b16 %v1231, %v1229
    %v1334 = vpack.c.b16 %v1232, %v1230
    %v1335 = vpack.c.b16 %v1235, %v1233
    %v1336 = vpack.c.b16 %v1236, %v1234
    %v1337 = vpack.c.b16 %v1239, %v1237
    %v1338 = vpack.c.b16 %v1240, %v1238
    %v1339 = vpack.c.b16 %v1243, %v1241
    %v1340 = vpack.c.b16 %v1244, %v1242
    %v1341 = vpack.c.b16 %v1247, %v1245
    %v1342 = vpack.c.b16 %v1248, %v1246
    %v1343 = vpack.c.b16 %v1251, %v1249
    %v1344 = vpack.c.b16 %v1252, %v1250
    %v1345 = vpack.c.b16 %v1255, %v1253
    %v1346 = vpack.c.b16 %v1256, %v1254
    %v1347 = vpack.c.b16 %v1259, %v1257
    %v1348 = vpack.c.b16 %v1260, %v1258
    %v1349 = vpack.c.b16 %v1263, %v1261
    %v1350 = vpack.c.b16 %v1264, %v1262
    %v1351 = vpack.c.b16 %v1267, %v1265
    %v1352 = vpack.c.b16 %v1268, %v1266
    %v1353 = vpack.c.b16 %v1271, %v1269
    %v1354 = vpack.c.b16 %v1272, %v1270
    %v1355 = vpack.c.b16 %v1275, %v1273
    %v1356 = vpack.c.b16 %v1276, %v1274
    %v1357 = vpack.c.b16 %v1279, %v1277
    %v1358 = vpack.c.b16 %v1280, %v1278
    %v1359 = vpack.c.b16 %v1283, %v1281
    %v1360 = vpack.c.b16 %v1284, %v1282
    %v1361 = vpack.c.b16 %v1287, %v1285
    %v1362 = vpack.c.b16 %v1288, %v1286
    %v1363 = vpack.c.b16 %v1291, %v1289
    %v1364 = vpack.c.b16 %v1292, %v1290
    %v1365 = vpack.c.b16 %v1295, %v1293
    %v1366 = vpack.c.b16 %v1296, %v1294
    %v1367 = vpack.c.b16 %v1299, %v1297
    %v1368 = vpack.c.b16 %v1300, %v1298
    %v1369 = vpack.c.b16 %v1303, %v1301
    %v1370 = vpack.c.b16 %v1304, %v1302
    %v1371 = vpack.c.b16 %v1307, %v1305
    %v1372 = vpack.c.b16 %v1308, %v1306
    %1437 = vmatpush.bf16.msra.mxu0 %v1323
    %1438 = vmatpush.bf16.msra.mxu0 %v1321
    %1439 = vmatpush.bf16.msra.mxu0 %v1319
    %1440 = vmatpush.bf16.msra.mxu0 %v1317
    %1441 = vmatpush.bf16.msra.mxu0 %v1315
    %1442 = vmatpush.bf16.msra.mxu0 %v1313
    %1443 = vmatpush.bf16.msra.mxu0 %v1311
    %1444 = vmatpush.bf16.msra.mxu0 %v1309
    %1445 = vmatmul.bf16.gmra.mxu0 %v984
    %v1446 = vpop.f32.mrf.mxu0
    %v1447 = vadd.f32 %v1113, %v1446
    %v1448 = vpop.f32.mrf.mxu0
    %v1449 = vadd.f32 %v1113, %v1448
    %1450 = vmatmul.bf16.gmra.mxu0 %v988
    %v1451 = vpop.f32.mrf.mxu0
    %v1452 = vadd.f32 %v1113, %v1451
    %v1453 = vpop.f32.mrf.mxu0
    %v1454 = vadd.f32 %v1113, %v1453
    %1455 = vmatmul.bf16.gmra.mxu0 %v992
    %v1456 = vpop.f32.mrf.mxu0
    %v1457 = vadd.f32 %v1113, %v1456
    %v1458 = vpop.f32.mrf.mxu0
    %v1459 = vadd.f32 %v1113, %v1458
    %1460 = vmatmul.bf16.gmra.mxu0 %v996
    %v1461 = vpop.f32.mrf.mxu0
    %v1462 = vadd.f32 %v1113, %v1461
    %v1463 = vpop.f32.mrf.mxu0
    %v1464 = vadd.f32 %v1113, %v1463
    %1465 = vmatmul.bf16.gmra.mxu0 %v1000
    %v1466 = vpop.f32.mrf.mxu0
    %v1467 = vadd.f32 %v1113, %v1466
    %v1468 = vpop.f32.mrf.mxu0
    %v1469 = vadd.f32 %v1113, %v1468
    %1470 = vmatmul.bf16.gmra.mxu0 %v1004
    %v1471 = vpop.f32.mrf.mxu0
    %v1472 = vadd.f32 %v1113, %v1471
    %v1473 = vpop.f32.mrf.mxu0
    %v1474 = vadd.f32 %v1113, %v1473
    %1475 = vmatmul.bf16.gmra.mxu0 %v1008
    %v1476 = vpop.f32.mrf.mxu0
    %v1477 = vadd.f32 %v1113, %v1476
    %v1478 = vpop.f32.mrf.mxu0
    %v1479 = vadd.f32 %v1113, %v1478
    %1480 = vmatmul.bf16.gmra.mxu0 %v1012
    %v1481 = vpop.f32.mrf.mxu0
    %v1482 = vadd.f32 %v1113, %v1481
    %v1483 = vpop.f32.mrf.mxu0
    %v1484 = vadd.f32 %v1113, %v1483
    %1485 = vmatmul.bf16.gmra.mxu0 %v1016
    %v1486 = vpop.f32.mrf.mxu0
    %v1487 = vadd.f32 %v1113, %v1486
    %v1488 = vpop.f32.mrf.mxu0
    %v1489 = vadd.f32 %v1113, %v1488
    %1490 = vmatmul.bf16.gmra.mxu0 %v1020
    %v1491 = vpop.f32.mrf.mxu0
    %v1492 = vadd.f32 %v1113, %v1491
    %v1493 = vpop.f32.mrf.mxu0
    %v1494 = vadd.f32 %v1113, %v1493
    %1495 = vmatmul.bf16.gmra.mxu0 %v1024
    %v1496 = vpop.f32.mrf.mxu0
    %v1497 = vadd.f32 %v1113, %v1496
    %v1498 = vpop.f32.mrf.mxu0
    %v1499 = vadd.f32 %v1113, %v1498
    %1500 = vmatmul.bf16.gmra.mxu0 %v1028
    %v1501 = vpop.f32.mrf.mxu0
    %v1502 = vadd.f32 %v1113, %v1501
    %v1503 = vpop.f32.mrf.mxu0
    %v1504 = vadd.f32 %v1113, %v1503
    %1505 = vmatmul.bf16.gmra.mxu0 %v1032
    %v1506 = vpop.f32.mrf.mxu0
    %v1507 = vadd.f32 %v1113, %v1506
    %v1508 = vpop.f32.mrf.mxu0
    %v1509 = vadd.f32 %v1113, %v1508
    %1510 = vmatmul.bf16.gmra.mxu0 %v1036
    %v1511 = vpop.f32.mrf.mxu0
    %v1512 = vadd.f32 %v1113, %v1511
    %v1513 = vpop.f32.mrf.mxu0
    %v1514 = vadd.f32 %v1113, %v1513
    %1515 = vmatmul.bf16.gmra.mxu0 %v1040
    %v1516 = vpop.f32.mrf.mxu0
    %v1517 = vadd.f32 %v1113, %v1516
    %v1518 = vpop.f32.mrf.mxu0
    %v1519 = vadd.f32 %v1113, %v1518
    %1520 = vmatmul.bf16.gmra.mxu0 %v1044
    %v1521 = vpop.f32.mrf.mxu0
    %v1522 = vadd.f32 %v1113, %v1521
    %v1523 = vpop.f32.mrf.mxu0
    %v1524 = vadd.f32 %v1113, %v1523
    %1525 = vdwg.mxu0
    %1526 = vmatpush.bf16.msra.mxu0 %v1339
    %1527 = vmatpush.bf16.msra.mxu0 %v1337
    %1528 = vmatpush.bf16.msra.mxu0 %v1335
    %1529 = vmatpush.bf16.msra.mxu0 %v1333
    %1530 = vmatpush.bf16.msra.mxu0 %v1331
    %1531 = vmatpush.bf16.msra.mxu0 %v1329
    %1532 = vmatpush.bf16.msra.mxu0 %v1327
    %1533 = vmatpush.bf16.msra.mxu0 %v1325
    %1534 = vmatmul.bf16.gmra.mxu0 %v985
    %v1535 = vpop.f32.mrf.mxu0
    %v1536 = vadd.f32 %v1447, %v1535
    %v1537 = vpop.f32.mrf.mxu0
    %v1538 = vadd.f32 %v1449, %v1537
    %1539 = vmatmul.bf16.gmra.mxu0 %v989
    %v1540 = vpop.f32.mrf.mxu0
    %v1541 = vadd.f32 %v1452, %v1540
    %v1542 = vpop.f32.mrf.mxu0
    %v1543 = vadd.f32 %v1454, %v1542
    %1544 = vmatmul.bf16.gmra.mxu0 %v993
    %v1545 = vpop.f32.mrf.mxu0
    %v1546 = vadd.f32 %v1457, %v1545
    %v1547 = vpop.f32.mrf.mxu0
    %v1548 = vadd.f32 %v1459, %v1547
    %1549 = vmatmul.bf16.gmra.mxu0 %v997
    %v1550 = vpop.f32.mrf.mxu0
    %v1551 = vadd.f32 %v1462, %v1550
    %v1552 = vpop.f32.mrf.mxu0
    %v1553 = vadd.f32 %v1464, %v1552
    %1554 = vmatmul.bf16.gmra.mxu0 %v1001
    %v1555 = vpop.f32.mrf.mxu0
    %v1556 = vadd.f32 %v1467, %v1555
    %v1557 = vpop.f32.mrf.mxu0
    %v1558 = vadd.f32 %v1469, %v1557
    %1559 = vmatmul.bf16.gmra.mxu0 %v1005
    %v1560 = vpop.f32.mrf.mxu0
    %v1561 = vadd.f32 %v1472, %v1560
    %v1562 = vpop.f32.mrf.mxu0
    %v1563 = vadd.f32 %v1474, %v1562
    %1564 = vmatmul.bf16.gmra.mxu0 %v1009
    %v1565 = vpop.f32.mrf.mxu0
    %v1566 = vadd.f32 %v1477, %v1565
    %v1567 = vpop.f32.mrf.mxu0
    %v1568 = vadd.f32 %v1479, %v1567
    %1569 = vmatmul.bf16.gmra.mxu0 %v1013
    %v1570 = vpop.f32.mrf.mxu0
    %v1571 = vadd.f32 %v1482, %v1570
    %v1572 = vpop.f32.mrf.mxu0
    %v1573 = vadd.f32 %v1484, %v1572
    %1574 = vmatmul.bf16.gmra.mxu0 %v1017
    %v1575 = vpop.f32.mrf.mxu0
    %v1576 = vadd.f32 %v1487, %v1575
    %v1577 = vpop.f32.mrf.mxu0
    %v1578 = vadd.f32 %v1489, %v1577
    %1579 = vmatmul.bf16.gmra.mxu0 %v1021
    %v1580 = vpop.f32.mrf.mxu0
    %v1581 = vadd.f32 %v1492, %v1580
    %v1582 = vpop.f32.mrf.mxu0
    %v1583 = vadd.f32 %v1494, %v1582
    %1584 = vmatmul.bf16.gmra.mxu0 %v1025
    %v1585 = vpop.f32.mrf.mxu0
    %v1586 = vadd.f32 %v1497, %v1585
    %v1587 = vpop.f32.mrf.mxu0
    %v1588 = vadd.f32 %v1499, %v1587
    %1589 = vmatmul.bf16.gmra.mxu0 %v1029
    %v1590 = vpop.f32.mrf.mxu0
    %v1591 = vadd.f32 %v1502, %v1590
    %v1592 = vpop.f32.mrf.mxu0
    %v1593 = vadd.f32 %v1504, %v1592
    %1594 = vmatmul.bf16.gmra.mxu0 %v1033
    %v1595 = vpop.f32.mrf.mxu0
    %v1596 = vadd.f32 %v1507, %v1595
    %v1597 = vpop.f32.mrf.mxu0
    %v1598 = vadd.f32 %v1509, %v1597
    %1599 = vmatmul.bf16.gmra.mxu0 %v1037
    %v1600 = vpop.f32.mrf.mxu0
    %v1601 = vadd.f32 %v1512, %v1600
    %v1602 = vpop.f32.mrf.mxu0
    %v1603 = vadd.f32 %v1514, %v1602
    %1604 = vmatmul.bf16.gmra.mxu0 %v1041
    %v1605 = vpop.f32.mrf.mxu0
    %v1606 = vadd.f32 %v1517, %v1605
    %v1607 = vpop.f32.mrf.mxu0
    %v1608 = vadd.f32 %v1519, %v1607
    %1609 = vmatmul.bf16.gmra.mxu0 %v1045
    %v1610 = vpop.f32.mrf.mxu0
    %v1611 = vadd.f32 %v1522, %v1610
    %v1612 = vpop.f32.mrf.mxu0
    %v1613 = vadd.f32 %v1524, %v1612
    %1614 = vdwg.mxu0
    %1615 = vmatpush.bf16.msra.mxu0 %v1355
    %1616 = vmatpush.bf16.msra.mxu0 %v1353
    %1617 = vmatpush.bf16.msra.mxu0 %v1351
    %1618 = vmatpush.bf16.msra.mxu0 %v1349
    %1619 = vmatpush.bf16.msra.mxu0 %v1347
    %1620 = vmatpush.bf16.msra.mxu0 %v1345
    %1621 = vmatpush.bf16.msra.mxu0 %v1343
    %1622 = vmatpush.bf16.msra.mxu0 %v1341
    %1623 = vmatmul.bf16.gmra.mxu0 %v986
    %v1624 = vpop.f32.mrf.mxu0
    %v1625 = vadd.f32 %v1536, %v1624
    %v1626 = vpop.f32.mrf.mxu0
    %v1627 = vadd.f32 %v1538, %v1626
    %1628 = vmatmul.bf16.gmra.mxu0 %v990
    %v1629 = vpop.f32.mrf.mxu0
    %v1630 = vadd.f32 %v1541, %v1629
    %v1631 = vpop.f32.mrf.mxu0
    %v1632 = vadd.f32 %v1543, %v1631
    %1633 = vmatmul.bf16.gmra.mxu0 %v994
    %v1634 = vpop.f32.mrf.mxu0
    %v1635 = vadd.f32 %v1546, %v1634
    %v1636 = vpop.f32.mrf.mxu0
    %v1637 = vadd.f32 %v1548, %v1636
    %1638 = vmatmul.bf16.gmra.mxu0 %v998
    %v1639 = vpop.f32.mrf.mxu0
    %v1640 = vadd.f32 %v1551, %v1639
    %v1641 = vpop.f32.mrf.mxu0
    %v1642 = vadd.f32 %v1553, %v1641
    %1643 = vmatmul.bf16.gmra.mxu0 %v1002
    %v1644 = vpop.f32.mrf.mxu0
    %v1645 = vadd.f32 %v1556, %v1644
    %v1646 = vpop.f32.mrf.mxu0
    %v1647 = vadd.f32 %v1558, %v1646
    %1648 = vmatmul.bf16.gmra.mxu0 %v1006
    %v1649 = vpop.f32.mrf.mxu0
    %v1650 = vadd.f32 %v1561, %v1649
    %v1651 = vpop.f32.mrf.mxu0
    %v1652 = vadd.f32 %v1563, %v1651
    %1653 = vmatmul.bf16.gmra.mxu0 %v1010
    %v1654 = vpop.f32.mrf.mxu0
    %v1655 = vadd.f32 %v1566, %v1654
    %v1656 = vpop.f32.mrf.mxu0
    %v1657 = vadd.f32 %v1568, %v1656
    %1658 = vmatmul.bf16.gmra.mxu0 %v1014
    %v1659 = vpop.f32.mrf.mxu0
    %v1660 = vadd.f32 %v1571, %v1659
    %v1661 = vpop.f32.mrf.mxu0
    %v1662 = vadd.f32 %v1573, %v1661
    %1663 = vmatmul.bf16.gmra.mxu0 %v1018
    %v1664 = vpop.f32.mrf.mxu0
    %v1665 = vadd.f32 %v1576, %v1664
    %v1666 = vpop.f32.mrf.mxu0
    %v1667 = vadd.f32 %v1578, %v1666
    %1668 = vmatmul.bf16.gmra.mxu0 %v1022
    %v1669 = vpop.f32.mrf.mxu0
    %v1670 = vadd.f32 %v1581, %v1669
    %v1671 = vpop.f32.mrf.mxu0
    %v1672 = vadd.f32 %v1583, %v1671
    %1673 = vmatmul.bf16.gmra.mxu0 %v1026
    %v1674 = vpop.f32.mrf.mxu0
    %v1675 = vadd.f32 %v1586, %v1674
    %v1676 = vpop.f32.mrf.mxu0
    %v1677 = vadd.f32 %v1588, %v1676
    %1678 = vmatmul.bf16.gmra.mxu0 %v1030
    %v1679 = vpop.f32.mrf.mxu0
    %v1680 = vadd.f32 %v1591, %v1679
    %v1681 = vpop.f32.mrf.mxu0
    %v1682 = vadd.f32 %v1593, %v1681
    %1683 = vmatmul.bf16.gmra.mxu0 %v1034
    %v1684 = vpop.f32.mrf.mxu0
    %v1685 = vadd.f32 %v1596, %v1684
    %v1686 = vpop.f32.mrf.mxu0
    %v1687 = vadd.f32 %v1598, %v1686
    %1688 = vmatmul.bf16.gmra.mxu0 %v1038
    %v1689 = vpop.f32.mrf.mxu0
    %v1690 = vadd.f32 %v1601, %v1689
    %v1691 = vpop.f32.mrf.mxu0
    %v1692 = vadd.f32 %v1603, %v1691
    %1693 = vmatmul.bf16.gmra.mxu0 %v1042
    %v1694 = vpop.f32.mrf.mxu0
    %v1695 = vadd.f32 %v1606, %v1694
    %v1696 = vpop.f32.mrf.mxu0
    %v1697 = vadd.f32 %v1608, %v1696
    %1698 = vmatmul.bf16.gmra.mxu0 %v1046
    %v1699 = vpop.f32.mrf.mxu0
    %v1700 = vadd.f32 %v1611, %v1699
    %v1701 = vpop.f32.mrf.mxu0
    %v1702 = vadd.f32 %v1613, %v1701
    %1703 = vdwg.mxu0
    %1704 = vmatpush.bf16.msra.mxu0 %v1371
    %1705 = vmatpush.bf16.msra.mxu0 %v1369
    %1706 = vmatpush.bf16.msra.mxu0 %v1367
    %1707 = vmatpush.bf16.msra.mxu0 %v1365
    %1708 = vmatpush.bf16.msra.mxu0 %v1363
    %1709 = vmatpush.bf16.msra.mxu0 %v1361
    %1710 = vmatpush.bf16.msra.mxu0 %v1359
    %1711 = vmatpush.bf16.msra.mxu0 %v1357
    %1712 = vmatmul.bf16.gmra.mxu0 %v987
    %v1713 = vpop.f32.mrf.mxu0
    %v1714 = vadd.f32 %v1625, %v1713
    %v1715 = vpop.f32.mrf.mxu0
    %v1716 = vadd.f32 %v1627, %v1715
    %1717 = vmatmul.bf16.gmra.mxu0 %v991
    %v1718 = vpop.f32.mrf.mxu0
    %v1719 = vadd.f32 %v1630, %v1718
    %v1720 = vpop.f32.mrf.mxu0
    %v1721 = vadd.f32 %v1632, %v1720
    %1722 = vmatmul.bf16.gmra.mxu0 %v995
    %v1723 = vpop.f32.mrf.mxu0
    %v1724 = vadd.f32 %v1635, %v1723
    %v1725 = vpop.f32.mrf.mxu0
    %v1726 = vadd.f32 %v1637, %v1725
    %1727 = vmatmul.bf16.gmra.mxu0 %v999
    %v1728 = vpop.f32.mrf.mxu0
    %v1729 = vadd.f32 %v1640, %v1728
    %v1730 = vpop.f32.mrf.mxu0
    %v1731 = vadd.f32 %v1642, %v1730
    %1732 = vmatmul.bf16.gmra.mxu0 %v1003
    %v1733 = vpop.f32.mrf.mxu0
    %v1734 = vadd.f32 %v1645, %v1733
    %v1735 = vpop.f32.mrf.mxu0
    %v1736 = vadd.f32 %v1647, %v1735
    %1737 = vmatmul.bf16.gmra.mxu0 %v1007
    %v1738 = vpop.f32.mrf.mxu0
    %v1739 = vadd.f32 %v1650, %v1738
    %v1740 = vpop.f32.mrf.mxu0
    %v1741 = vadd.f32 %v1652, %v1740
    %1742 = vmatmul.bf16.gmra.mxu0 %v1011
    %v1743 = vpop.f32.mrf.mxu0
    %v1744 = vadd.f32 %v1655, %v1743
    %v1745 = vpop.f32.mrf.mxu0
    %v1746 = vadd.f32 %v1657, %v1745
    %1747 = vmatmul.bf16.gmra.mxu0 %v1015
    %v1748 = vpop.f32.mrf.mxu0
    %v1749 = vadd.f32 %v1660, %v1748
    %v1750 = vpop.f32.mrf.mxu0
    %v1751 = vadd.f32 %v1662, %v1750
    %1752 = vmatmul.bf16.gmra.mxu0 %v1019
    %v1753 = vpop.f32.mrf.mxu0
    %v1754 = vadd.f32 %v1665, %v1753
    %v1755 = vpop.f32.mrf.mxu0
    %v1756 = vadd.f32 %v1667, %v1755
    %1757 = vmatmul.bf16.gmra.mxu0 %v1023
    %v1758 = vpop.f32.mrf.mxu0
    %v1759 = vadd.f32 %v1670, %v1758
    %v1760 = vpop.f32.mrf.mxu0
    %v1761 = vadd.f32 %v1672, %v1760
    %1762 = vmatmul.bf16.gmra.mxu0 %v1027
    %v1763 = vpop.f32.mrf.mxu0
    %v1764 = vadd.f32 %v1675, %v1763
    %v1765 = vpop.f32.mrf.mxu0
    %v1766 = vadd.f32 %v1677, %v1765
    %1767 = vmatmul.bf16.gmra.mxu0 %v1031
    %v1768 = vpop.f32.mrf.mxu0
    %v1769 = vadd.f32 %v1680, %v1768
    %v1770 = vpop.f32.mrf.mxu0
    %v1771 = vadd.f32 %v1682, %v1770
    %1772 = vmatmul.bf16.gmra.mxu0 %v1035
    %v1773 = vpop.f32.mrf.mxu0
    %v1774 = vadd.f32 %v1685, %v1773
    %v1775 = vpop.f32.mrf.mxu0
    %v1776 = vadd.f32 %v1687, %v1775
    %1777 = vmatmul.bf16.gmra.mxu0 %v1039
    %v1778 = vpop.f32.mrf.mxu0
    %v1779 = vadd.f32 %v1690, %v1778
    %v1780 = vpop.f32.mrf.mxu0
    %v1781 = vadd.f32 %v1692, %v1780
    %1782 = vmatmul.bf16.gmra.mxu0 %v1043
    %v1783 = vpop.f32.mrf.mxu0
    %v1784 = vadd.f32 %v1695, %v1783
    %v1785 = vpop.f32.mrf.mxu0
    %v1786 = vadd.f32 %v1697, %v1785
    %1787 = vmatmul.bf16.gmra.mxu0 %v1047
    %v1788 = vpop.f32.mrf.mxu0
    %v1789 = vadd.f32 %v1700, %v1788
    %v1790 = vpop.f32.mrf.mxu0
    %v1791 = vadd.f32 %v1702, %v1790
    %1792 = vdwg.mxu0
    %1793 = vmatpush.bf16.msra.mxu0 %v1324
    %1794 = vmatpush.bf16.msra.mxu0 %v1322
    %1795 = vmatpush.bf16.msra.mxu0 %v1320
    %1796 = vmatpush.bf16.msra.mxu0 %v1318
    %1797 = vmatpush.bf16.msra.mxu0 %v1316
    %1798 = vmatpush.bf16.msra.mxu0 %v1314
    %1799 = vmatpush.bf16.msra.mxu0 %v1312
    %1800 = vmatpush.bf16.msra.mxu0 %v1310
    %1801 = vmatmul.bf16.gmra.mxu0 %v984
    %v1802 = vpop.f32.mrf.mxu0
    %v1803 = vadd.f32 %v1114, %v1802
    %v1804 = vpop.f32.mrf.mxu0
    %v1805 = vadd.f32 %v1114, %v1804
    %1806 = vmatmul.bf16.gmra.mxu0 %v988
    %v1807 = vpop.f32.mrf.mxu0
    %v1808 = vadd.f32 %v1114, %v1807
    %v1809 = vpop.f32.mrf.mxu0
    %v1810 = vadd.f32 %v1114, %v1809
    %1811 = vmatmul.bf16.gmra.mxu0 %v992
    %v1812 = vpop.f32.mrf.mxu0
    %v1813 = vadd.f32 %v1114, %v1812
    %v1814 = vpop.f32.mrf.mxu0
    %v1815 = vadd.f32 %v1114, %v1814
    %1816 = vmatmul.bf16.gmra.mxu0 %v996
    %v1817 = vpop.f32.mrf.mxu0
    %v1818 = vadd.f32 %v1114, %v1817
    %v1819 = vpop.f32.mrf.mxu0
    %v1820 = vadd.f32 %v1114, %v1819
    %1821 = vmatmul.bf16.gmra.mxu0 %v1000
    %v1822 = vpop.f32.mrf.mxu0
    %v1823 = vadd.f32 %v1114, %v1822
    %v1824 = vpop.f32.mrf.mxu0
    %v1825 = vadd.f32 %v1114, %v1824
    %1826 = vmatmul.bf16.gmra.mxu0 %v1004
    %v1827 = vpop.f32.mrf.mxu0
    %v1828 = vadd.f32 %v1114, %v1827
    %v1829 = vpop.f32.mrf.mxu0
    %v1830 = vadd.f32 %v1114, %v1829
    %1831 = vmatmul.bf16.gmra.mxu0 %v1008
    %v1832 = vpop.f32.mrf.mxu0
    %v1833 = vadd.f32 %v1114, %v1832
    %v1834 = vpop.f32.mrf.mxu0
    %v1835 = vadd.f32 %v1114, %v1834
    %1836 = vmatmul.bf16.gmra.mxu0 %v1012
    %v1837 = vpop.f32.mrf.mxu0
    %v1838 = vadd.f32 %v1114, %v1837
    %v1839 = vpop.f32.mrf.mxu0
    %v1840 = vadd.f32 %v1114, %v1839
    %1841 = vmatmul.bf16.gmra.mxu0 %v1016
    %v1842 = vpop.f32.mrf.mxu0
    %v1843 = vadd.f32 %v1114, %v1842
    %v1844 = vpop.f32.mrf.mxu0
    %v1845 = vadd.f32 %v1114, %v1844
    %1846 = vmatmul.bf16.gmra.mxu0 %v1020
    %v1847 = vpop.f32.mrf.mxu0
    %v1848 = vadd.f32 %v1114, %v1847
    %v1849 = vpop.f32.mrf.mxu0
    %v1850 = vadd.f32 %v1114, %v1849
    %1851 = vmatmul.bf16.gmra.mxu0 %v1024
    %v1852 = vpop.f32.mrf.mxu0
    %v1853 = vadd.f32 %v1114, %v1852
    %v1854 = vpop.f32.mrf.mxu0
    %v1855 = vadd.f32 %v1114, %v1854
    %1856 = vmatmul.bf16.gmra.mxu0 %v1028
    %v1857 = vpop.f32.mrf.mxu0
    %v1858 = vadd.f32 %v1114, %v1857
    %v1859 = vpop.f32.mrf.mxu0
    %v1860 = vadd.f32 %v1114, %v1859
    %1861 = vmatmul.bf16.gmra.mxu0 %v1032
    %v1862 = vpop.f32.mrf.mxu0
    %v1863 = vadd.f32 %v1114, %v1862
    %v1864 = vpop.f32.mrf.mxu0
    %v1865 = vadd.f32 %v1114, %v1864
    %1866 = vmatmul.bf16.gmra.mxu0 %v1036
    %v1867 = vpop.f32.mrf.mxu0
    %v1868 = vadd.f32 %v1114, %v1867
    %v1869 = vpop.f32.mrf.mxu0
    %v1870 = vadd.f32 %v1114, %v1869
    %1871 = vmatmul.bf16.gmra.mxu0 %v1040
    %v1872 = vpop.f32.mrf.mxu0
    %v1873 = vadd.f32 %v1114, %v1872
    %v1874 = vpop.f32.mrf.mxu0
    %v1875 = vadd.f32 %v1114, %v1874
    %1876 = vmatmul.bf16.gmra.mxu0 %v1044
    %v1877 = vpop.f32.mrf.mxu0
    %v1878 = vadd.f32 %v1114, %v1877
    %v1879 = vpop.f32.mrf.mxu0
    %v1880 = vadd.f32 %v1114, %v1879
    %1881 = vdwg.mxu0
    %1882 = vmatpush.bf16.msra.mxu0 %v1340
    %1883 = vmatpush.bf16.msra.mxu0 %v1338
    %1884 = vmatpush.bf16.msra.mxu0 %v1336
    %1885 = vmatpush.bf16.msra.mxu0 %v1334
    %1886 = vmatpush.bf16.msra.mxu0 %v1332
    %1887 = vmatpush.bf16.msra.mxu0 %v1330
    %1888 = vmatpush.bf16.msra.mxu0 %v1328
    %1889 = vmatpush.bf16.msra.mxu0 %v1326
    %1890 = vmatmul.bf16.gmra.mxu0 %v985
    %v1891 = vpop.f32.mrf.mxu0
    %v1892 = vadd.f32 %v1803, %v1891
    %v1893 = vpop.f32.mrf.mxu0
    %v1894 = vadd.f32 %v1805, %v1893
    %1895 = vmatmul.bf16.gmra.mxu0 %v989
    %v1896 = vpop.f32.mrf.mxu0
    %v1897 = vadd.f32 %v1808, %v1896
    %v1898 = vpop.f32.mrf.mxu0
    %v1899 = vadd.f32 %v1810, %v1898
    %1900 = vmatmul.bf16.gmra.mxu0 %v993
    %v1901 = vpop.f32.mrf.mxu0
    %v1902 = vadd.f32 %v1813, %v1901
    %v1903 = vpop.f32.mrf.mxu0
    %v1904 = vadd.f32 %v1815, %v1903
    %1905 = vmatmul.bf16.gmra.mxu0 %v997
    %v1906 = vpop.f32.mrf.mxu0
    %v1907 = vadd.f32 %v1818, %v1906
    %v1908 = vpop.f32.mrf.mxu0
    %v1909 = vadd.f32 %v1820, %v1908
    %1910 = vmatmul.bf16.gmra.mxu0 %v1001
    %v1911 = vpop.f32.mrf.mxu0
    %v1912 = vadd.f32 %v1823, %v1911
    %v1913 = vpop.f32.mrf.mxu0
    %v1914 = vadd.f32 %v1825, %v1913
    %1915 = vmatmul.bf16.gmra.mxu0 %v1005
    %v1916 = vpop.f32.mrf.mxu0
    %v1917 = vadd.f32 %v1828, %v1916
    %v1918 = vpop.f32.mrf.mxu0
    %v1919 = vadd.f32 %v1830, %v1918
    %1920 = vmatmul.bf16.gmra.mxu0 %v1009
    %v1921 = vpop.f32.mrf.mxu0
    %v1922 = vadd.f32 %v1833, %v1921
    %v1923 = vpop.f32.mrf.mxu0
    %v1924 = vadd.f32 %v1835, %v1923
    %1925 = vmatmul.bf16.gmra.mxu0 %v1013
    %v1926 = vpop.f32.mrf.mxu0
    %v1927 = vadd.f32 %v1838, %v1926
    %v1928 = vpop.f32.mrf.mxu0
    %v1929 = vadd.f32 %v1840, %v1928
    %1930 = vmatmul.bf16.gmra.mxu0 %v1017
    %v1931 = vpop.f32.mrf.mxu0
    %v1932 = vadd.f32 %v1843, %v1931
    %v1933 = vpop.f32.mrf.mxu0
    %v1934 = vadd.f32 %v1845, %v1933
    %1935 = vmatmul.bf16.gmra.mxu0 %v1021
    %v1936 = vpop.f32.mrf.mxu0
    %v1937 = vadd.f32 %v1848, %v1936
    %v1938 = vpop.f32.mrf.mxu0
    %v1939 = vadd.f32 %v1850, %v1938
    %1940 = vmatmul.bf16.gmra.mxu0 %v1025
    %v1941 = vpop.f32.mrf.mxu0
    %v1942 = vadd.f32 %v1853, %v1941
    %v1943 = vpop.f32.mrf.mxu0
    %v1944 = vadd.f32 %v1855, %v1943
    %1945 = vmatmul.bf16.gmra.mxu0 %v1029
    %v1946 = vpop.f32.mrf.mxu0
    %v1947 = vadd.f32 %v1858, %v1946
    %v1948 = vpop.f32.mrf.mxu0
    %v1949 = vadd.f32 %v1860, %v1948
    %1950 = vmatmul.bf16.gmra.mxu0 %v1033
    %v1951 = vpop.f32.mrf.mxu0
    %v1952 = vadd.f32 %v1863, %v1951
    %v1953 = vpop.f32.mrf.mxu0
    %v1954 = vadd.f32 %v1865, %v1953
    %1955 = vmatmul.bf16.gmra.mxu0 %v1037
    %v1956 = vpop.f32.mrf.mxu0
    %v1957 = vadd.f32 %v1868, %v1956
    %v1958 = vpop.f32.mrf.mxu0
    %v1959 = vadd.f32 %v1870, %v1958
    %1960 = vmatmul.bf16.gmra.mxu0 %v1041
    %v1961 = vpop.f32.mrf.mxu0
    %v1962 = vadd.f32 %v1873, %v1961
    %v1963 = vpop.f32.mrf.mxu0
    %v1964 = vadd.f32 %v1875, %v1963
    %1965 = vmatmul.bf16.gmra.mxu0 %v1045
    %v1966 = vpop.f32.mrf.mxu0
    %v1967 = vadd.f32 %v1878, %v1966
    %v1968 = vpop.f32.mrf.mxu0
    %v1969 = vadd.f32 %v1880, %v1968
    %1970 = vdwg.mxu0
    %1971 = vmatpush.bf16.msra.mxu0 %v1356
    %1972 = vmatpush.bf16.msra.mxu0 %v1354
    %1973 = vmatpush.bf16.msra.mxu0 %v1352
    %1974 = vmatpush.bf16.msra.mxu0 %v1350
    %1975 = vmatpush.bf16.msra.mxu0 %v1348
    %1976 = vmatpush.bf16.msra.mxu0 %v1346
    %1977 = vmatpush.bf16.msra.mxu0 %v1344
    %1978 = vmatpush.bf16.msra.mxu0 %v1342
    %1979 = vmatmul.bf16.gmra.mxu0 %v986
    %v1980 = vpop.f32.mrf.mxu0
    %v1981 = vadd.f32 %v1892, %v1980
    %v1982 = vpop.f32.mrf.mxu0
    %v1983 = vadd.f32 %v1894, %v1982
    %1984 = vmatmul.bf16.gmra.mxu0 %v990
    %v1985 = vpop.f32.mrf.mxu0
    %v1986 = vadd.f32 %v1897, %v1985
    %v1987 = vpop.f32.mrf.mxu0
    %v1988 = vadd.f32 %v1899, %v1987
    %1989 = vmatmul.bf16.gmra.mxu0 %v994
    %v1990 = vpop.f32.mrf.mxu0
    %v1991 = vadd.f32 %v1902, %v1990
    %v1992 = vpop.f32.mrf.mxu0
    %v1993 = vadd.f32 %v1904, %v1992
    %1994 = vmatmul.bf16.gmra.mxu0 %v998
    %v1995 = vpop.f32.mrf.mxu0
    %v1996 = vadd.f32 %v1907, %v1995
    %v1997 = vpop.f32.mrf.mxu0
    %v1998 = vadd.f32 %v1909, %v1997
    %1999 = vmatmul.bf16.gmra.mxu0 %v1002
    %v2000 = vpop.f32.mrf.mxu0
    %v2001 = vadd.f32 %v1912, %v2000
    %v2002 = vpop.f32.mrf.mxu0
    %v2003 = vadd.f32 %v1914, %v2002
    %2004 = vmatmul.bf16.gmra.mxu0 %v1006
    %v2005 = vpop.f32.mrf.mxu0
    %v2006 = vadd.f32 %v1917, %v2005
    %v2007 = vpop.f32.mrf.mxu0
    %v2008 = vadd.f32 %v1919, %v2007
    %2009 = vmatmul.bf16.gmra.mxu0 %v1010
    %v2010 = vpop.f32.mrf.mxu0
    %v2011 = vadd.f32 %v1922, %v2010
    %v2012 = vpop.f32.mrf.mxu0
    %v2013 = vadd.f32 %v1924, %v2012
    %2014 = vmatmul.bf16.gmra.mxu0 %v1014
    %v2015 = vpop.f32.mrf.mxu0
    %v2016 = vadd.f32 %v1927, %v2015
    %v2017 = vpop.f32.mrf.mxu0
    %v2018 = vadd.f32 %v1929, %v2017
    %2019 = vmatmul.bf16.gmra.mxu0 %v1018
    %v2020 = vpop.f32.mrf.mxu0
    %v2021 = vadd.f32 %v1932, %v2020
    %v2022 = vpop.f32.mrf.mxu0
    %v2023 = vadd.f32 %v1934, %v2022
    %2024 = vmatmul.bf16.gmra.mxu0 %v1022
    %v2025 = vpop.f32.mrf.mxu0
    %v2026 = vadd.f32 %v1937, %v2025
    %v2027 = vpop.f32.mrf.mxu0
    %v2028 = vadd.f32 %v1939, %v2027
    %2029 = vmatmul.bf16.gmra.mxu0 %v1026
    %v2030 = vpop.f32.mrf.mxu0
    %v2031 = vadd.f32 %v1942, %v2030
    %v2032 = vpop.f32.mrf.mxu0
    %v2033 = vadd.f32 %v1944, %v2032
    %2034 = vmatmul.bf16.gmra.mxu0 %v1030
    %v2035 = vpop.f32.mrf.mxu0
    %v2036 = vadd.f32 %v1947, %v2035
    %v2037 = vpop.f32.mrf.mxu0
    %v2038 = vadd.f32 %v1949, %v2037
    %2039 = vmatmul.bf16.gmra.mxu0 %v1034
    %v2040 = vpop.f32.mrf.mxu0
    %v2041 = vadd.f32 %v1952, %v2040
    %v2042 = vpop.f32.mrf.mxu0
    %v2043 = vadd.f32 %v1954, %v2042
    %2044 = vmatmul.bf16.gmra.mxu0 %v1038
    %v2045 = vpop.f32.mrf.mxu0
    %v2046 = vadd.f32 %v1957, %v2045
    %v2047 = vpop.f32.mrf.mxu0
    %v2048 = vadd.f32 %v1959, %v2047
    %2049 = vmatmul.bf16.gmra.mxu0 %v1042
    %v2050 = vpop.f32.mrf.mxu0
    %v2051 = vadd.f32 %v1962, %v2050
    %v2052 = vpop.f32.mrf.mxu0
    %v2053 = vadd.f32 %v1964, %v2052
    %2054 = vmatmul.bf16.gmra.mxu0 %v1046
    %v2055 = vpop.f32.mrf.mxu0
    %v2056 = vadd.f32 %v1967, %v2055
    %v2057 = vpop.f32.mrf.mxu0
    %v2058 = vadd.f32 %v1969, %v2057
    %2059 = vdwg.mxu0
    %2060 = vmatpush.bf16.msra.mxu0 %v1372
    %2061 = vmatpush.bf16.msra.mxu0 %v1370
    %2062 = vmatpush.bf16.msra.mxu0 %v1368
    %2063 = vmatpush.bf16.msra.mxu0 %v1366
    %2064 = vmatpush.bf16.msra.mxu0 %v1364
    %2065 = vmatpush.bf16.msra.mxu0 %v1362
    %2066 = vmatpush.bf16.msra.mxu0 %v1360
    %2067 = vmatpush.bf16.msra.mxu0 %v1358
    %2068 = vmatmul.bf16.gmra.mxu0 %v987
    %v2069 = vpop.f32.mrf.mxu0
    %v2070 = vadd.f32 %v1981, %v2069
    %v2071 = vpop.f32.mrf.mxu0
    %v2072 = vadd.f32 %v1983, %v2071
    %2073 = vmatmul.bf16.gmra.mxu0 %v991
    %v2074 = vpop.f32.mrf.mxu0
    %v2075 = vadd.f32 %v1986, %v2074
    %v2076 = vpop.f32.mrf.mxu0
    %v2077 = vadd.f32 %v1988, %v2076
    %2078 = vmatmul.bf16.gmra.mxu0 %v995
    %v2079 = vpop.f32.mrf.mxu0
    %v2080 = vadd.f32 %v1991, %v2079
    %v2081 = vpop.f32.mrf.mxu0
    %v2082 = vadd.f32 %v1993, %v2081
    %2083 = vmatmul.bf16.gmra.mxu0 %v999
    %v2084 = vpop.f32.mrf.mxu0
    %v2085 = vadd.f32 %v1996, %v2084
    %v2086 = vpop.f32.mrf.mxu0
    %v2087 = vadd.f32 %v1998, %v2086
    %2088 = vmatmul.bf16.gmra.mxu0 %v1003
    %v2089 = vpop.f32.mrf.mxu0
    %v2090 = vadd.f32 %v2001, %v2089
    %v2091 = vpop.f32.mrf.mxu0
    %v2092 = vadd.f32 %v2003, %v2091
    %2093 = vmatmul.bf16.gmra.mxu0 %v1007
    %v2094 = vpop.f32.mrf.mxu0
    %v2095 = vadd.f32 %v2006, %v2094
    %v2096 = vpop.f32.mrf.mxu0
    %v2097 = vadd.f32 %v2008, %v2096
    %2098 = vmatmul.bf16.gmra.mxu0 %v1011
    %v2099 = vpop.f32.mrf.mxu0
    %v2100 = vadd.f32 %v2011, %v2099
    %v2101 = vpop.f32.mrf.mxu0
    %v2102 = vadd.f32 %v2013, %v2101
    %2103 = vmatmul.bf16.gmra.mxu0 %v1015
    %v2104 = vpop.f32.mrf.mxu0
    %v2105 = vadd.f32 %v2016, %v2104
    %v2106 = vpop.f32.mrf.mxu0
    %v2107 = vadd.f32 %v2018, %v2106
    %2108 = vmatmul.bf16.gmra.mxu0 %v1019
    %v2109 = vpop.f32.mrf.mxu0
    %v2110 = vadd.f32 %v2021, %v2109
    %v2111 = vpop.f32.mrf.mxu0
    %v2112 = vadd.f32 %v2023, %v2111
    %2113 = vmatmul.bf16.gmra.mxu0 %v1023
    %v2114 = vpop.f32.mrf.mxu0
    %v2115 = vadd.f32 %v2026, %v2114
    %v2116 = vpop.f32.mrf.mxu0
    %v2117 = vadd.f32 %v2028, %v2116
    %2118 = vmatmul.bf16.gmra.mxu0 %v1027
    %v2119 = vpop.f32.mrf.mxu0
    %v2120 = vadd.f32 %v2031, %v2119
    %v2121 = vpop.f32.mrf.mxu0
    %v2122 = vadd.f32 %v2033, %v2121
    %2123 = vmatmul.bf16.gmra.mxu0 %v1031
    %v2124 = vpop.f32.mrf.mxu0
    %v2125 = vadd.f32 %v2036, %v2124
    %v2126 = vpop.f32.mrf.mxu0
    %v2127 = vadd.f32 %v2038, %v2126
    %2128 = vmatmul.bf16.gmra.mxu0 %v1035
    %v2129 = vpop.f32.mrf.mxu0
    %v2130 = vadd.f32 %v2041, %v2129
    %v2131 = vpop.f32.mrf.mxu0
    %v2132 = vadd.f32 %v2043, %v2131
    %2133 = vmatmul.bf16.gmra.mxu0 %v1039
    %v2134 = vpop.f32.mrf.mxu0
    %v2135 = vadd.f32 %v2046, %v2134
    %v2136 = vpop.f32.mrf.mxu0
    %v2137 = vadd.f32 %v2048, %v2136
    %2138 = vmatmul.bf16.gmra.mxu0 %v1043
    %v2139 = vpop.f32.mrf.mxu0
    %v2140 = vadd.f32 %v2051, %v2139
    %v2141 = vpop.f32.mrf.mxu0
    %v2142 = vadd.f32 %v2053, %v2141
    %2143 = vmatmul.bf16.gmra.mxu0 %v1047
    %v2144 = vpop.f32.mrf.mxu0
    %v2145 = vadd.f32 %v2056, %v2144
    %v2146 = vpop.f32.mrf.mxu0
    %v2147 = vadd.f32 %v2058, %v2146
    %2148 = vdwg.mxu0
    %v2149 = vmax.f32 %v1714, 0.0
    %v2150 = vmax.f32 %v2070, 0.0
    %v2151 = vmax.f32 %v1716, 0.0
    %v2152 = vmax.f32 %v2072, 0.0
    %v2153 = vmax.f32 %v1719, 0.0
    %v2154 = vmax.f32 %v2075, 0.0
    %v2155 = vmax.f32 %v1721, 0.0
    %v2156 = vmax.f32 %v2077, 0.0
    %v2157 = vmax.f32 %v1724, 0.0
    %v2158 = vmax.f32 %v2080, 0.0
    %v2159 = vmax.f32 %v1726, 0.0
    %v2160 = vmax.f32 %v2082, 0.0
    %v2161 = vmax.f32 %v1729, 0.0
    %v2162 = vmax.f32 %v2085, 0.0
    %v2163 = vmax.f32 %v1731, 0.0
    %v2164 = vmax.f32 %v2087, 0.0
    %v2165 = vmax.f32 %v1734, 0.0
    %v2166 = vmax.f32 %v2090, 0.0
    %v2167 = vmax.f32 %v1736, 0.0
    %v2168 = vmax.f32 %v2092, 0.0
    %v2169 = vmax.f32 %v1739, 0.0
    %v2170 = vmax.f32 %v2095, 0.0
    %v2171 = vmax.f32 %v1741, 0.0
    %v2172 = vmax.f32 %v2097, 0.0
    %v2173 = vmax.f32 %v1744, 0.0
    %v2174 = vmax.f32 %v2100, 0.0
    %v2175 = vmax.f32 %v1746, 0.0
    %v2176 = vmax.f32 %v2102, 0.0
    %v2177 = vmax.f32 %v1749, 0.0
    %v2178 = vmax.f32 %v2105, 0.0
    %v2179 = vmax.f32 %v1751, 0.0
    %v2180 = vmax.f32 %v2107, 0.0
    %v2181 = vmax.f32 %v1754, 0.0
    %v2182 = vmax.f32 %v2110, 0.0
    %v2183 = vmax.f32 %v1756, 0.0
    %v2184 = vmax.f32 %v2112, 0.0
    %v2185 = vmax.f32 %v1759, 0.0
    %v2186 = vmax.f32 %v2115, 0.0
    %v2187 = vmax.f32 %v1761, 0.0
    %v2188 = vmax.f32 %v2117, 0.0
    %v2189 = vmax.f32 %v1764, 0.0
    %v2190 = vmax.f32 %v2120, 0.0
    %v2191 = vmax.f32 %v1766, 0.0
    %v2192 = vmax.f32 %v2122, 0.0
    %v2193 = vmax.f32 %v1769, 0.0
    %v2194 = vmax.f32 %v2125, 0.0
    %v2195 = vmax.f32 %v1771, 0.0
    %v2196 = vmax.f32 %v2127, 0.0
    %v2197 = vmax.f32 %v1774, 0.0
    %v2198 = vmax.f32 %v2130, 0.0
    %v2199 = vmax.f32 %v1776, 0.0
    %v2200 = vmax.f32 %v2132, 0.0
    %v2201 = vmax.f32 %v1779, 0.0
    %v2202 = vmax.f32 %v2135, 0.0
    %v2203 = vmax.f32 %v1781, 0.0
    %v2204 = vmax.f32 %v2137, 0.0
    %v2205 = vmax.f32 %v1784, 0.0
    %v2206 = vmax.f32 %v2140, 0.0
    %v2207 = vmax.f32 %v1786, 0.0
    %v2208 = vmax.f32 %v2142, 0.0
    %v2209 = vmax.f32 %v1789, 0.0
    %v2210 = vmax.f32 %v2145, 0.0
    %v2211 = vmax.f32 %v1791, 0.0
    %v2212 = vmax.f32 %v2147, 0.0
    %v2213 = vpack.c.bf16 %v2151, %v2149
    %v2214 = vpack.c.bf16 %v2152, %v2150
    %v2215 = vpack.c.bf16 %v2155, %v2153
    %v2216 = vpack.c.bf16 %v2156, %v2154
    %v2217 = vpack.c.bf16 %v2159, %v2157
    %v2218 = vpack.c.bf16 %v2160, %v2158
    %v2219 = vpack.c.bf16 %v2163, %v2161
    %v2220 = vpack.c.bf16 %v2164, %v2162
    %v2221 = vpack.c.bf16 %v2167, %v2165
    %v2222 = vpack.c.bf16 %v2168, %v2166
    %v2223 = vpack.c.bf16 %v2171, %v2169
    %v2224 = vpack.c.bf16 %v2172, %v2170
    %v2225 = vpack.c.bf16 %v2175, %v2173
    %v2226 = vpack.c.bf16 %v2176, %v2174
    %v2227 = vpack.c.bf16 %v2179, %v2177
    %v2228 = vpack.c.bf16 %v2180, %v2178
    %v2229 = vpack.c.bf16 %v2183, %v2181
    %v2230 = vpack.c.bf16 %v2184, %v2182
    %v2231 = vpack.c.bf16 %v2187, %v2185
    %v2232 = vpack.c.bf16 %v2188, %v2186
    %v2233 = vpack.c.bf16 %v2191, %v2189
    %v2234 = vpack.c.bf16 %v2192, %v2190
    %v2235 = vpack.c.bf16 %v2195, %v2193
    %v2236 = vpack.c.bf16 %v2196, %v2194
    %v2237 = vpack.c.bf16 %v2199, %v2197
    %v2238 = vpack.c.bf16 %v2200, %v2198
    %v2239 = vpack.c.bf16 %v2203, %v2201
    %v2240 = vpack.c.bf16 %v2204, %v2202
    %v2241 = vpack.c.bf16 %v2207, %v2205
    %v2242 = vpack.c.bf16 %v2208, %v2206
    %v2243 = vpack.c.bf16 %v2211, %v2209
    %v2244 = vpack.c.bf16 %v2212, %v2210
    %v2245 = vld [vmem:[#allocation10] sm:$0xff]
    %v2246 = vld [vmem:[#allocation10 + $0x8] sm:$0xff]
    %v2247 = vld [vmem:[#allocation10 + $0x10] sm:$0xff]
    %v2248 = vld [vmem:[#allocation10 + $0x18] sm:$0xff]
    %v2249 = vld [vmem:[#allocation10 + $0x20] sm:$0xff]
    %v2250 = vld [vmem:[#allocation10 + $0x28] sm:$0xff]
    %v2251 = vld [vmem:[#allocation10 + $0x30] sm:$0xff]
    %v2252 = vld [vmem:[#allocation10 + $0x38] sm:$0xff]
    %v2253 = vld [vmem:[#allocation10 + $0x40] sm:$0xff]
    %v2254 = vld [vmem:[#allocation10 + $0x48] sm:$0xff]
    %v2255 = vld [vmem:[#allocation10 + $0x50] sm:$0xff]
    %v2256 = vld [vmem:[#allocation10 + $0x58] sm:$0xff]
    %v2257 = vld [vmem:[#allocation10 + $0x60] sm:$0xff]
    %v2258 = vld [vmem:[#allocation10 + $0x68] sm:$0xff]
    %v2259 = vld [vmem:[#allocation10 + $0x70] sm:$0xff]
    %v2260 = vld [vmem:[#allocation10 + $0x78] sm:$0xff]
    %v2261 = vld [vmem:[#allocation10 + $0x80] sm:$0xff]
    %v2262 = vld [vmem:[#allocation10 + $0x88] sm:$0xff]
    %v2263 = vld [vmem:[#allocation10 + $0x90] sm:$0xff]
    %v2264 = vld [vmem:[#allocation10 + $0x98] sm:$0xff]
    %v2265 = vld [vmem:[#allocation10 + $0xa0] sm:$0xff]
    %v2266 = vld [vmem:[#allocation10 + $0xa8] sm:$0xff]
    %v2267 = vld [vmem:[#allocation10 + $0xb0] sm:$0xff]
    %v2268 = vld [vmem:[#allocation10 + $0xb8] sm:$0xff]
    %v2269 = vld [vmem:[#allocation10 + $0xc0] sm:$0xff]
    %v2270 = vld [vmem:[#allocation10 + $0xc8] sm:$0xff]
    %v2271 = vld [vmem:[#allocation10 + $0xd0] sm:$0xff]
    %v2272 = vld [vmem:[#allocation10 + $0xd8] sm:$0xff]
    %v2273 = vld [vmem:[#allocation10 + $0xe0] sm:$0xff]
    %v2274 = vld [vmem:[#allocation10 + $0xe8] sm:$0xff]
    %v2275 = vld [vmem:[#allocation10 + $0xf0] sm:$0xff]
    %v2276 = vld [vmem:[#allocation10 + $0xf8] sm:$0xff]
    %v2278 = vperm.slane %v259, 0
    %v2279 = vperm.slane %v259, 1
    %v2314 = vunpack.c.l.b16 %v2245
    %v2315 = vunpack.c.h.b16 %v2245
    %v2316 = vunpack.c.l.b16 %v2246
    %v2317 = vunpack.c.h.b16 %v2246
    %v2318 = vunpack.c.l.b16 %v2247
    %v2319 = vunpack.c.h.b16 %v2247
    %v2320 = vunpack.c.l.b16 %v2248
    %v2321 = vunpack.c.h.b16 %v2248
    %v2322 = vunpack.c.l.b16 %v2249
    %v2323 = vunpack.c.h.b16 %v2249
    %v2324 = vunpack.c.l.b16 %v2250
    %v2325 = vunpack.c.h.b16 %v2250
    %v2326 = vunpack.c.l.b16 %v2251
    %v2327 = vunpack.c.h.b16 %v2251
    %v2328 = vunpack.c.l.b16 %v2252
    %v2329 = vunpack.c.h.b16 %v2252
    %v2330 = vunpack.c.l.b16 %v2253
    %v2331 = vunpack.c.h.b16 %v2253
    %v2332 = vunpack.c.l.b16 %v2254
    %v2333 = vunpack.c.h.b16 %v2254
    %v2334 = vunpack.c.l.b16 %v2255
    %v2335 = vunpack.c.h.b16 %v2255
    %v2336 = vunpack.c.l.b16 %v2256
    %v2337 = vunpack.c.h.b16 %v2256
    %v2338 = vunpack.c.l.b16 %v2257
    %v2339 = vunpack.c.h.b16 %v2257
    %v2340 = vunpack.c.l.b16 %v2258
    %v2341 = vunpack.c.h.b16 %v2258
    %v2342 = vunpack.c.l.b16 %v2259
    %v2343 = vunpack.c.h.b16 %v2259
    %v2344 = vunpack.c.l.b16 %v2260
    %v2345 = vunpack.c.h.b16 %v2260
    %v2346 = vunpack.c.l.b16 %v2261
    %v2347 = vunpack.c.h.b16 %v2261
    %v2348 = vunpack.c.l.b16 %v2262
    %v2349 = vunpack.c.h.b16 %v2262
    %v2350 = vunpack.c.l.b16 %v2263
    %v2351 = vunpack.c.h.b16 %v2263
    %v2352 = vunpack.c.l.b16 %v2264
    %v2353 = vunpack.c.h.b16 %v2264
    %v2354 = vunpack.c.l.b16 %v2265
    %v2355 = vunpack.c.h.b16 %v2265
    %v2356 = vunpack.c.l.b16 %v2266
    %v2357 = vunpack.c.h.b16 %v2266
    %v2358 = vunpack.c.l.b16 %v2267
    %v2359 = vunpack.c.h.b16 %v2267
    %v2360 = vunpack.c.l.b16 %v2268
    %v2361 = vunpack.c.h.b16 %v2268
    %v2362 = vunpack.c.l.b16 %v2269
    %v2363 = vunpack.c.h.b16 %v2269
    %v2364 = vunpack.c.l.b16 %v2270
    %v2365 = vunpack.c.h.b16 %v2270
    %v2366 = vunpack.c.l.b16 %v2271
    %v2367 = vunpack.c.h.b16 %v2271
    %v2368 = vunpack.c.l.b16 %v2272
    %v2369 = vunpack.c.h.b16 %v2272
    %v2370 = vunpack.c.l.b16 %v2273
    %v2371 = vunpack.c.h.b16 %v2273
    %v2372 = vunpack.c.l.b16 %v2274
    %v2373 = vunpack.c.h.b16 %v2274
    %v2374 = vunpack.c.l.b16 %v2275
    %v2375 = vunpack.c.h.b16 %v2275
    %v2376 = vunpack.c.l.b16 %v2276
    %v2377 = vunpack.c.h.b16 %v2276
    %v2378 = vpack.c.b16 %v2316, %v2314
    %v2379 = vpack.c.b16 %v2317, %v2315
    %v2380 = vpack.c.b16 %v2320, %v2318
    %v2381 = vpack.c.b16 %v2321, %v2319
    %v2382 = vpack.c.b16 %v2324, %v2322
    %v2383 = vpack.c.b16 %v2325, %v2323
    %v2384 = vpack.c.b16 %v2328, %v2326
    %v2385 = vpack.c.b16 %v2329, %v2327
    %v2386 = vpack.c.b16 %v2332, %v2330
    %v2387 = vpack.c.b16 %v2333, %v2331
    %v2388 = vpack.c.b16 %v2336, %v2334
    %v2389 = vpack.c.b16 %v2337, %v2335
    %v2390 = vpack.c.b16 %v2340, %v2338
    %v2391 = vpack.c.b16 %v2341, %v2339
    %v2392 = vpack.c.b16 %v2344, %v2342
    %v2393 = vpack.c.b16 %v2345, %v2343
    %v2394 = vpack.c.b16 %v2348, %v2346
    %v2395 = vpack.c.b16 %v2349, %v2347
    %v2396 = vpack.c.b16 %v2352, %v2350
    %v2397 = vpack.c.b16 %v2353, %v2351
    %v2398 = vpack.c.b16 %v2356, %v2354
    %v2399 = vpack.c.b16 %v2357, %v2355
    %v2400 = vpack.c.b16 %v2360, %v2358
    %v2401 = vpack.c.b16 %v2361, %v2359
    %v2402 = vpack.c.b16 %v2364, %v2362
    %v2403 = vpack.c.b16 %v2365, %v2363
    %v2404 = vpack.c.b16 %v2368, %v2366
    %v2405 = vpack.c.b16 %v2369, %v2367
    %v2406 = vpack.c.b16 %v2372, %v2370
    %v2407 = vpack.c.b16 %v2373, %v2371
    %v2408 = vpack.c.b16 %v2376, %v2374
    %v2409 = vpack.c.b16 %v2377, %v2375
    %2442 = vmatpush.bf16.msra.mxu0 %v2392
    %2443 = vmatpush.bf16.msra.mxu0 %v2390
    %2444 = vmatpush.bf16.msra.mxu0 %v2388
    %2445 = vmatpush.bf16.msra.mxu0 %v2386
    %2446 = vmatpush.bf16.msra.mxu0 %v2384
    %2447 = vmatpush.bf16.msra.mxu0 %v2382
    %2448 = vmatpush.bf16.msra.mxu0 %v2380
    %2449 = vmatpush.bf16.msra.mxu0 %v2378
    %2450 = vmatmul.bf16.gmra.mxu0 %v2213
    %v2451 = vpop.f32.mrf.mxu0
    %v2452 = vadd.f32 %v2278, %v2451
    %v2453 = vpop.f32.mrf.mxu0
    %v2454 = vadd.f32 %v2278, %v2453
    %2455 = vmatmul.bf16.gmra.mxu0 %v2215
    %v2456 = vpop.f32.mrf.mxu0
    %v2457 = vadd.f32 %v2278, %v2456
    %v2458 = vpop.f32.mrf.mxu0
    %v2459 = vadd.f32 %v2278, %v2458
    %2460 = vmatmul.bf16.gmra.mxu0 %v2217
    %v2461 = vpop.f32.mrf.mxu0
    %v2462 = vadd.f32 %v2278, %v2461
    %v2463 = vpop.f32.mrf.mxu0
    %v2464 = vadd.f32 %v2278, %v2463
    %2465 = vmatmul.bf16.gmra.mxu0 %v2219
    %v2466 = vpop.f32.mrf.mxu0
    %v2467 = vadd.f32 %v2278, %v2466
    %v2468 = vpop.f32.mrf.mxu0
    %v2469 = vadd.f32 %v2278, %v2468
    %2470 = vmatmul.bf16.gmra.mxu0 %v2221
    %v2471 = vpop.f32.mrf.mxu0
    %v2472 = vadd.f32 %v2278, %v2471
    %v2473 = vpop.f32.mrf.mxu0
    %v2474 = vadd.f32 %v2278, %v2473
    %2475 = vmatmul.bf16.gmra.mxu0 %v2223
    %v2476 = vpop.f32.mrf.mxu0
    %v2477 = vadd.f32 %v2278, %v2476
    %v2478 = vpop.f32.mrf.mxu0
    %v2479 = vadd.f32 %v2278, %v2478
    %2480 = vmatmul.bf16.gmra.mxu0 %v2225
    %v2481 = vpop.f32.mrf.mxu0
    %v2482 = vadd.f32 %v2278, %v2481
    %v2483 = vpop.f32.mrf.mxu0
    %v2484 = vadd.f32 %v2278, %v2483
    %2485 = vmatmul.bf16.gmra.mxu0 %v2227
    %v2486 = vpop.f32.mrf.mxu0
    %v2487 = vadd.f32 %v2278, %v2486
    %v2488 = vpop.f32.mrf.mxu0
    %v2489 = vadd.f32 %v2278, %v2488
    %2490 = vmatmul.bf16.gmra.mxu0 %v2229
    %v2491 = vpop.f32.mrf.mxu0
    %v2492 = vadd.f32 %v2278, %v2491
    %v2493 = vpop.f32.mrf.mxu0
    %v2494 = vadd.f32 %v2278, %v2493
    %2495 = vmatmul.bf16.gmra.mxu0 %v2231
    %v2496 = vpop.f32.mrf.mxu0
    %v2497 = vadd.f32 %v2278, %v2496
    %v2498 = vpop.f32.mrf.mxu0
    %v2499 = vadd.f32 %v2278, %v2498
    %2500 = vmatmul.bf16.gmra.mxu0 %v2233
    %v2501 = vpop.f32.mrf.mxu0
    %v2502 = vadd.f32 %v2278, %v2501
    %v2503 = vpop.f32.mrf.mxu0
    %v2504 = vadd.f32 %v2278, %v2503
    %2505 = vmatmul.bf16.gmra.mxu0 %v2235
    %v2506 = vpop.f32.mrf.mxu0
    %v2507 = vadd.f32 %v2278, %v2506
    %v2508 = vpop.f32.mrf.mxu0
    %v2509 = vadd.f32 %v2278, %v2508
    %2510 = vmatmul.bf16.gmra.mxu0 %v2237
    %v2511 = vpop.f32.mrf.mxu0
    %v2512 = vadd.f32 %v2278, %v2511
    %v2513 = vpop.f32.mrf.mxu0
    %v2514 = vadd.f32 %v2278, %v2513
    %2515 = vmatmul.bf16.gmra.mxu0 %v2239
    %v2516 = vpop.f32.mrf.mxu0
    %v2517 = vadd.f32 %v2278, %v2516
    %v2518 = vpop.f32.mrf.mxu0
    %v2519 = vadd.f32 %v2278, %v2518
    %2520 = vmatmul.bf16.gmra.mxu0 %v2241
    %v2521 = vpop.f32.mrf.mxu0
    %v2522 = vadd.f32 %v2278, %v2521
    %v2523 = vpop.f32.mrf.mxu0
    %v2524 = vadd.f32 %v2278, %v2523
    %2525 = vmatmul.bf16.gmra.mxu0 %v2243
    %v2526 = vpop.f32.mrf.mxu0
    %v2527 = vadd.f32 %v2278, %v2526
    %v2528 = vpop.f32.mrf.mxu0
    %v2529 = vadd.f32 %v2278, %v2528
    %2530 = vdwg.mxu0
    %2531 = vmatpush.bf16.msra.mxu0 %v2408
    %2532 = vmatpush.bf16.msra.mxu0 %v2406
    %2533 = vmatpush.bf16.msra.mxu0 %v2404
    %2534 = vmatpush.bf16.msra.mxu0 %v2402
    %2535 = vmatpush.bf16.msra.mxu0 %v2400
    %2536 = vmatpush.bf16.msra.mxu0 %v2398
    %2537 = vmatpush.bf16.msra.mxu0 %v2396
    %2538 = vmatpush.bf16.msra.mxu0 %v2394
    %2539 = vmatmul.bf16.gmra.mxu0 %v2214
    %v2540 = vpop.f32.mrf.mxu0
    %v2541 = vadd.f32 %v2452, %v2540
    %v2542 = vpop.f32.mrf.mxu0
    %v2543 = vadd.f32 %v2454, %v2542
    %2544 = vmatmul.bf16.gmra.mxu0 %v2216
    %v2545 = vpop.f32.mrf.mxu0
    %v2546 = vadd.f32 %v2457, %v2545
    %v2547 = vpop.f32.mrf.mxu0
    %v2548 = vadd.f32 %v2459, %v2547
    %2549 = vmatmul.bf16.gmra.mxu0 %v2218
    %v2550 = vpop.f32.mrf.mxu0
    %v2551 = vadd.f32 %v2462, %v2550
    %v2552 = vpop.f32.mrf.mxu0
    %v2553 = vadd.f32 %v2464, %v2552
    %2554 = vmatmul.bf16.gmra.mxu0 %v2220
    %v2555 = vpop.f32.mrf.mxu0
    %v2556 = vadd.f32 %v2467, %v2555
    %v2557 = vpop.f32.mrf.mxu0
    %v2558 = vadd.f32 %v2469, %v2557
    %2559 = vmatmul.bf16.gmra.mxu0 %v2222
    %v2560 = vpop.f32.mrf.mxu0
    %v2561 = vadd.f32 %v2472, %v2560
    %v2562 = vpop.f32.mrf.mxu0
    %v2563 = vadd.f32 %v2474, %v2562
    %2564 = vmatmul.bf16.gmra.mxu0 %v2224
    %v2565 = vpop.f32.mrf.mxu0
    %v2566 = vadd.f32 %v2477, %v2565
    %v2567 = vpop.f32.mrf.mxu0
    %v2568 = vadd.f32 %v2479, %v2567
    %2569 = vmatmul.bf16.gmra.mxu0 %v2226
    %v2570 = vpop.f32.mrf.mxu0
    %v2571 = vadd.f32 %v2482, %v2570
    %v2572 = vpop.f32.mrf.mxu0
    %v2573 = vadd.f32 %v2484, %v2572
    %2574 = vmatmul.bf16.gmra.mxu0 %v2228
    %v2575 = vpop.f32.mrf.mxu0
    %v2576 = vadd.f32 %v2487, %v2575
    %v2577 = vpop.f32.mrf.mxu0
    %v2578 = vadd.f32 %v2489, %v2577
    %2579 = vmatmul.bf16.gmra.mxu0 %v2230
    %v2580 = vpop.f32.mrf.mxu0
    %v2581 = vadd.f32 %v2492, %v2580
    %v2582 = vpop.f32.mrf.mxu0
    %v2583 = vadd.f32 %v2494, %v2582
    %2584 = vmatmul.bf16.gmra.mxu0 %v2232
    %v2585 = vpop.f32.mrf.mxu0
    %v2586 = vadd.f32 %v2497, %v2585
    %v2587 = vpop.f32.mrf.mxu0
    %v2588 = vadd.f32 %v2499, %v2587
    %2589 = vmatmul.bf16.gmra.mxu0 %v2234
    %v2590 = vpop.f32.mrf.mxu0
    %v2591 = vadd.f32 %v2502, %v2590
    %v2592 = vpop.f32.mrf.mxu0
    %v2593 = vadd.f32 %v2504, %v2592
    %2594 = vmatmul.bf16.gmra.mxu0 %v2236
    %v2595 = vpop.f32.mrf.mxu0
    %v2596 = vadd.f32 %v2507, %v2595
    %v2597 = vpop.f32.mrf.mxu0
    %v2598 = vadd.f32 %v2509, %v2597
    %2599 = vmatmul.bf16.gmra.mxu0 %v2238
    %v2600 = vpop.f32.mrf.mxu0
    %v2601 = vadd.f32 %v2512, %v2600
    %v2602 = vpop.f32.mrf.mxu0
    %v2603 = vadd.f32 %v2514, %v2602
    %2604 = vmatmul.bf16.gmra.mxu0 %v2240
    %v2605 = vpop.f32.mrf.mxu0
    %v2606 = vadd.f32 %v2517, %v2605
    %v2607 = vpop.f32.mrf.mxu0
    %v2608 = vadd.f32 %v2519, %v2607
    %2609 = vmatmul.bf16.gmra.mxu0 %v2242
    %v2610 = vpop.f32.mrf.mxu0
    %v2611 = vadd.f32 %v2522, %v2610
    %v2612 = vpop.f32.mrf.mxu0
    %v2613 = vadd.f32 %v2524, %v2612
    %2614 = vmatmul.bf16.gmra.mxu0 %v2244
    %v2615 = vpop.f32.mrf.mxu0
    %v2616 = vadd.f32 %v2527, %v2615
    %v2617 = vpop.f32.mrf.mxu0
    %v2618 = vadd.f32 %v2529, %v2617
    %2619 = vdwg.mxu0
    %2620 = vmatpush.bf16.msra.mxu0 %v2393
    %2621 = vmatpush.bf16.msra.mxu0 %v2391
    %2622 = vmatpush.bf16.msra.mxu0 %v2389
    %2623 = vmatpush.bf16.msra.mxu0 %v2387
    %2624 = vmatpush.bf16.msra.mxu0 %v2385
    %2625 = vmatpush.bf16.msra.mxu0 %v2383
    %2626 = vmatpush.bf16.msra.mxu0 %v2381
    %2627 = vmatpush.bf16.msra.mxu0 %v2379
    %2628 = vmatmul.bf16.gmra.mxu0 %v2213
    %v2629 = vpop.f32.mrf.mxu0
    %v2630 = vadd.f32 %v2279, %v2629
    %v2631 = vpop.f32.mrf.mxu0
    %v2632 = vadd.f32 %v2279, %v2631
    %2633 = vmatmul.bf16.gmra.mxu0 %v2215
    %v2634 = vpop.f32.mrf.mxu0
    %v2635 = vadd.f32 %v2279, %v2634
    %v2636 = vpop.f32.mrf.mxu0
    %v2637 = vadd.f32 %v2279, %v2636
    %2638 = vmatmul.bf16.gmra.mxu0 %v2217
    %v2639 = vpop.f32.mrf.mxu0
    %v2640 = vadd.f32 %v2279, %v2639
    %v2641 = vpop.f32.mrf.mxu0
    %v2642 = vadd.f32 %v2279, %v2641
    %2643 = vmatmul.bf16.gmra.mxu0 %v2219
    %v2644 = vpop.f32.mrf.mxu0
    %v2645 = vadd.f32 %v2279, %v2644
    %v2646 = vpop.f32.mrf.mxu0
    %v2647 = vadd.f32 %v2279, %v2646
    %2648 = vmatmul.bf16.gmra.mxu0 %v2221
    %v2649 = vpop.f32.mrf.mxu0
    %v2650 = vadd.f32 %v2279, %v2649
    %v2651 = vpop.f32.mrf.mxu0
    %v2652 = vadd.f32 %v2279, %v2651
    %2653 = vmatmul.bf16.gmra.mxu0 %v2223
    %v2654 = vpop.f32.mrf.mxu0
    %v2655 = vadd.f32 %v2279, %v2654
    %v2656 = vpop.f32.mrf.mxu0
    %v2657 = vadd.f32 %v2279, %v2656
    %2658 = vmatmul.bf16.gmra.mxu0 %v2225
    %v2659 = vpop.f32.mrf.mxu0
    %v2660 = vadd.f32 %v2279, %v2659
    %v2661 = vpop.f32.mrf.mxu0
    %v2662 = vadd.f32 %v2279, %v2661
    %2663 = vmatmul.bf16.gmra.mxu0 %v2227
    %v2664 = vpop.f32.mrf.mxu0
    %v2665 = vadd.f32 %v2279, %v2664
    %v2666 = vpop.f32.mrf.mxu0
    %v2667 = vadd.f32 %v2279, %v2666
    %2668 = vmatmul.bf16.gmra.mxu0 %v2229
    %v2669 = vpop.f32.mrf.mxu0
    %v2670 = vadd.f32 %v2279, %v2669
    %v2671 = vpop.f32.mrf.mxu0
    %v2672 = vadd.f32 %v2279, %v2671
    %2673 = vmatmul.bf16.gmra.mxu0 %v2231
    %v2674 = vpop.f32.mrf.mxu0
    %v2675 = vadd.f32 %v2279, %v2674
    %v2676 = vpop.f32.mrf.mxu0
    %v2677 = vadd.f32 %v2279, %v2676
    %2678 = vmatmul.bf16.gmra.mxu0 %v2233
    %v2679 = vpop.f32.mrf.mxu0
    %v2680 = vadd.f32 %v2279, %v2679
    %v2681 = vpop.f32.mrf.mxu0
    %v2682 = vadd.f32 %v2279, %v2681
    %2683 = vmatmul.bf16.gmra.mxu0 %v2235
    %v2684 = vpop.f32.mrf.mxu0
    %v2685 = vadd.f32 %v2279, %v2684
    %v2686 = vpop.f32.mrf.mxu0
    %v2687 = vadd.f32 %v2279, %v2686
    %2688 = vmatmul.bf16.gmra.mxu0 %v2237
    %v2689 = vpop.f32.mrf.mxu0
    %v2690 = vadd.f32 %v2279, %v2689
    %v2691 = vpop.f32.mrf.mxu0
    %v2692 = vadd.f32 %v2279, %v2691
    %2693 = vmatmul.bf16.gmra.mxu0 %v2239
    %v2694 = vpop.f32.mrf.mxu0
    %v2695 = vadd.f32 %v2279, %v2694
    %v2696 = vpop.f32.mrf.mxu0
    %v2697 = vadd.f32 %v2279, %v2696
    %2698 = vmatmul.bf16.gmra.mxu0 %v2241
    %v2699 = vpop.f32.mrf.mxu0
    %v2700 = vadd.f32 %v2279, %v2699
    %v2701 = vpop.f32.mrf.mxu0
    %v2702 = vadd.f32 %v2279, %v2701
    %2703 = vmatmul.bf16.gmra.mxu0 %v2243
    %v2704 = vpop.f32.mrf.mxu0
    %v2705 = vadd.f32 %v2279, %v2704
    %v2706 = vpop.f32.mrf.mxu0
    %v2707 = vadd.f32 %v2279, %v2706
    %2708 = vdwg.mxu0
    %2709 = vmatpush.bf16.msra.mxu0 %v2409
    %2710 = vmatpush.bf16.msra.mxu0 %v2407
    %2711 = vmatpush.bf16.msra.mxu0 %v2405
    %2712 = vmatpush.bf16.msra.mxu0 %v2403
    %2713 = vmatpush.bf16.msra.mxu0 %v2401
    %2714 = vmatpush.bf16.msra.mxu0 %v2399
    %2715 = vmatpush.bf16.msra.mxu0 %v2397
    %2716 = vmatpush.bf16.msra.mxu0 %v2395
    %2717 = vmatmul.bf16.gmra.mxu0 %v2214
    %v2718 = vpop.f32.mrf.mxu0
    %v2719 = vadd.f32 %v2630, %v2718
    %v2720 = vpop.f32.mrf.mxu0
    %v2721 = vadd.f32 %v2632, %v2720
    %2722 = vmatmul.bf16.gmra.mxu0 %v2216
    %v2723 = vpop.f32.mrf.mxu0
    %v2724 = vadd.f32 %v2635, %v2723
    %v2725 = vpop.f32.mrf.mxu0
    %v2726 = vadd.f32 %v2637, %v2725
    %2727 = vmatmul.bf16.gmra.mxu0 %v2218
    %v2728 = vpop.f32.mrf.mxu0
    %v2729 = vadd.f32 %v2640, %v2728
    %v2730 = vpop.f32.mrf.mxu0
    %v2731 = vadd.f32 %v2642, %v2730
    %2732 = vmatmul.bf16.gmra.mxu0 %v2220
    %v2733 = vpop.f32.mrf.mxu0
    %v2734 = vadd.f32 %v2645, %v2733
    %v2735 = vpop.f32.mrf.mxu0
    %v2736 = vadd.f32 %v2647, %v2735
    %2737 = vmatmul.bf16.gmra.mxu0 %v2222
    %v2738 = vpop.f32.mrf.mxu0
    %v2739 = vadd.f32 %v2650, %v2738
    %v2740 = vpop.f32.mrf.mxu0
    %v2741 = vadd.f32 %v2652, %v2740
    %2742 = vmatmul.bf16.gmra.mxu0 %v2224
    %v2743 = vpop.f32.mrf.mxu0
    %v2744 = vadd.f32 %v2655, %v2743
    %v2745 = vpop.f32.mrf.mxu0
    %v2746 = vadd.f32 %v2657, %v2745
    %2747 = vmatmul.bf16.gmra.mxu0 %v2226
    %v2748 = vpop.f32.mrf.mxu0
    %v2749 = vadd.f32 %v2660, %v2748
    %v2750 = vpop.f32.mrf.mxu0
    %v2751 = vadd.f32 %v2662, %v2750
    %2752 = vmatmul.bf16.gmra.mxu0 %v2228
    %v2753 = vpop.f32.mrf.mxu0
    %v2754 = vadd.f32 %v2665, %v2753
    %v2755 = vpop.f32.mrf.mxu0
    %v2756 = vadd.f32 %v2667, %v2755
    %2757 = vmatmul.bf16.gmra.mxu0 %v2230
    %v2758 = vpop.f32.mrf.mxu0
    %v2759 = vadd.f32 %v2670, %v2758
    %v2760 = vpop.f32.mrf.mxu0
    %v2761 = vadd.f32 %v2672, %v2760
    %2762 = vmatmul.bf16.gmra.mxu0 %v2232
    %v2763 = vpop.f32.mrf.mxu0
    %v2764 = vadd.f32 %v2675, %v2763
    %v2765 = vpop.f32.mrf.mxu0
    %v2766 = vadd.f32 %v2677, %v2765
    %2767 = vmatmul.bf16.gmra.mxu0 %v2234
    %v2768 = vpop.f32.mrf.mxu0
    %v2769 = vadd.f32 %v2680, %v2768
    %v2770 = vpop.f32.mrf.mxu0
    %v2771 = vadd.f32 %v2682, %v2770
    %2772 = vmatmul.bf16.gmra.mxu0 %v2236
    %v2773 = vpop.f32.mrf.mxu0
    %v2774 = vadd.f32 %v2685, %v2773
    %v2775 = vpop.f32.mrf.mxu0
    %v2776 = vadd.f32 %v2687, %v2775
    %2777 = vmatmul.bf16.gmra.mxu0 %v2238
    %v2778 = vpop.f32.mrf.mxu0
    %v2779 = vadd.f32 %v2690, %v2778
    %v2780 = vpop.f32.mrf.mxu0
    %v2781 = vadd.f32 %v2692, %v2780
    %2782 = vmatmul.bf16.gmra.mxu0 %v2240
    %v2783 = vpop.f32.mrf.mxu0
    %v2784 = vadd.f32 %v2695, %v2783
    %v2785 = vpop.f32.mrf.mxu0
    %v2786 = vadd.f32 %v2697, %v2785
    %2787 = vmatmul.bf16.gmra.mxu0 %v2242
    %v2788 = vpop.f32.mrf.mxu0
    %v2789 = vadd.f32 %v2700, %v2788
    %v2790 = vpop.f32.mrf.mxu0
    %v2791 = vadd.f32 %v2702, %v2790
    %2792 = vmatmul.bf16.gmra.mxu0 %v2244
    %v2793 = vpop.f32.mrf.mxu0
    %v2794 = vadd.f32 %v2705, %v2793
    %v2795 = vpop.f32.mrf.mxu0
    %v2796 = vadd.f32 %v2707, %v2795
    %2797 = vdwg.mxu0
    %v2798 = vmax.f32 %v2541, 0.0
    %v2799 = vmax.f32 %v2719, 0.0
    %v2800 = vmax.f32 %v2543, 0.0
    %v2801 = vmax.f32 %v2721, 0.0
    %v2802 = vmax.f32 %v2546, 0.0
    %v2803 = vmax.f32 %v2724, 0.0
    %v2804 = vmax.f32 %v2548, 0.0
    %v2805 = vmax.f32 %v2726, 0.0
    %v2806 = vmax.f32 %v2551, 0.0
    %v2807 = vmax.f32 %v2729, 0.0
    %v2808 = vmax.f32 %v2553, 0.0
    %v2809 = vmax.f32 %v2731, 0.0
    %v2810 = vmax.f32 %v2556, 0.0
    %v2811 = vmax.f32 %v2734, 0.0
    %v2812 = vmax.f32 %v2558, 0.0
    %v2813 = vmax.f32 %v2736, 0.0
    %v2814 = vmax.f32 %v2561, 0.0
    %v2815 = vmax.f32 %v2739, 0.0
    %v2816 = vmax.f32 %v2563, 0.0
    %v2817 = vmax.f32 %v2741, 0.0
    %v2818 = vmax.f32 %v2566, 0.0
    %v2819 = vmax.f32 %v2744, 0.0
    %v2820 = vmax.f32 %v2568, 0.0
    %v2821 = vmax.f32 %v2746, 0.0
    %v2822 = vmax.f32 %v2571, 0.0
    %v2823 = vmax.f32 %v2749, 0.0
    %v2824 = vmax.f32 %v2573, 0.0
    %v2825 = vmax.f32 %v2751, 0.0
    %v2826 = vmax.f32 %v2576, 0.0
    %v2827 = vmax.f32 %v2754, 0.0
    %v2828 = vmax.f32 %v2578, 0.0
    %v2829 = vmax.f32 %v2756, 0.0
    %v2830 = vmax.f32 %v2581, 0.0
    %v2831 = vmax.f32 %v2759, 0.0
    %v2832 = vmax.f32 %v2583, 0.0
    %v2833 = vmax.f32 %v2761, 0.0
    %v2834 = vmax.f32 %v2586, 0.0
    %v2835 = vmax.f32 %v2764, 0.0
    %v2836 = vmax.f32 %v2588, 0.0
    %v2837 = vmax.f32 %v2766, 0.0
    %v2838 = vmax.f32 %v2591, 0.0
    %v2839 = vmax.f32 %v2769, 0.0
    %v2840 = vmax.f32 %v2593, 0.0
    %v2841 = vmax.f32 %v2771, 0.0
    %v2842 = vmax.f32 %v2596, 0.0
    %v2843 = vmax.f32 %v2774, 0.0
    %v2844 = vmax.f32 %v2598, 0.0
    %v2845 = vmax.f32 %v2776, 0.0
    %v2846 = vmax.f32 %v2601, 0.0
    %v2847 = vmax.f32 %v2779, 0.0
    %v2848 = vmax.f32 %v2603, 0.0
    %v2849 = vmax.f32 %v2781, 0.0
    %v2850 = vmax.f32 %v2606, 0.0
    %v2851 = vmax.f32 %v2784, 0.0
    %v2852 = vmax.f32 %v2608, 0.0
    %v2853 = vmax.f32 %v2786, 0.0
    %v2854 = vmax.f32 %v2611, 0.0
    %v2855 = vmax.f32 %v2789, 0.0
    %v2856 = vmax.f32 %v2613, 0.0
    %v2857 = vmax.f32 %v2791, 0.0
    %v2858 = vmax.f32 %v2616, 0.0
    %v2859 = vmax.f32 %v2794, 0.0
    %v2860 = vmax.f32 %v2618, 0.0
    %v2861 = vmax.f32 %v2796, 0.0
    %v2862 = vpack.c.bf16 %v2800, %v2798
    %v2863 = vpack.c.bf16 %v2801, %v2799
    %v2864 = vpack.c.bf16 %v2804, %v2802
    %v2865 = vpack.c.bf16 %v2805, %v2803
    %v2866 = vpack.c.bf16 %v2808, %v2806
    %v2867 = vpack.c.bf16 %v2809, %v2807
    %v2868 = vpack.c.bf16 %v2812, %v2810
    %v2869 = vpack.c.bf16 %v2813, %v2811
    %v2870 = vpack.c.bf16 %v2816, %v2814
    %v2871 = vpack.c.bf16 %v2817, %v2815
    %v2872 = vpack.c.bf16 %v2820, %v2818
    %v2873 = vpack.c.bf16 %v2821, %v2819
    %v2874 = vpack.c.bf16 %v2824, %v2822
    %v2875 = vpack.c.bf16 %v2825, %v2823
    %v2876 = vpack.c.bf16 %v2828, %v2826
    %v2877 = vpack.c.bf16 %v2829, %v2827
    %v2878 = vpack.c.bf16 %v2832, %v2830
    %v2879 = vpack.c.bf16 %v2833, %v2831
    %v2880 = vpack.c.bf16 %v2836, %v2834
    %v2881 = vpack.c.bf16 %v2837, %v2835
    %v2882 = vpack.c.bf16 %v2840, %v2838
    %v2883 = vpack.c.bf16 %v2841, %v2839
    %v2884 = vpack.c.bf16 %v2844, %v2842
    %v2885 = vpack.c.bf16 %v2845, %v2843
    %v2886 = vpack.c.bf16 %v2848, %v2846
    %v2887 = vpack.c.bf16 %v2849, %v2847
    %v2888 = vpack.c.bf16 %v2852, %v2850
    %v2889 = vpack.c.bf16 %v2853, %v2851
    %v2890 = vpack.c.bf16 %v2856, %v2854
    %v2891 = vpack.c.bf16 %v2857, %v2855
    %v2892 = vpack.c.bf16 %v2860, %v2858
    %v2893 = vpack.c.bf16 %v2861, %v2859
    %v2894 = vld [vmem:[#allocation12] sm:$0xff]
    %v2895 = vld [vmem:[#allocation12 + $0x8] sm:$0xff]
    %v2896 = vld [vmem:[#allocation12 + $0x10] sm:$0xff]
    %v2897 = vld [vmem:[#allocation12 + $0x18] sm:$0xff]
    %v2898 = vld [vmem:[#allocation12 + $0x20] sm:$0xff]
    %v2899 = vld [vmem:[#allocation12 + $0x28] sm:$0xff]
    %v2900 = vld [vmem:[#allocation12 + $0x30] sm:$0xff]
    %v2901 = vld [vmem:[#allocation12 + $0x38] sm:$0xff]
    %v2902 = vld [vmem:[#allocation12 + $0x40] sm:$0xff]
    %v2903 = vld [vmem:[#allocation12 + $0x48] sm:$0xff]
    %v2904 = vld [vmem:[#allocation12 + $0x50] sm:$0xff]
    %v2905 = vld [vmem:[#allocation12 + $0x58] sm:$0xff]
    %v2906 = vld [vmem:[#allocation12 + $0x60] sm:$0xff]
    %v2907 = vld [vmem:[#allocation12 + $0x68] sm:$0xff]
    %v2908 = vld [vmem:[#allocation12 + $0x70] sm:$0xff]
    %v2909 = vld [vmem:[#allocation12 + $0x78] sm:$0xff]
    %v2910 = vld [vmem:[#allocation12 + $0x80] sm:$0xff]
    %v2911 = vld [vmem:[#allocation12 + $0x88] sm:$0xff]
    %v2912 = vld [vmem:[#allocation12 + $0x90] sm:$0xff]
    %v2913 = vld [vmem:[#allocation12 + $0x98] sm:$0xff]
    %v2914 = vld [vmem:[#allocation12 + $0xa0] sm:$0xff]
    %v2915 = vld [vmem:[#allocation12 + $0xa8] sm:$0xff]
    %v2916 = vld [vmem:[#allocation12 + $0xb0] sm:$0xff]
    %v2917 = vld [vmem:[#allocation12 + $0xb8] sm:$0xff]
    %v2918 = vld [vmem:[#allocation12 + $0xc0] sm:$0xff]
    %v2919 = vld [vmem:[#allocation12 + $0xc8] sm:$0xff]
    %v2920 = vld [vmem:[#allocation12 + $0xd0] sm:$0xff]
    %v2921 = vld [vmem:[#allocation12 + $0xd8] sm:$0xff]
    %v2922 = vld [vmem:[#allocation12 + $0xe0] sm:$0xff]
    %v2923 = vld [vmem:[#allocation12 + $0xe8] sm:$0xff]
    %v2924 = vld [vmem:[#allocation12 + $0xf0] sm:$0xff]
    %v2925 = vld [vmem:[#allocation12 + $0xf8] sm:$0xff]
    %v2927 = vperm.slane %v261, 0
    %v2928 = vperm.slane %v261, 1
    %v2963 = vunpack.c.l.b16 %v2894
    %v2964 = vunpack.c.h.b16 %v2894
    %v2965 = vunpack.c.l.b16 %v2895
    %v2966 = vunpack.c.h.b16 %v2895
    %v2967 = vunpack.c.l.b16 %v2896
    %v2968 = vunpack.c.h.b16 %v2896
    %v2969 = vunpack.c.l.b16 %v2897
    %v2970 = vunpack.c.h.b16 %v2897
    %v2971 = vunpack.c.l.b16 %v2898
    %v2972 = vunpack.c.h.b16 %v2898
    %v2973 = vunpack.c.l.b16 %v2899
    %v2974 = vunpack.c.h.b16 %v2899
    %v2975 = vunpack.c.l.b16 %v2900
    %v2976 = vunpack.c.h.b16 %v2900
    %v2977 = vunpack.c.l.b16 %v2901
    %v2978 = vunpack.c.h.b16 %v2901
    %v2979 = vunpack.c.l.b16 %v2902
    %v2980 = vunpack.c.h.b16 %v2902
    %v2981 = vunpack.c.l.b16 %v2903
    %v2982 = vunpack.c.h.b16 %v2903
    %v2983 = vunpack.c.l.b16 %v2904
    %v2984 = vunpack.c.h.b16 %v2904
    %v2985 = vunpack.c.l.b16 %v2905
    %v2986 = vunpack.c.h.b16 %v2905
    %v2987 = vunpack.c.l.b16 %v2906
    %v2988 = vunpack.c.h.b16 %v2906
    %v2989 = vunpack.c.l.b16 %v2907
    %v2990 = vunpack.c.h.b16 %v2907
    %v2991 = vunpack.c.l.b16 %v2908
    %v2992 = vunpack.c.h.b16 %v2908
    %v2993 = vunpack.c.l.b16 %v2909
    %v2994 = vunpack.c.h.b16 %v2909
    %v2995 = vunpack.c.l.b16 %v2910
    %v2996 = vunpack.c.h.b16 %v2910
    %v2997 = vunpack.c.l.b16 %v2911
    %v2998 = vunpack.c.h.b16 %v2911
    %v2999 = vunpack.c.l.b16 %v2912
    %v3000 = vunpack.c.h.b16 %v2912
    %v3001 = vunpack.c.l.b16 %v2913
    %v3002 = vunpack.c.h.b16 %v2913
    %v3003 = vunpack.c.l.b16 %v2914
    %v3004 = vunpack.c.h.b16 %v2914
    %v3005 = vunpack.c.l.b16 %v2915
    %v3006 = vunpack.c.h.b16 %v2915
    %v3007 = vunpack.c.l.b16 %v2916
    %v3008 = vunpack.c.h.b16 %v2916
    %v3009 = vunpack.c.l.b16 %v2917
    %v3010 = vunpack.c.h.b16 %v2917
    %v3011 = vunpack.c.l.b16 %v2918
    %v3012 = vunpack.c.h.b16 %v2918
    %v3013 = vunpack.c.l.b16 %v2919
    %v3014 = vunpack.c.h.b16 %v2919
    %v3015 = vunpack.c.l.b16 %v2920
    %v3016 = vunpack.c.h.b16 %v2920
    %v3017 = vunpack.c.l.b16 %v2921
    %v3018 = vunpack.c.h.b16 %v2921
    %v3019 = vunpack.c.l.b16 %v2922
    %v3020 = vunpack.c.h.b16 %v2922
    %v3021 = vunpack.c.l.b16 %v2923
    %v3022 = vunpack.c.h.b16 %v2923
    %v3023 = vunpack.c.l.b16 %v2924
    %v3024 = vunpack.c.h.b16 %v2924
    %v3025 = vunpack.c.l.b16 %v2925
    %v3026 = vunpack.c.h.b16 %v2925
    %v3027 = vpack.c.b16 %v2965, %v2963
    %v3028 = vpack.c.b16 %v2966, %v2964
    %v3029 = vpack.c.b16 %v2969, %v2967
    %v3030 = vpack.c.b16 %v2970, %v2968
    %v3031 = vpack.c.b16 %v2973, %v2971
    %v3032 = vpack.c.b16 %v2974, %v2972
    %v3033 = vpack.c.b16 %v2977, %v2975
    %v3034 = vpack.c.b16 %v2978, %v2976
    %v3035 = vpack.c.b16 %v2981, %v2979
    %v3036 = vpack.c.b16 %v2982, %v2980
    %v3037 = vpack.c.b16 %v2985, %v2983
    %v3038 = vpack.c.b16 %v2986, %v2984
    %v3039 = vpack.c.b16 %v2989, %v2987
    %v3040 = vpack.c.b16 %v2990, %v2988
    %v3041 = vpack.c.b16 %v2993, %v2991
    %v3042 = vpack.c.b16 %v2994, %v2992
    %v3043 = vpack.c.b16 %v2997, %v2995
    %v3044 = vpack.c.b16 %v2998, %v2996
    %v3045 = vpack.c.b16 %v3001, %v2999
    %v3046 = vpack.c.b16 %v3002, %v3000
    %v3047 = vpack.c.b16 %v3005, %v3003
    %v3048 = vpack.c.b16 %v3006, %v3004
    %v3049 = vpack.c.b16 %v3009, %v3007
    %v3050 = vpack.c.b16 %v3010, %v3008
    %v3051 = vpack.c.b16 %v3013, %v3011
    %v3052 = vpack.c.b16 %v3014, %v3012
    %v3053 = vpack.c.b16 %v3017, %v3015
    %v3054 = vpack.c.b16 %v3018, %v3016
    %v3055 = vpack.c.b16 %v3021, %v3019
    %v3056 = vpack.c.b16 %v3022, %v3020
    %v3057 = vpack.c.b16 %v3025, %v3023
    %v3058 = vpack.c.b16 %v3026, %v3024
    %3091 = vmatpush.bf16.msra.mxu0 %v3041
    %3092 = vmatpush.bf16.msra.mxu0 %v3039
    %3093 = vmatpush.bf16.msra.mxu0 %v3037
    %3094 = vmatpush.bf16.msra.mxu0 %v3035
    %3095 = vmatpush.bf16.msra.mxu0 %v3033
    %3096 = vmatpush.bf16.msra.mxu0 %v3031
    %3097 = vmatpush.bf16.msra.mxu0 %v3029
    %3098 = vmatpush.bf16.msra.mxu0 %v3027
    %3099 = vmatmul.bf16.gmra.mxu0 %v2862
    %v3100 = vpop.f32.mrf.mxu0
    %v3101 = vadd.f32 %v2927, %v3100
    %v3102 = vpop.f32.mrf.mxu0
    %v3103 = vadd.f32 %v2927, %v3102
    %3104 = vmatmul.bf16.gmra.mxu0 %v2864
    %v3105 = vpop.f32.mrf.mxu0
    %v3106 = vadd.f32 %v2927, %v3105
    %v3107 = vpop.f32.mrf.mxu0
    %v3108 = vadd.f32 %v2927, %v3107
    %3109 = vmatmul.bf16.gmra.mxu0 %v2866
    %v3110 = vpop.f32.mrf.mxu0
    %v3111 = vadd.f32 %v2927, %v3110
    %v3112 = vpop.f32.mrf.mxu0
    %v3113 = vadd.f32 %v2927, %v3112
    %3114 = vmatmul.bf16.gmra.mxu0 %v2868
    %v3115 = vpop.f32.mrf.mxu0
    %v3116 = vadd.f32 %v2927, %v3115
    %v3117 = vpop.f32.mrf.mxu0
    %v3118 = vadd.f32 %v2927, %v3117
    %3119 = vmatmul.bf16.gmra.mxu0 %v2870
    %v3120 = vpop.f32.mrf.mxu0
    %v3121 = vadd.f32 %v2927, %v3120
    %v3122 = vpop.f32.mrf.mxu0
    %v3123 = vadd.f32 %v2927, %v3122
    %3124 = vmatmul.bf16.gmra.mxu0 %v2872
    %v3125 = vpop.f32.mrf.mxu0
    %v3126 = vadd.f32 %v2927, %v3125
    %v3127 = vpop.f32.mrf.mxu0
    %v3128 = vadd.f32 %v2927, %v3127
    %3129 = vmatmul.bf16.gmra.mxu0 %v2874
    %v3130 = vpop.f32.mrf.mxu0
    %v3131 = vadd.f32 %v2927, %v3130
    %v3132 = vpop.f32.mrf.mxu0
    %v3133 = vadd.f32 %v2927, %v3132
    %3134 = vmatmul.bf16.gmra.mxu0 %v2876
    %v3135 = vpop.f32.mrf.mxu0
    %v3136 = vadd.f32 %v2927, %v3135
    %v3137 = vpop.f32.mrf.mxu0
    %v3138 = vadd.f32 %v2927, %v3137
    %3139 = vmatmul.bf16.gmra.mxu0 %v2878
    %v3140 = vpop.f32.mrf.mxu0
    %v3141 = vadd.f32 %v2927, %v3140
    %v3142 = vpop.f32.mrf.mxu0
    %v3143 = vadd.f32 %v2927, %v3142
    %3144 = vmatmul.bf16.gmra.mxu0 %v2880
    %v3145 = vpop.f32.mrf.mxu0
    %v3146 = vadd.f32 %v2927, %v3145
    %v3147 = vpop.f32.mrf.mxu0
    %v3148 = vadd.f32 %v2927, %v3147
    %3149 = vmatmul.bf16.gmra.mxu0 %v2882
    %v3150 = vpop.f32.mrf.mxu0
    %v3151 = vadd.f32 %v2927, %v3150
    %v3152 = vpop.f32.mrf.mxu0
    %v3153 = vadd.f32 %v2927, %v3152
    %3154 = vmatmul.bf16.gmra.mxu0 %v2884
    %v3155 = vpop.f32.mrf.mxu0
    %v3156 = vadd.f32 %v2927, %v3155
    %v3157 = vpop.f32.mrf.mxu0
    %v3158 = vadd.f32 %v2927, %v3157
    %3159 = vmatmul.bf16.gmra.mxu0 %v2886
    %v3160 = vpop.f32.mrf.mxu0
    %v3161 = vadd.f32 %v2927, %v3160
    %v3162 = vpop.f32.mrf.mxu0
    %v3163 = vadd.f32 %v2927, %v3162
    %3164 = vmatmul.bf16.gmra.mxu0 %v2888
    %v3165 = vpop.f32.mrf.mxu0
    %v3166 = vadd.f32 %v2927, %v3165
    %v3167 = vpop.f32.mrf.mxu0
    %v3168 = vadd.f32 %v2927, %v3167
    %3169 = vmatmul.bf16.gmra.mxu0 %v2890
    %v3170 = vpop.f32.mrf.mxu0
    %v3171 = vadd.f32 %v2927, %v3170
    %v3172 = vpop.f32.mrf.mxu0
    %v3173 = vadd.f32 %v2927, %v3172
    %3174 = vmatmul.bf16.gmra.mxu0 %v2892
    %v3175 = vpop.f32.mrf.mxu0
    %v3176 = vadd.f32 %v2927, %v3175
    %v3177 = vpop.f32.mrf.mxu0
    %v3178 = vadd.f32 %v2927, %v3177
    %3179 = vdwg.mxu0
    %3180 = vmatpush.bf16.msra.mxu0 %v3057
    %3181 = vmatpush.bf16.msra.mxu0 %v3055
    %3182 = vmatpush.bf16.msra.mxu0 %v3053
    %3183 = vmatpush.bf16.msra.mxu0 %v3051
    %3184 = vmatpush.bf16.msra.mxu0 %v3049
    %3185 = vmatpush.bf16.msra.mxu0 %v3047
    %3186 = vmatpush.bf16.msra.mxu0 %v3045
    %3187 = vmatpush.bf16.msra.mxu0 %v3043
    %3188 = vmatmul.bf16.gmra.mxu0 %v2863
    %v3189 = vpop.f32.mrf.mxu0
    %v3190 = vadd.f32 %v3101, %v3189
    %v3191 = vpop.f32.mrf.mxu0
    %v3192 = vadd.f32 %v3103, %v3191
    %3193 = vmatmul.bf16.gmra.mxu0 %v2865
    %v3194 = vpop.f32.mrf.mxu0
    %v3195 = vadd.f32 %v3106, %v3194
    %v3196 = vpop.f32.mrf.mxu0
    %v3197 = vadd.f32 %v3108, %v3196
    %3198 = vmatmul.bf16.gmra.mxu0 %v2867
    %v3199 = vpop.f32.mrf.mxu0
    %v3200 = vadd.f32 %v3111, %v3199
    %v3201 = vpop.f32.mrf.mxu0
    %v3202 = vadd.f32 %v3113, %v3201
    %3203 = vmatmul.bf16.gmra.mxu0 %v2869
    %v3204 = vpop.f32.mrf.mxu0
    %v3205 = vadd.f32 %v3116, %v3204
    %v3206 = vpop.f32.mrf.mxu0
    %v3207 = vadd.f32 %v3118, %v3206
    %3208 = vmatmul.bf16.gmra.mxu0 %v2871
    %v3209 = vpop.f32.mrf.mxu0
    %v3210 = vadd.f32 %v3121, %v3209
    %v3211 = vpop.f32.mrf.mxu0
    %v3212 = vadd.f32 %v3123, %v3211
    %3213 = vmatmul.bf16.gmra.mxu0 %v2873
    %v3214 = vpop.f32.mrf.mxu0
    %v3215 = vadd.f32 %v3126, %v3214
    %v3216 = vpop.f32.mrf.mxu0
    %v3217 = vadd.f32 %v3128, %v3216
    %3218 = vmatmul.bf16.gmra.mxu0 %v2875
    %v3219 = vpop.f32.mrf.mxu0
    %v3220 = vadd.f32 %v3131, %v3219
    %v3221 = vpop.f32.mrf.mxu0
    %v3222 = vadd.f32 %v3133, %v3221
    %3223 = vmatmul.bf16.gmra.mxu0 %v2877
    %v3224 = vpop.f32.mrf.mxu0
    %v3225 = vadd.f32 %v3136, %v3224
    %v3226 = vpop.f32.mrf.mxu0
    %v3227 = vadd.f32 %v3138, %v3226
    %3228 = vmatmul.bf16.gmra.mxu0 %v2879
    %v3229 = vpop.f32.mrf.mxu0
    %v3230 = vadd.f32 %v3141, %v3229
    %v3231 = vpop.f32.mrf.mxu0
    %v3232 = vadd.f32 %v3143, %v3231
    %3233 = vmatmul.bf16.gmra.mxu0 %v2881
    %v3234 = vpop.f32.mrf.mxu0
    %v3235 = vadd.f32 %v3146, %v3234
    %v3236 = vpop.f32.mrf.mxu0
    %v3237 = vadd.f32 %v3148, %v3236
    %3238 = vmatmul.bf16.gmra.mxu0 %v2883
    %v3239 = vpop.f32.mrf.mxu0
    %v3240 = vadd.f32 %v3151, %v3239
    %v3241 = vpop.f32.mrf.mxu0
    %v3242 = vadd.f32 %v3153, %v3241
    %3243 = vmatmul.bf16.gmra.mxu0 %v2885
    %v3244 = vpop.f32.mrf.mxu0
    %v3245 = vadd.f32 %v3156, %v3244
    %v3246 = vpop.f32.mrf.mxu0
    %v3247 = vadd.f32 %v3158, %v3246
    %3248 = vmatmul.bf16.gmra.mxu0 %v2887
    %v3249 = vpop.f32.mrf.mxu0
    %v3250 = vadd.f32 %v3161, %v3249
    %v3251 = vpop.f32.mrf.mxu0
    %v3252 = vadd.f32 %v3163, %v3251
    %3253 = vmatmul.bf16.gmra.mxu0 %v2889
    %v3254 = vpop.f32.mrf.mxu0
    %v3255 = vadd.f32 %v3166, %v3254
    %v3256 = vpop.f32.mrf.mxu0
    %v3257 = vadd.f32 %v3168, %v3256
    %3258 = vmatmul.bf16.gmra.mxu0 %v2891
    %v3259 = vpop.f32.mrf.mxu0
    %v3260 = vadd.f32 %v3171, %v3259
    %v3261 = vpop.f32.mrf.mxu0
    %v3262 = vadd.f32 %v3173, %v3261
    %3263 = vmatmul.bf16.gmra.mxu0 %v2893
    %v3264 = vpop.f32.mrf.mxu0
    %v3265 = vadd.f32 %v3176, %v3264
    %v3266 = vpop.f32.mrf.mxu0
    %v3267 = vadd.f32 %v3178, %v3266
    %3268 = vdwg.mxu0
    %3269 = vmatpush.bf16.msra.mxu0 %v3042
    %3270 = vmatpush.bf16.msra.mxu0 %v3040
    %3271 = vmatpush.bf16.msra.mxu0 %v3038
    %3272 = vmatpush.bf16.msra.mxu0 %v3036
    %3273 = vmatpush.bf16.msra.mxu0 %v3034
    %3274 = vmatpush.bf16.msra.mxu0 %v3032
    %3275 = vmatpush.bf16.msra.mxu0 %v3030
    %3276 = vmatpush.bf16.msra.mxu0 %v3028
    %3277 = vmatmul.bf16.gmra.mxu0 %v2862
    %v3278 = vpop.f32.mrf.mxu0
    %v3279 = vadd.f32 %v2928, %v3278
    %v3280 = vpop.f32.mrf.mxu0
    %v3281 = vadd.f32 %v2928, %v3280
    %3282 = vmatmul.bf16.gmra.mxu0 %v2864
    %v3283 = vpop.f32.mrf.mxu0
    %v3284 = vadd.f32 %v2928, %v3283
    %v3285 = vpop.f32.mrf.mxu0
    %v3286 = vadd.f32 %v2928, %v3285
    %3287 = vmatmul.bf16.gmra.mxu0 %v2866
    %v3288 = vpop.f32.mrf.mxu0
    %v3289 = vadd.f32 %v2928, %v3288
    %v3290 = vpop.f32.mrf.mxu0
    %v3291 = vadd.f32 %v2928, %v3290
    %3292 = vmatmul.bf16.gmra.mxu0 %v2868
    %v3293 = vpop.f32.mrf.mxu0
    %v3294 = vadd.f32 %v2928, %v3293
    %v3295 = vpop.f32.mrf.mxu0
    %v3296 = vadd.f32 %v2928, %v3295
    %3297 = vmatmul.bf16.gmra.mxu0 %v2870
    %v3298 = vpop.f32.mrf.mxu0
    %v3299 = vadd.f32 %v2928, %v3298
    %v3300 = vpop.f32.mrf.mxu0
    %v3301 = vadd.f32 %v2928, %v3300
    %3302 = vmatmul.bf16.gmra.mxu0 %v2872
    %v3303 = vpop.f32.mrf.mxu0
    %v3304 = vadd.f32 %v2928, %v3303
    %v3305 = vpop.f32.mrf.mxu0
    %v3306 = vadd.f32 %v2928, %v3305
    %3307 = vmatmul.bf16.gmra.mxu0 %v2874
    %v3308 = vpop.f32.mrf.mxu0
    %v3309 = vadd.f32 %v2928, %v3308
    %v3310 = vpop.f32.mrf.mxu0
    %v3311 = vadd.f32 %v2928, %v3310
    %3312 = vmatmul.bf16.gmra.mxu0 %v2876
    %v3313 = vpop.f32.mrf.mxu0
    %v3314 = vadd.f32 %v2928, %v3313
    %v3315 = vpop.f32.mrf.mxu0
    %v3316 = vadd.f32 %v2928, %v3315
    %3317 = vmatmul.bf16.gmra.mxu0 %v2878
    %v3318 = vpop.f32.mrf.mxu0
    %v3319 = vadd.f32 %v2928, %v3318
    %v3320 = vpop.f32.mrf.mxu0
    %v3321 = vadd.f32 %v2928, %v3320
    %3322 = vmatmul.bf16.gmra.mxu0 %v2880
    %v3323 = vpop.f32.mrf.mxu0
    %v3324 = vadd.f32 %v2928, %v3323
    %v3325 = vpop.f32.mrf.mxu0
    %v3326 = vadd.f32 %v2928, %v3325
    %3327 = vmatmul.bf16.gmra.mxu0 %v2882
    %v3328 = vpop.f32.mrf.mxu0
    %v3329 = vadd.f32 %v2928, %v3328
    %v3330 = vpop.f32.mrf.mxu0
    %v3331 = vadd.f32 %v2928, %v3330
    %3332 = vmatmul.bf16.gmra.mxu0 %v2884
    %v3333 = vpop.f32.mrf.mxu0
    %v3334 = vadd.f32 %v2928, %v3333
    %v3335 = vpop.f32.mrf.mxu0
    %v3336 = vadd.f32 %v2928, %v3335
    %3337 = vmatmul.bf16.gmra.mxu0 %v2886
    %v3338 = vpop.f32.mrf.mxu0
    %v3339 = vadd.f32 %v2928, %v3338
    %v3340 = vpop.f32.mrf.mxu0
    %v3341 = vadd.f32 %v2928, %v3340
    %3342 = vmatmul.bf16.gmra.mxu0 %v2888
    %v3343 = vpop.f32.mrf.mxu0
    %v3344 = vadd.f32 %v2928, %v3343
    %v3345 = vpop.f32.mrf.mxu0
    %v3346 = vadd.f32 %v2928, %v3345
    %3347 = vmatmul.bf16.gmra.mxu0 %v2890
    %v3348 = vpop.f32.mrf.mxu0
    %v3349 = vadd.f32 %v2928, %v3348
    %v3350 = vpop.f32.mrf.mxu0
    %v3351 = vadd.f32 %v2928, %v3350
    %3352 = vmatmul.bf16.gmra.mxu0 %v2892
    %v3353 = vpop.f32.mrf.mxu0
    %v3354 = vadd.f32 %v2928, %v3353
    %v3355 = vpop.f32.mrf.mxu0
    %v3356 = vadd.f32 %v2928, %v3355
    %3357 = vdwg.mxu0
    %3358 = vmatpush.bf16.msra.mxu0 %v3058
    %3359 = vmatpush.bf16.msra.mxu0 %v3056
    %3360 = vmatpush.bf16.msra.mxu0 %v3054
    %3361 = vmatpush.bf16.msra.mxu0 %v3052
    %3362 = vmatpush.bf16.msra.mxu0 %v3050
    %3363 = vmatpush.bf16.msra.mxu0 %v3048
    %3364 = vmatpush.bf16.msra.mxu0 %v3046
    %3365 = vmatpush.bf16.msra.mxu0 %v3044
    %3366 = vmatmul.bf16.gmra.mxu0 %v2863
    %v3367 = vpop.f32.mrf.mxu0
    %v3368 = vadd.f32 %v3279, %v3367
    %v3369 = vpop.f32.mrf.mxu0
    %v3370 = vadd.f32 %v3281, %v3369
    %3371 = vmatmul.bf16.gmra.mxu0 %v2865
    %v3372 = vpop.f32.mrf.mxu0
    %v3373 = vadd.f32 %v3284, %v3372
    %v3374 = vpop.f32.mrf.mxu0
    %v3375 = vadd.f32 %v3286, %v3374
    %3376 = vmatmul.bf16.gmra.mxu0 %v2867
    %v3377 = vpop.f32.mrf.mxu0
    %v3378 = vadd.f32 %v3289, %v3377
    %v3379 = vpop.f32.mrf.mxu0
    %v3380 = vadd.f32 %v3291, %v3379
    %3381 = vmatmul.bf16.gmra.mxu0 %v2869
    %v3382 = vpop.f32.mrf.mxu0
    %v3383 = vadd.f32 %v3294, %v3382
    %v3384 = vpop.f32.mrf.mxu0
    %v3385 = vadd.f32 %v3296, %v3384
    %3386 = vmatmul.bf16.gmra.mxu0 %v2871
    %v3387 = vpop.f32.mrf.mxu0
    %v3388 = vadd.f32 %v3299, %v3387
    %v3389 = vpop.f32.mrf.mxu0
    %v3390 = vadd.f32 %v3301, %v3389
    %3391 = vmatmul.bf16.gmra.mxu0 %v2873
    %v3392 = vpop.f32.mrf.mxu0
    %v3393 = vadd.f32 %v3304, %v3392
    %v3394 = vpop.f32.mrf.mxu0
    %v3395 = vadd.f32 %v3306, %v3394
    %3396 = vmatmul.bf16.gmra.mxu0 %v2875
    %v3397 = vpop.f32.mrf.mxu0
    %v3398 = vadd.f32 %v3309, %v3397
    %v3399 = vpop.f32.mrf.mxu0
    %v3400 = vadd.f32 %v3311, %v3399
    %3401 = vmatmul.bf16.gmra.mxu0 %v2877
    %v3402 = vpop.f32.mrf.mxu0
    %v3403 = vadd.f32 %v3314, %v3402
    %v3404 = vpop.f32.mrf.mxu0
    %v3405 = vadd.f32 %v3316, %v3404
    %3406 = vmatmul.bf16.gmra.mxu0 %v2879
    %v3407 = vpop.f32.mrf.mxu0
    %v3408 = vadd.f32 %v3319, %v3407
    %v3409 = vpop.f32.mrf.mxu0
    %v3410 = vadd.f32 %v3321, %v3409
    %3411 = vmatmul.bf16.gmra.mxu0 %v2881
    %v3412 = vpop.f32.mrf.mxu0
    %v3413 = vadd.f32 %v3324, %v3412
    %v3414 = vpop.f32.mrf.mxu0
    %v3415 = vadd.f32 %v3326, %v3414
    %3416 = vmatmul.bf16.gmra.mxu0 %v2883
    %v3417 = vpop.f32.mrf.mxu0
    %v3418 = vadd.f32 %v3329, %v3417
    %v3419 = vpop.f32.mrf.mxu0
    %v3420 = vadd.f32 %v3331, %v3419
    %3421 = vmatmul.bf16.gmra.mxu0 %v2885
    %v3422 = vpop.f32.mrf.mxu0
    %v3423 = vadd.f32 %v3334, %v3422
    %v3424 = vpop.f32.mrf.mxu0
    %v3425 = vadd.f32 %v3336, %v3424
    %3426 = vmatmul.bf16.gmra.mxu0 %v2887
    %v3427 = vpop.f32.mrf.mxu0
    %v3428 = vadd.f32 %v3339, %v3427
    %v3429 = vpop.f32.mrf.mxu0
    %v3430 = vadd.f32 %v3341, %v3429
    %3431 = vmatmul.bf16.gmra.mxu0 %v2889
    %v3432 = vpop.f32.mrf.mxu0
    %v3433 = vadd.f32 %v3344, %v3432
    %v3434 = vpop.f32.mrf.mxu0
    %v3435 = vadd.f32 %v3346, %v3434
    %3436 = vmatmul.bf16.gmra.mxu0 %v2891
    %v3437 = vpop.f32.mrf.mxu0
    %v3438 = vadd.f32 %v3349, %v3437
    %v3439 = vpop.f32.mrf.mxu0
    %v3440 = vadd.f32 %v3351, %v3439
    %3441 = vmatmul.bf16.gmra.mxu0 %v2893
    %v3442 = vpop.f32.mrf.mxu0
    %v3443 = vadd.f32 %v3354, %v3442
    %v3444 = vpop.f32.mrf.mxu0
    %v3445 = vadd.f32 %v3356, %v3444
    %3446 = vdwg.mxu0
    %v3447 = vmax.f32 %v3190, 0.0
    %v3448 = vmax.f32 %v3368, 0.0
    %v3449 = vmax.f32 %v3192, 0.0
    %v3450 = vmax.f32 %v3370, 0.0
    %v3451 = vmax.f32 %v3195, 0.0
    %v3452 = vmax.f32 %v3373, 0.0
    %v3453 = vmax.f32 %v3197, 0.0
    %v3454 = vmax.f32 %v3375, 0.0
    %v3455 = vmax.f32 %v3200, 0.0
    %v3456 = vmax.f32 %v3378, 0.0
    %v3457 = vmax.f32 %v3202, 0.0
    %v3458 = vmax.f32 %v3380, 0.0
    %v3459 = vmax.f32 %v3205, 0.0
    %v3460 = vmax.f32 %v3383, 0.0
    %v3461 = vmax.f32 %v3207, 0.0
    %v3462 = vmax.f32 %v3385, 0.0
    %v3463 = vmax.f32 %v3210, 0.0
    %v3464 = vmax.f32 %v3388, 0.0
    %v3465 = vmax.f32 %v3212, 0.0
    %v3466 = vmax.f32 %v3390, 0.0
    %v3467 = vmax.f32 %v3215, 0.0
    %v3468 = vmax.f32 %v3393, 0.0
    %v3469 = vmax.f32 %v3217, 0.0
    %v3470 = vmax.f32 %v3395, 0.0
    %v3471 = vmax.f32 %v3220, 0.0
    %v3472 = vmax.f32 %v3398, 0.0
    %v3473 = vmax.f32 %v3222, 0.0
    %v3474 = vmax.f32 %v3400, 0.0
    %v3475 = vmax.f32 %v3225, 0.0
    %v3476 = vmax.f32 %v3403, 0.0
    %v3477 = vmax.f32 %v3227, 0.0
    %v3478 = vmax.f32 %v3405, 0.0
    %v3479 = vmax.f32 %v3230, 0.0
    %v3480 = vmax.f32 %v3408, 0.0
    %v3481 = vmax.f32 %v3232, 0.0
    %v3482 = vmax.f32 %v3410, 0.0
    %v3483 = vmax.f32 %v3235, 0.0
    %v3484 = vmax.f32 %v3413, 0.0
    %v3485 = vmax.f32 %v3237, 0.0
    %v3486 = vmax.f32 %v3415, 0.0
    %v3487 = vmax.f32 %v3240, 0.0
    %v3488 = vmax.f32 %v3418, 0.0
    %v3489 = vmax.f32 %v3242, 0.0
    %v3490 = vmax.f32 %v3420, 0.0
    %v3491 = vmax.f32 %v3245, 0.0
    %v3492 = vmax.f32 %v3423, 0.0
    %v3493 = vmax.f32 %v3247, 0.0
    %v3494 = vmax.f32 %v3425, 0.0
    %v3495 = vmax.f32 %v3250, 0.0
    %v3496 = vmax.f32 %v3428, 0.0
    %v3497 = vmax.f32 %v3252, 0.0
    %v3498 = vmax.f32 %v3430, 0.0
    %v3499 = vmax.f32 %v3255, 0.0
    %v3500 = vmax.f32 %v3433, 0.0
    %v3501 = vmax.f32 %v3257, 0.0
    %v3502 = vmax.f32 %v3435, 0.0
    %v3503 = vmax.f32 %v3260, 0.0
    %v3504 = vmax.f32 %v3438, 0.0
    %v3505 = vmax.f32 %v3262, 0.0
    %v3506 = vmax.f32 %v3440, 0.0
    %v3507 = vmax.f32 %v3265, 0.0
    %v3508 = vmax.f32 %v3443, 0.0
    %v3509 = vmax.f32 %v3267, 0.0
    %v3510 = vmax.f32 %v3445, 0.0
    %v3511 = vpack.c.bf16 %v3449, %v3447
    %v3512 = vpack.c.bf16 %v3450, %v3448
    %v3513 = vpack.c.bf16 %v3453, %v3451
    %v3514 = vpack.c.bf16 %v3454, %v3452
    %v3515 = vpack.c.bf16 %v3457, %v3455
    %v3516 = vpack.c.bf16 %v3458, %v3456
    %v3517 = vpack.c.bf16 %v3461, %v3459
    %v3518 = vpack.c.bf16 %v3462, %v3460
    %v3519 = vpack.c.bf16 %v3465, %v3463
    %v3520 = vpack.c.bf16 %v3466, %v3464
    %v3521 = vpack.c.bf16 %v3469, %v3467
    %v3522 = vpack.c.bf16 %v3470, %v3468
    %v3523 = vpack.c.bf16 %v3473, %v3471
    %v3524 = vpack.c.bf16 %v3474, %v3472
    %v3525 = vpack.c.bf16 %v3477, %v3475
    %v3526 = vpack.c.bf16 %v3478, %v3476
    %v3527 = vpack.c.bf16 %v3481, %v3479
    %v3528 = vpack.c.bf16 %v3482, %v3480
    %v3529 = vpack.c.bf16 %v3485, %v3483
    %v3530 = vpack.c.bf16 %v3486, %v3484
    %v3531 = vpack.c.bf16 %v3489, %v3487
    %v3532 = vpack.c.bf16 %v3490, %v3488
    %v3533 = vpack.c.bf16 %v3493, %v3491
    %v3534 = vpack.c.bf16 %v3494, %v3492
    %v3535 = vpack.c.bf16 %v3497, %v3495
    %v3536 = vpack.c.bf16 %v3498, %v3496
    %v3537 = vpack.c.bf16 %v3501, %v3499
    %v3538 = vpack.c.bf16 %v3502, %v3500
    %v3539 = vpack.c.bf16 %v3505, %v3503
    %v3540 = vpack.c.bf16 %v3506, %v3504
    %v3541 = vpack.c.bf16 %v3509, %v3507
    %v3542 = vpack.c.bf16 %v3510, %v3508
    %v3543 = vld [vmem:[#allocation13] sm:$0xff]
    %v3544 = vld [vmem:[#allocation13 + $0x8] sm:$0xff]
    %v3545 = vld [vmem:[#allocation13 + $0x10] sm:$0xff]
    %v3546 = vld [vmem:[#allocation13 + $0x18] sm:$0xff]
    %v3547 = vld [vmem:[#allocation13 + $0x20] sm:$0xff]
    %v3548 = vld [vmem:[#allocation13 + $0x28] sm:$0xff]
    %v3549 = vld [vmem:[#allocation13 + $0x30] sm:$0xff]
    %v3550 = vld [vmem:[#allocation13 + $0x38] sm:$0xff]
    %v3551 = vld [vmem:[#allocation13 + $0x40] sm:$0xff]
    %v3552 = vld [vmem:[#allocation13 + $0x48] sm:$0xff]
    %v3553 = vld [vmem:[#allocation13 + $0x50] sm:$0xff]
    %v3554 = vld [vmem:[#allocation13 + $0x58] sm:$0xff]
    %v3555 = vld [vmem:[#allocation13 + $0x60] sm:$0xff]
    %v3556 = vld [vmem:[#allocation13 + $0x68] sm:$0xff]
    %v3557 = vld [vmem:[#allocation13 + $0x70] sm:$0xff]
    %v3558 = vld [vmem:[#allocation13 + $0x78] sm:$0xff]
    %v3559 = vld [vmem:[#allocation13 + $0x80] sm:$0xff]
    %v3560 = vld [vmem:[#allocation13 + $0x88] sm:$0xff]
    %v3561 = vld [vmem:[#allocation13 + $0x90] sm:$0xff]
    %v3562 = vld [vmem:[#allocation13 + $0x98] sm:$0xff]
    %v3563 = vld [vmem:[#allocation13 + $0xa0] sm:$0xff]
    %v3564 = vld [vmem:[#allocation13 + $0xa8] sm:$0xff]
    %v3565 = vld [vmem:[#allocation13 + $0xb0] sm:$0xff]
    %v3566 = vld [vmem:[#allocation13 + $0xb8] sm:$0xff]
    %v3567 = vld [vmem:[#allocation13 + $0xc0] sm:$0xff]
    %v3568 = vld [vmem:[#allocation13 + $0xc8] sm:$0xff]
    %v3569 = vld [vmem:[#allocation13 + $0xd0] sm:$0xff]
    %v3570 = vld [vmem:[#allocation13 + $0xd8] sm:$0xff]
    %v3571 = vld [vmem:[#allocation13 + $0xe0] sm:$0xff]
    %v3572 = vld [vmem:[#allocation13 + $0xe8] sm:$0xff]
    %v3573 = vld [vmem:[#allocation13 + $0xf0] sm:$0xff]
    %v3574 = vld [vmem:[#allocation13 + $0xf8] sm:$0xff]
    %v3576 = vperm.slane %v263, 0
    %v3577 = vperm.slane %v263, 1
    %v3612 = vunpack.c.l.b16 %v3543
    %v3613 = vunpack.c.h.b16 %v3543
    %v3614 = vunpack.c.l.b16 %v3544
    %v3615 = vunpack.c.h.b16 %v3544
    %v3616 = vunpack.c.l.b16 %v3545
    %v3617 = vunpack.c.h.b16 %v3545
    %v3618 = vunpack.c.l.b16 %v3546
    %v3619 = vunpack.c.h.b16 %v3546
    %v3620 = vunpack.c.l.b16 %v3547
    %v3621 = vunpack.c.h.b16 %v3547
    %v3622 = vunpack.c.l.b16 %v3548
    %v3623 = vunpack.c.h.b16 %v3548
    %v3624 = vunpack.c.l.b16 %v3549
    %v3625 = vunpack.c.h.b16 %v3549
    %v3626 = vunpack.c.l.b16 %v3550
    %v3627 = vunpack.c.h.b16 %v3550
    %v3628 = vunpack.c.l.b16 %v3551
    %v3629 = vunpack.c.h.b16 %v3551
    %v3630 = vunpack.c.l.b16 %v3552
    %v3631 = vunpack.c.h.b16 %v3552
    %v3632 = vunpack.c.l.b16 %v3553
    %v3633 = vunpack.c.h.b16 %v3553
    %v3634 = vunpack.c.l.b16 %v3554
    %v3635 = vunpack.c.h.b16 %v3554
    %v3636 = vunpack.c.l.b16 %v3555
    %v3637 = vunpack.c.h.b16 %v3555
    %v3638 = vunpack.c.l.b16 %v3556
    %v3639 = vunpack.c.h.b16 %v3556
    %v3640 = vunpack.c.l.b16 %v3557
    %v3641 = vunpack.c.h.b16 %v3557
    %v3642 = vunpack.c.l.b16 %v3558
    %v3643 = vunpack.c.h.b16 %v3558
    %v3644 = vunpack.c.l.b16 %v3559
    %v3645 = vunpack.c.h.b16 %v3559
    %v3646 = vunpack.c.l.b16 %v3560
    %v3647 = vunpack.c.h.b16 %v3560
    %v3648 = vunpack.c.l.b16 %v3561
    %v3649 = vunpack.c.h.b16 %v3561
    %v3650 = vunpack.c.l.b16 %v3562
    %v3651 = vunpack.c.h.b16 %v3562
    %v3652 = vunpack.c.l.b16 %v3563
    %v3653 = vunpack.c.h.b16 %v3563
    %v3654 = vunpack.c.l.b16 %v3564
    %v3655 = vunpack.c.h.b16 %v3564
    %v3656 = vunpack.c.l.b16 %v3565
    %v3657 = vunpack.c.h.b16 %v3565
    %v3658 = vunpack.c.l.b16 %v3566
    %v3659 = vunpack.c.h.b16 %v3566
    %v3660 = vunpack.c.l.b16 %v3567
    %v3661 = vunpack.c.h.b16 %v3567
    %v3662 = vunpack.c.l.b16 %v3568
    %v3663 = vunpack.c.h.b16 %v3568
    %v3664 = vunpack.c.l.b16 %v3569
    %v3665 = vunpack.c.h.b16 %v3569
    %v3666 = vunpack.c.l.b16 %v3570
    %v3667 = vunpack.c.h.b16 %v3570
    %v3668 = vunpack.c.l.b16 %v3571
    %v3669 = vunpack.c.h.b16 %v3571
    %v3670 = vunpack.c.l.b16 %v3572
    %v3671 = vunpack.c.h.b16 %v3572
    %v3672 = vunpack.c.l.b16 %v3573
    %v3673 = vunpack.c.h.b16 %v3573
    %v3674 = vunpack.c.l.b16 %v3574
    %v3675 = vunpack.c.h.b16 %v3574
    %v3676 = vpack.c.b16 %v3614, %v3612
    %v3677 = vpack.c.b16 %v3615, %v3613
    %v3678 = vpack.c.b16 %v3618, %v3616
    %v3679 = vpack.c.b16 %v3619, %v3617
    %v3680 = vpack.c.b16 %v3622, %v3620
    %v3681 = vpack.c.b16 %v3623, %v3621
    %v3682 = vpack.c.b16 %v3626, %v3624
    %v3683 = vpack.c.b16 %v3627, %v3625
    %v3684 = vpack.c.b16 %v3630, %v3628
    %v3685 = vpack.c.b16 %v3631, %v3629
    %v3686 = vpack.c.b16 %v3634, %v3632
    %v3687 = vpack.c.b16 %v3635, %v3633
    %v3688 = vpack.c.b16 %v3638, %v3636
    %v3689 = vpack.c.b16 %v3639, %v3637
    %v3690 = vpack.c.b16 %v3642, %v3640
    %v3691 = vpack.c.b16 %v3643, %v3641
    %v3692 = vpack.c.b16 %v3646, %v3644
    %v3693 = vpack.c.b16 %v3647, %v3645
    %v3694 = vpack.c.b16 %v3650, %v3648
    %v3695 = vpack.c.b16 %v3651, %v3649
    %v3696 = vpack.c.b16 %v3654, %v3652
    %v3697 = vpack.c.b16 %v3655, %v3653
    %v3698 = vpack.c.b16 %v3658, %v3656
    %v3699 = vpack.c.b16 %v3659, %v3657
    %v3700 = vpack.c.b16 %v3662, %v3660
    %v3701 = vpack.c.b16 %v3663, %v3661
    %v3702 = vpack.c.b16 %v3666, %v3664
    %v3703 = vpack.c.b16 %v3667, %v3665
    %v3704 = vpack.c.b16 %v3670, %v3668
    %v3705 = vpack.c.b16 %v3671, %v3669
    %v3706 = vpack.c.b16 %v3674, %v3672
    %v3707 = vpack.c.b16 %v3675, %v3673
    %3740 = vmatpush.bf16.msra.mxu0 %v3690
    %3741 = vmatpush.bf16.msra.mxu0 %v3688
    %3742 = vmatpush.bf16.msra.mxu0 %v3686
    %3743 = vmatpush.bf16.msra.mxu0 %v3684
    %3744 = vmatpush.bf16.msra.mxu0 %v3682
    %3745 = vmatpush.bf16.msra.mxu0 %v3680
    %3746 = vmatpush.bf16.msra.mxu0 %v3678
    %3747 = vmatpush.bf16.msra.mxu0 %v3676
    %3748 = vmatmul.bf16.gmra.mxu0 %v3511
    %v3749 = vpop.f32.mrf.mxu0
    %v3750 = vadd.f32 %v3576, %v3749
    %v3751 = vpop.f32.mrf.mxu0
    %v3752 = vadd.f32 %v3576, %v3751
    %3753 = vmatmul.bf16.gmra.mxu0 %v3513
    %v3754 = vpop.f32.mrf.mxu0
    %v3755 = vadd.f32 %v3576, %v3754
    %v3756 = vpop.f32.mrf.mxu0
    %v3757 = vadd.f32 %v3576, %v3756
    %3758 = vmatmul.bf16.gmra.mxu0 %v3515
    %v3759 = vpop.f32.mrf.mxu0
    %v3760 = vadd.f32 %v3576, %v3759
    %v3761 = vpop.f32.mrf.mxu0
    %v3762 = vadd.f32 %v3576, %v3761
    %3763 = vmatmul.bf16.gmra.mxu0 %v3517
    %v3764 = vpop.f32.mrf.mxu0
    %v3765 = vadd.f32 %v3576, %v3764
    %v3766 = vpop.f32.mrf.mxu0
    %v3767 = vadd.f32 %v3576, %v3766
    %3768 = vmatmul.bf16.gmra.mxu0 %v3519
    %v3769 = vpop.f32.mrf.mxu0
    %v3770 = vadd.f32 %v3576, %v3769
    %v3771 = vpop.f32.mrf.mxu0
    %v3772 = vadd.f32 %v3576, %v3771
    %3773 = vmatmul.bf16.gmra.mxu0 %v3521
    %v3774 = vpop.f32.mrf.mxu0
    %v3775 = vadd.f32 %v3576, %v3774
    %v3776 = vpop.f32.mrf.mxu0
    %v3777 = vadd.f32 %v3576, %v3776
    %3778 = vmatmul.bf16.gmra.mxu0 %v3523
    %v3779 = vpop.f32.mrf.mxu0
    %v3780 = vadd.f32 %v3576, %v3779
    %v3781 = vpop.f32.mrf.mxu0
    %v3782 = vadd.f32 %v3576, %v3781
    %3783 = vmatmul.bf16.gmra.mxu0 %v3525
    %v3784 = vpop.f32.mrf.mxu0
    %v3785 = vadd.f32 %v3576, %v3784
    %v3786 = vpop.f32.mrf.mxu0
    %v3787 = vadd.f32 %v3576, %v3786
    %3788 = vmatmul.bf16.gmra.mxu0 %v3527
    %v3789 = vpop.f32.mrf.mxu0
    %v3790 = vadd.f32 %v3576, %v3789
    %v3791 = vpop.f32.mrf.mxu0
    %v3792 = vadd.f32 %v3576, %v3791
    %3793 = vmatmul.bf16.gmra.mxu0 %v3529
    %v3794 = vpop.f32.mrf.mxu0
    %v3795 = vadd.f32 %v3576, %v3794
    %v3796 = vpop.f32.mrf.mxu0
    %v3797 = vadd.f32 %v3576, %v3796
    %3798 = vmatmul.bf16.gmra.mxu0 %v3531
    %v3799 = vpop.f32.mrf.mxu0
    %v3800 = vadd.f32 %v3576, %v3799
    %v3801 = vpop.f32.mrf.mxu0
    %v3802 = vadd.f32 %v3576, %v3801
    %3803 = vmatmul.bf16.gmra.mxu0 %v3533
    %v3804 = vpop.f32.mrf.mxu0
    %v3805 = vadd.f32 %v3576, %v3804
    %v3806 = vpop.f32.mrf.mxu0
    %v3807 = vadd.f32 %v3576, %v3806
    %3808 = vmatmul.bf16.gmra.mxu0 %v3535
    %v3809 = vpop.f32.mrf.mxu0
    %v3810 = vadd.f32 %v3576, %v3809
    %v3811 = vpop.f32.mrf.mxu0
    %v3812 = vadd.f32 %v3576, %v3811
    %3813 = vmatmul.bf16.gmra.mxu0 %v3537
    %v3814 = vpop.f32.mrf.mxu0
    %v3815 = vadd.f32 %v3576, %v3814
    %v3816 = vpop.f32.mrf.mxu0
    %v3817 = vadd.f32 %v3576, %v3816
    %3818 = vmatmul.bf16.gmra.mxu0 %v3539
    %v3819 = vpop.f32.mrf.mxu0
    %v3820 = vadd.f32 %v3576, %v3819
    %v3821 = vpop.f32.mrf.mxu0
    %v3822 = vadd.f32 %v3576, %v3821
    %3823 = vmatmul.bf16.gmra.mxu0 %v3541
    %v3824 = vpop.f32.mrf.mxu0
    %v3825 = vadd.f32 %v3576, %v3824
    %v3826 = vpop.f32.mrf.mxu0
    %v3827 = vadd.f32 %v3576, %v3826
    %3828 = vdwg.mxu0
    %3829 = vmatpush.bf16.msra.mxu0 %v3706
    %3830 = vmatpush.bf16.msra.mxu0 %v3704
    %3831 = vmatpush.bf16.msra.mxu0 %v3702
    %3832 = vmatpush.bf16.msra.mxu0 %v3700
    %3833 = vmatpush.bf16.msra.mxu0 %v3698
    %3834 = vmatpush.bf16.msra.mxu0 %v3696
    %3835 = vmatpush.bf16.msra.mxu0 %v3694
    %3836 = vmatpush.bf16.msra.mxu0 %v3692
    %3837 = vmatmul.bf16.gmra.mxu0 %v3512
    %v3838 = vpop.f32.mrf.mxu0
    %v3839 = vadd.f32 %v3750, %v3838
    %v3840 = vpop.f32.mrf.mxu0
    %v3841 = vadd.f32 %v3752, %v3840
    %3842 = vmatmul.bf16.gmra.mxu0 %v3514
    %v3843 = vpop.f32.mrf.mxu0
    %v3844 = vadd.f32 %v3755, %v3843
    %v3845 = vpop.f32.mrf.mxu0
    %v3846 = vadd.f32 %v3757, %v3845
    %3847 = vmatmul.bf16.gmra.mxu0 %v3516
    %v3848 = vpop.f32.mrf.mxu0
    %v3849 = vadd.f32 %v3760, %v3848
    %v3850 = vpop.f32.mrf.mxu0
    %v3851 = vadd.f32 %v3762, %v3850
    %3852 = vmatmul.bf16.gmra.mxu0 %v3518
    %v3853 = vpop.f32.mrf.mxu0
    %v3854 = vadd.f32 %v3765, %v3853
    %v3855 = vpop.f32.mrf.mxu0
    %v3856 = vadd.f32 %v3767, %v3855
    %3857 = vmatmul.bf16.gmra.mxu0 %v3520
    %v3858 = vpop.f32.mrf.mxu0
    %v3859 = vadd.f32 %v3770, %v3858
    %v3860 = vpop.f32.mrf.mxu0
    %v3861 = vadd.f32 %v3772, %v3860
    %3862 = vmatmul.bf16.gmra.mxu0 %v3522
    %v3863 = vpop.f32.mrf.mxu0
    %v3864 = vadd.f32 %v3775, %v3863
    %v3865 = vpop.f32.mrf.mxu0
    %v3866 = vadd.f32 %v3777, %v3865
    %3867 = vmatmul.bf16.gmra.mxu0 %v3524
    %v3868 = vpop.f32.mrf.mxu0
    %v3869 = vadd.f32 %v3780, %v3868
    %v3870 = vpop.f32.mrf.mxu0
    %v3871 = vadd.f32 %v3782, %v3870
    %3872 = vmatmul.bf16.gmra.mxu0 %v3526
    %v3873 = vpop.f32.mrf.mxu0
    %v3874 = vadd.f32 %v3785, %v3873
    %v3875 = vpop.f32.mrf.mxu0
    %v3876 = vadd.f32 %v3787, %v3875
    %3877 = vmatmul.bf16.gmra.mxu0 %v3528
    %v3878 = vpop.f32.mrf.mxu0
    %v3879 = vadd.f32 %v3790, %v3878
    %v3880 = vpop.f32.mrf.mxu0
    %v3881 = vadd.f32 %v3792, %v3880
    %3882 = vmatmul.bf16.gmra.mxu0 %v3530
    %v3883 = vpop.f32.mrf.mxu0
    %v3884 = vadd.f32 %v3795, %v3883
    %v3885 = vpop.f32.mrf.mxu0
    %v3886 = vadd.f32 %v3797, %v3885
    %3887 = vmatmul.bf16.gmra.mxu0 %v3532
    %v3888 = vpop.f32.mrf.mxu0
    %v3889 = vadd.f32 %v3800, %v3888
    %v3890 = vpop.f32.mrf.mxu0
    %v3891 = vadd.f32 %v3802, %v3890
    %3892 = vmatmul.bf16.gmra.mxu0 %v3534
    %v3893 = vpop.f32.mrf.mxu0
    %v3894 = vadd.f32 %v3805, %v3893
    %v3895 = vpop.f32.mrf.mxu0
    %v3896 = vadd.f32 %v3807, %v3895
    %3897 = vmatmul.bf16.gmra.mxu0 %v3536
    %v3898 = vpop.f32.mrf.mxu0
    %v3899 = vadd.f32 %v3810, %v3898
    %v3900 = vpop.f32.mrf.mxu0
    %v3901 = vadd.f32 %v3812, %v3900
    %3902 = vmatmul.bf16.gmra.mxu0 %v3538
    %v3903 = vpop.f32.mrf.mxu0
    %v3904 = vadd.f32 %v3815, %v3903
    %v3905 = vpop.f32.mrf.mxu0
    %v3906 = vadd.f32 %v3817, %v3905
    %3907 = vmatmul.bf16.gmra.mxu0 %v3540
    %v3908 = vpop.f32.mrf.mxu0
    %v3909 = vadd.f32 %v3820, %v3908
    %v3910 = vpop.f32.mrf.mxu0
    %v3911 = vadd.f32 %v3822, %v3910
    %3912 = vmatmul.bf16.gmra.mxu0 %v3542
    %v3913 = vpop.f32.mrf.mxu0
    %v3914 = vadd.f32 %v3825, %v3913
    %v3915 = vpop.f32.mrf.mxu0
    %v3916 = vadd.f32 %v3827, %v3915
    %3917 = vdwg.mxu0
    %3918 = vmatpush.bf16.msra.mxu0 %v3691
    %3919 = vmatpush.bf16.msra.mxu0 %v3689
    %3920 = vmatpush.bf16.msra.mxu0 %v3687
    %3921 = vmatpush.bf16.msra.mxu0 %v3685
    %3922 = vmatpush.bf16.msra.mxu0 %v3683
    %3923 = vmatpush.bf16.msra.mxu0 %v3681
    %3924 = vmatpush.bf16.msra.mxu0 %v3679
    %3925 = vmatpush.bf16.msra.mxu0 %v3677
    %3926 = vmatmul.bf16.gmra.mxu0 %v3511
    %v3927 = vpop.f32.mrf.mxu0
    %v3928 = vadd.f32 %v3577, %v3927
    %v3929 = vpop.f32.mrf.mxu0
    %v3930 = vadd.f32 %v3577, %v3929
    %3931 = vmatmul.bf16.gmra.mxu0 %v3513
    %v3932 = vpop.f32.mrf.mxu0
    %v3933 = vadd.f32 %v3577, %v3932
    %v3934 = vpop.f32.mrf.mxu0
    %v3935 = vadd.f32 %v3577, %v3934
    %3936 = vmatmul.bf16.gmra.mxu0 %v3515
    %v3937 = vpop.f32.mrf.mxu0
    %v3938 = vadd.f32 %v3577, %v3937
    %v3939 = vpop.f32.mrf.mxu0
    %v3940 = vadd.f32 %v3577, %v3939
    %3941 = vmatmul.bf16.gmra.mxu0 %v3517
    %v3942 = vpop.f32.mrf.mxu0
    %v3943 = vadd.f32 %v3577, %v3942
    %v3944 = vpop.f32.mrf.mxu0
    %v3945 = vadd.f32 %v3577, %v3944
    %3946 = vmatmul.bf16.gmra.mxu0 %v3519
    %v3947 = vpop.f32.mrf.mxu0
    %v3948 = vadd.f32 %v3577, %v3947
    %v3949 = vpop.f32.mrf.mxu0
    %v3950 = vadd.f32 %v3577, %v3949
    %3951 = vmatmul.bf16.gmra.mxu0 %v3521
    %v3952 = vpop.f32.mrf.mxu0
    %v3953 = vadd.f32 %v3577, %v3952
    %v3954 = vpop.f32.mrf.mxu0
    %v3955 = vadd.f32 %v3577, %v3954
    %3956 = vmatmul.bf16.gmra.mxu0 %v3523
    %v3957 = vpop.f32.mrf.mxu0
    %v3958 = vadd.f32 %v3577, %v3957
    %v3959 = vpop.f32.mrf.mxu0
    %v3960 = vadd.f32 %v3577, %v3959
    %3961 = vmatmul.bf16.gmra.mxu0 %v3525
    %v3962 = vpop.f32.mrf.mxu0
    %v3963 = vadd.f32 %v3577, %v3962
    %v3964 = vpop.f32.mrf.mxu0
    %v3965 = vadd.f32 %v3577, %v3964
    %3966 = vmatmul.bf16.gmra.mxu0 %v3527
    %v3967 = vpop.f32.mrf.mxu0
    %v3968 = vadd.f32 %v3577, %v3967
    %v3969 = vpop.f32.mrf.mxu0
    %v3970 = vadd.f32 %v3577, %v3969
    %3971 = vmatmul.bf16.gmra.mxu0 %v3529
    %v3972 = vpop.f32.mrf.mxu0
    %v3973 = vadd.f32 %v3577, %v3972
    %v3974 = vpop.f32.mrf.mxu0
    %v3975 = vadd.f32 %v3577, %v3974
    %3976 = vmatmul.bf16.gmra.mxu0 %v3531
    %v3977 = vpop.f32.mrf.mxu0
    %v3978 = vadd.f32 %v3577, %v3977
    %v3979 = vpop.f32.mrf.mxu0
    %v3980 = vadd.f32 %v3577, %v3979
    %3981 = vmatmul.bf16.gmra.mxu0 %v3533
    %v3982 = vpop.f32.mrf.mxu0
    %v3983 = vadd.f32 %v3577, %v3982
    %v3984 = vpop.f32.mrf.mxu0
    %v3985 = vadd.f32 %v3577, %v3984
    %3986 = vmatmul.bf16.gmra.mxu0 %v3535
    %v3987 = vpop.f32.mrf.mxu0
    %v3988 = vadd.f32 %v3577, %v3987
    %v3989 = vpop.f32.mrf.mxu0
    %v3990 = vadd.f32 %v3577, %v3989
    %3991 = vmatmul.bf16.gmra.mxu0 %v3537
    %v3992 = vpop.f32.mrf.mxu0
    %v3993 = vadd.f32 %v3577, %v3992
    %v3994 = vpop.f32.mrf.mxu0
    %v3995 = vadd.f32 %v3577, %v3994
    %3996 = vmatmul.bf16.gmra.mxu0 %v3539
    %v3997 = vpop.f32.mrf.mxu0
    %v3998 = vadd.f32 %v3577, %v3997
    %v3999 = vpop.f32.mrf.mxu0
    %v4000 = vadd.f32 %v3577, %v3999
    %4001 = vmatmul.bf16.gmra.mxu0 %v3541
    %v4002 = vpop.f32.mrf.mxu0
    %v4003 = vadd.f32 %v3577, %v4002
    %v4004 = vpop.f32.mrf.mxu0
    %v4005 = vadd.f32 %v3577, %v4004
    %4006 = vdwg.mxu0
    %4007 = vmatpush.bf16.msra.mxu0 %v3707
    %4008 = vmatpush.bf16.msra.mxu0 %v3705
    %4009 = vmatpush.bf16.msra.mxu0 %v3703
    %4010 = vmatpush.bf16.msra.mxu0 %v3701
    %4011 = vmatpush.bf16.msra.mxu0 %v3699
    %4012 = vmatpush.bf16.msra.mxu0 %v3697
    %4013 = vmatpush.bf16.msra.mxu0 %v3695
    %4014 = vmatpush.bf16.msra.mxu0 %v3693
    %4015 = vmatmul.bf16.gmra.mxu0 %v3512
    %v4016 = vpop.f32.mrf.mxu0
    %v4017 = vadd.f32 %v3928, %v4016
    %v4018 = vpop.f32.mrf.mxu0
    %v4019 = vadd.f32 %v3930, %v4018
    %4020 = vmatmul.bf16.gmra.mxu0 %v3514
    %v4021 = vpop.f32.mrf.mxu0
    %v4022 = vadd.f32 %v3933, %v4021
    %v4023 = vpop.f32.mrf.mxu0
    %v4024 = vadd.f32 %v3935, %v4023
    %4025 = vmatmul.bf16.gmra.mxu0 %v3516
    %v4026 = vpop.f32.mrf.mxu0
    %v4027 = vadd.f32 %v3938, %v4026
    %v4028 = vpop.f32.mrf.mxu0
    %v4029 = vadd.f32 %v3940, %v4028
    %4030 = vmatmul.bf16.gmra.mxu0 %v3518
    %v4031 = vpop.f32.mrf.mxu0
    %v4032 = vadd.f32 %v3943, %v4031
    %v4033 = vpop.f32.mrf.mxu0
    %v4034 = vadd.f32 %v3945, %v4033
    %4035 = vmatmul.bf16.gmra.mxu0 %v3520
    %v4036 = vpop.f32.mrf.mxu0
    %v4037 = vadd.f32 %v3948, %v4036
    %v4038 = vpop.f32.mrf.mxu0
    %v4039 = vadd.f32 %v3950, %v4038
    %4040 = vmatmul.bf16.gmra.mxu0 %v3522
    %v4041 = vpop.f32.mrf.mxu0
    %v4042 = vadd.f32 %v3953, %v4041
    %v4043 = vpop.f32.mrf.mxu0
    %v4044 = vadd.f32 %v3955, %v4043
    %4045 = vmatmul.bf16.gmra.mxu0 %v3524
    %v4046 = vpop.f32.mrf.mxu0
    %v4047 = vadd.f32 %v3958, %v4046
    %v4048 = vpop.f32.mrf.mxu0
    %v4049 = vadd.f32 %v3960, %v4048
    %4050 = vmatmul.bf16.gmra.mxu0 %v3526
    %v4051 = vpop.f32.mrf.mxu0
    %v4052 = vadd.f32 %v3963, %v4051
    %v4053 = vpop.f32.mrf.mxu0
    %v4054 = vadd.f32 %v3965, %v4053
    %4055 = vmatmul.bf16.gmra.mxu0 %v3528
    %v4056 = vpop.f32.mrf.mxu0
    %v4057 = vadd.f32 %v3968, %v4056
    %v4058 = vpop.f32.mrf.mxu0
    %v4059 = vadd.f32 %v3970, %v4058
    %4060 = vmatmul.bf16.gmra.mxu0 %v3530
    %v4061 = vpop.f32.mrf.mxu0
    %v4062 = vadd.f32 %v3973, %v4061
    %v4063 = vpop.f32.mrf.mxu0
    %v4064 = vadd.f32 %v3975, %v4063
    %4065 = vmatmul.bf16.gmra.mxu0 %v3532
    %v4066 = vpop.f32.mrf.mxu0
    %v4067 = vadd.f32 %v3978, %v4066
    %v4068 = vpop.f32.mrf.mxu0
    %v4069 = vadd.f32 %v3980, %v4068
    %4070 = vmatmul.bf16.gmra.mxu0 %v3534
    %v4071 = vpop.f32.mrf.mxu0
    %v4072 = vadd.f32 %v3983, %v4071
    %v4073 = vpop.f32.mrf.mxu0
    %v4074 = vadd.f32 %v3985, %v4073
    %4075 = vmatmul.bf16.gmra.mxu0 %v3536
    %v4076 = vpop.f32.mrf.mxu0
    %v4077 = vadd.f32 %v3988, %v4076
    %v4078 = vpop.f32.mrf.mxu0
    %v4079 = vadd.f32 %v3990, %v4078
    %4080 = vmatmul.bf16.gmra.mxu0 %v3538
    %v4081 = vpop.f32.mrf.mxu0
    %v4082 = vadd.f32 %v3993, %v4081
    %v4083 = vpop.f32.mrf.mxu0
    %v4084 = vadd.f32 %v3995, %v4083
    %4085 = vmatmul.bf16.gmra.mxu0 %v3540
    %v4086 = vpop.f32.mrf.mxu0
    %v4087 = vadd.f32 %v3998, %v4086
    %v4088 = vpop.f32.mrf.mxu0
    %v4089 = vadd.f32 %v4000, %v4088
    %4090 = vmatmul.bf16.gmra.mxu0 %v3542
    %v4091 = vpop.f32.mrf.mxu0
    %v4092 = vadd.f32 %v4003, %v4091
    %v4093 = vpop.f32.mrf.mxu0
    %v4094 = vadd.f32 %v4005, %v4093
    %4095 = vdwg.mxu0
    %v4096 = vmax.f32 %v3839, 0.0
    %v4097 = vmax.f32 %v4017, 0.0
    %v4098 = vmax.f32 %v3841, 0.0
    %v4099 = vmax.f32 %v4019, 0.0
    %v4100 = vmax.f32 %v3844, 0.0
    %v4101 = vmax.f32 %v4022, 0.0
    %v4102 = vmax.f32 %v3846, 0.0
    %v4103 = vmax.f32 %v4024, 0.0
    %v4104 = vmax.f32 %v3849, 0.0
    %v4105 = vmax.f32 %v4027, 0.0
    %v4106 = vmax.f32 %v3851, 0.0
    %v4107 = vmax.f32 %v4029, 0.0
    %v4108 = vmax.f32 %v3854, 0.0
    %v4109 = vmax.f32 %v4032, 0.0
    %v4110 = vmax.f32 %v3856, 0.0
    %v4111 = vmax.f32 %v4034, 0.0
    %v4112 = vmax.f32 %v3859, 0.0
    %v4113 = vmax.f32 %v4037, 0.0
    %v4114 = vmax.f32 %v3861, 0.0
    %v4115 = vmax.f32 %v4039, 0.0
    %v4116 = vmax.f32 %v3864, 0.0
    %v4117 = vmax.f32 %v4042, 0.0
    %v4118 = vmax.f32 %v3866, 0.0
    %v4119 = vmax.f32 %v4044, 0.0
    %v4120 = vmax.f32 %v3869, 0.0
    %v4121 = vmax.f32 %v4047, 0.0
    %v4122 = vmax.f32 %v3871, 0.0
    %v4123 = vmax.f32 %v4049, 0.0
    %v4124 = vmax.f32 %v3874, 0.0
    %v4125 = vmax.f32 %v4052, 0.0
    %v4126 = vmax.f32 %v3876, 0.0
    %v4127 = vmax.f32 %v4054, 0.0
    %v4128 = vmax.f32 %v3879, 0.0
    %v4129 = vmax.f32 %v4057, 0.0
    %v4130 = vmax.f32 %v3881, 0.0
    %v4131 = vmax.f32 %v4059, 0.0
    %v4132 = vmax.f32 %v3884, 0.0
    %v4133 = vmax.f32 %v4062, 0.0
    %v4134 = vmax.f32 %v3886, 0.0
    %v4135 = vmax.f32 %v4064, 0.0
    %v4136 = vmax.f32 %v3889, 0.0
    %v4137 = vmax.f32 %v4067, 0.0
    %v4138 = vmax.f32 %v3891, 0.0
    %v4139 = vmax.f32 %v4069, 0.0
    %v4140 = vmax.f32 %v3894, 0.0
    %v4141 = vmax.f32 %v4072, 0.0
    %v4142 = vmax.f32 %v3896, 0.0
    %v4143 = vmax.f32 %v4074, 0.0
    %v4144 = vmax.f32 %v3899, 0.0
    %v4145 = vmax.f32 %v4077, 0.0
    %v4146 = vmax.f32 %v3901, 0.0
    %v4147 = vmax.f32 %v4079, 0.0
    %v4148 = vmax.f32 %v3904, 0.0
    %v4149 = vmax.f32 %v4082, 0.0
    %v4150 = vmax.f32 %v3906, 0.0
    %v4151 = vmax.f32 %v4084, 0.0
    %v4152 = vmax.f32 %v3909, 0.0
    %v4153 = vmax.f32 %v4087, 0.0
    %v4154 = vmax.f32 %v3911, 0.0
    %v4155 = vmax.f32 %v4089, 0.0
    %v4156 = vmax.f32 %v3914, 0.0
    %v4157 = vmax.f32 %v4092, 0.0
    %v4158 = vmax.f32 %v3916, 0.0
    %v4159 = vmax.f32 %v4094, 0.0
    %v4160 = vpack.c.bf16 %v4098, %v4096
    %v4161 = vpack.c.bf16 %v4099, %v4097
    %v4162 = vpack.c.bf16 %v4102, %v4100
    %v4163 = vpack.c.bf16 %v4103, %v4101
    %v4164 = vpack.c.bf16 %v4106, %v4104
    %v4165 = vpack.c.bf16 %v4107, %v4105
    %v4166 = vpack.c.bf16 %v4110, %v4108
    %v4167 = vpack.c.bf16 %v4111, %v4109
    %v4168 = vpack.c.bf16 %v4114, %v4112
    %v4169 = vpack.c.bf16 %v4115, %v4113
    %v4170 = vpack.c.bf16 %v4118, %v4116
    %v4171 = vpack.c.bf16 %v4119, %v4117
    %v4172 = vpack.c.bf16 %v4122, %v4120
    %v4173 = vpack.c.bf16 %v4123, %v4121
    %v4174 = vpack.c.bf16 %v4126, %v4124
    %v4175 = vpack.c.bf16 %v4127, %v4125
    %v4176 = vpack.c.bf16 %v4130, %v4128
    %v4177 = vpack.c.bf16 %v4131, %v4129
    %v4178 = vpack.c.bf16 %v4134, %v4132
    %v4179 = vpack.c.bf16 %v4135, %v4133
    %v4180 = vpack.c.bf16 %v4138, %v4136
    %v4181 = vpack.c.bf16 %v4139, %v4137
    %v4182 = vpack.c.bf16 %v4142, %v4140
    %v4183 = vpack.c.bf16 %v4143, %v4141
    %v4184 = vpack.c.bf16 %v4146, %v4144
    %v4185 = vpack.c.bf16 %v4147, %v4145
    %v4186 = vpack.c.bf16 %v4150, %v4148
    %v4187 = vpack.c.bf16 %v4151, %v4149
    %v4188 = vpack.c.bf16 %v4154, %v4152
    %v4189 = vpack.c.bf16 %v4155, %v4153
    %v4190 = vpack.c.bf16 %v4158, %v4156
    %v4191 = vpack.c.bf16 %v4159, %v4157
    %v4192 = vld [vmem:[#allocation15] sm:$0xff]
    %v4193 = vld [vmem:[#allocation15 + $0x8] sm:$0xff]
    %v4194 = vld [vmem:[#allocation15 + $0x10] sm:$0xff]
    %v4195 = vld [vmem:[#allocation15 + $0x18] sm:$0xff]
    %v4196 = vld [vmem:[#allocation15 + $0x20] sm:$0xff]
    %v4197 = vld [vmem:[#allocation15 + $0x28] sm:$0xff]
    %v4198 = vld [vmem:[#allocation15 + $0x30] sm:$0xff]
    %v4199 = vld [vmem:[#allocation15 + $0x38] sm:$0xff]
    %v4200 = vld [vmem:[#allocation15 + $0x40] sm:$0xff]
    %v4201 = vld [vmem:[#allocation15 + $0x48] sm:$0xff]
    %v4202 = vld [vmem:[#allocation15 + $0x50] sm:$0xff]
    %v4203 = vld [vmem:[#allocation15 + $0x58] sm:$0xff]
    %v4204 = vld [vmem:[#allocation15 + $0x60] sm:$0xff]
    %v4205 = vld [vmem:[#allocation15 + $0x68] sm:$0xff]
    %v4206 = vld [vmem:[#allocation15 + $0x70] sm:$0xff]
    %v4207 = vld [vmem:[#allocation15 + $0x78] sm:$0xff]
    %v4208 = vld [vmem:[#allocation15 + $0x80] sm:$0xff]
    %v4209 = vld [vmem:[#allocation15 + $0x88] sm:$0xff]
    %v4210 = vld [vmem:[#allocation15 + $0x90] sm:$0xff]
    %v4211 = vld [vmem:[#allocation15 + $0x98] sm:$0xff]
    %v4212 = vld [vmem:[#allocation15 + $0xa0] sm:$0xff]
    %v4213 = vld [vmem:[#allocation15 + $0xa8] sm:$0xff]
    %v4214 = vld [vmem:[#allocation15 + $0xb0] sm:$0xff]
    %v4215 = vld [vmem:[#allocation15 + $0xb8] sm:$0xff]
    %v4216 = vld [vmem:[#allocation15 + $0xc0] sm:$0xff]
    %v4217 = vld [vmem:[#allocation15 + $0xc8] sm:$0xff]
    %v4218 = vld [vmem:[#allocation15 + $0xd0] sm:$0xff]
    %v4219 = vld [vmem:[#allocation15 + $0xd8] sm:$0xff]
    %v4220 = vld [vmem:[#allocation15 + $0xe0] sm:$0xff]
    %v4221 = vld [vmem:[#allocation15 + $0xe8] sm:$0xff]
    %v4222 = vld [vmem:[#allocation15 + $0xf0] sm:$0xff]
    %v4223 = vld [vmem:[#allocation15 + $0xf8] sm:$0xff]
    %v4224 = vld [vmem:[#allocation15 + $0x100] sm:$0xff]
    %v4225 = vld [vmem:[#allocation15 + $0x108] sm:$0xff]
    %v4226 = vld [vmem:[#allocation15 + $0x110] sm:$0xff]
    %v4227 = vld [vmem:[#allocation15 + $0x118] sm:$0xff]
    %v4228 = vld [vmem:[#allocation15 + $0x120] sm:$0xff]
    %v4229 = vld [vmem:[#allocation15 + $0x128] sm:$0xff]
    %v4230 = vld [vmem:[#allocation15 + $0x130] sm:$0xff]
    %v4231 = vld [vmem:[#allocation15 + $0x138] sm:$0xff]
    %v4232 = vld [vmem:[#allocation15 + $0x140] sm:$0xff]
    %v4233 = vld [vmem:[#allocation15 + $0x148] sm:$0xff]
    %v4234 = vld [vmem:[#allocation15 + $0x150] sm:$0xff]
    %v4235 = vld [vmem:[#allocation15 + $0x158] sm:$0xff]
    %v4236 = vld [vmem:[#allocation15 + $0x160] sm:$0xff]
    %v4237 = vld [vmem:[#allocation15 + $0x168] sm:$0xff]
    %v4238 = vld [vmem:[#allocation15 + $0x170] sm:$0xff]
    %v4239 = vld [vmem:[#allocation15 + $0x178] sm:$0xff]
    %v4240 = vld [vmem:[#allocation15 + $0x180] sm:$0xff]
    %v4241 = vld [vmem:[#allocation15 + $0x188] sm:$0xff]
    %v4242 = vld [vmem:[#allocation15 + $0x190] sm:$0xff]
    %v4243 = vld [vmem:[#allocation15 + $0x198] sm:$0xff]
    %v4244 = vld [vmem:[#allocation15 + $0x1a0] sm:$0xff]
    %v4245 = vld [vmem:[#allocation15 + $0x1a8] sm:$0xff]
    %v4246 = vld [vmem:[#allocation15 + $0x1b0] sm:$0xff]
    %v4247 = vld [vmem:[#allocation15 + $0x1b8] sm:$0xff]
    %v4248 = vld [vmem:[#allocation15 + $0x1c0] sm:$0xff]
    %v4249 = vld [vmem:[#allocation15 + $0x1c8] sm:$0xff]
    %v4250 = vld [vmem:[#allocation15 + $0x1d0] sm:$0xff]
    %v4251 = vld [vmem:[#allocation15 + $0x1d8] sm:$0xff]
    %v4252 = vld [vmem:[#allocation15 + $0x1e0] sm:$0xff]
    %v4253 = vld [vmem:[#allocation15 + $0x1e8] sm:$0xff]
    %v4254 = vld [vmem:[#allocation15 + $0x1f0] sm:$0xff]
    %v4255 = vld [vmem:[#allocation15 + $0x1f8] sm:$0xff]
    %v4257 = vperm.slane %v265, 0
    %v4258 = vperm.slane %v265, 1
    %v4259 = vperm.slane %v265, 2
    %v4260 = vperm.slane %v265, 3
    %v4329 = vunpack.c.l.b16 %v4192
    %v4330 = vunpack.c.h.b16 %v4192
    %v4331 = vunpack.c.l.b16 %v4193
    %v4332 = vunpack.c.h.b16 %v4193
    %v4333 = vunpack.c.l.b16 %v4194
    %v4334 = vunpack.c.h.b16 %v4194
    %v4335 = vunpack.c.l.b16 %v4195
    %v4336 = vunpack.c.h.b16 %v4195
    %v4337 = vunpack.c.l.b16 %v4196
    %v4338 = vunpack.c.h.b16 %v4196
    %v4339 = vunpack.c.l.b16 %v4197
    %v4340 = vunpack.c.h.b16 %v4197
    %v4341 = vunpack.c.l.b16 %v4198
    %v4342 = vunpack.c.h.b16 %v4198
    %v4343 = vunpack.c.l.b16 %v4199
    %v4344 = vunpack.c.h.b16 %v4199
    %v4345 = vunpack.c.l.b16 %v4200
    %v4346 = vunpack.c.h.b16 %v4200
    %v4347 = vunpack.c.l.b16 %v4201
    %v4348 = vunpack.c.h.b16 %v4201
    %v4349 = vunpack.c.l.b16 %v4202
    %v4350 = vunpack.c.h.b16 %v4202
    %v4351 = vunpack.c.l.b16 %v4203
    %v4352 = vunpack.c.h.b16 %v4203
    %v4353 = vunpack.c.l.b16 %v4204
    %v4354 = vunpack.c.h.b16 %v4204
    %v4355 = vunpack.c.l.b16 %v4205
    %v4356 = vunpack.c.h.b16 %v4205
    %v4357 = vunpack.c.l.b16 %v4206
    %v4358 = vunpack.c.h.b16 %v4206
    %v4359 = vunpack.c.l.b16 %v4207
    %v4360 = vunpack.c.h.b16 %v4207
    %v4361 = vunpack.c.l.b16 %v4208
    %v4362 = vunpack.c.h.b16 %v4208
    %v4363 = vunpack.c.l.b16 %v4209
    %v4364 = vunpack.c.h.b16 %v4209
    %v4365 = vunpack.c.l.b16 %v4210
    %v4366 = vunpack.c.h.b16 %v4210
    %v4367 = vunpack.c.l.b16 %v4211
    %v4368 = vunpack.c.h.b16 %v4211
    %v4369 = vunpack.c.l.b16 %v4212
    %v4370 = vunpack.c.h.b16 %v4212
    %v4371 = vunpack.c.l.b16 %v4213
    %v4372 = vunpack.c.h.b16 %v4213
    %v4373 = vunpack.c.l.b16 %v4214
    %v4374 = vunpack.c.h.b16 %v4214
    %v4375 = vunpack.c.l.b16 %v4215
    %v4376 = vunpack.c.h.b16 %v4215
    %v4377 = vunpack.c.l.b16 %v4216
    %v4378 = vunpack.c.h.b16 %v4216
    %v4379 = vunpack.c.l.b16 %v4217
    %v4380 = vunpack.c.h.b16 %v4217
    %v4381 = vunpack.c.l.b16 %v4218
    %v4382 = vunpack.c.h.b16 %v4218
    %v4383 = vunpack.c.l.b16 %v4219
    %v4384 = vunpack.c.h.b16 %v4219
    %v4385 = vunpack.c.l.b16 %v4220
    %v4386 = vunpack.c.h.b16 %v4220
    %v4387 = vunpack.c.l.b16 %v4221
    %v4388 = vunpack.c.h.b16 %v4221
    %v4389 = vunpack.c.l.b16 %v4222
    %v4390 = vunpack.c.h.b16 %v4222
    %v4391 = vunpack.c.l.b16 %v4223
    %v4392 = vunpack.c.h.b16 %v4223
    %v4393 = vunpack.c.l.b16 %v4224
    %v4394 = vunpack.c.h.b16 %v4224
    %v4395 = vunpack.c.l.b16 %v4225
    %v4396 = vunpack.c.h.b16 %v4225
    %v4397 = vunpack.c.l.b16 %v4226
    %v4398 = vunpack.c.h.b16 %v4226
    %v4399 = vunpack.c.l.b16 %v4227
    %v4400 = vunpack.c.h.b16 %v4227
    %v4401 = vunpack.c.l.b16 %v4228
    %v4402 = vunpack.c.h.b16 %v4228
    %v4403 = vunpack.c.l.b16 %v4229
    %v4404 = vunpack.c.h.b16 %v4229
    %v4405 = vunpack.c.l.b16 %v4230
    %v4406 = vunpack.c.h.b16 %v4230
    %v4407 = vunpack.c.l.b16 %v4231
    %v4408 = vunpack.c.h.b16 %v4231
    %v4409 = vunpack.c.l.b16 %v4232
    %v4410 = vunpack.c.h.b16 %v4232
    %v4411 = vunpack.c.l.b16 %v4233
    %v4412 = vunpack.c.h.b16 %v4233
    %v4413 = vunpack.c.l.b16 %v4234
    %v4414 = vunpack.c.h.b16 %v4234
    %v4415 = vunpack.c.l.b16 %v4235
    %v4416 = vunpack.c.h.b16 %v4235
    %v4417 = vunpack.c.l.b16 %v4236
    %v4418 = vunpack.c.h.b16 %v4236
    %v4419 = vunpack.c.l.b16 %v4237
    %v4420 = vunpack.c.h.b16 %v4237
    %v4421 = vunpack.c.l.b16 %v4238
    %v4422 = vunpack.c.h.b16 %v4238
    %v4423 = vunpack.c.l.b16 %v4239
    %v4424 = vunpack.c.h.b16 %v4239
    %v4425 = vunpack.c.l.b16 %v4240
    %v4426 = vunpack.c.h.b16 %v4240
    %v4427 = vunpack.c.l.b16 %v4241
    %v4428 = vunpack.c.h.b16 %v4241
    %v4429 = vunpack.c.l.b16 %v4242
    %v4430 = vunpack.c.h.b16 %v4242
    %v4431 = vunpack.c.l.b16 %v4243
    %v4432 = vunpack.c.h.b16 %v4243
    %v4433 = vunpack.c.l.b16 %v4244
    %v4434 = vunpack.c.h.b16 %v4244
    %v4435 = vunpack.c.l.b16 %v4245
    %v4436 = vunpack.c.h.b16 %v4245
    %v4437 = vunpack.c.l.b16 %v4246
    %v4438 = vunpack.c.h.b16 %v4246
    %v4439 = vunpack.c.l.b16 %v4247
    %v4440 = vunpack.c.h.b16 %v4247
    %v4441 = vunpack.c.l.b16 %v4248
    %v4442 = vunpack.c.h.b16 %v4248
    %v4443 = vunpack.c.l.b16 %v4249
    %v4444 = vunpack.c.h.b16 %v4249
    %v4445 = vunpack.c.l.b16 %v4250
    %v4446 = vunpack.c.h.b16 %v4250
    %v4447 = vunpack.c.l.b16 %v4251
    %v4448 = vunpack.c.h.b16 %v4251
    %v4449 = vunpack.c.l.b16 %v4252
    %v4450 = vunpack.c.h.b16 %v4252
    %v4451 = vunpack.c.l.b16 %v4253
    %v4452 = vunpack.c.h.b16 %v4253
    %v4453 = vunpack.c.l.b16 %v4254
    %v4454 = vunpack.c.h.b16 %v4254
    %v4455 = vunpack.c.l.b16 %v4255
    %v4456 = vunpack.c.h.b16 %v4255
    %v4457 = vpack.c.b16 %v4333, %v4329
    %v4458 = vpack.c.b16 %v4334, %v4330
    %v4459 = vpack.c.b16 %v4335, %v4331
    %v4460 = vpack.c.b16 %v4336, %v4332
    %v4461 = vpack.c.b16 %v4341, %v4337
    %v4462 = vpack.c.b16 %v4342, %v4338
    %v4463 = vpack.c.b16 %v4343, %v4339
    %v4464 = vpack.c.b16 %v4344, %v4340
    %v4465 = vpack.c.b16 %v4349, %v4345
    %v4466 = vpack.c.b16 %v4350, %v4346
    %v4467 = vpack.c.b16 %v4351, %v4347
    %v4468 = vpack.c.b16 %v4352, %v4348
    %v4469 = vpack.c.b16 %v4357, %v4353
    %v4470 = vpack.c.b16 %v4358, %v4354
    %v4471 = vpack.c.b16 %v4359, %v4355
    %v4472 = vpack.c.b16 %v4360, %v4356
    %v4473 = vpack.c.b16 %v4365, %v4361
    %v4474 = vpack.c.b16 %v4366, %v4362
    %v4475 = vpack.c.b16 %v4367, %v4363
    %v4476 = vpack.c.b16 %v4368, %v4364
    %v4477 = vpack.c.b16 %v4373, %v4369
    %v4478 = vpack.c.b16 %v4374, %v4370
    %v4479 = vpack.c.b16 %v4375, %v4371
    %v4480 = vpack.c.b16 %v4376, %v4372
    %v4481 = vpack.c.b16 %v4381, %v4377
    %v4482 = vpack.c.b16 %v4382, %v4378
    %v4483 = vpack.c.b16 %v4383, %v4379
    %v4484 = vpack.c.b16 %v4384, %v4380
    %v4485 = vpack.c.b16 %v4389, %v4385
    %v4486 = vpack.c.b16 %v4390, %v4386
    %v4487 = vpack.c.b16 %v4391, %v4387
    %v4488 = vpack.c.b16 %v4392, %v4388
    %v4489 = vpack.c.b16 %v4397, %v4393
    %v4490 = vpack.c.b16 %v4398, %v4394
    %v4491 = vpack.c.b16 %v4399, %v4395
    %v4492 = vpack.c.b16 %v4400, %v4396
    %v4493 = vpack.c.b16 %v4405, %v4401
    %v4494 = vpack.c.b16 %v4406, %v4402
    %v4495 = vpack.c.b16 %v4407, %v4403
    %v4496 = vpack.c.b16 %v4408, %v4404
    %v4497 = vpack.c.b16 %v4413, %v4409
    %v4498 = vpack.c.b16 %v4414, %v4410
    %v4499 = vpack.c.b16 %v4415, %v4411
    %v4500 = vpack.c.b16 %v4416, %v4412
    %v4501 = vpack.c.b16 %v4421, %v4417
    %v4502 = vpack.c.b16 %v4422, %v4418
    %v4503 = vpack.c.b16 %v4423, %v4419
    %v4504 = vpack.c.b16 %v4424, %v4420
    %v4505 = vpack.c.b16 %v4429, %v4425
    %v4506 = vpack.c.b16 %v4430, %v4426
    %v4507 = vpack.c.b16 %v4431, %v4427
    %v4508 = vpack.c.b16 %v4432, %v4428
    %v4509 = vpack.c.b16 %v4437, %v4433
    %v4510 = vpack.c.b16 %v4438, %v4434
    %v4511 = vpack.c.b16 %v4439, %v4435
    %v4512 = vpack.c.b16 %v4440, %v4436
    %v4513 = vpack.c.b16 %v4445, %v4441
    %v4514 = vpack.c.b16 %v4446, %v4442
    %v4515 = vpack.c.b16 %v4447, %v4443
    %v4516 = vpack.c.b16 %v4448, %v4444
    %v4517 = vpack.c.b16 %v4453, %v4449
    %v4518 = vpack.c.b16 %v4454, %v4450
    %v4519 = vpack.c.b16 %v4455, %v4451
    %v4520 = vpack.c.b16 %v4456, %v4452
    %4585 = vmatpush.bf16.msra.mxu0 %v4485
    %4586 = vmatpush.bf16.msra.mxu0 %v4481
    %4587 = vmatpush.bf16.msra.mxu0 %v4477
    %4588 = vmatpush.bf16.msra.mxu0 %v4473
    %4589 = vmatpush.bf16.msra.mxu0 %v4469
    %4590 = vmatpush.bf16.msra.mxu0 %v4465
    %4591 = vmatpush.bf16.msra.mxu0 %v4461
    %4592 = vmatpush.bf16.msra.mxu0 %v4457
    %4593 = vmatmul.bf16.gmra.mxu0 %v4160
    %v4594 = vpop.f32.mrf.mxu0
    %v4595 = vadd.f32 %v4257, %v4594
    %v4596 = vpop.f32.mrf.mxu0
    %v4597 = vadd.f32 %v4257, %v4596
    %4598 = vmatmul.bf16.gmra.mxu0 %v4162
    %v4599 = vpop.f32.mrf.mxu0
    %v4600 = vadd.f32 %v4257, %v4599
    %v4601 = vpop.f32.mrf.mxu0
    %v4602 = vadd.f32 %v4257, %v4601
    %4603 = vmatmul.bf16.gmra.mxu0 %v4164
    %v4604 = vpop.f32.mrf.mxu0
    %v4605 = vadd.f32 %v4257, %v4604
    %v4606 = vpop.f32.mrf.mxu0
    %v4607 = vadd.f32 %v4257, %v4606
    %4608 = vmatmul.bf16.gmra.mxu0 %v4166
    %v4609 = vpop.f32.mrf.mxu0
    %v4610 = vadd.f32 %v4257, %v4609
    %v4611 = vpop.f32.mrf.mxu0
    %v4612 = vadd.f32 %v4257, %v4611
    %4613 = vmatmul.bf16.gmra.mxu0 %v4168
    %v4614 = vpop.f32.mrf.mxu0
    %v4615 = vadd.f32 %v4257, %v4614
    %v4616 = vpop.f32.mrf.mxu0
    %v4617 = vadd.f32 %v4257, %v4616
    %4618 = vmatmul.bf16.gmra.mxu0 %v4170
    %v4619 = vpop.f32.mrf.mxu0
    %v4620 = vadd.f32 %v4257, %v4619
    %v4621 = vpop.f32.mrf.mxu0
    %v4622 = vadd.f32 %v4257, %v4621
    %4623 = vmatmul.bf16.gmra.mxu0 %v4172
    %v4624 = vpop.f32.mrf.mxu0
    %v4625 = vadd.f32 %v4257, %v4624
    %v4626 = vpop.f32.mrf.mxu0
    %v4627 = vadd.f32 %v4257, %v4626
    %4628 = vmatmul.bf16.gmra.mxu0 %v4174
    %v4629 = vpop.f32.mrf.mxu0
    %v4630 = vadd.f32 %v4257, %v4629
    %v4631 = vpop.f32.mrf.mxu0
    %v4632 = vadd.f32 %v4257, %v4631
    %4633 = vmatmul.bf16.gmra.mxu0 %v4176
    %v4634 = vpop.f32.mrf.mxu0
    %v4635 = vadd.f32 %v4257, %v4634
    %v4636 = vpop.f32.mrf.mxu0
    %v4637 = vadd.f32 %v4257, %v4636
    %4638 = vmatmul.bf16.gmra.mxu0 %v4178
    %v4639 = vpop.f32.mrf.mxu0
    %v4640 = vadd.f32 %v4257, %v4639
    %v4641 = vpop.f32.mrf.mxu0
    %v4642 = vadd.f32 %v4257, %v4641
    %4643 = vmatmul.bf16.gmra.mxu0 %v4180
    %v4644 = vpop.f32.mrf.mxu0
    %v4645 = vadd.f32 %v4257, %v4644
    %v4646 = vpop.f32.mrf.mxu0
    %v4647 = vadd.f32 %v4257, %v4646
    %4648 = vmatmul.bf16.gmra.mxu0 %v4182
    %v4649 = vpop.f32.mrf.mxu0
    %v4650 = vadd.f32 %v4257, %v4649
    %v4651 = vpop.f32.mrf.mxu0
    %v4652 = vadd.f32 %v4257, %v4651
    %4653 = vmatmul.bf16.gmra.mxu0 %v4184
    %v4654 = vpop.f32.mrf.mxu0
    %v4655 = vadd.f32 %v4257, %v4654
    %v4656 = vpop.f32.mrf.mxu0
    %v4657 = vadd.f32 %v4257, %v4656
    %4658 = vmatmul.bf16.gmra.mxu0 %v4186
    %v4659 = vpop.f32.mrf.mxu0
    %v4660 = vadd.f32 %v4257, %v4659
    %v4661 = vpop.f32.mrf.mxu0
    %v4662 = vadd.f32 %v4257, %v4661
    %4663 = vmatmul.bf16.gmra.mxu0 %v4188
    %v4664 = vpop.f32.mrf.mxu0
    %v4665 = vadd.f32 %v4257, %v4664
    %v4666 = vpop.f32.mrf.mxu0
    %v4667 = vadd.f32 %v4257, %v4666
    %4668 = vmatmul.bf16.gmra.mxu0 %v4190
    %v4669 = vpop.f32.mrf.mxu0
    %v4670 = vadd.f32 %v4257, %v4669
    %v4671 = vpop.f32.mrf.mxu0
    %v4672 = vadd.f32 %v4257, %v4671
    %4673 = vdwg.mxu0
    %4674 = vmatpush.bf16.msra.mxu0 %v4517
    %4675 = vmatpush.bf16.msra.mxu0 %v4513
    %4676 = vmatpush.bf16.msra.mxu0 %v4509
    %4677 = vmatpush.bf16.msra.mxu0 %v4505
    %4678 = vmatpush.bf16.msra.mxu0 %v4501
    %4679 = vmatpush.bf16.msra.mxu0 %v4497
    %4680 = vmatpush.bf16.msra.mxu0 %v4493
    %4681 = vmatpush.bf16.msra.mxu0 %v4489
    %4682 = vmatmul.bf16.gmra.mxu0 %v4161
    %v4683 = vpop.f32.mrf.mxu0
    %v4684 = vadd.f32 %v4595, %v4683
    %v4685 = vpop.f32.mrf.mxu0
    %v4686 = vadd.f32 %v4597, %v4685
    %4687 = vmatmul.bf16.gmra.mxu0 %v4163
    %v4688 = vpop.f32.mrf.mxu0
    %v4689 = vadd.f32 %v4600, %v4688
    %v4690 = vpop.f32.mrf.mxu0
    %v4691 = vadd.f32 %v4602, %v4690
    %4692 = vmatmul.bf16.gmra.mxu0 %v4165
    %v4693 = vpop.f32.mrf.mxu0
    %v4694 = vadd.f32 %v4605, %v4693
    %v4695 = vpop.f32.mrf.mxu0
    %v4696 = vadd.f32 %v4607, %v4695
    %4697 = vmatmul.bf16.gmra.mxu0 %v4167
    %v4698 = vpop.f32.mrf.mxu0
    %v4699 = vadd.f32 %v4610, %v4698
    %v4700 = vpop.f32.mrf.mxu0
    %v4701 = vadd.f32 %v4612, %v4700
    %4702 = vmatmul.bf16.gmra.mxu0 %v4169
    %v4703 = vpop.f32.mrf.mxu0
    %v4704 = vadd.f32 %v4615, %v4703
    %v4705 = vpop.f32.mrf.mxu0
    %v4706 = vadd.f32 %v4617, %v4705
    %4707 = vmatmul.bf16.gmra.mxu0 %v4171
    %v4708 = vpop.f32.mrf.mxu0
    %v4709 = vadd.f32 %v4620, %v4708
    %v4710 = vpop.f32.mrf.mxu0
    %v4711 = vadd.f32 %v4622, %v4710
    %4712 = vmatmul.bf16.gmra.mxu0 %v4173
    %v4713 = vpop.f32.mrf.mxu0
    %v4714 = vadd.f32 %v4625, %v4713
    %v4715 = vpop.f32.mrf.mxu0
    %v4716 = vadd.f32 %v4627, %v4715
    %4717 = vmatmul.bf16.gmra.mxu0 %v4175
    %v4718 = vpop.f32.mrf.mxu0
    %v4719 = vadd.f32 %v4630, %v4718
    %v4720 = vpop.f32.mrf.mxu0
    %v4721 = vadd.f32 %v4632, %v4720
    %4722 = vmatmul.bf16.gmra.mxu0 %v4177
    %v4723 = vpop.f32.mrf.mxu0
    %v4724 = vadd.f32 %v4635, %v4723
    %v4725 = vpop.f32.mrf.mxu0
    %v4726 = vadd.f32 %v4637, %v4725
    %4727 = vmatmul.bf16.gmra.mxu0 %v4179
    %v4728 = vpop.f32.mrf.mxu0
    %v4729 = vadd.f32 %v4640, %v4728
    %v4730 = vpop.f32.mrf.mxu0
    %v4731 = vadd.f32 %v4642, %v4730
    %4732 = vmatmul.bf16.gmra.mxu0 %v4181
    %v4733 = vpop.f32.mrf.mxu0
    %v4734 = vadd.f32 %v4645, %v4733
    %v4735 = vpop.f32.mrf.mxu0
    %v4736 = vadd.f32 %v4647, %v4735
    %4737 = vmatmul.bf16.gmra.mxu0 %v4183
    %v4738 = vpop.f32.mrf.mxu0
    %v4739 = vadd.f32 %v4650, %v4738
    %v4740 = vpop.f32.mrf.mxu0
    %v4741 = vadd.f32 %v4652, %v4740
    %4742 = vmatmul.bf16.gmra.mxu0 %v4185
    %v4743 = vpop.f32.mrf.mxu0
    %v4744 = vadd.f32 %v4655, %v4743
    %v4745 = vpop.f32.mrf.mxu0
    %v4746 = vadd.f32 %v4657, %v4745
    %4747 = vmatmul.bf16.gmra.mxu0 %v4187
    %v4748 = vpop.f32.mrf.mxu0
    %v4749 = vadd.f32 %v4660, %v4748
    %v4750 = vpop.f32.mrf.mxu0
    %v4751 = vadd.f32 %v4662, %v4750
    %4752 = vmatmul.bf16.gmra.mxu0 %v4189
    %v4753 = vpop.f32.mrf.mxu0
    %v4754 = vadd.f32 %v4665, %v4753
    %v4755 = vpop.f32.mrf.mxu0
    %v4756 = vadd.f32 %v4667, %v4755
    %4757 = vmatmul.bf16.gmra.mxu0 %v4191
    %v4758 = vpop.f32.mrf.mxu0
    %v4759 = vadd.f32 %v4670, %v4758
    %v4760 = vpop.f32.mrf.mxu0
    %v4761 = vadd.f32 %v4672, %v4760
    %4762 = vdwg.mxu0
    %4763 = vmatpush.bf16.msra.mxu0 %v4486
    %4764 = vmatpush.bf16.msra.mxu0 %v4482
    %4765 = vmatpush.bf16.msra.mxu0 %v4478
    %4766 = vmatpush.bf16.msra.mxu0 %v4474
    %4767 = vmatpush.bf16.msra.mxu0 %v4470
    %4768 = vmatpush.bf16.msra.mxu0 %v4466
    %4769 = vmatpush.bf16.msra.mxu0 %v4462
    %4770 = vmatpush.bf16.msra.mxu0 %v4458
    %4771 = vmatmul.bf16.gmra.mxu0 %v4160
    %v4772 = vpop.f32.mrf.mxu0
    %v4773 = vadd.f32 %v4258, %v4772
    %v4774 = vpop.f32.mrf.mxu0
    %v4775 = vadd.f32 %v4258, %v4774
    %4776 = vmatmul.bf16.gmra.mxu0 %v4162
    %v4777 = vpop.f32.mrf.mxu0
    %v4778 = vadd.f32 %v4258, %v4777
    %v4779 = vpop.f32.mrf.mxu0
    %v4780 = vadd.f32 %v4258, %v4779
    %4781 = vmatmul.bf16.gmra.mxu0 %v4164
    %v4782 = vpop.f32.mrf.mxu0
    %v4783 = vadd.f32 %v4258, %v4782
    %v4784 = vpop.f32.mrf.mxu0
    %v4785 = vadd.f32 %v4258, %v4784
    %4786 = vmatmul.bf16.gmra.mxu0 %v4166
    %v4787 = vpop.f32.mrf.mxu0
    %v4788 = vadd.f32 %v4258, %v4787
    %v4789 = vpop.f32.mrf.mxu0
    %v4790 = vadd.f32 %v4258, %v4789
    %4791 = vmatmul.bf16.gmra.mxu0 %v4168
    %v4792 = vpop.f32.mrf.mxu0
    %v4793 = vadd.f32 %v4258, %v4792
    %v4794 = vpop.f32.mrf.mxu0
    %v4795 = vadd.f32 %v4258, %v4794
    %4796 = vmatmul.bf16.gmra.mxu0 %v4170
    %v4797 = vpop.f32.mrf.mxu0
    %v4798 = vadd.f32 %v4258, %v4797
    %v4799 = vpop.f32.mrf.mxu0
    %v4800 = vadd.f32 %v4258, %v4799
    %4801 = vmatmul.bf16.gmra.mxu0 %v4172
    %v4802 = vpop.f32.mrf.mxu0
    %v4803 = vadd.f32 %v4258, %v4802
    %v4804 = vpop.f32.mrf.mxu0
    %v4805 = vadd.f32 %v4258, %v4804
    %4806 = vmatmul.bf16.gmra.mxu0 %v4174
    %v4807 = vpop.f32.mrf.mxu0
    %v4808 = vadd.f32 %v4258, %v4807
    %v4809 = vpop.f32.mrf.mxu0
    %v4810 = vadd.f32 %v4258, %v4809
    %4811 = vmatmul.bf16.gmra.mxu0 %v4176
    %v4812 = vpop.f32.mrf.mxu0
    %v4813 = vadd.f32 %v4258, %v4812
    %v4814 = vpop.f32.mrf.mxu0
    %v4815 = vadd.f32 %v4258, %v4814
    %4816 = vmatmul.bf16.gmra.mxu0 %v4178
    %v4817 = vpop.f32.mrf.mxu0
    %v4818 = vadd.f32 %v4258, %v4817
    %v4819 = vpop.f32.mrf.mxu0
    %v4820 = vadd.f32 %v4258, %v4819
    %4821 = vmatmul.bf16.gmra.mxu0 %v4180
    %v4822 = vpop.f32.mrf.mxu0
    %v4823 = vadd.f32 %v4258, %v4822
    %v4824 = vpop.f32.mrf.mxu0
    %v4825 = vadd.f32 %v4258, %v4824
    %4826 = vmatmul.bf16.gmra.mxu0 %v4182
    %v4827 = vpop.f32.mrf.mxu0
    %v4828 = vadd.f32 %v4258, %v4827
    %v4829 = vpop.f32.mrf.mxu0
    %v4830 = vadd.f32 %v4258, %v4829
    %4831 = vmatmul.bf16.gmra.mxu0 %v4184
    %v4832 = vpop.f32.mrf.mxu0
    %v4833 = vadd.f32 %v4258, %v4832
    %v4834 = vpop.f32.mrf.mxu0
    %v4835 = vadd.f32 %v4258, %v4834
    %4836 = vmatmul.bf16.gmra.mxu0 %v4186
    %v4837 = vpop.f32.mrf.mxu0
    %v4838 = vadd.f32 %v4258, %v4837
    %v4839 = vpop.f32.mrf.mxu0
    %v4840 = vadd.f32 %v4258, %v4839
    %4841 = vmatmul.bf16.gmra.mxu0 %v4188
    %v4842 = vpop.f32.mrf.mxu0
    %v4843 = vadd.f32 %v4258, %v4842
    %v4844 = vpop.f32.mrf.mxu0
    %v4845 = vadd.f32 %v4258, %v4844
    %4846 = vmatmul.bf16.gmra.mxu0 %v4190
    %v4847 = vpop.f32.mrf.mxu0
    %v4848 = vadd.f32 %v4258, %v4847
    %v4849 = vpop.f32.mrf.mxu0
    %v4850 = vadd.f32 %v4258, %v4849
    %4851 = vdwg.mxu0
    %4852 = vmatpush.bf16.msra.mxu0 %v4518
    %4853 = vmatpush.bf16.msra.mxu0 %v4514
    %4854 = vmatpush.bf16.msra.mxu0 %v4510
    %4855 = vmatpush.bf16.msra.mxu0 %v4506
    %4856 = vmatpush.bf16.msra.mxu0 %v4502
    %4857 = vmatpush.bf16.msra.mxu0 %v4498
    %4858 = vmatpush.bf16.msra.mxu0 %v4494
    %4859 = vmatpush.bf16.msra.mxu0 %v4490
    %4860 = vmatmul.bf16.gmra.mxu0 %v4161
    %v4861 = vpop.f32.mrf.mxu0
    %v4862 = vadd.f32 %v4773, %v4861
    %v4863 = vpop.f32.mrf.mxu0
    %v4864 = vadd.f32 %v4775, %v4863
    %4865 = vmatmul.bf16.gmra.mxu0 %v4163
    %v4866 = vpop.f32.mrf.mxu0
    %v4867 = vadd.f32 %v4778, %v4866
    %v4868 = vpop.f32.mrf.mxu0
    %v4869 = vadd.f32 %v4780, %v4868
    %4870 = vmatmul.bf16.gmra.mxu0 %v4165
    %v4871 = vpop.f32.mrf.mxu0
    %v4872 = vadd.f32 %v4783, %v4871
    %v4873 = vpop.f32.mrf.mxu0
    %v4874 = vadd.f32 %v4785, %v4873
    %4875 = vmatmul.bf16.gmra.mxu0 %v4167
    %v4876 = vpop.f32.mrf.mxu0
    %v4877 = vadd.f32 %v4788, %v4876
    %v4878 = vpop.f32.mrf.mxu0
    %v4879 = vadd.f32 %v4790, %v4878
    %4880 = vmatmul.bf16.gmra.mxu0 %v4169
    %v4881 = vpop.f32.mrf.mxu0
    %v4882 = vadd.f32 %v4793, %v4881
    %v4883 = vpop.f32.mrf.mxu0
    %v4884 = vadd.f32 %v4795, %v4883
    %4885 = vmatmul.bf16.gmra.mxu0 %v4171
    %v4886 = vpop.f32.mrf.mxu0
    %v4887 = vadd.f32 %v4798, %v4886
    %v4888 = vpop.f32.mrf.mxu0
    %v4889 = vadd.f32 %v4800, %v4888
    %4890 = vmatmul.bf16.gmra.mxu0 %v4173
    %v4891 = vpop.f32.mrf.mxu0
    %v4892 = vadd.f32 %v4803, %v4891
    %v4893 = vpop.f32.mrf.mxu0
    %v4894 = vadd.f32 %v4805, %v4893
    %4895 = vmatmul.bf16.gmra.mxu0 %v4175
    %v4896 = vpop.f32.mrf.mxu0
    %v4897 = vadd.f32 %v4808, %v4896
    %v4898 = vpop.f32.mrf.mxu0
    %v4899 = vadd.f32 %v4810, %v4898
    %4900 = vmatmul.bf16.gmra.mxu0 %v4177
    %v4901 = vpop.f32.mrf.mxu0
    %v4902 = vadd.f32 %v4813, %v4901
    %v4903 = vpop.f32.mrf.mxu0
    %v4904 = vadd.f32 %v4815, %v4903
    %4905 = vmatmul.bf16.gmra.mxu0 %v4179
    %v4906 = vpop.f32.mrf.mxu0
    %v4907 = vadd.f32 %v4818, %v4906
    %v4908 = vpop.f32.mrf.mxu0
    %v4909 = vadd.f32 %v4820, %v4908
    %4910 = vmatmul.bf16.gmra.mxu0 %v4181
    %v4911 = vpop.f32.mrf.mxu0
    %v4912 = vadd.f32 %v4823, %v4911
    %v4913 = vpop.f32.mrf.mxu0
    %v4914 = vadd.f32 %v4825, %v4913
    %4915 = vmatmul.bf16.gmra.mxu0 %v4183
    %v4916 = vpop.f32.mrf.mxu0
    %v4917 = vadd.f32 %v4828, %v4916
    %v4918 = vpop.f32.mrf.mxu0
    %v4919 = vadd.f32 %v4830, %v4918
    %4920 = vmatmul.bf16.gmra.mxu0 %v4185
    %v4921 = vpop.f32.mrf.mxu0
    %v4922 = vadd.f32 %v4833, %v4921
    %v4923 = vpop.f32.mrf.mxu0
    %v4924 = vadd.f32 %v4835, %v4923
    %4925 = vmatmul.bf16.gmra.mxu0 %v4187
    %v4926 = vpop.f32.mrf.mxu0
    %v4927 = vadd.f32 %v4838, %v4926
    %v4928 = vpop.f32.mrf.mxu0
    %v4929 = vadd.f32 %v4840, %v4928
    %4930 = vmatmul.bf16.gmra.mxu0 %v4189
    %v4931 = vpop.f32.mrf.mxu0
    %v4932 = vadd.f32 %v4843, %v4931
    %v4933 = vpop.f32.mrf.mxu0
    %v4934 = vadd.f32 %v4845, %v4933
    %4935 = vmatmul.bf16.gmra.mxu0 %v4191
    %v4936 = vpop.f32.mrf.mxu0
    %v4937 = vadd.f32 %v4848, %v4936
    %v4938 = vpop.f32.mrf.mxu0
    %v4939 = vadd.f32 %v4850, %v4938
    %4940 = vdwg.mxu0
    %4941 = vmatpush.bf16.msra.mxu0 %v4487
    %4942 = vmatpush.bf16.msra.mxu0 %v4483
    %4943 = vmatpush.bf16.msra.mxu0 %v4479
    %4944 = vmatpush.bf16.msra.mxu0 %v4475
    %4945 = vmatpush.bf16.msra.mxu0 %v4471
    %4946 = vmatpush.bf16.msra.mxu0 %v4467
    %4947 = vmatpush.bf16.msra.mxu0 %v4463
    %4948 = vmatpush.bf16.msra.mxu0 %v4459
    %4949 = vmatmul.bf16.gmra.mxu0 %v4160
    %v4950 = vpop.f32.mrf.mxu0
    %v4951 = vadd.f32 %v4259, %v4950
    %v4952 = vpop.f32.mrf.mxu0
    %v4953 = vadd.f32 %v4259, %v4952
    %4954 = vmatmul.bf16.gmra.mxu0 %v4162
    %v4955 = vpop.f32.mrf.mxu0
    %v4956 = vadd.f32 %v4259, %v4955
    %v4957 = vpop.f32.mrf.mxu0
    %v4958 = vadd.f32 %v4259, %v4957
    %4959 = vmatmul.bf16.gmra.mxu0 %v4164
    %v4960 = vpop.f32.mrf.mxu0
    %v4961 = vadd.f32 %v4259, %v4960
    %v4962 = vpop.f32.mrf.mxu0
    %v4963 = vadd.f32 %v4259, %v4962
    %4964 = vmatmul.bf16.gmra.mxu0 %v4166
    %v4965 = vpop.f32.mrf.mxu0
    %v4966 = vadd.f32 %v4259, %v4965
    %v4967 = vpop.f32.mrf.mxu0
    %v4968 = vadd.f32 %v4259, %v4967
    %4969 = vmatmul.bf16.gmra.mxu0 %v4168
    %v4970 = vpop.f32.mrf.mxu0
    %v4971 = vadd.f32 %v4259, %v4970
    %v4972 = vpop.f32.mrf.mxu0
    %v4973 = vadd.f32 %v4259, %v4972
    %4974 = vmatmul.bf16.gmra.mxu0 %v4170
    %v4975 = vpop.f32.mrf.mxu0
    %v4976 = vadd.f32 %v4259, %v4975
    %v4977 = vpop.f32.mrf.mxu0
    %v4978 = vadd.f32 %v4259, %v4977
    %4979 = vmatmul.bf16.gmra.mxu0 %v4172
    %v4980 = vpop.f32.mrf.mxu0
    %v4981 = vadd.f32 %v4259, %v4980
    %v4982 = vpop.f32.mrf.mxu0
    %v4983 = vadd.f32 %v4259, %v4982
    %4984 = vmatmul.bf16.gmra.mxu0 %v4174
    %v4985 = vpop.f32.mrf.mxu0
    %v4986 = vadd.f32 %v4259, %v4985
    %v4987 = vpop.f32.mrf.mxu0
    %v4988 = vadd.f32 %v4259, %v4987
    %4989 = vmatmul.bf16.gmra.mxu0 %v4176
    %v4990 = vpop.f32.mrf.mxu0
    %v4991 = vadd.f32 %v4259, %v4990
    %v4992 = vpop.f32.mrf.mxu0
    %v4993 = vadd.f32 %v4259, %v4992
    %4994 = vmatmul.bf16.gmra.mxu0 %v4178
    %v4995 = vpop.f32.mrf.mxu0
    %v4996 = vadd.f32 %v4259, %v4995
    %v4997 = vpop.f32.mrf.mxu0
    %v4998 = vadd.f32 %v4259, %v4997
    %4999 = vmatmul.bf16.gmra.mxu0 %v4180
    %v5000 = vpop.f32.mrf.mxu0
    %v5001 = vadd.f32 %v4259, %v5000
    %v5002 = vpop.f32.mrf.mxu0
    %v5003 = vadd.f32 %v4259, %v5002
    %5004 = vmatmul.bf16.gmra.mxu0 %v4182
    %v5005 = vpop.f32.mrf.mxu0
    %v5006 = vadd.f32 %v4259, %v5005
    %v5007 = vpop.f32.mrf.mxu0
    %v5008 = vadd.f32 %v4259, %v5007
    %5009 = vmatmul.bf16.gmra.mxu0 %v4184
    %v5010 = vpop.f32.mrf.mxu0
    %v5011 = vadd.f32 %v4259, %v5010
    %v5012 = vpop.f32.mrf.mxu0
    %v5013 = vadd.f32 %v4259, %v5012
    %5014 = vmatmul.bf16.gmra.mxu0 %v4186
    %v5015 = vpop.f32.mrf.mxu0
    %v5016 = vadd.f32 %v4259, %v5015
    %v5017 = vpop.f32.mrf.mxu0
    %v5018 = vadd.f32 %v4259, %v5017
    %5019 = vmatmul.bf16.gmra.mxu0 %v4188
    %v5020 = vpop.f32.mrf.mxu0
    %v5021 = vadd.f32 %v4259, %v5020
    %v5022 = vpop.f32.mrf.mxu0
    %v5023 = vadd.f32 %v4259, %v5022
    %5024 = vmatmul.bf16.gmra.mxu0 %v4190
    %v5025 = vpop.f32.mrf.mxu0
    %v5026 = vadd.f32 %v4259, %v5025
    %v5027 = vpop.f32.mrf.mxu0
    %v5028 = vadd.f32 %v4259, %v5027
    %5029 = vdwg.mxu0
    %5030 = vmatpush.bf16.msra.mxu0 %v4519
    %5031 = vmatpush.bf16.msra.mxu0 %v4515
    %5032 = vmatpush.bf16.msra.mxu0 %v4511
    %5033 = vmatpush.bf16.msra.mxu0 %v4507
    %5034 = vmatpush.bf16.msra.mxu0 %v4503
    %5035 = vmatpush.bf16.msra.mxu0 %v4499
    %5036 = vmatpush.bf16.msra.mxu0 %v4495
    %5037 = vmatpush.bf16.msra.mxu0 %v4491
    %5038 = vmatmul.bf16.gmra.mxu0 %v4161
    %v5039 = vpop.f32.mrf.mxu0
    %v5040 = vadd.f32 %v4951, %v5039
    %v5041 = vpop.f32.mrf.mxu0
    %v5042 = vadd.f32 %v4953, %v5041
    %5043 = vmatmul.bf16.gmra.mxu0 %v4163
    %v5044 = vpop.f32.mrf.mxu0
    %v5045 = vadd.f32 %v4956, %v5044
    %v5046 = vpop.f32.mrf.mxu0
    %v5047 = vadd.f32 %v4958, %v5046
    %5048 = vmatmul.bf16.gmra.mxu0 %v4165
    %v5049 = vpop.f32.mrf.mxu0
    %v5050 = vadd.f32 %v4961, %v5049
    %v5051 = vpop.f32.mrf.mxu0
    %v5052 = vadd.f32 %v4963, %v5051
    %5053 = vmatmul.bf16.gmra.mxu0 %v4167
    %v5054 = vpop.f32.mrf.mxu0
    %v5055 = vadd.f32 %v4966, %v5054
    %v5056 = vpop.f32.mrf.mxu0
    %v5057 = vadd.f32 %v4968, %v5056
    %5058 = vmatmul.bf16.gmra.mxu0 %v4169
    %v5059 = vpop.f32.mrf.mxu0
    %v5060 = vadd.f32 %v4971, %v5059
    %v5061 = vpop.f32.mrf.mxu0
    %v5062 = vadd.f32 %v4973, %v5061
    %5063 = vmatmul.bf16.gmra.mxu0 %v4171
    %v5064 = vpop.f32.mrf.mxu0
    %v5065 = vadd.f32 %v4976, %v5064
    %v5066 = vpop.f32.mrf.mxu0
    %v5067 = vadd.f32 %v4978, %v5066
    %5068 = vmatmul.bf16.gmra.mxu0 %v4173
    %v5069 = vpop.f32.mrf.mxu0
    %v5070 = vadd.f32 %v4981, %v5069
    %v5071 = vpop.f32.mrf.mxu0
    %v5072 = vadd.f32 %v4983, %v5071
    %5073 = vmatmul.bf16.gmra.mxu0 %v4175
    %v5074 = vpop.f32.mrf.mxu0
    %v5075 = vadd.f32 %v4986, %v5074
    %v5076 = vpop.f32.mrf.mxu0
    %v5077 = vadd.f32 %v4988, %v5076
    %5078 = vmatmul.bf16.gmra.mxu0 %v4177
    %v5079 = vpop.f32.mrf.mxu0
    %v5080 = vadd.f32 %v4991, %v5079
    %v5081 = vpop.f32.mrf.mxu0
    %v5082 = vadd.f32 %v4993, %v5081
    %5083 = vmatmul.bf16.gmra.mxu0 %v4179
    %v5084 = vpop.f32.mrf.mxu0
    %v5085 = vadd.f32 %v4996, %v5084
    %v5086 = vpop.f32.mrf.mxu0
    %v5087 = vadd.f32 %v4998, %v5086
    %5088 = vmatmul.bf16.gmra.mxu0 %v4181
    %v5089 = vpop.f32.mrf.mxu0
    %v5090 = vadd.f32 %v5001, %v5089
    %v5091 = vpop.f32.mrf.mxu0
    %v5092 = vadd.f32 %v5003, %v5091
    %5093 = vmatmul.bf16.gmra.mxu0 %v4183
    %v5094 = vpop.f32.mrf.mxu0
    %v5095 = vadd.f32 %v5006, %v5094
    %v5096 = vpop.f32.mrf.mxu0
    %v5097 = vadd.f32 %v5008, %v5096
    %5098 = vmatmul.bf16.gmra.mxu0 %v4185
    %v5099 = vpop.f32.mrf.mxu0
    %v5100 = vadd.f32 %v5011, %v5099
    %v5101 = vpop.f32.mrf.mxu0
    %v5102 = vadd.f32 %v5013, %v5101
    %5103 = vmatmul.bf16.gmra.mxu0 %v4187
    %v5104 = vpop.f32.mrf.mxu0
    %v5105 = vadd.f32 %v5016, %v5104
    %v5106 = vpop.f32.mrf.mxu0
    %v5107 = vadd.f32 %v5018, %v5106
    %5108 = vmatmul.bf16.gmra.mxu0 %v4189
    %v5109 = vpop.f32.mrf.mxu0
    %v5110 = vadd.f32 %v5021, %v5109
    %v5111 = vpop.f32.mrf.mxu0
    %v5112 = vadd.f32 %v5023, %v5111
    %5113 = vmatmul.bf16.gmra.mxu0 %v4191
    %v5114 = vpop.f32.mrf.mxu0
    %v5115 = vadd.f32 %v5026, %v5114
    %v5116 = vpop.f32.mrf.mxu0
    %v5117 = vadd.f32 %v5028, %v5116
    %5118 = vdwg.mxu0
    %5119 = vmatpush.bf16.msra.mxu0 %v4488
    %5120 = vmatpush.bf16.msra.mxu0 %v4484
    %5121 = vmatpush.bf16.msra.mxu0 %v4480
    %5122 = vmatpush.bf16.msra.mxu0 %v4476
    %5123 = vmatpush.bf16.msra.mxu0 %v4472
    %5124 = vmatpush.bf16.msra.mxu0 %v4468
    %5125 = vmatpush.bf16.msra.mxu0 %v4464
    %5126 = vmatpush.bf16.msra.mxu0 %v4460
    %5127 = vmatmul.bf16.gmra.mxu0 %v4160
    %v5128 = vpop.f32.mrf.mxu0
    %v5129 = vadd.f32 %v4260, %v5128
    %v5130 = vpop.f32.mrf.mxu0
    %v5131 = vadd.f32 %v4260, %v5130
    %5132 = vmatmul.bf16.gmra.mxu0 %v4162
    %v5133 = vpop.f32.mrf.mxu0
    %v5134 = vadd.f32 %v4260, %v5133
    %v5135 = vpop.f32.mrf.mxu0
    %v5136 = vadd.f32 %v4260, %v5135
    %5137 = vmatmul.bf16.gmra.mxu0 %v4164
    %v5138 = vpop.f32.mrf.mxu0
    %v5139 = vadd.f32 %v4260, %v5138
    %v5140 = vpop.f32.mrf.mxu0
    %v5141 = vadd.f32 %v4260, %v5140
    %5142 = vmatmul.bf16.gmra.mxu0 %v4166
    %v5143 = vpop.f32.mrf.mxu0
    %v5144 = vadd.f32 %v4260, %v5143
    %v5145 = vpop.f32.mrf.mxu0
    %v5146 = vadd.f32 %v4260, %v5145
    %5147 = vmatmul.bf16.gmra.mxu0 %v4168
    %v5148 = vpop.f32.mrf.mxu0
    %v5149 = vadd.f32 %v4260, %v5148
    %v5150 = vpop.f32.mrf.mxu0
    %v5151 = vadd.f32 %v4260, %v5150
    %5152 = vmatmul.bf16.gmra.mxu0 %v4170
    %v5153 = vpop.f32.mrf.mxu0
    %v5154 = vadd.f32 %v4260, %v5153
    %v5155 = vpop.f32.mrf.mxu0
    %v5156 = vadd.f32 %v4260, %v5155
    %5157 = vmatmul.bf16.gmra.mxu0 %v4172
    %v5158 = vpop.f32.mrf.mxu0
    %v5159 = vadd.f32 %v4260, %v5158
    %v5160 = vpop.f32.mrf.mxu0
    %v5161 = vadd.f32 %v4260, %v5160
    %5162 = vmatmul.bf16.gmra.mxu0 %v4174
    %v5163 = vpop.f32.mrf.mxu0
    %v5164 = vadd.f32 %v4260, %v5163
    %v5165 = vpop.f32.mrf.mxu0
    %v5166 = vadd.f32 %v4260, %v5165
    %5167 = vmatmul.bf16.gmra.mxu0 %v4176
    %v5168 = vpop.f32.mrf.mxu0
    %v5169 = vadd.f32 %v4260, %v5168
    %v5170 = vpop.f32.mrf.mxu0
    %v5171 = vadd.f32 %v4260, %v5170
    %5172 = vmatmul.bf16.gmra.mxu0 %v4178
    %v5173 = vpop.f32.mrf.mxu0
    %v5174 = vadd.f32 %v4260, %v5173
    %v5175 = vpop.f32.mrf.mxu0
    %v5176 = vadd.f32 %v4260, %v5175
    %5177 = vmatmul.bf16.gmra.mxu0 %v4180
    %v5178 = vpop.f32.mrf.mxu0
    %v5179 = vadd.f32 %v4260, %v5178
    %v5180 = vpop.f32.mrf.mxu0
    %v5181 = vadd.f32 %v4260, %v5180
    %5182 = vmatmul.bf16.gmra.mxu0 %v4182
    %v5183 = vpop.f32.mrf.mxu0
    %v5184 = vadd.f32 %v4260, %v5183
    %v5185 = vpop.f32.mrf.mxu0
    %v5186 = vadd.f32 %v4260, %v5185
    %5187 = vmatmul.bf16.gmra.mxu0 %v4184
    %v5188 = vpop.f32.mrf.mxu0
    %v5189 = vadd.f32 %v4260, %v5188
    %v5190 = vpop.f32.mrf.mxu0
    %v5191 = vadd.f32 %v4260, %v5190
    %5192 = vmatmul.bf16.gmra.mxu0 %v4186
    %v5193 = vpop.f32.mrf.mxu0
    %v5194 = vadd.f32 %v4260, %v5193
    %v5195 = vpop.f32.mrf.mxu0
    %v5196 = vadd.f32 %v4260, %v5195
    %5197 = vmatmul.bf16.gmra.mxu0 %v4188
    %v5198 = vpop.f32.mrf.mxu0
    %v5199 = vadd.f32 %v4260, %v5198
    %v5200 = vpop.f32.mrf.mxu0
    %v5201 = vadd.f32 %v4260, %v5200
    %5202 = vmatmul.bf16.gmra.mxu0 %v4190
    %v5203 = vpop.f32.mrf.mxu0
    %v5204 = vadd.f32 %v4260, %v5203
    %v5205 = vpop.f32.mrf.mxu0
    %v5206 = vadd.f32 %v4260, %v5205
    %5207 = vdwg.mxu0
    %5208 = vmatpush.bf16.msra.mxu0 %v4520
    %5209 = vmatpush.bf16.msra.mxu0 %v4516
    %5210 = vmatpush.bf16.msra.mxu0 %v4512
    %5211 = vmatpush.bf16.msra.mxu0 %v4508
    %5212 = vmatpush.bf16.msra.mxu0 %v4504
    %5213 = vmatpush.bf16.msra.mxu0 %v4500
    %5214 = vmatpush.bf16.msra.mxu0 %v4496
    %5215 = vmatpush.bf16.msra.mxu0 %v4492
    %5216 = vmatmul.bf16.gmra.mxu0 %v4161
    %v5217 = vpop.f32.mrf.mxu0
    %v5218 = vadd.f32 %v5129, %v5217
    %v5219 = vpop.f32.mrf.mxu0
    %v5220 = vadd.f32 %v5131, %v5219
    %5221 = vmatmul.bf16.gmra.mxu0 %v4163
    %v5222 = vpop.f32.mrf.mxu0
    %v5223 = vadd.f32 %v5134, %v5222
    %v5224 = vpop.f32.mrf.mxu0
    %v5225 = vadd.f32 %v5136, %v5224
    %5226 = vmatmul.bf16.gmra.mxu0 %v4165
    %v5227 = vpop.f32.mrf.mxu0
    %v5228 = vadd.f32 %v5139, %v5227
    %v5229 = vpop.f32.mrf.mxu0
    %v5230 = vadd.f32 %v5141, %v5229
    %5231 = vmatmul.bf16.gmra.mxu0 %v4167
    %v5232 = vpop.f32.mrf.mxu0
    %v5233 = vadd.f32 %v5144, %v5232
    %v5234 = vpop.f32.mrf.mxu0
    %v5235 = vadd.f32 %v5146, %v5234
    %5236 = vmatmul.bf16.gmra.mxu0 %v4169
    %v5237 = vpop.f32.mrf.mxu0
    %v5238 = vadd.f32 %v5149, %v5237
    %v5239 = vpop.f32.mrf.mxu0
    %v5240 = vadd.f32 %v5151, %v5239
    %5241 = vmatmul.bf16.gmra.mxu0 %v4171
    %v5242 = vpop.f32.mrf.mxu0
    %v5243 = vadd.f32 %v5154, %v5242
    %v5244 = vpop.f32.mrf.mxu0
    %v5245 = vadd.f32 %v5156, %v5244
    %5246 = vmatmul.bf16.gmra.mxu0 %v4173
    %v5247 = vpop.f32.mrf.mxu0
    %v5248 = vadd.f32 %v5159, %v5247
    %v5249 = vpop.f32.mrf.mxu0
    %v5250 = vadd.f32 %v5161, %v5249
    %5251 = vmatmul.bf16.gmra.mxu0 %v4175
    %v5252 = vpop.f32.mrf.mxu0
    %v5253 = vadd.f32 %v5164, %v5252
    %v5254 = vpop.f32.mrf.mxu0
    %v5255 = vadd.f32 %v5166, %v5254
    %5256 = vmatmul.bf16.gmra.mxu0 %v4177
    %v5257 = vpop.f32.mrf.mxu0
    %v5258 = vadd.f32 %v5169, %v5257
    %v5259 = vpop.f32.mrf.mxu0
    %v5260 = vadd.f32 %v5171, %v5259
    %5261 = vmatmul.bf16.gmra.mxu0 %v4179
    %v5262 = vpop.f32.mrf.mxu0
    %v5263 = vadd.f32 %v5174, %v5262
    %v5264 = vpop.f32.mrf.mxu0
    %v5265 = vadd.f32 %v5176, %v5264
    %5266 = vmatmul.bf16.gmra.mxu0 %v4181
    %v5267 = vpop.f32.mrf.mxu0
    %v5268 = vadd.f32 %v5179, %v5267
    %v5269 = vpop.f32.mrf.mxu0
    %v5270 = vadd.f32 %v5181, %v5269
    %5271 = vmatmul.bf16.gmra.mxu0 %v4183
    %v5272 = vpop.f32.mrf.mxu0
    %v5273 = vadd.f32 %v5184, %v5272
    %v5274 = vpop.f32.mrf.mxu0
    %v5275 = vadd.f32 %v5186, %v5274
    %5276 = vmatmul.bf16.gmra.mxu0 %v4185
    %v5277 = vpop.f32.mrf.mxu0
    %v5278 = vadd.f32 %v5189, %v5277
    %v5279 = vpop.f32.mrf.mxu0
    %v5280 = vadd.f32 %v5191, %v5279
    %5281 = vmatmul.bf16.gmra.mxu0 %v4187
    %v5282 = vpop.f32.mrf.mxu0
    %v5283 = vadd.f32 %v5194, %v5282
    %v5284 = vpop.f32.mrf.mxu0
    %v5285 = vadd.f32 %v5196, %v5284
    %5286 = vmatmul.bf16.gmra.mxu0 %v4189
    %v5287 = vpop.f32.mrf.mxu0
    %v5288 = vadd.f32 %v5199, %v5287
    %v5289 = vpop.f32.mrf.mxu0
    %v5290 = vadd.f32 %v5201, %v5289
    %5291 = vmatmul.bf16.gmra.mxu0 %v4191
    %v5292 = vpop.f32.mrf.mxu0
    %v5293 = vadd.f32 %v5204, %v5292
    %v5294 = vpop.f32.mrf.mxu0
    %v5295 = vadd.f32 %v5206, %v5294
    %5296 = vdwg.mxu0
    %v5297 = vxor.u32 %v4684, 2147483648
    %v5298 = vxor.u32 %v4686, 2147483648
    %v5299 = vxor.u32 %v4689, 2147483648
    %v5300 = vxor.u32 %v4691, 2147483648
    %v5301 = vxor.u32 %v4694, 2147483648
    %v5302 = vxor.u32 %v4696, 2147483648
    %v5303 = vxor.u32 %v4699, 2147483648
    %v5304 = vxor.u32 %v4701, 2147483648
    %v5305 = vxor.u32 %v4704, 2147483648
    %v5306 = vxor.u32 %v4706, 2147483648
    %v5307 = vxor.u32 %v4709, 2147483648
    %v5308 = vxor.u32 %v4711, 2147483648
    %v5309 = vxor.u32 %v4714, 2147483648
    %v5310 = vxor.u32 %v4716, 2147483648
    %v5311 = vxor.u32 %v4719, 2147483648
    %v5312 = vxor.u32 %v4721, 2147483648
    %v5313 = vxor.u32 %v4724, 2147483648
    %v5314 = vxor.u32 %v4726, 2147483648
    %v5315 = vxor.u32 %v4729, 2147483648
    %v5316 = vxor.u32 %v4731, 2147483648
    %v5317 = vxor.u32 %v4734, 2147483648
    %v5318 = vxor.u32 %v4736, 2147483648
    %v5319 = vxor.u32 %v4739, 2147483648
    %v5320 = vxor.u32 %v4741, 2147483648
    %v5321 = vxor.u32 %v4744, 2147483648
    %v5322 = vxor.u32 %v4746, 2147483648
    %v5323 = vxor.u32 %v4749, 2147483648
    %v5324 = vxor.u32 %v4751, 2147483648
    %v5325 = vxor.u32 %v4754, 2147483648
    %v5326 = vxor.u32 %v4756, 2147483648
    %v5327 = vxor.u32 %v4759, 2147483648
    %v5328 = vxor.u32 %v4761, 2147483648
    %v5329 = vmul.f32 %v5297, 1.442695
    %v5330 = vpow.pop %v5329
    %v5331 = vmul.f32 %v5298, 1.442695
    %v5332 = vpow.pop %v5331
    %v5333 = vmul.f32 %v5299, 1.442695
    %v5334 = vpow.pop %v5333
    %v5335 = vmul.f32 %v5300, 1.442695
    %v5336 = vpow.pop %v5335
    %v5337 = vmul.f32 %v5301, 1.442695
    %v5338 = vpow.pop %v5337
    %v5339 = vmul.f32 %v5302, 1.442695
    %v5340 = vpow.pop %v5339
    %v5341 = vmul.f32 %v5303, 1.442695
    %v5342 = vpow.pop %v5341
    %v5343 = vmul.f32 %v5304, 1.442695
    %v5344 = vpow.pop %v5343
    %v5345 = vmul.f32 %v5305, 1.442695
    %v5346 = vpow.pop %v5345
    %v5347 = vmul.f32 %v5306, 1.442695
    %v5348 = vpow.pop %v5347
    %v5349 = vmul.f32 %v5307, 1.442695
    %v5350 = vpow.pop %v5349
    %v5351 = vmul.f32 %v5308, 1.442695
    %v5352 = vpow.pop %v5351
    %v5353 = vmul.f32 %v5309, 1.442695
    %v5354 = vpow.pop %v5353
    %v5355 = vmul.f32 %v5310, 1.442695
    %v5356 = vpow.pop %v5355
    %v5357 = vmul.f32 %v5311, 1.442695
    %v5358 = vpow.pop %v5357
    %v5359 = vmul.f32 %v5312, 1.442695
    %v5360 = vpow.pop %v5359
    %v5361 = vmul.f32 %v5313, 1.442695
    %v5362 = vpow.pop %v5361
    %v5363 = vmul.f32 %v5314, 1.442695
    %v5364 = vpow.pop %v5363
    %v5365 = vmul.f32 %v5315, 1.442695
    %v5366 = vpow.pop %v5365
    %v5367 = vmul.f32 %v5316, 1.442695
    %v5368 = vpow.pop %v5367
    %v5369 = vmul.f32 %v5317, 1.442695
    %v5370 = vpow.pop %v5369
    %v5371 = vmul.f32 %v5318, 1.442695
    %v5372 = vpow.pop %v5371
    %v5373 = vmul.f32 %v5319, 1.442695
    %v5374 = vpow.pop %v5373
    %v5375 = vmul.f32 %v5320, 1.442695
    %v5376 = vpow.pop %v5375
    %v5377 = vmul.f32 %v5321, 1.442695
    %v5378 = vpow.pop %v5377
    %v5379 = vmul.f32 %v5322, 1.442695
    %v5380 = vpow.pop %v5379
    %v5381 = vmul.f32 %v5323, 1.442695
    %v5382 = vpow.pop %v5381
    %v5383 = vmul.f32 %v5324, 1.442695
    %v5384 = vpow.pop %v5383
    %v5385 = vmul.f32 %v5325, 1.442695
    %v5386 = vpow.pop %v5385
    %v5387 = vmul.f32 %v5326, 1.442695
    %v5388 = vpow.pop %v5387
    %v5389 = vmul.f32 %v5327, 1.442695
    %v5390 = vpow.pop %v5389
    %v5391 = vmul.f32 %v5328, 1.442695
    %v5392 = vpow.pop %v5391
    %v5393 = vadd.f32 %v5330, 1.0
    %v5394 = vadd.f32 %v5332, 1.0
    %v5395 = vadd.f32 %v5334, 1.0
    %v5396 = vadd.f32 %v5336, 1.0
    %v5397 = vadd.f32 %v5338, 1.0
    %v5398 = vadd.f32 %v5340, 1.0
    %v5399 = vadd.f32 %v5342, 1.0
    %v5400 = vadd.f32 %v5344, 1.0
    %v5401 = vadd.f32 %v5346, 1.0
    %v5402 = vadd.f32 %v5348, 1.0
    %v5403 = vadd.f32 %v5350, 1.0
    %v5404 = vadd.f32 %v5352, 1.0
    %v5405 = vadd.f32 %v5354, 1.0
    %v5406 = vadd.f32 %v5356, 1.0
    %v5407 = vadd.f32 %v5358, 1.0
    %v5408 = vadd.f32 %v5360, 1.0
    %v5409 = vadd.f32 %v5362, 1.0
    %v5410 = vadd.f32 %v5364, 1.0
    %v5411 = vadd.f32 %v5366, 1.0
    %v5412 = vadd.f32 %v5368, 1.0
    %v5413 = vadd.f32 %v5370, 1.0
    %v5414 = vadd.f32 %v5372, 1.0
    %v5415 = vadd.f32 %v5374, 1.0
    %v5416 = vadd.f32 %v5376, 1.0
    %v5417 = vadd.f32 %v5378, 1.0
    %v5418 = vadd.f32 %v5380, 1.0
    %v5419 = vadd.f32 %v5382, 1.0
    %v5420 = vadd.f32 %v5384, 1.0
    %v5421 = vadd.f32 %v5386, 1.0
    %v5422 = vadd.f32 %v5388, 1.0
    %v5423 = vadd.f32 %v5390, 1.0
    %v5424 = vadd.f32 %v5392, 1.0
    %v5425 = vrcp.pop %v5393
    %v5426 = vmul.f32 %v5393, %v5425
    %v5427 = vsub.f32 1.0, %v5426
    %v5428 = vmul.f32 %v5425, %v5427
    %v5429 = vadd.f32 %v5425, %v5428
    %vm5430 = vweird.f32 %v5393
    %vm5431 = vweird.f32 %v5425
    %vm5432 = vmor %vm5430, %vm5431
    %v5433 = vsel %vm5432, %v5425, %v5429
    %v5434 = vand.u32 2147483647, %v5393
    %vm5435 = vcmp.eq.f32.partialorder %v5434, 8.507059e+37
    %v5436 = vand.u32 %v5393, 2147483648
    %v5437 = vor.u32 1.1754944e-38, %v5436
    %v5438 = vsel %vm5435, %v5437, %v5433
    %v5439 = vmul.f32 1.0, %v5438
    %v5440 = vrcp.pop %v5394
    %v5441 = vmul.f32 %v5394, %v5440
    %v5442 = vsub.f32 1.0, %v5441
    %v5443 = vmul.f32 %v5440, %v5442
    %v5444 = vadd.f32 %v5440, %v5443
    %vm5445 = vweird.f32 %v5394
    %vm5446 = vweird.f32 %v5440
    %vm5447 = vmor %vm5445, %vm5446
    %v5448 = vsel %vm5447, %v5440, %v5444
    %v5449 = vand.u32 2147483647, %v5394
    %vm5450 = vcmp.eq.f32.partialorder %v5449, 8.507059e+37
    %v5451 = vand.u32 %v5394, 2147483648
    %v5452 = vor.u32 1.1754944e-38, %v5451
    %v5453 = vsel %vm5450, %v5452, %v5448
    %v5454 = vmul.f32 1.0, %v5453
    %v5455 = vrcp.pop %v5395
    %v5456 = vmul.f32 %v5395, %v5455
    %v5457 = vsub.f32 1.0, %v5456
    %v5458 = vmul.f32 %v5455, %v5457
    %v5459 = vadd.f32 %v5455, %v5458
    %vm5460 = vweird.f32 %v5395
    %vm5461 = vweird.f32 %v5455
    %vm5462 = vmor %vm5460, %vm5461
    %v5463 = vsel %vm5462, %v5455, %v5459
    %v5464 = vand.u32 2147483647, %v5395
    %vm5465 = vcmp.eq.f32.partialorder %v5464, 8.507059e+37
    %v5466 = vand.u32 %v5395, 2147483648
    %v5467 = vor.u32 1.1754944e-38, %v5466
    %v5468 = vsel %vm5465, %v5467, %v5463
    %v5469 = vmul.f32 1.0, %v5468
    %v5470 = vrcp.pop %v5396
    %v5471 = vmul.f32 %v5396, %v5470
    %v5472 = vsub.f32 1.0, %v5471
    %v5473 = vmul.f32 %v5470, %v5472
    %v5474 = vadd.f32 %v5470, %v5473
    %vm5475 = vweird.f32 %v5396
    %vm5476 = vweird.f32 %v5470
    %vm5477 = vmor %vm5475, %vm5476
    %v5478 = vsel %vm5477, %v5470, %v5474
    %v5479 = vand.u32 2147483647, %v5396
    %vm5480 = vcmp.eq.f32.partialorder %v5479, 8.507059e+37
    %v5481 = vand.u32 %v5396, 2147483648
    %v5482 = vor.u32 1.1754944e-38, %v5481
    %v5483 = vsel %vm5480, %v5482, %v5478
    %v5484 = vmul.f32 1.0, %v5483
    %v5485 = vrcp.pop %v5397
    %v5486 = vmul.f32 %v5397, %v5485
    %v5487 = vsub.f32 1.0, %v5486
    %v5488 = vmul.f32 %v5485, %v5487
    %v5489 = vadd.f32 %v5485, %v5488
    %vm5490 = vweird.f32 %v5397
    %vm5491 = vweird.f32 %v5485
    %vm5492 = vmor %vm5490, %vm5491
    %v5493 = vsel %vm5492, %v5485, %v5489
    %v5494 = vand.u32 2147483647, %v5397
    %vm5495 = vcmp.eq.f32.partialorder %v5494, 8.507059e+37
    %v5496 = vand.u32 %v5397, 2147483648
    %v5497 = vor.u32 1.1754944e-38, %v5496
    %v5498 = vsel %vm5495, %v5497, %v5493
    %v5499 = vmul.f32 1.0, %v5498
    %v5500 = vrcp.pop %v5398
    %v5501 = vmul.f32 %v5398, %v5500
    %v5502 = vsub.f32 1.0, %v5501
    %v5503 = vmul.f32 %v5500, %v5502
    %v5504 = vadd.f32 %v5500, %v5503
    %vm5505 = vweird.f32 %v5398
    %vm5506 = vweird.f32 %v5500
    %vm5507 = vmor %vm5505, %vm5506
    %v5508 = vsel %vm5507, %v5500, %v5504
    %v5509 = vand.u32 2147483647, %v5398
    %vm5510 = vcmp.eq.f32.partialorder %v5509, 8.507059e+37
    %v5511 = vand.u32 %v5398, 2147483648
    %v5512 = vor.u32 1.1754944e-38, %v5511
    %v5513 = vsel %vm5510, %v5512, %v5508
    %v5514 = vmul.f32 1.0, %v5513
    %v5515 = vrcp.pop %v5399
    %v5516 = vmul.f32 %v5399, %v5515
    %v5517 = vsub.f32 1.0, %v5516
    %v5518 = vmul.f32 %v5515, %v5517
    %v5519 = vadd.f32 %v5515, %v5518
    %vm5520 = vweird.f32 %v5399
    %vm5521 = vweird.f32 %v5515
    %vm5522 = vmor %vm5520, %vm5521
    %v5523 = vsel %vm5522, %v5515, %v5519
    %v5524 = vand.u32 2147483647, %v5399
    %vm5525 = vcmp.eq.f32.partialorder %v5524, 8.507059e+37
    %v5526 = vand.u32 %v5399, 2147483648
    %v5527 = vor.u32 1.1754944e-38, %v5526
    %v5528 = vsel %vm5525, %v5527, %v5523
    %v5529 = vmul.f32 1.0, %v5528
    %v5530 = vrcp.pop %v5400
    %v5531 = vmul.f32 %v5400, %v5530
    %v5532 = vsub.f32 1.0, %v5531
    %v5533 = vmul.f32 %v5530, %v5532
    %v5534 = vadd.f32 %v5530, %v5533
    %vm5535 = vweird.f32 %v5400
    %vm5536 = vweird.f32 %v5530
    %vm5537 = vmor %vm5535, %vm5536
    %v5538 = vsel %vm5537, %v5530, %v5534
    %v5539 = vand.u32 2147483647, %v5400
    %vm5540 = vcmp.eq.f32.partialorder %v5539, 8.507059e+37
    %v5541 = vand.u32 %v5400, 2147483648
    %v5542 = vor.u32 1.1754944e-38, %v5541
    %v5543 = vsel %vm5540, %v5542, %v5538
    %v5544 = vmul.f32 1.0, %v5543
    %v5545 = vrcp.pop %v5401
    %v5546 = vmul.f32 %v5401, %v5545
    %v5547 = vsub.f32 1.0, %v5546
    %v5548 = vmul.f32 %v5545, %v5547
    %v5549 = vadd.f32 %v5545, %v5548
    %vm5550 = vweird.f32 %v5401
    %vm5551 = vweird.f32 %v5545
    %vm5552 = vmor %vm5550, %vm5551
    %v5553 = vsel %vm5552, %v5545, %v5549
    %v5554 = vand.u32 2147483647, %v5401
    %vm5555 = vcmp.eq.f32.partialorder %v5554, 8.507059e+37
    %v5556 = vand.u32 %v5401, 2147483648
    %v5557 = vor.u32 1.1754944e-38, %v5556
    %v5558 = vsel %vm5555, %v5557, %v5553
    %v5559 = vmul.f32 1.0, %v5558
    %v5560 = vrcp.pop %v5402
    %v5561 = vmul.f32 %v5402, %v5560
    %v5562 = vsub.f32 1.0, %v5561
    %v5563 = vmul.f32 %v5560, %v5562
    %v5564 = vadd.f32 %v5560, %v5563
    %vm5565 = vweird.f32 %v5402
    %vm5566 = vweird.f32 %v5560
    %vm5567 = vmor %vm5565, %vm5566
    %v5568 = vsel %vm5567, %v5560, %v5564
    %v5569 = vand.u32 2147483647, %v5402
    %vm5570 = vcmp.eq.f32.partialorder %v5569, 8.507059e+37
    %v5571 = vand.u32 %v5402, 2147483648
    %v5572 = vor.u32 1.1754944e-38, %v5571
    %v5573 = vsel %vm5570, %v5572, %v5568
    %v5574 = vmul.f32 1.0, %v5573
    %v5575 = vrcp.pop %v5403
    %v5576 = vmul.f32 %v5403, %v5575
    %v5577 = vsub.f32 1.0, %v5576
    %v5578 = vmul.f32 %v5575, %v5577
    %v5579 = vadd.f32 %v5575, %v5578
    %vm5580 = vweird.f32 %v5403
    %vm5581 = vweird.f32 %v5575
    %vm5582 = vmor %vm5580, %vm5581
    %v5583 = vsel %vm5582, %v5575, %v5579
    %v5584 = vand.u32 2147483647, %v5403
    %vm5585 = vcmp.eq.f32.partialorder %v5584, 8.507059e+37
    %v5586 = vand.u32 %v5403, 2147483648
    %v5587 = vor.u32 1.1754944e-38, %v5586
    %v5588 = vsel %vm5585, %v5587, %v5583
    %v5589 = vmul.f32 1.0, %v5588
    %v5590 = vrcp.pop %v5404
    %v5591 = vmul.f32 %v5404, %v5590
    %v5592 = vsub.f32 1.0, %v5591
    %v5593 = vmul.f32 %v5590, %v5592
    %v5594 = vadd.f32 %v5590, %v5593
    %vm5595 = vweird.f32 %v5404
    %vm5596 = vweird.f32 %v5590
    %vm5597 = vmor %vm5595, %vm5596
    %v5598 = vsel %vm5597, %v5590, %v5594
    %v5599 = vand.u32 2147483647, %v5404
    %vm5600 = vcmp.eq.f32.partialorder %v5599, 8.507059e+37
    %v5601 = vand.u32 %v5404, 2147483648
    %v5602 = vor.u32 1.1754944e-38, %v5601
    %v5603 = vsel %vm5600, %v5602, %v5598
    %v5604 = vmul.f32 1.0, %v5603
    %v5605 = vrcp.pop %v5405
    %v5606 = vmul.f32 %v5405, %v5605
    %v5607 = vsub.f32 1.0, %v5606
    %v5608 = vmul.f32 %v5605, %v5607
    %v5609 = vadd.f32 %v5605, %v5608
    %vm5610 = vweird.f32 %v5405
    %vm5611 = vweird.f32 %v5605
    %vm5612 = vmor %vm5610, %vm5611
    %v5613 = vsel %vm5612, %v5605, %v5609
    %v5614 = vand.u32 2147483647, %v5405
    %vm5615 = vcmp.eq.f32.partialorder %v5614, 8.507059e+37
    %v5616 = vand.u32 %v5405, 2147483648
    %v5617 = vor.u32 1.1754944e-38, %v5616
    %v5618 = vsel %vm5615, %v5617, %v5613
    %v5619 = vmul.f32 1.0, %v5618
    %v5620 = vrcp.pop %v5406
    %v5621 = vmul.f32 %v5406, %v5620
    %v5622 = vsub.f32 1.0, %v5621
    %v5623 = vmul.f32 %v5620, %v5622
    %v5624 = vadd.f32 %v5620, %v5623
    %vm5625 = vweird.f32 %v5406
    %vm5626 = vweird.f32 %v5620
    %vm5627 = vmor %vm5625, %vm5626
    %v5628 = vsel %vm5627, %v5620, %v5624
    %v5629 = vand.u32 2147483647, %v5406
    %vm5630 = vcmp.eq.f32.partialorder %v5629, 8.507059e+37
    %v5631 = vand.u32 %v5406, 2147483648
    %v5632 = vor.u32 1.1754944e-38, %v5631
    %v5633 = vsel %vm5630, %v5632, %v5628
    %v5634 = vmul.f32 1.0, %v5633
    %v5635 = vrcp.pop %v5407
    %v5636 = vmul.f32 %v5407, %v5635
    %v5637 = vsub.f32 1.0, %v5636
    %v5638 = vmul.f32 %v5635, %v5637
    %v5639 = vadd.f32 %v5635, %v5638
    %vm5640 = vweird.f32 %v5407
    %vm5641 = vweird.f32 %v5635
    %vm5642 = vmor %vm5640, %vm5641
    %v5643 = vsel %vm5642, %v5635, %v5639
    %v5644 = vand.u32 2147483647, %v5407
    %vm5645 = vcmp.eq.f32.partialorder %v5644, 8.507059e+37
    %v5646 = vand.u32 %v5407, 2147483648
    %v5647 = vor.u32 1.1754944e-38, %v5646
    %v5648 = vsel %vm5645, %v5647, %v5643
    %v5649 = vmul.f32 1.0, %v5648
    %v5650 = vrcp.pop %v5408
    %v5651 = vmul.f32 %v5408, %v5650
    %v5652 = vsub.f32 1.0, %v5651
    %v5653 = vmul.f32 %v5650, %v5652
    %v5654 = vadd.f32 %v5650, %v5653
    %vm5655 = vweird.f32 %v5408
    %vm5656 = vweird.f32 %v5650
    %vm5657 = vmor %vm5655, %vm5656
    %v5658 = vsel %vm5657, %v5650, %v5654
    %v5659 = vand.u32 2147483647, %v5408
    %vm5660 = vcmp.eq.f32.partialorder %v5659, 8.507059e+37
    %v5661 = vand.u32 %v5408, 2147483648
    %v5662 = vor.u32 1.1754944e-38, %v5661
    %v5663 = vsel %vm5660, %v5662, %v5658
    %v5664 = vmul.f32 1.0, %v5663
    %v5665 = vrcp.pop %v5409
    %v5666 = vmul.f32 %v5409, %v5665
    %v5667 = vsub.f32 1.0, %v5666
    %v5668 = vmul.f32 %v5665, %v5667
    %v5669 = vadd.f32 %v5665, %v5668
    %vm5670 = vweird.f32 %v5409
    %vm5671 = vweird.f32 %v5665
    %vm5672 = vmor %vm5670, %vm5671
    %v5673 = vsel %vm5672, %v5665, %v5669
    %v5674 = vand.u32 2147483647, %v5409
    %vm5675 = vcmp.eq.f32.partialorder %v5674, 8.507059e+37
    %v5676 = vand.u32 %v5409, 2147483648
    %v5677 = vor.u32 1.1754944e-38, %v5676
    %v5678 = vsel %vm5675, %v5677, %v5673
    %v5679 = vmul.f32 1.0, %v5678
    %v5680 = vrcp.pop %v5410
    %v5681 = vmul.f32 %v5410, %v5680
    %v5682 = vsub.f32 1.0, %v5681
    %v5683 = vmul.f32 %v5680, %v5682
    %v5684 = vadd.f32 %v5680, %v5683
    %vm5685 = vweird.f32 %v5410
    %vm5686 = vweird.f32 %v5680
    %vm5687 = vmor %vm5685, %vm5686
    %v5688 = vsel %vm5687, %v5680, %v5684
    %v5689 = vand.u32 2147483647, %v5410
    %vm5690 = vcmp.eq.f32.partialorder %v5689, 8.507059e+37
    %v5691 = vand.u32 %v5410, 2147483648
    %v5692 = vor.u32 1.1754944e-38, %v5691
    %v5693 = vsel %vm5690, %v5692, %v5688
    %v5694 = vmul.f32 1.0, %v5693
    %v5695 = vrcp.pop %v5411
    %v5696 = vmul.f32 %v5411, %v5695
    %v5697 = vsub.f32 1.0, %v5696
    %v5698 = vmul.f32 %v5695, %v5697
    %v5699 = vadd.f32 %v5695, %v5698
    %vm5700 = vweird.f32 %v5411
    %vm5701 = vweird.f32 %v5695
    %vm5702 = vmor %vm5700, %vm5701
    %v5703 = vsel %vm5702, %v5695, %v5699
    %v5704 = vand.u32 2147483647, %v5411
    %vm5705 = vcmp.eq.f32.partialorder %v5704, 8.507059e+37
    %v5706 = vand.u32 %v5411, 2147483648
    %v5707 = vor.u32 1.1754944e-38, %v5706
    %v5708 = vsel %vm5705, %v5707, %v5703
    %v5709 = vmul.f32 1.0, %v5708
    %v5710 = vrcp.pop %v5412
    %v5711 = vmul.f32 %v5412, %v5710
    %v5712 = vsub.f32 1.0, %v5711
    %v5713 = vmul.f32 %v5710, %v5712
    %v5714 = vadd.f32 %v5710, %v5713
    %vm5715 = vweird.f32 %v5412
    %vm5716 = vweird.f32 %v5710
    %vm5717 = vmor %vm5715, %vm5716
    %v5718 = vsel %vm5717, %v5710, %v5714
    %v5719 = vand.u32 2147483647, %v5412
    %vm5720 = vcmp.eq.f32.partialorder %v5719, 8.507059e+37
    %v5721 = vand.u32 %v5412, 2147483648
    %v5722 = vor.u32 1.1754944e-38, %v5721
    %v5723 = vsel %vm5720, %v5722, %v5718
    %v5724 = vmul.f32 1.0, %v5723
    %v5725 = vrcp.pop %v5413
    %v5726 = vmul.f32 %v5413, %v5725
    %v5727 = vsub.f32 1.0, %v5726
    %v5728 = vmul.f32 %v5725, %v5727
    %v5729 = vadd.f32 %v5725, %v5728
    %vm5730 = vweird.f32 %v5413
    %vm5731 = vweird.f32 %v5725
    %vm5732 = vmor %vm5730, %vm5731
    %v5733 = vsel %vm5732, %v5725, %v5729
    %v5734 = vand.u32 2147483647, %v5413
    %vm5735 = vcmp.eq.f32.partialorder %v5734, 8.507059e+37
    %v5736 = vand.u32 %v5413, 2147483648
    %v5737 = vor.u32 1.1754944e-38, %v5736
    %v5738 = vsel %vm5735, %v5737, %v5733
    %v5739 = vmul.f32 1.0, %v5738
    %v5740 = vrcp.pop %v5414
    %v5741 = vmul.f32 %v5414, %v5740
    %v5742 = vsub.f32 1.0, %v5741
    %v5743 = vmul.f32 %v5740, %v5742
    %v5744 = vadd.f32 %v5740, %v5743
    %vm5745 = vweird.f32 %v5414
    %vm5746 = vweird.f32 %v5740
    %vm5747 = vmor %vm5745, %vm5746
    %v5748 = vsel %vm5747, %v5740, %v5744
    %v5749 = vand.u32 2147483647, %v5414
    %vm5750 = vcmp.eq.f32.partialorder %v5749, 8.507059e+37
    %v5751 = vand.u32 %v5414, 2147483648
    %v5752 = vor.u32 1.1754944e-38, %v5751
    %v5753 = vsel %vm5750, %v5752, %v5748
    %v5754 = vmul.f32 1.0, %v5753
    %v5755 = vrcp.pop %v5415
    %v5756 = vmul.f32 %v5415, %v5755
    %v5757 = vsub.f32 1.0, %v5756
    %v5758 = vmul.f32 %v5755, %v5757
    %v5759 = vadd.f32 %v5755, %v5758
    %vm5760 = vweird.f32 %v5415
    %vm5761 = vweird.f32 %v5755
    %vm5762 = vmor %vm5760, %vm5761
    %v5763 = vsel %vm5762, %v5755, %v5759
    %v5764 = vand.u32 2147483647, %v5415
    %vm5765 = vcmp.eq.f32.partialorder %v5764, 8.507059e+37
    %v5766 = vand.u32 %v5415, 2147483648
    %v5767 = vor.u32 1.1754944e-38, %v5766
    %v5768 = vsel %vm5765, %v5767, %v5763
    %v5769 = vmul.f32 1.0, %v5768
    %v5770 = vrcp.pop %v5416
    %v5771 = vmul.f32 %v5416, %v5770
    %v5772 = vsub.f32 1.0, %v5771
    %v5773 = vmul.f32 %v5770, %v5772
    %v5774 = vadd.f32 %v5770, %v5773
    %vm5775 = vweird.f32 %v5416
    %vm5776 = vweird.f32 %v5770
    %vm5777 = vmor %vm5775, %vm5776
    %v5778 = vsel %vm5777, %v5770, %v5774
    %v5779 = vand.u32 2147483647, %v5416
    %vm5780 = vcmp.eq.f32.partialorder %v5779, 8.507059e+37
    %v5781 = vand.u32 %v5416, 2147483648
    %v5782 = vor.u32 1.1754944e-38, %v5781
    %v5783 = vsel %vm5780, %v5782, %v5778
    %v5784 = vmul.f32 1.0, %v5783
    %v5785 = vrcp.pop %v5417
    %v5786 = vmul.f32 %v5417, %v5785
    %v5787 = vsub.f32 1.0, %v5786
    %v5788 = vmul.f32 %v5785, %v5787
    %v5789 = vadd.f32 %v5785, %v5788
    %vm5790 = vweird.f32 %v5417
    %vm5791 = vweird.f32 %v5785
    %vm5792 = vmor %vm5790, %vm5791
    %v5793 = vsel %vm5792, %v5785, %v5789
    %v5794 = vand.u32 2147483647, %v5417
    %vm5795 = vcmp.eq.f32.partialorder %v5794, 8.507059e+37
    %v5796 = vand.u32 %v5417, 2147483648
    %v5797 = vor.u32 1.1754944e-38, %v5796
    %v5798 = vsel %vm5795, %v5797, %v5793
    %v5799 = vmul.f32 1.0, %v5798
    %v5800 = vrcp.pop %v5418
    %v5801 = vmul.f32 %v5418, %v5800
    %v5802 = vsub.f32 1.0, %v5801
    %v5803 = vmul.f32 %v5800, %v5802
    %v5804 = vadd.f32 %v5800, %v5803
    %vm5805 = vweird.f32 %v5418
    %vm5806 = vweird.f32 %v5800
    %vm5807 = vmor %vm5805, %vm5806
    %v5808 = vsel %vm5807, %v5800, %v5804
    %v5809 = vand.u32 2147483647, %v5418
    %vm5810 = vcmp.eq.f32.partialorder %v5809, 8.507059e+37
    %v5811 = vand.u32 %v5418, 2147483648
    %v5812 = vor.u32 1.1754944e-38, %v5811
    %v5813 = vsel %vm5810, %v5812, %v5808
    %v5814 = vmul.f32 1.0, %v5813
    %v5815 = vrcp.pop %v5419
    %v5816 = vmul.f32 %v5419, %v5815
    %v5817 = vsub.f32 1.0, %v5816
    %v5818 = vmul.f32 %v5815, %v5817
    %v5819 = vadd.f32 %v5815, %v5818
    %vm5820 = vweird.f32 %v5419
    %vm5821 = vweird.f32 %v5815
    %vm5822 = vmor %vm5820, %vm5821
    %v5823 = vsel %vm5822, %v5815, %v5819
    %v5824 = vand.u32 2147483647, %v5419
    %vm5825 = vcmp.eq.f32.partialorder %v5824, 8.507059e+37
    %v5826 = vand.u32 %v5419, 2147483648
    %v5827 = vor.u32 1.1754944e-38, %v5826
    %v5828 = vsel %vm5825, %v5827, %v5823
    %v5829 = vmul.f32 1.0, %v5828
    %v5830 = vrcp.pop %v5420
    %v5831 = vmul.f32 %v5420, %v5830
    %v5832 = vsub.f32 1.0, %v5831
    %v5833 = vmul.f32 %v5830, %v5832
    %v5834 = vadd.f32 %v5830, %v5833
    %vm5835 = vweird.f32 %v5420
    %vm5836 = vweird.f32 %v5830
    %vm5837 = vmor %vm5835, %vm5836
    %v5838 = vsel %vm5837, %v5830, %v5834
    %v5839 = vand.u32 2147483647, %v5420
    %vm5840 = vcmp.eq.f32.partialorder %v5839, 8.507059e+37
    %v5841 = vand.u32 %v5420, 2147483648
    %v5842 = vor.u32 1.1754944e-38, %v5841
    %v5843 = vsel %vm5840, %v5842, %v5838
    %v5844 = vmul.f32 1.0, %v5843
    %v5845 = vrcp.pop %v5421
    %v5846 = vmul.f32 %v5421, %v5845
    %v5847 = vsub.f32 1.0, %v5846
    %v5848 = vmul.f32 %v5845, %v5847
    %v5849 = vadd.f32 %v5845, %v5848
    %vm5850 = vweird.f32 %v5421
    %vm5851 = vweird.f32 %v5845
    %vm5852 = vmor %vm5850, %vm5851
    %v5853 = vsel %vm5852, %v5845, %v5849
    %v5854 = vand.u32 2147483647, %v5421
    %vm5855 = vcmp.eq.f32.partialorder %v5854, 8.507059e+37
    %v5856 = vand.u32 %v5421, 2147483648
    %v5857 = vor.u32 1.1754944e-38, %v5856
    %v5858 = vsel %vm5855, %v5857, %v5853
    %v5859 = vmul.f32 1.0, %v5858
    %v5860 = vrcp.pop %v5422
    %v5861 = vmul.f32 %v5422, %v5860
    %v5862 = vsub.f32 1.0, %v5861
    %v5863 = vmul.f32 %v5860, %v5862
    %v5864 = vadd.f32 %v5860, %v5863
    %vm5865 = vweird.f32 %v5422
    %vm5866 = vweird.f32 %v5860
    %vm5867 = vmor %vm5865, %vm5866
    %v5868 = vsel %vm5867, %v5860, %v5864
    %v5869 = vand.u32 2147483647, %v5422
    %vm5870 = vcmp.eq.f32.partialorder %v5869, 8.507059e+37
    %v5871 = vand.u32 %v5422, 2147483648
    %v5872 = vor.u32 1.1754944e-38, %v5871
    %v5873 = vsel %vm5870, %v5872, %v5868
    %v5874 = vmul.f32 1.0, %v5873
    %v5875 = vrcp.pop %v5423
    %v5876 = vmul.f32 %v5423, %v5875
    %v5877 = vsub.f32 1.0, %v5876
    %v5878 = vmul.f32 %v5875, %v5877
    %v5879 = vadd.f32 %v5875, %v5878
    %vm5880 = vweird.f32 %v5423
    %vm5881 = vweird.f32 %v5875
    %vm5882 = vmor %vm5880, %vm5881
    %v5883 = vsel %vm5882, %v5875, %v5879
    %v5884 = vand.u32 2147483647, %v5423
    %vm5885 = vcmp.eq.f32.partialorder %v5884, 8.507059e+37
    %v5886 = vand.u32 %v5423, 2147483648
    %v5887 = vor.u32 1.1754944e-38, %v5886
    %v5888 = vsel %vm5885, %v5887, %v5883
    %v5889 = vmul.f32 1.0, %v5888
    %v5890 = vrcp.pop %v5424
    %v5891 = vmul.f32 %v5424, %v5890
    %v5892 = vsub.f32 1.0, %v5891
    %v5893 = vmul.f32 %v5890, %v5892
    %v5894 = vadd.f32 %v5890, %v5893
    %vm5895 = vweird.f32 %v5424
    %vm5896 = vweird.f32 %v5890
    %vm5897 = vmor %vm5895, %vm5896
    %v5898 = vsel %vm5897, %v5890, %v5894
    %v5899 = vand.u32 2147483647, %v5424
    %vm5900 = vcmp.eq.f32.partialorder %v5899, 8.507059e+37
    %v5901 = vand.u32 %v5424, 2147483648
    %v5902 = vor.u32 1.1754944e-38, %v5901
    %v5903 = vsel %vm5900, %v5902, %v5898
    %v5904 = vmul.f32 1.0, %v5903
    %v5905 = vxor.u32 %v5040, 2147483648
    %v5906 = vxor.u32 %v5042, 2147483648
    %v5907 = vxor.u32 %v5045, 2147483648
    %v5908 = vxor.u32 %v5047, 2147483648
    %v5909 = vxor.u32 %v5050, 2147483648
    %v5910 = vxor.u32 %v5052, 2147483648
    %v5911 = vxor.u32 %v5055, 2147483648
    %v5912 = vxor.u32 %v5057, 2147483648
    %v5913 = vxor.u32 %v5060, 2147483648
    %v5914 = vxor.u32 %v5062, 2147483648
    %v5915 = vxor.u32 %v5065, 2147483648
    %v5916 = vxor.u32 %v5067, 2147483648
    %v5917 = vxor.u32 %v5070, 2147483648
    %v5918 = vxor.u32 %v5072, 2147483648
    %v5919 = vxor.u32 %v5075, 2147483648
    %v5920 = vxor.u32 %v5077, 2147483648
    %v5921 = vxor.u32 %v5080, 2147483648
    %v5922 = vxor.u32 %v5082, 2147483648
    %v5923 = vxor.u32 %v5085, 2147483648
    %v5924 = vxor.u32 %v5087, 2147483648
    %v5925 = vxor.u32 %v5090, 2147483648
    %v5926 = vxor.u32 %v5092, 2147483648
    %v5927 = vxor.u32 %v5095, 2147483648
    %v5928 = vxor.u32 %v5097, 2147483648
    %v5929 = vxor.u32 %v5100, 2147483648
    %v5930 = vxor.u32 %v5102, 2147483648
    %v5931 = vxor.u32 %v5105, 2147483648
    %v5932 = vxor.u32 %v5107, 2147483648
    %v5933 = vxor.u32 %v5110, 2147483648
    %v5934 = vxor.u32 %v5112, 2147483648
    %v5935 = vxor.u32 %v5115, 2147483648
    %v5936 = vxor.u32 %v5117, 2147483648
    %v5937 = vmul.f32 %v5905, 1.442695
    %v5938 = vpow.pop %v5937
    %v5939 = vmul.f32 %v5906, 1.442695
    %v5940 = vpow.pop %v5939
    %v5941 = vmul.f32 %v5907, 1.442695
    %v5942 = vpow.pop %v5941
    %v5943 = vmul.f32 %v5908, 1.442695
    %v5944 = vpow.pop %v5943
    %v5945 = vmul.f32 %v5909, 1.442695
    %v5946 = vpow.pop %v5945
    %v5947 = vmul.f32 %v5910, 1.442695
    %v5948 = vpow.pop %v5947
    %v5949 = vmul.f32 %v5911, 1.442695
    %v5950 = vpow.pop %v5949
    %v5951 = vmul.f32 %v5912, 1.442695
    %v5952 = vpow.pop %v5951
    %v5953 = vmul.f32 %v5913, 1.442695
    %v5954 = vpow.pop %v5953
    %v5955 = vmul.f32 %v5914, 1.442695
    %v5956 = vpow.pop %v5955
    %v5957 = vmul.f32 %v5915, 1.442695
    %v5958 = vpow.pop %v5957
    %v5959 = vmul.f32 %v5916, 1.442695
    %v5960 = vpow.pop %v5959
    %v5961 = vmul.f32 %v5917, 1.442695
    %v5962 = vpow.pop %v5961
    %v5963 = vmul.f32 %v5918, 1.442695
    %v5964 = vpow.pop %v5963
    %v5965 = vmul.f32 %v5919, 1.442695
    %v5966 = vpow.pop %v5965
    %v5967 = vmul.f32 %v5920, 1.442695
    %v5968 = vpow.pop %v5967
    %v5969 = vmul.f32 %v5921, 1.442695
    %v5970 = vpow.pop %v5969
    %v5971 = vmul.f32 %v5922, 1.442695
    %v5972 = vpow.pop %v5971
    %v5973 = vmul.f32 %v5923, 1.442695
    %v5974 = vpow.pop %v5973
    %v5975 = vmul.f32 %v5924, 1.442695
    %v5976 = vpow.pop %v5975
    %v5977 = vmul.f32 %v5925, 1.442695
    %v5978 = vpow.pop %v5977
    %v5979 = vmul.f32 %v5926, 1.442695
    %v5980 = vpow.pop %v5979
    %v5981 = vmul.f32 %v5927, 1.442695
    %v5982 = vpow.pop %v5981
    %v5983 = vmul.f32 %v5928, 1.442695
    %v5984 = vpow.pop %v5983
    %v5985 = vmul.f32 %v5929, 1.442695
    %v5986 = vpow.pop %v5985
    %v5987 = vmul.f32 %v5930, 1.442695
    %v5988 = vpow.pop %v5987
    %v5989 = vmul.f32 %v5931, 1.442695
    %v5990 = vpow.pop %v5989
    %v5991 = vmul.f32 %v5932, 1.442695
    %v5992 = vpow.pop %v5991
    %v5993 = vmul.f32 %v5933, 1.442695
    %v5994 = vpow.pop %v5993
    %v5995 = vmul.f32 %v5934, 1.442695
    %v5996 = vpow.pop %v5995
    %v5997 = vmul.f32 %v5935, 1.442695
    %v5998 = vpow.pop %v5997
    %v5999 = vmul.f32 %v5936, 1.442695
    %v6000 = vpow.pop %v5999
    %v6001 = vadd.f32 %v5938, 1.0
    %v6002 = vadd.f32 %v5940, 1.0
    %v6003 = vadd.f32 %v5942, 1.0
    %v6004 = vadd.f32 %v5944, 1.0
    %v6005 = vadd.f32 %v5946, 1.0
    %v6006 = vadd.f32 %v5948, 1.0
    %v6007 = vadd.f32 %v5950, 1.0
    %v6008 = vadd.f32 %v5952, 1.0
    %v6009 = vadd.f32 %v5954, 1.0
    %v6010 = vadd.f32 %v5956, 1.0
    %v6011 = vadd.f32 %v5958, 1.0
    %v6012 = vadd.f32 %v5960, 1.0
    %v6013 = vadd.f32 %v5962, 1.0
    %v6014 = vadd.f32 %v5964, 1.0
    %v6015 = vadd.f32 %v5966, 1.0
    %v6016 = vadd.f32 %v5968, 1.0
    %v6017 = vadd.f32 %v5970, 1.0
    %v6018 = vadd.f32 %v5972, 1.0
    %v6019 = vadd.f32 %v5974, 1.0
    %v6020 = vadd.f32 %v5976, 1.0
    %v6021 = vadd.f32 %v5978, 1.0
    %v6022 = vadd.f32 %v5980, 1.0
    %v6023 = vadd.f32 %v5982, 1.0
    %v6024 = vadd.f32 %v5984, 1.0
    %v6025 = vadd.f32 %v5986, 1.0
    %v6026 = vadd.f32 %v5988, 1.0
    %v6027 = vadd.f32 %v5990, 1.0
    %v6028 = vadd.f32 %v5992, 1.0
    %v6029 = vadd.f32 %v5994, 1.0
    %v6030 = vadd.f32 %v5996, 1.0
    %v6031 = vadd.f32 %v5998, 1.0
    %v6032 = vadd.f32 %v6000, 1.0
    %v6033 = vrcp.pop %v6001
    %v6034 = vmul.f32 %v6001, %v6033
    %v6035 = vsub.f32 1.0, %v6034
    %v6036 = vmul.f32 %v6033, %v6035
    %v6037 = vadd.f32 %v6033, %v6036
    %vm6038 = vweird.f32 %v6001
    %vm6039 = vweird.f32 %v6033
    %vm6040 = vmor %vm6038, %vm6039
    %v6041 = vsel %vm6040, %v6033, %v6037
    %v6042 = vand.u32 2147483647, %v6001
    %vm6043 = vcmp.eq.f32.partialorder %v6042, 8.507059e+37
    %v6044 = vand.u32 %v6001, 2147483648
    %v6045 = vor.u32 1.1754944e-38, %v6044
    %v6046 = vsel %vm6043, %v6045, %v6041
    %v6047 = vmul.f32 1.0, %v6046
    %v6048 = vrcp.pop %v6002
    %v6049 = vmul.f32 %v6002, %v6048
    %v6050 = vsub.f32 1.0, %v6049
    %v6051 = vmul.f32 %v6048, %v6050
    %v6052 = vadd.f32 %v6048, %v6051
    %vm6053 = vweird.f32 %v6002
    %vm6054 = vweird.f32 %v6048
    %vm6055 = vmor %vm6053, %vm6054
    %v6056 = vsel %vm6055, %v6048, %v6052
    %v6057 = vand.u32 2147483647, %v6002
    %vm6058 = vcmp.eq.f32.partialorder %v6057, 8.507059e+37
    %v6059 = vand.u32 %v6002, 2147483648
    %v6060 = vor.u32 1.1754944e-38, %v6059
    %v6061 = vsel %vm6058, %v6060, %v6056
    %v6062 = vmul.f32 1.0, %v6061
    %v6063 = vrcp.pop %v6003
    %v6064 = vmul.f32 %v6003, %v6063
    %v6065 = vsub.f32 1.0, %v6064
    %v6066 = vmul.f32 %v6063, %v6065
    %v6067 = vadd.f32 %v6063, %v6066
    %vm6068 = vweird.f32 %v6003
    %vm6069 = vweird.f32 %v6063
    %vm6070 = vmor %vm6068, %vm6069
    %v6071 = vsel %vm6070, %v6063, %v6067
    %v6072 = vand.u32 2147483647, %v6003
    %vm6073 = vcmp.eq.f32.partialorder %v6072, 8.507059e+37
    %v6074 = vand.u32 %v6003, 2147483648
    %v6075 = vor.u32 1.1754944e-38, %v6074
    %v6076 = vsel %vm6073, %v6075, %v6071
    %v6077 = vmul.f32 1.0, %v6076
    %v6078 = vrcp.pop %v6004
    %v6079 = vmul.f32 %v6004, %v6078
    %v6080 = vsub.f32 1.0, %v6079
    %v6081 = vmul.f32 %v6078, %v6080
    %v6082 = vadd.f32 %v6078, %v6081
    %vm6083 = vweird.f32 %v6004
    %vm6084 = vweird.f32 %v6078
    %vm6085 = vmor %vm6083, %vm6084
    %v6086 = vsel %vm6085, %v6078, %v6082
    %v6087 = vand.u32 2147483647, %v6004
    %vm6088 = vcmp.eq.f32.partialorder %v6087, 8.507059e+37
    %v6089 = vand.u32 %v6004, 2147483648
    %v6090 = vor.u32 1.1754944e-38, %v6089
    %v6091 = vsel %vm6088, %v6090, %v6086
    %v6092 = vmul.f32 1.0, %v6091
    %v6093 = vrcp.pop %v6005
    %v6094 = vmul.f32 %v6005, %v6093
    %v6095 = vsub.f32 1.0, %v6094
    %v6096 = vmul.f32 %v6093, %v6095
    %v6097 = vadd.f32 %v6093, %v6096
    %vm6098 = vweird.f32 %v6005
    %vm6099 = vweird.f32 %v6093
    %vm6100 = vmor %vm6098, %vm6099
    %v6101 = vsel %vm6100, %v6093, %v6097
    %v6102 = vand.u32 2147483647, %v6005
    %vm6103 = vcmp.eq.f32.partialorder %v6102, 8.507059e+37
    %v6104 = vand.u32 %v6005, 2147483648
    %v6105 = vor.u32 1.1754944e-38, %v6104
    %v6106 = vsel %vm6103, %v6105, %v6101
    %v6107 = vmul.f32 1.0, %v6106
    %v6108 = vrcp.pop %v6006
    %v6109 = vmul.f32 %v6006, %v6108
    %v6110 = vsub.f32 1.0, %v6109
    %v6111 = vmul.f32 %v6108, %v6110
    %v6112 = vadd.f32 %v6108, %v6111
    %vm6113 = vweird.f32 %v6006
    %vm6114 = vweird.f32 %v6108
    %vm6115 = vmor %vm6113, %vm6114
    %v6116 = vsel %vm6115, %v6108, %v6112
    %v6117 = vand.u32 2147483647, %v6006
    %vm6118 = vcmp.eq.f32.partialorder %v6117, 8.507059e+37
    %v6119 = vand.u32 %v6006, 2147483648
    %v6120 = vor.u32 1.1754944e-38, %v6119
    %v6121 = vsel %vm6118, %v6120, %v6116
    %v6122 = vmul.f32 1.0, %v6121
    %v6123 = vrcp.pop %v6007
    %v6124 = vmul.f32 %v6007, %v6123
    %v6125 = vsub.f32 1.0, %v6124
    %v6126 = vmul.f32 %v6123, %v6125
    %v6127 = vadd.f32 %v6123, %v6126
    %vm6128 = vweird.f32 %v6007
    %vm6129 = vweird.f32 %v6123
    %vm6130 = vmor %vm6128, %vm6129
    %v6131 = vsel %vm6130, %v6123, %v6127
    %v6132 = vand.u32 2147483647, %v6007
    %vm6133 = vcmp.eq.f32.partialorder %v6132, 8.507059e+37
    %v6134 = vand.u32 %v6007, 2147483648
    %v6135 = vor.u32 1.1754944e-38, %v6134
    %v6136 = vsel %vm6133, %v6135, %v6131
    %v6137 = vmul.f32 1.0, %v6136
    %v6138 = vrcp.pop %v6008
    %v6139 = vmul.f32 %v6008, %v6138
    %v6140 = vsub.f32 1.0, %v6139
    %v6141 = vmul.f32 %v6138, %v6140
    %v6142 = vadd.f32 %v6138, %v6141
    %vm6143 = vweird.f32 %v6008
    %vm6144 = vweird.f32 %v6138
    %vm6145 = vmor %vm6143, %vm6144
    %v6146 = vsel %vm6145, %v6138, %v6142
    %v6147 = vand.u32 2147483647, %v6008
    %vm6148 = vcmp.eq.f32.partialorder %v6147, 8.507059e+37
    %v6149 = vand.u32 %v6008, 2147483648
    %v6150 = vor.u32 1.1754944e-38, %v6149
    %v6151 = vsel %vm6148, %v6150, %v6146
    %v6152 = vmul.f32 1.0, %v6151
    %v6153 = vrcp.pop %v6009
    %v6154 = vmul.f32 %v6009, %v6153
    %v6155 = vsub.f32 1.0, %v6154
    %v6156 = vmul.f32 %v6153, %v6155
    %v6157 = vadd.f32 %v6153, %v6156
    %vm6158 = vweird.f32 %v6009
    %vm6159 = vweird.f32 %v6153
    %vm6160 = vmor %vm6158, %vm6159
    %v6161 = vsel %vm6160, %v6153, %v6157
    %v6162 = vand.u32 2147483647, %v6009
    %vm6163 = vcmp.eq.f32.partialorder %v6162, 8.507059e+37
    %v6164 = vand.u32 %v6009, 2147483648
    %v6165 = vor.u32 1.1754944e-38, %v6164
    %v6166 = vsel %vm6163, %v6165, %v6161
    %v6167 = vmul.f32 1.0, %v6166
    %v6168 = vrcp.pop %v6010
    %v6169 = vmul.f32 %v6010, %v6168
    %v6170 = vsub.f32 1.0, %v6169
    %v6171 = vmul.f32 %v6168, %v6170
    %v6172 = vadd.f32 %v6168, %v6171
    %vm6173 = vweird.f32 %v6010
    %vm6174 = vweird.f32 %v6168
    %vm6175 = vmor %vm6173, %vm6174
    %v6176 = vsel %vm6175, %v6168, %v6172
    %v6177 = vand.u32 2147483647, %v6010
    %vm6178 = vcmp.eq.f32.partialorder %v6177, 8.507059e+37
    %v6179 = vand.u32 %v6010, 2147483648
    %v6180 = vor.u32 1.1754944e-38, %v6179
    %v6181 = vsel %vm6178, %v6180, %v6176
    %v6182 = vmul.f32 1.0, %v6181
    %v6183 = vrcp.pop %v6011
    %v6184 = vmul.f32 %v6011, %v6183
    %v6185 = vsub.f32 1.0, %v6184
    %v6186 = vmul.f32 %v6183, %v6185
    %v6187 = vadd.f32 %v6183, %v6186
    %vm6188 = vweird.f32 %v6011
    %vm6189 = vweird.f32 %v6183
    %vm6190 = vmor %vm6188, %vm6189
    %v6191 = vsel %vm6190, %v6183, %v6187
    %v6192 = vand.u32 2147483647, %v6011
    %vm6193 = vcmp.eq.f32.partialorder %v6192, 8.507059e+37
    %v6194 = vand.u32 %v6011, 2147483648
    %v6195 = vor.u32 1.1754944e-38, %v6194
    %v6196 = vsel %vm6193, %v6195, %v6191
    %v6197 = vmul.f32 1.0, %v6196
    %v6198 = vrcp.pop %v6012
    %v6199 = vmul.f32 %v6012, %v6198
    %v6200 = vsub.f32 1.0, %v6199
    %v6201 = vmul.f32 %v6198, %v6200
    %v6202 = vadd.f32 %v6198, %v6201
    %vm6203 = vweird.f32 %v6012
    %vm6204 = vweird.f32 %v6198
    %vm6205 = vmor %vm6203, %vm6204
    %v6206 = vsel %vm6205, %v6198, %v6202
    %v6207 = vand.u32 2147483647, %v6012
    %vm6208 = vcmp.eq.f32.partialorder %v6207, 8.507059e+37
    %v6209 = vand.u32 %v6012, 2147483648
    %v6210 = vor.u32 1.1754944e-38, %v6209
    %v6211 = vsel %vm6208, %v6210, %v6206
    %v6212 = vmul.f32 1.0, %v6211
    %v6213 = vrcp.pop %v6013
    %v6214 = vmul.f32 %v6013, %v6213
    %v6215 = vsub.f32 1.0, %v6214
    %v6216 = vmul.f32 %v6213, %v6215
    %v6217 = vadd.f32 %v6213, %v6216
    %vm6218 = vweird.f32 %v6013
    %vm6219 = vweird.f32 %v6213
    %vm6220 = vmor %vm6218, %vm6219
    %v6221 = vsel %vm6220, %v6213, %v6217
    %v6222 = vand.u32 2147483647, %v6013
    %vm6223 = vcmp.eq.f32.partialorder %v6222, 8.507059e+37
    %v6224 = vand.u32 %v6013, 2147483648
    %v6225 = vor.u32 1.1754944e-38, %v6224
    %v6226 = vsel %vm6223, %v6225, %v6221
    %v6227 = vmul.f32 1.0, %v6226
    %v6228 = vrcp.pop %v6014
    %v6229 = vmul.f32 %v6014, %v6228
    %v6230 = vsub.f32 1.0, %v6229
    %v6231 = vmul.f32 %v6228, %v6230
    %v6232 = vadd.f32 %v6228, %v6231
    %vm6233 = vweird.f32 %v6014
    %vm6234 = vweird.f32 %v6228
    %vm6235 = vmor %vm6233, %vm6234
    %v6236 = vsel %vm6235, %v6228, %v6232
    %v6237 = vand.u32 2147483647, %v6014
    %vm6238 = vcmp.eq.f32.partialorder %v6237, 8.507059e+37
    %v6239 = vand.u32 %v6014, 2147483648
    %v6240 = vor.u32 1.1754944e-38, %v6239
    %v6241 = vsel %vm6238, %v6240, %v6236
    %v6242 = vmul.f32 1.0, %v6241
    %v6243 = vrcp.pop %v6015
    %v6244 = vmul.f32 %v6015, %v6243
    %v6245 = vsub.f32 1.0, %v6244
    %v6246 = vmul.f32 %v6243, %v6245
    %v6247 = vadd.f32 %v6243, %v6246
    %vm6248 = vweird.f32 %v6015
    %vm6249 = vweird.f32 %v6243
    %vm6250 = vmor %vm6248, %vm6249
    %v6251 = vsel %vm6250, %v6243, %v6247
    %v6252 = vand.u32 2147483647, %v6015
    %vm6253 = vcmp.eq.f32.partialorder %v6252, 8.507059e+37
    %v6254 = vand.u32 %v6015, 2147483648
    %v6255 = vor.u32 1.1754944e-38, %v6254
    %v6256 = vsel %vm6253, %v6255, %v6251
    %v6257 = vmul.f32 1.0, %v6256
    %v6258 = vrcp.pop %v6016
    %v6259 = vmul.f32 %v6016, %v6258
    %v6260 = vsub.f32 1.0, %v6259
    %v6261 = vmul.f32 %v6258, %v6260
    %v6262 = vadd.f32 %v6258, %v6261
    %vm6263 = vweird.f32 %v6016
    %vm6264 = vweird.f32 %v6258
    %vm6265 = vmor %vm6263, %vm6264
    %v6266 = vsel %vm6265, %v6258, %v6262
    %v6267 = vand.u32 2147483647, %v6016
    %vm6268 = vcmp.eq.f32.partialorder %v6267, 8.507059e+37
    %v6269 = vand.u32 %v6016, 2147483648
    %v6270 = vor.u32 1.1754944e-38, %v6269
    %v6271 = vsel %vm6268, %v6270, %v6266
    %v6272 = vmul.f32 1.0, %v6271
    %v6273 = vrcp.pop %v6017
    %v6274 = vmul.f32 %v6017, %v6273
    %v6275 = vsub.f32 1.0, %v6274
    %v6276 = vmul.f32 %v6273, %v6275
    %v6277 = vadd.f32 %v6273, %v6276
    %vm6278 = vweird.f32 %v6017
    %vm6279 = vweird.f32 %v6273
    %vm6280 = vmor %vm6278, %vm6279
    %v6281 = vsel %vm6280, %v6273, %v6277
    %v6282 = vand.u32 2147483647, %v6017
    %vm6283 = vcmp.eq.f32.partialorder %v6282, 8.507059e+37
    %v6284 = vand.u32 %v6017, 2147483648
    %v6285 = vor.u32 1.1754944e-38, %v6284
    %v6286 = vsel %vm6283, %v6285, %v6281
    %v6287 = vmul.f32 1.0, %v6286
    %v6288 = vrcp.pop %v6018
    %v6289 = vmul.f32 %v6018, %v6288
    %v6290 = vsub.f32 1.0, %v6289
    %v6291 = vmul.f32 %v6288, %v6290
    %v6292 = vadd.f32 %v6288, %v6291
    %vm6293 = vweird.f32 %v6018
    %vm6294 = vweird.f32 %v6288
    %vm6295 = vmor %vm6293, %vm6294
    %v6296 = vsel %vm6295, %v6288, %v6292
    %v6297 = vand.u32 2147483647, %v6018
    %vm6298 = vcmp.eq.f32.partialorder %v6297, 8.507059e+37
    %v6299 = vand.u32 %v6018, 2147483648
    %v6300 = vor.u32 1.1754944e-38, %v6299
    %v6301 = vsel %vm6298, %v6300, %v6296
    %v6302 = vmul.f32 1.0, %v6301
    %v6303 = vrcp.pop %v6019
    %v6304 = vmul.f32 %v6019, %v6303
    %v6305 = vsub.f32 1.0, %v6304
    %v6306 = vmul.f32 %v6303, %v6305
    %v6307 = vadd.f32 %v6303, %v6306
    %vm6308 = vweird.f32 %v6019
    %vm6309 = vweird.f32 %v6303
    %vm6310 = vmor %vm6308, %vm6309
    %v6311 = vsel %vm6310, %v6303, %v6307
    %v6312 = vand.u32 2147483647, %v6019
    %vm6313 = vcmp.eq.f32.partialorder %v6312, 8.507059e+37
    %v6314 = vand.u32 %v6019, 2147483648
    %v6315 = vor.u32 1.1754944e-38, %v6314
    %v6316 = vsel %vm6313, %v6315, %v6311
    %v6317 = vmul.f32 1.0, %v6316
    %v6318 = vrcp.pop %v6020
    %v6319 = vmul.f32 %v6020, %v6318
    %v6320 = vsub.f32 1.0, %v6319
    %v6321 = vmul.f32 %v6318, %v6320
    %v6322 = vadd.f32 %v6318, %v6321
    %vm6323 = vweird.f32 %v6020
    %vm6324 = vweird.f32 %v6318
    %vm6325 = vmor %vm6323, %vm6324
    %v6326 = vsel %vm6325, %v6318, %v6322
    %v6327 = vand.u32 2147483647, %v6020
    %vm6328 = vcmp.eq.f32.partialorder %v6327, 8.507059e+37
    %v6329 = vand.u32 %v6020, 2147483648
    %v6330 = vor.u32 1.1754944e-38, %v6329
    %v6331 = vsel %vm6328, %v6330, %v6326
    %v6332 = vmul.f32 1.0, %v6331
    %v6333 = vrcp.pop %v6021
    %v6334 = vmul.f32 %v6021, %v6333
    %v6335 = vsub.f32 1.0, %v6334
    %v6336 = vmul.f32 %v6333, %v6335
    %v6337 = vadd.f32 %v6333, %v6336
    %vm6338 = vweird.f32 %v6021
    %vm6339 = vweird.f32 %v6333
    %vm6340 = vmor %vm6338, %vm6339
    %v6341 = vsel %vm6340, %v6333, %v6337
    %v6342 = vand.u32 2147483647, %v6021
    %vm6343 = vcmp.eq.f32.partialorder %v6342, 8.507059e+37
    %v6344 = vand.u32 %v6021, 2147483648
    %v6345 = vor.u32 1.1754944e-38, %v6344
    %v6346 = vsel %vm6343, %v6345, %v6341
    %v6347 = vmul.f32 1.0, %v6346
    %v6348 = vrcp.pop %v6022
    %v6349 = vmul.f32 %v6022, %v6348
    %v6350 = vsub.f32 1.0, %v6349
    %v6351 = vmul.f32 %v6348, %v6350
    %v6352 = vadd.f32 %v6348, %v6351
    %vm6353 = vweird.f32 %v6022
    %vm6354 = vweird.f32 %v6348
    %vm6355 = vmor %vm6353, %vm6354
    %v6356 = vsel %vm6355, %v6348, %v6352
    %v6357 = vand.u32 2147483647, %v6022
    %vm6358 = vcmp.eq.f32.partialorder %v6357, 8.507059e+37
    %v6359 = vand.u32 %v6022, 2147483648
    %v6360 = vor.u32 1.1754944e-38, %v6359
    %v6361 = vsel %vm6358, %v6360, %v6356
    %v6362 = vmul.f32 1.0, %v6361
    %v6363 = vrcp.pop %v6023
    %v6364 = vmul.f32 %v6023, %v6363
    %v6365 = vsub.f32 1.0, %v6364
    %v6366 = vmul.f32 %v6363, %v6365
    %v6367 = vadd.f32 %v6363, %v6366
    %vm6368 = vweird.f32 %v6023
    %vm6369 = vweird.f32 %v6363
    %vm6370 = vmor %vm6368, %vm6369
    %v6371 = vsel %vm6370, %v6363, %v6367
    %v6372 = vand.u32 2147483647, %v6023
    %vm6373 = vcmp.eq.f32.partialorder %v6372, 8.507059e+37
    %v6374 = vand.u32 %v6023, 2147483648
    %v6375 = vor.u32 1.1754944e-38, %v6374
    %v6376 = vsel %vm6373, %v6375, %v6371
    %v6377 = vmul.f32 1.0, %v6376
    %v6378 = vrcp.pop %v6024
    %v6379 = vmul.f32 %v6024, %v6378
    %v6380 = vsub.f32 1.0, %v6379
    %v6381 = vmul.f32 %v6378, %v6380
    %v6382 = vadd.f32 %v6378, %v6381
    %vm6383 = vweird.f32 %v6024
    %vm6384 = vweird.f32 %v6378
    %vm6385 = vmor %vm6383, %vm6384
    %v6386 = vsel %vm6385, %v6378, %v6382
    %v6387 = vand.u32 2147483647, %v6024
    %vm6388 = vcmp.eq.f32.partialorder %v6387, 8.507059e+37
    %v6389 = vand.u32 %v6024, 2147483648
    %v6390 = vor.u32 1.1754944e-38, %v6389
    %v6391 = vsel %vm6388, %v6390, %v6386
    %v6392 = vmul.f32 1.0, %v6391
    %v6393 = vrcp.pop %v6025
    %v6394 = vmul.f32 %v6025, %v6393
    %v6395 = vsub.f32 1.0, %v6394
    %v6396 = vmul.f32 %v6393, %v6395
    %v6397 = vadd.f32 %v6393, %v6396
    %vm6398 = vweird.f32 %v6025
    %vm6399 = vweird.f32 %v6393
    %vm6400 = vmor %vm6398, %vm6399
    %v6401 = vsel %vm6400, %v6393, %v6397
    %v6402 = vand.u32 2147483647, %v6025
    %vm6403 = vcmp.eq.f32.partialorder %v6402, 8.507059e+37
    %v6404 = vand.u32 %v6025, 2147483648
    %v6405 = vor.u32 1.1754944e-38, %v6404
    %v6406 = vsel %vm6403, %v6405, %v6401
    %v6407 = vmul.f32 1.0, %v6406
    %v6408 = vrcp.pop %v6026
    %v6409 = vmul.f32 %v6026, %v6408
    %v6410 = vsub.f32 1.0, %v6409
    %v6411 = vmul.f32 %v6408, %v6410
    %v6412 = vadd.f32 %v6408, %v6411
    %vm6413 = vweird.f32 %v6026
    %vm6414 = vweird.f32 %v6408
    %vm6415 = vmor %vm6413, %vm6414
    %v6416 = vsel %vm6415, %v6408, %v6412
    %v6417 = vand.u32 2147483647, %v6026
    %vm6418 = vcmp.eq.f32.partialorder %v6417, 8.507059e+37
    %v6419 = vand.u32 %v6026, 2147483648
    %v6420 = vor.u32 1.1754944e-38, %v6419
    %v6421 = vsel %vm6418, %v6420, %v6416
    %v6422 = vmul.f32 1.0, %v6421
    %v6423 = vrcp.pop %v6027
    %v6424 = vmul.f32 %v6027, %v6423
    %v6425 = vsub.f32 1.0, %v6424
    %v6426 = vmul.f32 %v6423, %v6425
    %v6427 = vadd.f32 %v6423, %v6426
    %vm6428 = vweird.f32 %v6027
    %vm6429 = vweird.f32 %v6423
    %vm6430 = vmor %vm6428, %vm6429
    %v6431 = vsel %vm6430, %v6423, %v6427
    %v6432 = vand.u32 2147483647, %v6027
    %vm6433 = vcmp.eq.f32.partialorder %v6432, 8.507059e+37
    %v6434 = vand.u32 %v6027, 2147483648
    %v6435 = vor.u32 1.1754944e-38, %v6434
    %v6436 = vsel %vm6433, %v6435, %v6431
    %v6437 = vmul.f32 1.0, %v6436
    %v6438 = vrcp.pop %v6028
    %v6439 = vmul.f32 %v6028, %v6438
    %v6440 = vsub.f32 1.0, %v6439
    %v6441 = vmul.f32 %v6438, %v6440
    %v6442 = vadd.f32 %v6438, %v6441
    %vm6443 = vweird.f32 %v6028
    %vm6444 = vweird.f32 %v6438
    %vm6445 = vmor %vm6443, %vm6444
    %v6446 = vsel %vm6445, %v6438, %v6442
    %v6447 = vand.u32 2147483647, %v6028
    %vm6448 = vcmp.eq.f32.partialorder %v6447, 8.507059e+37
    %v6449 = vand.u32 %v6028, 2147483648
    %v6450 = vor.u32 1.1754944e-38, %v6449
    %v6451 = vsel %vm6448, %v6450, %v6446
    %v6452 = vmul.f32 1.0, %v6451
    %v6453 = vrcp.pop %v6029
    %v6454 = vmul.f32 %v6029, %v6453
    %v6455 = vsub.f32 1.0, %v6454
    %v6456 = vmul.f32 %v6453, %v6455
    %v6457 = vadd.f32 %v6453, %v6456
    %vm6458 = vweird.f32 %v6029
    %vm6459 = vweird.f32 %v6453
    %vm6460 = vmor %vm6458, %vm6459
    %v6461 = vsel %vm6460, %v6453, %v6457
    %v6462 = vand.u32 2147483647, %v6029
    %vm6463 = vcmp.eq.f32.partialorder %v6462, 8.507059e+37
    %v6464 = vand.u32 %v6029, 2147483648
    %v6465 = vor.u32 1.1754944e-38, %v6464
    %v6466 = vsel %vm6463, %v6465, %v6461
    %v6467 = vmul.f32 1.0, %v6466
    %v6468 = vrcp.pop %v6030
    %v6469 = vmul.f32 %v6030, %v6468
    %v6470 = vsub.f32 1.0, %v6469
    %v6471 = vmul.f32 %v6468, %v6470
    %v6472 = vadd.f32 %v6468, %v6471
    %vm6473 = vweird.f32 %v6030
    %vm6474 = vweird.f32 %v6468
    %vm6475 = vmor %vm6473, %vm6474
    %v6476 = vsel %vm6475, %v6468, %v6472
    %v6477 = vand.u32 2147483647, %v6030
    %vm6478 = vcmp.eq.f32.partialorder %v6477, 8.507059e+37
    %v6479 = vand.u32 %v6030, 2147483648
    %v6480 = vor.u32 1.1754944e-38, %v6479
    %v6481 = vsel %vm6478, %v6480, %v6476
    %v6482 = vmul.f32 1.0, %v6481
    %v6483 = vrcp.pop %v6031
    %v6484 = vmul.f32 %v6031, %v6483
    %v6485 = vsub.f32 1.0, %v6484
    %v6486 = vmul.f32 %v6483, %v6485
    %v6487 = vadd.f32 %v6483, %v6486
    %vm6488 = vweird.f32 %v6031
    %vm6489 = vweird.f32 %v6483
    %vm6490 = vmor %vm6488, %vm6489
    %v6491 = vsel %vm6490, %v6483, %v6487
    %v6492 = vand.u32 2147483647, %v6031
    %vm6493 = vcmp.eq.f32.partialorder %v6492, 8.507059e+37
    %v6494 = vand.u32 %v6031, 2147483648
    %v6495 = vor.u32 1.1754944e-38, %v6494
    %v6496 = vsel %vm6493, %v6495, %v6491
    %v6497 = vmul.f32 1.0, %v6496
    %v6498 = vrcp.pop %v6032
    %v6499 = vmul.f32 %v6032, %v6498
    %v6500 = vsub.f32 1.0, %v6499
    %v6501 = vmul.f32 %v6498, %v6500
    %v6502 = vadd.f32 %v6498, %v6501
    %vm6503 = vweird.f32 %v6032
    %vm6504 = vweird.f32 %v6498
    %vm6505 = vmor %vm6503, %vm6504
    %v6506 = vsel %vm6505, %v6498, %v6502
    %v6507 = vand.u32 2147483647, %v6032
    %vm6508 = vcmp.eq.f32.partialorder %v6507, 8.507059e+37
    %v6509 = vand.u32 %v6032, 2147483648
    %v6510 = vor.u32 1.1754944e-38, %v6509
    %v6511 = vsel %vm6508, %v6510, %v6506
    %v6512 = vmul.f32 1.0, %v6511
    %v6513 = vsub.f32 1.0, %v5439
    %v6514 = vsub.f32 1.0, %v5454
    %v6515 = vsub.f32 1.0, %v5469
    %v6516 = vsub.f32 1.0, %v5484
    %v6517 = vsub.f32 1.0, %v5499
    %v6518 = vsub.f32 1.0, %v5514
    %v6519 = vsub.f32 1.0, %v5529
    %v6520 = vsub.f32 1.0, %v5544
    %v6521 = vsub.f32 1.0, %v5559
    %v6522 = vsub.f32 1.0, %v5574
    %v6523 = vsub.f32 1.0, %v5589
    %v6524 = vsub.f32 1.0, %v5604
    %v6525 = vsub.f32 1.0, %v5619
    %v6526 = vsub.f32 1.0, %v5634
    %v6527 = vsub.f32 1.0, %v5649
    %v6528 = vsub.f32 1.0, %v5664
    %v6529 = vsub.f32 1.0, %v5679
    %v6530 = vsub.f32 1.0, %v5694
    %v6531 = vsub.f32 1.0, %v5709
    %v6532 = vsub.f32 1.0, %v5724
    %v6533 = vsub.f32 1.0, %v5739
    %v6534 = vsub.f32 1.0, %v5754
    %v6535 = vsub.f32 1.0, %v5769
    %v6536 = vsub.f32 1.0, %v5784
    %v6537 = vsub.f32 1.0, %v5799
    %v6538 = vsub.f32 1.0, %v5814
    %v6539 = vsub.f32 1.0, %v5829
    %v6540 = vsub.f32 1.0, %v5844
    %v6541 = vsub.f32 1.0, %v5859
    %v6542 = vsub.f32 1.0, %v5874
    %v6543 = vsub.f32 1.0, %v5889
    %v6544 = vsub.f32 1.0, %v5904
    %v6545 = vmul.f32 %v6513, %v189
    %v6546 = vmul.f32 %v6514, %v190
    %v6547 = vmul.f32 %v6515, %v191
    %v6548 = vmul.f32 %v6516, %v192
    %v6549 = vmul.f32 %v6517, %v193
    %v6550 = vmul.f32 %v6518, %v194
    %v6551 = vmul.f32 %v6519, %v195
    %v6552 = vmul.f32 %v6520, %v196
    %v6553 = vmul.f32 %v6521, %v197
    %v6554 = vmul.f32 %v6522, %v198
    %v6555 = vmul.f32 %v6523, %v199
    %v6556 = vmul.f32 %v6524, %v200
    %v6557 = vmul.f32 %v6525, %v201
    %v6558 = vmul.f32 %v6526, %v202
    %v6559 = vmul.f32 %v6527, %v203
    %v6560 = vmul.f32 %v6528, %v204
    %v6561 = vmul.f32 %v6529, %v205
    %v6562 = vmul.f32 %v6530, %v206
    %v6563 = vmul.f32 %v6531, %v207
    %v6564 = vmul.f32 %v6532, %v208
    %v6565 = vmul.f32 %v6533, %v209
    %v6566 = vmul.f32 %v6534, %v210
    %v6567 = vmul.f32 %v6535, %v211
    %v6568 = vmul.f32 %v6536, %v212
    %v6569 = vmul.f32 %v6537, %v213
    %v6570 = vmul.f32 %v6538, %v214
    %v6571 = vmul.f32 %v6539, %v215
    %v6572 = vmul.f32 %v6540, %v216
    %v6573 = vmul.f32 %v6541, %v217
    %v6574 = vmul.f32 %v6542, %v218
    %v6575 = vmul.f32 %v6543, %v219
    %v6576 = vmul.f32 %v6544, %v220
    %v6577 = vmul.f32 %v5439, %v4862
    %v6578 = vmul.f32 %v5454, %v4864
    %v6579 = vmul.f32 %v5469, %v4867
    %v6580 = vmul.f32 %v5484, %v4869
    %v6581 = vmul.f32 %v5499, %v4872
    %v6582 = vmul.f32 %v5514, %v4874
    %v6583 = vmul.f32 %v5529, %v4877
    %v6584 = vmul.f32 %v5544, %v4879
    %v6585 = vmul.f32 %v5559, %v4882
    %v6586 = vmul.f32 %v5574, %v4884
    %v6587 = vmul.f32 %v5589, %v4887
    %v6588 = vmul.f32 %v5604, %v4889
    %v6589 = vmul.f32 %v5619, %v4892
    %v6590 = vmul.f32 %v5634, %v4894
    %v6591 = vmul.f32 %v5649, %v4897
    %v6592 = vmul.f32 %v5664, %v4899
    %v6593 = vmul.f32 %v5679, %v4902
    %v6594 = vmul.f32 %v5694, %v4904
    %v6595 = vmul.f32 %v5709, %v4907
    %v6596 = vmul.f32 %v5724, %v4909
    %v6597 = vmul.f32 %v5739, %v4912
    %v6598 = vmul.f32 %v5754, %v4914
    %v6599 = vmul.f32 %v5769, %v4917
    %v6600 = vmul.f32 %v5784, %v4919
    %v6601 = vmul.f32 %v5799, %v4922
    %v6602 = vmul.f32 %v5814, %v4924
    %v6603 = vmul.f32 %v5829, %v4927
    %v6604 = vmul.f32 %v5844, %v4929
    %v6605 = vmul.f32 %v5859, %v4932
    %v6606 = vmul.f32 %v5874, %v4934
    %v6607 = vmul.f32 %v5889, %v4937
    %v6608 = vmul.f32 %v5904, %v4939
    %v6609 = vadd.f32 %v6545, %v6577
    %v6610 = vadd.f32 %v6546, %v6578
    %v6611 = vadd.f32 %v6547, %v6579
    %v6612 = vadd.f32 %v6548, %v6580
    %v6613 = vadd.f32 %v6549, %v6581
    %v6614 = vadd.f32 %v6550, %v6582
    %v6615 = vadd.f32 %v6551, %v6583
    %v6616 = vadd.f32 %v6552, %v6584
    %v6617 = vadd.f32 %v6553, %v6585
    %v6618 = vadd.f32 %v6554, %v6586
    %v6619 = vadd.f32 %v6555, %v6587
    %v6620 = vadd.f32 %v6556, %v6588
    %v6621 = vadd.f32 %v6557, %v6589
    %v6622 = vadd.f32 %v6558, %v6590
    %v6623 = vadd.f32 %v6559, %v6591
    %v6624 = vadd.f32 %v6560, %v6592
    %v6625 = vadd.f32 %v6561, %v6593
    %v6626 = vadd.f32 %v6562, %v6594
    %v6627 = vadd.f32 %v6563, %v6595
    %v6628 = vadd.f32 %v6564, %v6596
    %v6629 = vadd.f32 %v6565, %v6597
    %v6630 = vadd.f32 %v6566, %v6598
    %v6631 = vadd.f32 %v6567, %v6599
    %v6632 = vadd.f32 %v6568, %v6600
    %v6633 = vadd.f32 %v6569, %v6601
    %v6634 = vadd.f32 %v6570, %v6602
    %v6635 = vadd.f32 %v6571, %v6603
    %v6636 = vadd.f32 %v6572, %v6604
    %v6637 = vadd.f32 %v6573, %v6605
    %v6638 = vadd.f32 %v6574, %v6606
    %v6639 = vadd.f32 %v6575, %v6607
    %v6640 = vadd.f32 %v6576, %v6608
    %v6641 = vsub.f32 1.0, %v6047
    %v6642 = vsub.f32 1.0, %v6062
    %v6643 = vsub.f32 1.0, %v6077
    %v6644 = vsub.f32 1.0, %v6092
    %v6645 = vsub.f32 1.0, %v6107
    %v6646 = vsub.f32 1.0, %v6122
    %v6647 = vsub.f32 1.0, %v6137
    %v6648 = vsub.f32 1.0, %v6152
    %v6649 = vsub.f32 1.0, %v6167
    %v6650 = vsub.f32 1.0, %v6182
    %v6651 = vsub.f32 1.0, %v6197
    %v6652 = vsub.f32 1.0, %v6212
    %v6653 = vsub.f32 1.0, %v6227
    %v6654 = vsub.f32 1.0, %v6242
    %v6655 = vsub.f32 1.0, %v6257
    %v6656 = vsub.f32 1.0, %v6272
    %v6657 = vsub.f32 1.0, %v6287
    %v6658 = vsub.f32 1.0, %v6302
    %v6659 = vsub.f32 1.0, %v6317
    %v6660 = vsub.f32 1.0, %v6332
    %v6661 = vsub.f32 1.0, %v6347
    %v6662 = vsub.f32 1.0, %v6362
    %v6663 = vsub.f32 1.0, %v6377
    %v6664 = vsub.f32 1.0, %v6392
    %v6665 = vsub.f32 1.0, %v6407
    %v6666 = vsub.f32 1.0, %v6422
    %v6667 = vsub.f32 1.0, %v6437
    %v6668 = vsub.f32 1.0, %v6452
    %v6669 = vsub.f32 1.0, %v6467
    %v6670 = vsub.f32 1.0, %v6482
    %v6671 = vsub.f32 1.0, %v6497
    %v6672 = vsub.f32 1.0, %v6512
    %v6673 = vmul.f32 %v6641, %v221
    %v6674 = vmul.f32 %v6642, %v222
    %v6675 = vmul.f32 %v6643, %v223
    %v6676 = vmul.f32 %v6644, %v224
    %v6677 = vmul.f32 %v6645, %v225
    %v6678 = vmul.f32 %v6646, %v226
    %v6679 = vmul.f32 %v6647, %v227
    %v6680 = vmul.f32 %v6648, %v228
    %v6681 = vmul.f32 %v6649, %v229
    %v6682 = vmul.f32 %v6650, %v230
    %v6683 = vmul.f32 %v6651, %v231
    %v6684 = vmul.f32 %v6652, %v232
    %v6685 = vmul.f32 %v6653, %v233
    %v6686 = vmul.f32 %v6654, %v234
    %v6687 = vmul.f32 %v6655, %v235
    %v6688 = vmul.f32 %v6656, %v236
    %v6689 = vmul.f32 %v6657, %v237
    %v6690 = vmul.f32 %v6658, %v238
    %v6691 = vmul.f32 %v6659, %v239
    %v6692 = vmul.f32 %v6660, %v240
    %v6693 = vmul.f32 %v6661, %v241
    %v6694 = vmul.f32 %v6662, %v242
    %v6695 = vmul.f32 %v6663, %v243
    %v6696 = vmul.f32 %v6664, %v244
    %v6697 = vmul.f32 %v6665, %v245
    %v6698 = vmul.f32 %v6666, %v246
    %v6699 = vmul.f32 %v6667, %v247
    %v6700 = vmul.f32 %v6668, %v248
    %v6701 = vmul.f32 %v6669, %v249
    %v6702 = vmul.f32 %v6670, %v250
    %v6703 = vmul.f32 %v6671, %v251
    %v6704 = vmul.f32 %v6672, %v252
    %v6705 = vmul.f32 %v6047, %v5218
    %v6706 = vmul.f32 %v6062, %v5220
    %v6707 = vmul.f32 %v6077, %v5223
    %v6708 = vmul.f32 %v6092, %v5225
    %v6709 = vmul.f32 %v6107, %v5228
    %v6710 = vmul.f32 %v6122, %v5230
    %v6711 = vmul.f32 %v6137, %v5233
    %v6712 = vmul.f32 %v6152, %v5235
    %v6713 = vmul.f32 %v6167, %v5238
    %v6714 = vmul.f32 %v6182, %v5240
    %v6715 = vmul.f32 %v6197, %v5243
    %v6716 = vmul.f32 %v6212, %v5245
    %v6717 = vmul.f32 %v6227, %v5248
    %v6718 = vmul.f32 %v6242, %v5250
    %v6719 = vmul.f32 %v6257, %v5253
    %v6720 = vmul.f32 %v6272, %v5255
    %v6721 = vmul.f32 %v6287, %v5258
    %v6722 = vmul.f32 %v6302, %v5260
    %v6723 = vmul.f32 %v6317, %v5263
    %v6724 = vmul.f32 %v6332, %v5265
    %v6725 = vmul.f32 %v6347, %v5268
    %v6726 = vmul.f32 %v6362, %v5270
    %v6727 = vmul.f32 %v6377, %v5273
    %v6728 = vmul.f32 %v6392, %v5275
    %v6729 = vmul.f32 %v6407, %v5278
    %v6730 = vmul.f32 %v6422, %v5280
    %v6731 = vmul.f32 %v6437, %v5283
    %v6732 = vmul.f32 %v6452, %v5285
    %v6733 = vmul.f32 %v6467, %v5288
    %v6734 = vmul.f32 %v6482, %v5290
    %v6735 = vmul.f32 %v6497, %v5293
    %v6736 = vmul.f32 %v6512, %v5295
    %v6737 = vadd.f32 %v6673, %v6705
    %v6738 = vadd.f32 %v6674, %v6706
    %v6739 = vadd.f32 %v6675, %v6707
    %v6740 = vadd.f32 %v6676, %v6708
    %v6741 = vadd.f32 %v6677, %v6709
    %v6742 = vadd.f32 %v6678, %v6710
    %v6743 = vadd.f32 %v6679, %v6711
    %v6744 = vadd.f32 %v6680, %v6712
    %v6745 = vadd.f32 %v6681, %v6713
    %v6746 = vadd.f32 %v6682, %v6714
    %v6747 = vadd.f32 %v6683, %v6715
    %v6748 = vadd.f32 %v6684, %v6716
    %v6749 = vadd.f32 %v6685, %v6717
    %v6750 = vadd.f32 %v6686, %v6718
    %v6751 = vadd.f32 %v6687, %v6719
    %v6752 = vadd.f32 %v6688, %v6720
    %v6753 = vadd.f32 %v6689, %v6721
    %v6754 = vadd.f32 %v6690, %v6722
    %v6755 = vadd.f32 %v6691, %v6723
    %v6756 = vadd.f32 %v6692, %v6724
    %v6757 = vadd.f32 %v6693, %v6725
    %v6758 = vadd.f32 %v6694, %v6726
    %v6759 = vadd.f32 %v6695, %v6727
    %v6760 = vadd.f32 %v6696, %v6728
    %v6761 = vadd.f32 %v6697, %v6729
    %v6762 = vadd.f32 %v6698, %v6730
    %v6763 = vadd.f32 %v6699, %v6731
    %v6764 = vadd.f32 %v6700, %v6732
    %v6765 = vadd.f32 %v6701, %v6733
    %v6766 = vadd.f32 %v6702, %v6734
    %v6767 = vadd.f32 %v6703, %v6735
    %v6768 = vadd.f32 %v6704, %v6736
    %6769 = vst [vmem:[%s10] sm:$0xff] %v6609
    %6770 = vst [vmem:[%s10 + $0x8] sm:$0xff] %v6737
    %6771 = vst [vmem:[%s10 + $0x10] sm:$0xff] %v6610
    %6772 = vst [vmem:[%s10 + $0x18] sm:$0xff] %v6738
    %6773 = vst [vmem:[%s10 + $0x20] sm:$0xff] %v6611
    %6774 = vst [vmem:[%s10 + $0x28] sm:$0xff] %v6739
    %6775 = vst [vmem:[%s10 + $0x30] sm:$0xff] %v6612
    %6776 = vst [vmem:[%s10 + $0x38] sm:$0xff] %v6740
    %6777 = vst [vmem:[%s10 + $0x40] sm:$0xff] %v6613
    %6778 = vst [vmem:[%s10 + $0x48] sm:$0xff] %v6741
    %6779 = vst [vmem:[%s10 + $0x50] sm:$0xff] %v6614
    %6780 = vst [vmem:[%s10 + $0x58] sm:$0xff] %v6742
    %6781 = vst [vmem:[%s10 + $0x60] sm:$0xff] %v6615
    %6782 = vst [vmem:[%s10 + $0x68] sm:$0xff] %v6743
    %6783 = vst [vmem:[%s10 + $0x70] sm:$0xff] %v6616
    %6784 = vst [vmem:[%s10 + $0x78] sm:$0xff] %v6744
    %6785 = vst [vmem:[%s10 + $0x80] sm:$0xff] %v6617
    %6786 = vst [vmem:[%s10 + $0x88] sm:$0xff] %v6745
    %6787 = vst [vmem:[%s10 + $0x90] sm:$0xff] %v6618
    %6788 = vst [vmem:[%s10 + $0x98] sm:$0xff] %v6746
    %6789 = vst [vmem:[%s10 + $0xa0] sm:$0xff] %v6619
    %6790 = vst [vmem:[%s10 + $0xa8] sm:$0xff] %v6747
    %6791 = vst [vmem:[%s10 + $0xb0] sm:$0xff] %v6620
    %6792 = vst [vmem:[%s10 + $0xb8] sm:$0xff] %v6748
    %6793 = vst [vmem:[%s10 + $0xc0] sm:$0xff] %v6621
    %6794 = vst [vmem:[%s10 + $0xc8] sm:$0xff] %v6749
    %6795 = vst [vmem:[%s10 + $0xd0] sm:$0xff] %v6622
    %6796 = vst [vmem:[%s10 + $0xd8] sm:$0xff] %v6750
    %6797 = vst [vmem:[%s10 + $0xe0] sm:$0xff] %v6623
    %6798 = vst [vmem:[%s10 + $0xe8] sm:$0xff] %v6751
    %6799 = vst [vmem:[%s10 + $0xf0] sm:$0xff] %v6624
    %6800 = vst [vmem:[%s10 + $0xf8] sm:$0xff] %v6752
    %6801 = vst [vmem:[%s10 + $0x100] sm:$0xff] %v6625
    %6802 = vst [vmem:[%s10 + $0x108] sm:$0xff] %v6753
    %6803 = vst [vmem:[%s10 + $0x110] sm:$0xff] %v6626
    %6804 = vst [vmem:[%s10 + $0x118] sm:$0xff] %v6754
    %6805 = vst [vmem:[%s10 + $0x120] sm:$0xff] %v6627
    %6806 = vst [vmem:[%s10 + $0x128] sm:$0xff] %v6755
    %6807 = vst [vmem:[%s10 + $0x130] sm:$0xff] %v6628
    %6808 = vst [vmem:[%s10 + $0x138] sm:$0xff] %v6756
    %6809 = vst [vmem:[%s10 + $0x140] sm:$0xff] %v6629
    %6810 = vst [vmem:[%s10 + $0x148] sm:$0xff] %v6757
    %6811 = vst [vmem:[%s10 + $0x150] sm:$0xff] %v6630
    %6812 = vst [vmem:[%s10 + $0x158] sm:$0xff] %v6758
    %6813 = vst [vmem:[%s10 + $0x160] sm:$0xff] %v6631
    %6814 = vst [vmem:[%s10 + $0x168] sm:$0xff] %v6759
    %6815 = vst [vmem:[%s10 + $0x170] sm:$0xff] %v6632
    %6816 = vst [vmem:[%s10 + $0x178] sm:$0xff] %v6760
    %6817 = vst [vmem:[%s10 + $0x180] sm:$0xff] %v6633
    %6818 = vst [vmem:[%s10 + $0x188] sm:$0xff] %v6761
    %6819 = vst [vmem:[%s10 + $0x190] sm:$0xff] %v6634
    %6820 = vst [vmem:[%s10 + $0x198] sm:$0xff] %v6762
    %6821 = vst [vmem:[%s10 + $0x1a0] sm:$0xff] %v6635
    %6822 = vst [vmem:[%s10 + $0x1a8] sm:$0xff] %v6763
    %6823 = vst [vmem:[%s10 + $0x1b0] sm:$0xff] %v6636
    %6824 = vst [vmem:[%s10 + $0x1b8] sm:$0xff] %v6764
    %6825 = vst [vmem:[%s10 + $0x1c0] sm:$0xff] %v6637
    %6826 = vst [vmem:[%s10 + $0x1c8] sm:$0xff] %v6765
    %6827 = vst [vmem:[%s10 + $0x1d0] sm:$0xff] %v6638
    %6828 = vst [vmem:[%s10 + $0x1d8] sm:$0xff] %v6766
    %6829 = vst [vmem:[%s10 + $0x1e0] sm:$0xff] %v6639
    %6830 = vst [vmem:[%s10 + $0x1e8] sm:$0xff] %v6767
    %6831 = vst [vmem:[%s10 + $0x1f0] sm:$0xff] %v6640
    %6832 = vst [vmem:[%s10 + $0x1f8] sm:$0xff] %v6768
    // Predicated region
    $region82: #{actor_forward.1} parent=1 // pred_check
      _
    $region83: #{actor_forward.1} parent=1 // pred_check_branch
      %6834 = sbr.rel (0) target = $region85
    $region84: #{actor_forward.1} parent=1 // pred_region
      _
    $region85: #{actor_forward.1} parent=1 // pred_fallthru
      _
    // Predicated region
    $region86: #{actor_forward.1} parent=1 // pred_check
      _
    $region87: #{actor_forward.1} parent=1 // pred_check_branch
      %6836 = sbr.rel (0) target = $region89
    $region88: #{actor_forward.1} parent=1 // pred_region
      _
    $region89: #{actor_forward.1} parent=1 // pred_fallthru
      _
    %6837 = vsyncpa [#allocation3], 1
    %6838 = vsyncpa [#allocation5], 1
    %6839 = vsyncpa [#allocation8], 1
    %6840 = vsyncpa [#allocation11], 1
    %6841 = vsyncpa [#allocation14], 1
    %6842 = vsyncpa [#allocation17], 1

</llo_original>
